<compile_context>
chip_gen: v7x
topology: tpu7x:2x2x1
jax: 0.10.0
libtpu: 0.0.40
codegen_flags: <defaults>
</compile_context>

<pallas_src>
import jax
import jax.numpy as jnp
from jax.experimental import pallas as pl
from jax.experimental.pallas import tpu as pltpu

EPS = 1e-5


def _make_kernel(use_patches):
    """Build the residual-block kernel body (training-mode BatchNorm).

    Refs (in order):
      x_ref   : (N, H, W, C)      f32 input, NHWC
      w1_ref  : (9, C, C) bf16    [if use_patches: (9*C, C) bf16]  conv1
                weights, taps ordered k = ky*3 + kx, rows = cin, cols = cout
      g1_ref  : (1, C) f32        bn1 gamma
      b1_ref  : (1, C) f32        bn1 beta
      w2_ref, g2_ref, b2_ref      same for conv2 / bn2
      o_ref   : (N, H, W, C) f32  output
      pad_ref : (N, H+2, W+2, C) f32 VMEM scratch shared by both convs
      patches_ref (only if use_patches): (N*H*W, 9*C) bf16 im2col scratch
    """

    def kernel(x_ref, w1_ref, g1_ref, b1_ref, w2_ref, g2_ref, b2_ref,
               o_ref, pad_ref, *extra):
        patches_ref = extra[0] if use_patches else None
        N, H, W, C = x_ref.shape
        M = N * H * W
        inv_m = 1.0 / M
        offsets = [(dy, dx) for dy in range(3) for dx in range(3)]

        # Zero only the 1-wide border of the padded scratch (4 thin strips);
        # the interior is fully overwritten and the border stays zero for
        # both convs -- no whole-buffer zero pass.
        zrow = jnp.zeros((N, 1, W + 2, C), jnp.float32)
        zcol = jnp.zeros((N, H + 2, 1, C), jnp.float32)
        pad_ref[:, 0:1, :, :] = zrow
        pad_ref[:, H + 1:H + 2, :, :] = zrow
        pad_ref[:, :, 0:1, :] = zcol
        pad_ref[:, :, W + 1:W + 2, :] = zcol

        def tap(dy, dx):
            # One 3x3 tap of the padded activation, flattened to (M, C) and
            # cast once to bf16 for the MXU.
            return (pad_ref[:, dy:dy + H, dx:dx + W, :]
                    .reshape(M, C).astype(jnp.bfloat16))

        def conv3x3(w_ref):
            if use_patches:
                # Scatter taps straight into the bf16 im2col scratch (lane
                # slices, no intermediate copies / concat), one MXU matmul.
                for k, (dy, dx) in enumerate(offsets):
                    patches_ref[:, k * C:(k + 1) * C] = tap(dy, dx)
                return jnp.dot(patches_ref[...], w_ref[...],
                               preferred_element_type=jnp.float32)
            # 9*C < 128: skip patch building entirely, 9 accumulating dots.
            acc = None
            for k, (dy, dx) in enumerate(offsets):
                d = jnp.dot(tap(dy, dx), w_ref[k],
                            preferred_element_type=jnp.float32)
                acc = d if acc is None else acc + d
            return acc

        def batchnorm(y, g_ref, b_ref):
            # Training-mode BN in f32.  Shifted two-pass variance (center
            # before squaring) avoids E[y^2]-mean^2 cancellation.
            mean = jnp.sum(y, axis=0, keepdims=True) * inv_m
            yc = y - mean
            var = jnp.sum(yc * yc, axis=0, keepdims=True) * inv_m
            scale = g_ref[...] * jax.lax.rsqrt(var + EPS)   # exact rsqrt
            return yc * scale + b_ref[...]

        # conv1 -> bn1 -> relu
        pad_ref[:, 1:H + 1, 1:W + 1, :] = x_ref[...]
        h = jnp.maximum(batchnorm(conv3x3(w1_ref), g1_ref, b1_ref), 0.0)

        # conv2 -> bn2   (reuse the padded scratch; its border is still zero)
        pad_ref[:, 1:H + 1, 1:W + 1, :] = h.reshape(N, H, W, C)
        h = batchnorm(conv3x3(w2_ref), g2_ref, b2_ref)

        # + residual -> relu   (residual read from the untouched input ref)
        o_ref[...] = jnp.maximum(h.reshape(N, H, W, C) + x_ref[...],
                                 0.0).astype(o_ref.dtype)

    return kernel


def _repack_weights(w, use_patches):
    """PyTorch OIHW conv weight -> kernel layout, bf16 MXU operand.

    TODO(synk): on v6e an int8 weight path would double MXU throughput, but
    v7x's MXU is bf16/fp8 only -- keep bf16 as the cross-generation format.
    """
    C = w.shape[0]
    wt = jnp.transpose(w, (2, 3, 1, 0)).astype(jnp.bfloat16)  # (ky,kx,cin,cout)
    return wt.reshape(9 * C, C) if use_patches else wt.reshape(9, C, C)


def residual_block_nhwc(x_nhwc, w1, g1, b1, w2, g2, b2):
    """NHWC-native entry point. Conv weights in PyTorch OIHW layout, no bias."""
    N, H, W, C = x_nhwc.shape
    M = N * H * W
    use_patches = 9 * C >= 128   # below this a single matmul can't fill the MXU

    w1k = _repack_weights(w1, use_patches)
    w2k = _repack_weights(w2, use_patches)
    g1k = g1.reshape(1, C).astype(jnp.float32)
    b1k = b1.reshape(1, C).astype(jnp.float32)
    g2k = g2.reshape(1, C).astype(jnp.float32)
    b2k = b2.reshape(1, C).astype(jnp.float32)

    full = lambda shape: pl.BlockSpec(shape, lambda: (0,) * len(shape))
    w_shape = (9 * C, C) if use_patches else (9, C, C)

    scratch = [pltpu.VMEM((N, H + 2, W + 2, C), jnp.float32)]
    if use_patches:
        scratch.append(pltpu.VMEM((M, 9 * C), jnp.bfloat16))

    # TODO(synk): at ResNet scale add a halo-tiled grid over (N, H) with
    # dimension_semantics=("parallel", ..., "arbitrary") (v7x has 2 TCs), a
    # cross-tile BN reduction (or two-pass BN), and per-generation tile sizes /
    # vmem_limit_bytes derived from pltpu.get_tpu_info() (v7x: 64 MiB physical
    # VMEM ~ half the v6e tile budget; v5e: default scoped limit is only
    # 16 MiB).  This toy block (<1 MiB live) stays a single VMEM-resident
    # program so training-mode BN statistics remain exact.
    # TODO(synk): with C=4 the NHWC output store uses 4/128 lanes (masked vst);
    # a lane-dense slab would need a sublane->lane relayout at this size.  At
    # real channel counts (C >= 128, second check in __main__) the trailing dim
    # is already lane-dense.
    return pl.pallas_call(
        _make_kernel(use_patches),
        out_shape=jax.ShapeDtypeStruct((N, H, W, C), x_nhwc.dtype),
        in_specs=[
            full((N, H, W, C)),
            full(w_shape), full((1, C)), full((1, C)),
            full(w_shape), full((1, C)), full((1, C)),
        ],
        out_specs=full((N, H, W, C)),
        scratch_shapes=scratch,
    )(x_nhwc, w1k, g1k, b1k, w2k, g2k, b2k)


@jax.jit
def residual_block(x_nchw, w1, g1, b1, w2, g2, b2):
    """PyTorch-parity adapter (NCHW in/out).  Prefer residual_block_nhwc to
    keep activations NHWC end-to-end and avoid the two transposes."""
    x_nhwc = jnp.transpose(x_nchw, (0, 2, 3, 1))
    out = residual_block_nhwc(x_nhwc, w1, g1, b1, w2, g2, b2)
    return jnp.transpose(out, (0, 3, 1, 2))


def _reference(x, w1, g1, b1, w2, g2, b2, conv_dtype=jnp.float32):
    """Pure-JAX reference mirroring the PyTorch forward (training-mode BN).

    conv_dtype=bfloat16 mirrors the kernel's MXU operand precision
    (bf16 multiplies, f32 accumulation)."""
    def conv(y, w):
        return jax.lax.conv_general_dilated(
            y.astype(conv_dtype), w.astype(conv_dtype),
            window_strides=(1, 1), padding=((1, 1), (1, 1)),
            dimension_numbers=("NCHW", "OIHW", "NCHW"),
            preferred_element_type=jnp.float32)

    def bn(y, g, b):
        mean = y.mean(axis=(0, 2, 3), keepdims=True)
        var = ((y - mean) ** 2).mean(axis=(0, 2, 3), keepdims=True)
        yn = (y - mean) / jnp.sqrt(var + EPS)
        return yn * g.reshape(1, -1, 1, 1) + b.reshape(1, -1, 1, 1)

    out = jnp.maximum(bn(conv(x, w1), g1, b1), 0.0)
    out = bn(conv(out, w2), g2, b2)
    return jnp.maximum(out + x, 0.0)


def _make_inputs(key, N, C, H, W, w_scale):
    kx, kw1, kw2, kg1, kb1, kg2, kb2 = jax.random.split(key, 7)
    x = jax.random.normal(kx, (N, C, H, W), dtype=jnp.float32)
    # conv weights: PyTorch OIHW layout (out, in, 3, 3), no bias.
    w1 = jax.random.normal(kw1, (C, C, 3, 3), dtype=jnp.float32) * w_scale
    w2 = jax.random.normal(kw2, (C, C, 3, 3), dtype=jnp.float32) * w_scale
    # BN affine params.
    g1 = 1.0 + 0.1 * jax.random.normal(kg1, (C,), dtype=jnp.float32)
    b1 = 0.1 * jax.random.normal(kb1, (C,), dtype=jnp.float32)
    g2 = 1.0 + 0.1 * jax.random.normal(kg2, (C,), dtype=jnp.float32)
    b2 = 0.1 * jax.random.normal(kb2, (C,), dtype=jnp.float32)
    return x, w1, g1, b1, w2, g2, b2


def _check(args, f32_tol):
    x = args[0]
    out = jax.block_until_ready(residual_block(*args))
    assert out.shape == x.shape, out.shape

    # Tight check against a reference with the kernel's conv operand precision
    # (bf16 multiplies, f32 accumulation == TPU MXU behaviour).
    ref_bf16 = jax.block_until_ready(
        _reference(*args, conv_dtype=jnp.bfloat16))
    assert jnp.allclose(out, ref_bf16, atol=5e-3, rtol=5e-3), float(
        jnp.max(jnp.abs(out - ref_bf16)))

    # Looser sanity check against the PyTorch-faithful full-f32 reference
    # (difference is only the deliberate bf16 MXU-operand rounding).
    ref_f32 = jax.block_until_ready(_reference(*args))
    assert jnp.allclose(out, ref_f32, atol=f32_tol, rtol=f32_tol), float(
        jnp.max(jnp.abs(out - ref_f32)))


if __name__ == "__main__":
    # TODO(synk): `downsample`/stride branch not implemented -- module defaults
    # are downsample=None, stride=1 (in_channel == out_channel).
    key = jax.random.PRNGKey(0)
    k1, k2 = jax.random.split(key)

    # Module-sized shape (C=4): 9C < 128 -> per-tap accumulating-dots path.
    _check(_make_inputs(k1, N=2, C=4, H=16, W=16, w_scale=0.2), f32_tol=5e-2)

    # MXU-filling, lane-dense shape (C=128): 9C=1152 -> bf16 im2col scratch +
    # single matmul path, unmasked 128-lane output stores.
    _check(_make_inputs(k2, N=1, C=128, H=8, W=8, w_scale=0.05), f32_tol=1e-1)

    print("KERNEL_OK")
</pallas_src>

<mosaic_0001>
module attributes {stable_mosaic.version = 11 : i64} {
  func.func @kernel(%arg0: memref<2x16x16x4xf32, #tpu.memory_space<vmem>>, %arg1: memref<9x4x4xbf16, #tpu.memory_space<vmem>>, %arg2: memref<1x4xf32, #tpu.memory_space<vmem>>, %arg3: memref<1x4xf32, #tpu.memory_space<vmem>>, %arg4: memref<9x4x4xbf16, #tpu.memory_space<vmem>>, %arg5: memref<1x4xf32, #tpu.memory_space<vmem>>, %arg6: memref<1x4xf32, #tpu.memory_space<vmem>>, %arg7: memref<2x16x16x4xf32, #tpu.memory_space<vmem>>, %arg8: memref<2x18x18x4xf32, #tpu.memory_space<vmem>>) attributes {dimension_semantics = [], scalar_prefetch = 0 : i64, scratch_operands = 1 : i64, tpu.core_type = #tpu.core_type<tc>} {
    %cst = arith.constant 0.000000e+00 : f32
    %0 = vector.broadcast %cst : f32 to vector<2x1x18x4xf32>
    %cst_0 = arith.constant 0.000000e+00 : f32
    %1 = vector.broadcast %cst_0 : f32 to vector<2x18x1x4xf32>
    %c0 = arith.constant 0 : index
    %c0_1 = arith.constant 0 : index
    %c0_2 = arith.constant 0 : index
    %c0_3 = arith.constant 0 : index
    %2 = vector.load %arg8[%c0, %c0_1, %c0_2, %c0_3] : memref<2x18x18x4xf32, #tpu.memory_space<vmem>>, vector<2x1x18x4xf32>
    tpu.vector_store %arg8[%c0, %c0_1, %c0_2, %c0_3], %0 {strides = array<i32>} : memref<2x18x18x4xf32, #tpu.memory_space<vmem>>, vector<2x1x18x4xf32>,
    %c0_4 = arith.constant 0 : index
    %c17 = arith.constant 17 : index
    %c0_5 = arith.constant 0 : index
    %c0_6 = arith.constant 0 : index
    %3 = vector.load %arg8[%c0_4, %c17, %c0_5, %c0_6] : memref<2x18x18x4xf32, #tpu.memory_space<vmem>>, vector<2x1x18x4xf32>
    tpu.vector_store %arg8[%c0_4, %c17, %c0_5, %c0_6], %0 {strides = array<i32>} : memref<2x18x18x4xf32, #tpu.memory_space<vmem>>, vector<2x1x18x4xf32>,
    %c0_7 = arith.constant 0 : index
    %c0_8 = arith.constant 0 : index
    %c0_9 = arith.constant 0 : index
    %c0_10 = arith.constant 0 : index
    %4 = vector.load %arg8[%c0_7, %c0_8, %c0_9, %c0_10] : memref<2x18x18x4xf32, #tpu.memory_space<vmem>>, vector<2x18x1x4xf32>
    tpu.vector_store %arg8[%c0_7, %c0_8, %c0_9, %c0_10], %1 {strides = array<i32>} : memref<2x18x18x4xf32, #tpu.memory_space<vmem>>, vector<2x18x1x4xf32>,
    %c0_11 = arith.constant 0 : index
    %c0_12 = arith.constant 0 : index
    %c17_13 = arith.constant 17 : index
    %c0_14 = arith.constant 0 : index
    %5 = vector.load %arg8[%c0_11, %c0_12, %c17_13, %c0_14] : memref<2x18x18x4xf32, #tpu.memory_space<vmem>>, vector<2x18x1x4xf32>
    tpu.vector_store %arg8[%c0_11, %c0_12, %c17_13, %c0_14], %1 {strides = array<i32>} : memref<2x18x18x4xf32, #tpu.memory_space<vmem>>, vector<2x18x1x4xf32>,
    %c0_15 = arith.constant 0 : index
    %c0_16 = arith.constant 0 : index
    %c0_17 = arith.constant 0 : index
    %c0_18 = arith.constant 0 : index
    %6 = vector.load %arg0[%c0_15, %c0_16, %c0_17, %c0_18] : memref<2x16x16x4xf32, #tpu.memory_space<vmem>>, vector<2x16x16x4xf32>
    %c0_19 = arith.constant 0 : index
    %c1 = arith.constant 1 : index
    %c1_20 = arith.constant 1 : index
    %c0_21 = arith.constant 0 : index
    %7 = vector.load %arg8[%c0_19, %c1, %c1_20, %c0_21] : memref<2x18x18x4xf32, #tpu.memory_space<vmem>>, vector<2x16x16x4xf32>
    tpu.vector_store %arg8[%c0_19, %c1, %c1_20, %c0_21], %6 {strides = array<i32>} : memref<2x18x18x4xf32, #tpu.memory_space<vmem>>, vector<2x16x16x4xf32>,
    %c0_22 = arith.constant 0 : index
    %c0_23 = arith.constant 0 : index
    %c0_24 = arith.constant 0 : index
    %c0_25 = arith.constant 0 : index
    %8 = vector.load %arg8[%c0_22, %c0_23, %c0_24, %c0_25] : memref<2x18x18x4xf32, #tpu.memory_space<vmem>>, vector<2x16x16x4xf32>
    %9 = vector.shape_cast %8 : vector<2x16x16x4xf32> to vector<512x4xf32>
    %10 = arith.truncf %9 : vector<512x4xf32> to vector<512x4xbf16>
    %c0_26 = arith.constant 0 : index
    %c0_27 = arith.constant 0 : index
    %c0_28 = arith.constant 0 : index
    %11 = vector.load %arg1[%c0_26, %c0_27, %c0_28] : memref<9x4x4xbf16, #tpu.memory_space<vmem>>, vector<1x4x4xbf16>
    %12 = vector.shape_cast %11 : vector<1x4x4xbf16> to vector<4x4xbf16>
    %cst_29 = arith.constant dense<0.000000e+00> : vector<512x4xf32>
    %13 = tpu.matmul %10, %12, %cst_29 {dimension_numbers = #tpu.dot_dimension_numbers<[1], [0], [0], [1], [0, 0, 1, 1], [], []>} : vector<512x4xbf16>, vector<4x4xbf16>, vector<512x4xf32> -> vector<512x4xf32>
    %c0_30 = arith.constant 0 : index
    %c0_31 = arith.constant 0 : index
    %c1_32 = arith.constant 1 : index
    %c0_33 = arith.constant 0 : index
    %14 = vector.load %arg8[%c0_30, %c0_31, %c1_32, %c0_33] : memref<2x18x18x4xf32, #tpu.memory_space<vmem>>, vector<2x16x16x4xf32>
    %15 = vector.shape_cast %14 : vector<2x16x16x4xf32> to vector<512x4xf32>
    %16 = arith.truncf %15 : vector<512x4xf32> to vector<512x4xbf16>
    %c1_34 = arith.constant 1 : index
    %c0_35 = arith.constant 0 : index
    %c0_36 = arith.constant 0 : index
    %17 = vector.load %arg1[%c1_34, %c0_35, %c0_36] : memref<9x4x4xbf16, #tpu.memory_space<vmem>>, vector<1x4x4xbf16>
    %18 = vector.shape_cast %17 : vector<1x4x4xbf16> to vector<4x4xbf16>
    %cst_37 = arith.constant dense<0.000000e+00> : vector<512x4xf32>
    %19 = tpu.matmul %16, %18, %cst_37 {dimension_numbers = #tpu.dot_dimension_numbers<[1], [0], [0], [1], [0, 0, 1, 1], [], []>} : vector<512x4xbf16>, vector<4x4xbf16>, vector<512x4xf32> -> vector<512x4xf32>
    %20 = arith.addf %13, %19 : vector<512x4xf32>
    %c0_38 = arith.constant 0 : index
    %c0_39 = arith.constant 0 : index
    %c2 = arith.constant 2 : index
    %c0_40 = arith.constant 0 : index
    %21 = vector.load %arg8[%c0_38, %c0_39, %c2, %c0_40] : memref<2x18x18x4xf32, #tpu.memory_space<vmem>>, vector<2x16x16x4xf32>
    %22 = vector.shape_cast %21 : vector<2x16x16x4xf32> to vector<512x4xf32>
    %23 = arith.truncf %22 : vector<512x4xf32> to vector<512x4xbf16>
    %c2_41 = arith.constant 2 : index
    %c0_42 = arith.constant 0 : index
    %c0_43 = arith.constant 0 : index
    %24 = vector.load %arg1[%c2_41, %c0_42, %c0_43] : memref<9x4x4xbf16, #tpu.memory_space<vmem>>, vector<1x4x4xbf16>
    %25 = vector.shape_cast %24 : vector<1x4x4xbf16> to vector<4x4xbf16>
    %cst_44 = arith.constant dense<0.000000e+00> : vector<512x4xf32>
    %26 = tpu.matmul %23, %25, %cst_44 {dimension_numbers = #tpu.dot_dimension_numbers<[1], [0], [0], [1], [0, 0, 1, 1], [], []>} : vector<512x4xbf16>, vector<4x4xbf16>, vector<512x4xf32> -> vector<512x4xf32>
    %27 = arith.addf %20, %26 : vector<512x4xf32>
    %c0_45 = arith.constant 0 : index
    %c1_46 = arith.constant 1 : index
    %c0_47 = arith.constant 0 : index
    %c0_48 = arith.constant 0 : index
    %28 = vector.load %arg8[%c0_45, %c1_46, %c0_47, %c0_48] : memref<2x18x18x4xf32, #tpu.memory_space<vmem>>, vector<2x16x16x4xf32>
    %29 = vector.shape_cast %28 : vector<2x16x16x4xf32> to vector<512x4xf32>
    %30 = arith.truncf %29 : vector<512x4xf32> to vector<512x4xbf16>
    %c3 = arith.constant 3 : index
    %c0_49 = arith.constant 0 : index
    %c0_50 = arith.constant 0 : index
    %31 = vector.load %arg1[%c3, %c0_49, %c0_50] : memref<9x4x4xbf16, #tpu.memory_space<vmem>>, vector<1x4x4xbf16>
    %32 = vector.shape_cast %31 : vector<1x4x4xbf16> to vector<4x4xbf16>
    %cst_51 = arith.constant dense<0.000000e+00> : vector<512x4xf32>
    %33 = tpu.matmul %30, %32, %cst_51 {dimension_numbers = #tpu.dot_dimension_numbers<[1], [0], [0], [1], [0, 0, 1, 1], [], []>} : vector<512x4xbf16>, vector<4x4xbf16>, vector<512x4xf32> -> vector<512x4xf32>
    %34 = arith.addf %27, %33 : vector<512x4xf32>
    %c0_52 = arith.constant 0 : index
    %c1_53 = arith.constant 1 : index
    %c1_54 = arith.constant 1 : index
    %c0_55 = arith.constant 0 : index
    %35 = vector.load %arg8[%c0_52, %c1_53, %c1_54, %c0_55] : memref<2x18x18x4xf32, #tpu.memory_space<vmem>>, vector<2x16x16x4xf32>
    %36 = vector.shape_cast %35 : vector<2x16x16x4xf32> to vector<512x4xf32>
    %37 = arith.truncf %36 : vector<512x4xf32> to vector<512x4xbf16>
    %c4 = arith.constant 4 : index
    %c0_56 = arith.constant 0 : index
    %c0_57 = arith.constant 0 : index
    %38 = vector.load %arg1[%c4, %c0_56, %c0_57] : memref<9x4x4xbf16, #tpu.memory_space<vmem>>, vector<1x4x4xbf16>
    %39 = vector.shape_cast %38 : vector<1x4x4xbf16> to vector<4x4xbf16>
    %cst_58 = arith.constant dense<0.000000e+00> : vector<512x4xf32>
    %40 = tpu.matmul %37, %39, %cst_58 {dimension_numbers = #tpu.dot_dimension_numbers<[1], [0], [0], [1], [0, 0, 1, 1], [], []>} : vector<512x4xbf16>, vector<4x4xbf16>, vector<512x4xf32> -> vector<512x4xf32>
    %41 = arith.addf %34, %40 : vector<512x4xf32>
    %c0_59 = arith.constant 0 : index
    %c1_60 = arith.constant 1 : index
    %c2_61 = arith.constant 2 : index
    %c0_62 = arith.constant 0 : index
    %42 = vector.load %arg8[%c0_59, %c1_60, %c2_61, %c0_62] : memref<2x18x18x4xf32, #tpu.memory_space<vmem>>, vector<2x16x16x4xf32>
    %43 = vector.shape_cast %42 : vector<2x16x16x4xf32> to vector<512x4xf32>
    %44 = arith.truncf %43 : vector<512x4xf32> to vector<512x4xbf16>
    %c5 = arith.constant 5 : index
    %c0_63 = arith.constant 0 : index
    %c0_64 = arith.constant 0 : index
    %45 = vector.load %arg1[%c5, %c0_63, %c0_64] : memref<9x4x4xbf16, #tpu.memory_space<vmem>>, vector<1x4x4xbf16>
    %46 = vector.shape_cast %45 : vector<1x4x4xbf16> to vector<4x4xbf16>
    %cst_65 = arith.constant dense<0.000000e+00> : vector<512x4xf32>
    %47 = tpu.matmul %44, %46, %cst_65 {dimension_numbers = #tpu.dot_dimension_numbers<[1], [0], [0], [1], [0, 0, 1, 1], [], []>} : vector<512x4xbf16>, vector<4x4xbf16>, vector<512x4xf32> -> vector<512x4xf32>
    %48 = arith.addf %41, %47 : vector<512x4xf32>
    %c0_66 = arith.constant 0 : index
    %c2_67 = arith.constant 2 : index
    %c0_68 = arith.constant 0 : index
    %c0_69 = arith.constant 0 : index
    %49 = vector.load %arg8[%c0_66, %c2_67, %c0_68, %c0_69] : memref<2x18x18x4xf32, #tpu.memory_space<vmem>>, vector<2x16x16x4xf32>
    %50 = vector.shape_cast %49 : vector<2x16x16x4xf32> to vector<512x4xf32>
    %51 = arith.truncf %50 : vector<512x4xf32> to vector<512x4xbf16>
    %c6 = arith.constant 6 : index
    %c0_70 = arith.constant 0 : index
    %c0_71 = arith.constant 0 : index
    %52 = vector.load %arg1[%c6, %c0_70, %c0_71] : memref<9x4x4xbf16, #tpu.memory_space<vmem>>, vector<1x4x4xbf16>
    %53 = vector.shape_cast %52 : vector<1x4x4xbf16> to vector<4x4xbf16>
    %cst_72 = arith.constant dense<0.000000e+00> : vector<512x4xf32>
    %54 = tpu.matmul %51, %53, %cst_72 {dimension_numbers = #tpu.dot_dimension_numbers<[1], [0], [0], [1], [0, 0, 1, 1], [], []>} : vector<512x4xbf16>, vector<4x4xbf16>, vector<512x4xf32> -> vector<512x4xf32>
    %55 = arith.addf %48, %54 : vector<512x4xf32>
    %c0_73 = arith.constant 0 : index
    %c2_74 = arith.constant 2 : index
    %c1_75 = arith.constant 1 : index
    %c0_76 = arith.constant 0 : index
    %56 = vector.load %arg8[%c0_73, %c2_74, %c1_75, %c0_76] : memref<2x18x18x4xf32, #tpu.memory_space<vmem>>, vector<2x16x16x4xf32>
    %57 = vector.shape_cast %56 : vector<2x16x16x4xf32> to vector<512x4xf32>
    %58 = arith.truncf %57 : vector<512x4xf32> to vector<512x4xbf16>
    %c7 = arith.constant 7 : index
    %c0_77 = arith.constant 0 : index
    %c0_78 = arith.constant 0 : index
    %59 = vector.load %arg1[%c7, %c0_77, %c0_78] : memref<9x4x4xbf16, #tpu.memory_space<vmem>>, vector<1x4x4xbf16>
    %60 = vector.shape_cast %59 : vector<1x4x4xbf16> to vector<4x4xbf16>
    %cst_79 = arith.constant dense<0.000000e+00> : vector<512x4xf32>
    %61 = tpu.matmul %58, %60, %cst_79 {dimension_numbers = #tpu.dot_dimension_numbers<[1], [0], [0], [1], [0, 0, 1, 1], [], []>} : vector<512x4xbf16>, vector<4x4xbf16>, vector<512x4xf32> -> vector<512x4xf32>
    %62 = arith.addf %55, %61 : vector<512x4xf32>
    %c0_80 = arith.constant 0 : index
    %c2_81 = arith.constant 2 : index
    %c2_82 = arith.constant 2 : index
    %c0_83 = arith.constant 0 : index
    %63 = vector.load %arg8[%c0_80, %c2_81, %c2_82, %c0_83] : memref<2x18x18x4xf32, #tpu.memory_space<vmem>>, vector<2x16x16x4xf32>
    %64 = vector.shape_cast %63 : vector<2x16x16x4xf32> to vector<512x4xf32>
    %65 = arith.truncf %64 : vector<512x4xf32> to vector<512x4xbf16>
    %c8 = arith.constant 8 : index
    %c0_84 = arith.constant 0 : index
    %c0_85 = arith.constant 0 : index
    %66 = vector.load %arg1[%c8, %c0_84, %c0_85] : memref<9x4x4xbf16, #tpu.memory_space<vmem>>, vector<1x4x4xbf16>
    %67 = vector.shape_cast %66 : vector<1x4x4xbf16> to vector<4x4xbf16>
    %cst_86 = arith.constant dense<0.000000e+00> : vector<512x4xf32>
    %68 = tpu.matmul %65, %67, %cst_86 {dimension_numbers = #tpu.dot_dimension_numbers<[1], [0], [0], [1], [0, 0, 1, 1], [], []>} : vector<512x4xbf16>, vector<4x4xbf16>, vector<512x4xf32> -> vector<512x4xf32>
    %69 = arith.addf %62, %68 : vector<512x4xf32>
    %cst_87 = arith.constant dense<0.000000e+00> : vector<4xf32>
    %70 = vector.multi_reduction <add>, %69, %cst_87 [0] : vector<512x4xf32> to vector<4xf32>
    %71 = vector.shape_cast %70 : vector<4xf32> to vector<1x4xf32>
    %cst_88 = arith.constant 0.001953125 : f32
    %72 = vector.broadcast %cst_88 : f32 to vector<1x4xf32>
    %73 = arith.mulf %71, %72 : vector<1x4xf32>
    %74 = vector.broadcast %73 : vector<1x4xf32> to vector<512x4xf32>
    %75 = arith.subf %69, %74 : vector<512x4xf32>
    %76 = arith.mulf %75, %75 : vector<512x4xf32>
    %cst_89 = arith.constant dense<0.000000e+00> : vector<4xf32>
    %77 = vector.multi_reduction <add>, %76, %cst_89 [0] : vector<512x4xf32> to vector<4xf32>
    %78 = vector.shape_cast %77 : vector<4xf32> to vector<1x4xf32>
    %cst_90 = arith.constant 0.001953125 : f32
    %79 = vector.broadcast %cst_90 : f32 to vector<1x4xf32>
    %80 = arith.mulf %78, %79 : vector<1x4xf32>
    %c0_91 = arith.constant 0 : index
    %c0_92 = arith.constant 0 : index
    %81 = vector.load %arg2[%c0_91, %c0_92] : memref<1x4xf32, #tpu.memory_space<vmem>>, vector<1x4xf32>
    %cst_93 = arith.constant 9.99999974E-6 : f32
    %82 = vector.broadcast %cst_93 : f32 to vector<1x4xf32>
    %83 = arith.addf %80, %82 : vector<1x4xf32>
    %84 = math.rsqrt %83 : vector<1x4xf32>
    %85 = arith.mulf %81, %84 : vector<1x4xf32>
    %86 = vector.broadcast %85 : vector<1x4xf32> to vector<512x4xf32>
    %87 = arith.mulf %75, %86 : vector<512x4xf32>
    %c0_94 = arith.constant 0 : index
    %c0_95 = arith.constant 0 : index
    %88 = vector.load %arg3[%c0_94, %c0_95] : memref<1x4xf32, #tpu.memory_space<vmem>>, vector<1x4xf32>
    %89 = vector.broadcast %88 : vector<1x4xf32> to vector<512x4xf32>
    %90 = arith.addf %87, %89 : vector<512x4xf32>
    %cst_96 = arith.constant 0.000000e+00 : f32
    %91 = vector.broadcast %cst_96 : f32 to vector<512x4xf32>
    %92 = arith.maximumf %90, %91 : vector<512x4xf32>
    %93 = vector.shape_cast %92 : vector<512x4xf32> to vector<2x16x16x4xf32>
    %c0_97 = arith.constant 0 : index
    %c1_98 = arith.constant 1 : index
    %c1_99 = arith.constant 1 : index
    %c0_100 = arith.constant 0 : index
    %94 = vector.load %arg8[%c0_97, %c1_98, %c1_99, %c0_100] : memref<2x18x18x4xf32, #tpu.memory_space<vmem>>, vector<2x16x16x4xf32>
    tpu.vector_store %arg8[%c0_97, %c1_98, %c1_99, %c0_100], %93 {strides = array<i32>} : memref<2x18x18x4xf32, #tpu.memory_space<vmem>>, vector<2x16x16x4xf32>,
    %c0_101 = arith.constant 0 : index
    %c0_102 = arith.constant 0 : index
    %c0_103 = arith.constant 0 : index
    %c0_104 = arith.constant 0 : index
    %95 = vector.load %arg8[%c0_101, %c0_102, %c0_103, %c0_104] : memref<2x18x18x4xf32, #tpu.memory_space<vmem>>, vector<2x16x16x4xf32>
    %96 = vector.shape_cast %95 : vector<2x16x16x4xf32> to vector<512x4xf32>
    %97 = arith.truncf %96 : vector<512x4xf32> to vector<512x4xbf16>
    %c0_105 = arith.constant 0 : index
    %c0_106 = arith.constant 0 : index
    %c0_107 = arith.constant 0 : index
    %98 = vector.load %arg4[%c0_105, %c0_106, %c0_107] : memref<9x4x4xbf16, #tpu.memory_space<vmem>>, vector<1x4x4xbf16>
    %99 = vector.shape_cast %98 : vector<1x4x4xbf16> to vector<4x4xbf16>
    %cst_108 = arith.constant dense<0.000000e+00> : vector<512x4xf32>
    %100 = tpu.matmul %97, %99, %cst_108 {dimension_numbers = #tpu.dot_dimension_numbers<[1], [0], [0], [1], [0, 0, 1, 1], [], []>} : vector<512x4xbf16>, vector<4x4xbf16>, vector<512x4xf32> -> vector<512x4xf32>
    %c0_109 = arith.constant 0 : index
    %c0_110 = arith.constant 0 : index
    %c1_111 = arith.constant 1 : index
    %c0_112 = arith.constant 0 : index
    %101 = vector.load %arg8[%c0_109, %c0_110, %c1_111, %c0_112] : memref<2x18x18x4xf32, #tpu.memory_space<vmem>>, vector<2x16x16x4xf32>
    %102 = vector.shape_cast %101 : vector<2x16x16x4xf32> to vector<512x4xf32>
    %103 = arith.truncf %102 : vector<512x4xf32> to vector<512x4xbf16>
    %c1_113 = arith.constant 1 : index
    %c0_114 = arith.constant 0 : index
    %c0_115 = arith.constant 0 : index
    %104 = vector.load %arg4[%c1_113, %c0_114, %c0_115] : memref<9x4x4xbf16, #tpu.memory_space<vmem>>, vector<1x4x4xbf16>
    %105 = vector.shape_cast %104 : vector<1x4x4xbf16> to vector<4x4xbf16>
    %cst_116 = arith.constant dense<0.000000e+00> : vector<512x4xf32>
    %106 = tpu.matmul %103, %105, %cst_116 {dimension_numbers = #tpu.dot_dimension_numbers<[1], [0], [0], [1], [0, 0, 1, 1], [], []>} : vector<512x4xbf16>, vector<4x4xbf16>, vector<512x4xf32> -> vector<512x4xf32>
    %107 = arith.addf %100, %106 : vector<512x4xf32>
    %c0_117 = arith.constant 0 : index
    %c0_118 = arith.constant 0 : index
    %c2_119 = arith.constant 2 : index
    %c0_120 = arith.constant 0 : index
    %108 = vector.load %arg8[%c0_117, %c0_118, %c2_119, %c0_120] : memref<2x18x18x4xf32, #tpu.memory_space<vmem>>, vector<2x16x16x4xf32>
    %109 = vector.shape_cast %108 : vector<2x16x16x4xf32> to vector<512x4xf32>
    %110 = arith.truncf %109 : vector<512x4xf32> to vector<512x4xbf16>
    %c2_121 = arith.constant 2 : index
    %c0_122 = arith.constant 0 : index
    %c0_123 = arith.constant 0 : index
    %111 = vector.load %arg4[%c2_121, %c0_122, %c0_123] : memref<9x4x4xbf16, #tpu.memory_space<vmem>>, vector<1x4x4xbf16>
    %112 = vector.shape_cast %111 : vector<1x4x4xbf16> to vector<4x4xbf16>
    %cst_124 = arith.constant dense<0.000000e+00> : vector<512x4xf32>
    %113 = tpu.matmul %110, %112, %cst_124 {dimension_numbers = #tpu.dot_dimension_numbers<[1], [0], [0], [1], [0, 0, 1, 1], [], []>} : vector<512x4xbf16>, vector<4x4xbf16>, vector<512x4xf32> -> vector<512x4xf32>
    %114 = arith.addf %107, %113 : vector<512x4xf32>
    %c0_125 = arith.constant 0 : index
    %c1_126 = arith.constant 1 : index
    %c0_127 = arith.constant 0 : index
    %c0_128 = arith.constant 0 : index
    %115 = vector.load %arg8[%c0_125, %c1_126, %c0_127, %c0_128] : memref<2x18x18x4xf32, #tpu.memory_space<vmem>>, vector<2x16x16x4xf32>
    %116 = vector.shape_cast %115 : vector<2x16x16x4xf32> to vector<512x4xf32>
    %117 = arith.truncf %116 : vector<512x4xf32> to vector<512x4xbf16>
    %c3_129 = arith.constant 3 : index
    %c0_130 = arith.constant 0 : index
    %c0_131 = arith.constant 0 : index
    %118 = vector.load %arg4[%c3_129, %c0_130, %c0_131] : memref<9x4x4xbf16, #tpu.memory_space<vmem>>, vector<1x4x4xbf16>
    %119 = vector.shape_cast %118 : vector<1x4x4xbf16> to vector<4x4xbf16>
    %cst_132 = arith.constant dense<0.000000e+00> : vector<512x4xf32>
    %120 = tpu.matmul %117, %119, %cst_132 {dimension_numbers = #tpu.dot_dimension_numbers<[1], [0], [0], [1], [0, 0, 1, 1], [], []>} : vector<512x4xbf16>, vector<4x4xbf16>, vector<512x4xf32> -> vector<512x4xf32>
    %121 = arith.addf %114, %120 : vector<512x4xf32>
    %c0_133 = arith.constant 0 : index
    %c1_134 = arith.constant 1 : index
    %c1_135 = arith.constant 1 : index
    %c0_136 = arith.constant 0 : index
    %122 = vector.load %arg8[%c0_133, %c1_134, %c1_135, %c0_136] : memref<2x18x18x4xf32, #tpu.memory_space<vmem>>, vector<2x16x16x4xf32>
    %123 = vector.shape_cast %122 : vector<2x16x16x4xf32> to vector<512x4xf32>
    %124 = arith.truncf %123 : vector<512x4xf32> to vector<512x4xbf16>
    %c4_137 = arith.constant 4 : index
    %c0_138 = arith.constant 0 : index
    %c0_139 = arith.constant 0 : index
    %125 = vector.load %arg4[%c4_137, %c0_138, %c0_139] : memref<9x4x4xbf16, #tpu.memory_space<vmem>>, vector<1x4x4xbf16>
    %126 = vector.shape_cast %125 : vector<1x4x4xbf16> to vector<4x4xbf16>
    %cst_140 = arith.constant dense<0.000000e+00> : vector<512x4xf32>
    %127 = tpu.matmul %124, %126, %cst_140 {dimension_numbers = #tpu.dot_dimension_numbers<[1], [0], [0], [1], [0, 0, 1, 1], [], []>} : vector<512x4xbf16>, vector<4x4xbf16>, vector<512x4xf32> -> vector<512x4xf32>
    %128 = arith.addf %121, %127 : vector<512x4xf32>
    %c0_141 = arith.constant 0 : index
    %c1_142 = arith.constant 1 : index
    %c2_143 = arith.constant 2 : index
    %c0_144 = arith.constant 0 : index
    %129 = vector.load %arg8[%c0_141, %c1_142, %c2_143, %c0_144] : memref<2x18x18x4xf32, #tpu.memory_space<vmem>>, vector<2x16x16x4xf32>
    %130 = vector.shape_cast %129 : vector<2x16x16x4xf32> to vector<512x4xf32>
    %131 = arith.truncf %130 : vector<512x4xf32> to vector<512x4xbf16>
    %c5_145 = arith.constant 5 : index
    %c0_146 = arith.constant 0 : index
    %c0_147 = arith.constant 0 : index
    %132 = vector.load %arg4[%c5_145, %c0_146, %c0_147] : memref<9x4x4xbf16, #tpu.memory_space<vmem>>, vector<1x4x4xbf16>
    %133 = vector.shape_cast %132 : vector<1x4x4xbf16> to vector<4x4xbf16>
    %cst_148 = arith.constant dense<0.000000e+00> : vector<512x4xf32>
    %134 = tpu.matmul %131, %133, %cst_148 {dimension_numbers = #tpu.dot_dimension_numbers<[1], [0], [0], [1], [0, 0, 1, 1], [], []>} : vector<512x4xbf16>, vector<4x4xbf16>, vector<512x4xf32> -> vector<512x4xf32>
    %135 = arith.addf %128, %134 : vector<512x4xf32>
    %c0_149 = arith.constant 0 : index
    %c2_150 = arith.constant 2 : index
    %c0_151 = arith.constant 0 : index
    %c0_152 = arith.constant 0 : index
    %136 = vector.load %arg8[%c0_149, %c2_150, %c0_151, %c0_152] : memref<2x18x18x4xf32, #tpu.memory_space<vmem>>, vector<2x16x16x4xf32>
    %137 = vector.shape_cast %136 : vector<2x16x16x4xf32> to vector<512x4xf32>
    %138 = arith.truncf %137 : vector<512x4xf32> to vector<512x4xbf16>
    %c6_153 = arith.constant 6 : index
    %c0_154 = arith.constant 0 : index
    %c0_155 = arith.constant 0 : index
    %139 = vector.load %arg4[%c6_153, %c0_154, %c0_155] : memref<9x4x4xbf16, #tpu.memory_space<vmem>>, vector<1x4x4xbf16>
    %140 = vector.shape_cast %139 : vector<1x4x4xbf16> to vector<4x4xbf16>
    %cst_156 = arith.constant dense<0.000000e+00> : vector<512x4xf32>
    %141 = tpu.matmul %138, %140, %cst_156 {dimension_numbers = #tpu.dot_dimension_numbers<[1], [0], [0], [1], [0, 0, 1, 1], [], []>} : vector<512x4xbf16>, vector<4x4xbf16>, vector<512x4xf32> -> vector<512x4xf32>
    %142 = arith.addf %135, %141 : vector<512x4xf32>
    %c0_157 = arith.constant 0 : index
    %c2_158 = arith.constant 2 : index
    %c1_159 = arith.constant 1 : index
    %c0_160 = arith.constant 0 : index
    %143 = vector.load %arg8[%c0_157, %c2_158, %c1_159, %c0_160] : memref<2x18x18x4xf32, #tpu.memory_space<vmem>>, vector<2x16x16x4xf32>
    %144 = vector.shape_cast %143 : vector<2x16x16x4xf32> to vector<512x4xf32>
    %145 = arith.truncf %144 : vector<512x4xf32> to vector<512x4xbf16>
    %c7_161 = arith.constant 7 : index
    %c0_162 = arith.constant 0 : index
    %c0_163 = arith.constant 0 : index
    %146 = vector.load %arg4[%c7_161, %c0_162, %c0_163] : memref<9x4x4xbf16, #tpu.memory_space<vmem>>, vector<1x4x4xbf16>
    %147 = vector.shape_cast %146 : vector<1x4x4xbf16> to vector<4x4xbf16>
    %cst_164 = arith.constant dense<0.000000e+00> : vector<512x4xf32>
    %148 = tpu.matmul %145, %147, %cst_164 {dimension_numbers = #tpu.dot_dimension_numbers<[1], [0], [0], [1], [0, 0, 1, 1], [], []>} : vector<512x4xbf16>, vector<4x4xbf16>, vector<512x4xf32> -> vector<512x4xf32>
    %149 = arith.addf %142, %148 : vector<512x4xf32>
    %c0_165 = arith.constant 0 : index
    %c2_166 = arith.constant 2 : index
    %c2_167 = arith.constant 2 : index
    %c0_168 = arith.constant 0 : index
    %150 = vector.load %arg8[%c0_165, %c2_166, %c2_167, %c0_168] : memref<2x18x18x4xf32, #tpu.memory_space<vmem>>, vector<2x16x16x4xf32>
    %151 = vector.shape_cast %150 : vector<2x16x16x4xf32> to vector<512x4xf32>
    %152 = arith.truncf %151 : vector<512x4xf32> to vector<512x4xbf16>
    %c8_169 = arith.constant 8 : index
    %c0_170 = arith.constant 0 : index
    %c0_171 = arith.constant 0 : index
    %153 = vector.load %arg4[%c8_169, %c0_170, %c0_171] : memref<9x4x4xbf16, #tpu.memory_space<vmem>>, vector<1x4x4xbf16>
    %154 = vector.shape_cast %153 : vector<1x4x4xbf16> to vector<4x4xbf16>
    %cst_172 = arith.constant dense<0.000000e+00> : vector<512x4xf32>
    %155 = tpu.matmul %152, %154, %cst_172 {dimension_numbers = #tpu.dot_dimension_numbers<[1], [0], [0], [1], [0, 0, 1, 1], [], []>} : vector<512x4xbf16>, vector<4x4xbf16>, vector<512x4xf32> -> vector<512x4xf32>
    %156 = arith.addf %149, %155 : vector<512x4xf32>
    %cst_173 = arith.constant dense<0.000000e+00> : vector<4xf32>
    %157 = vector.multi_reduction <add>, %156, %cst_173 [0] : vector<512x4xf32> to vector<4xf32>
    %158 = vector.shape_cast %157 : vector<4xf32> to vector<1x4xf32>
    %cst_174 = arith.constant 0.001953125 : f32
    %159 = vector.broadcast %cst_174 : f32 to vector<1x4xf32>
    %160 = arith.mulf %158, %159 : vector<1x4xf32>
    %161 = vector.broadcast %160 : vector<1x4xf32> to vector<512x4xf32>
    %162 = arith.subf %156, %161 : vector<512x4xf32>
    %163 = arith.mulf %162, %162 : vector<512x4xf32>
    %cst_175 = arith.constant dense<0.000000e+00> : vector<4xf32>
    %164 = vector.multi_reduction <add>, %163, %cst_175 [0] : vector<512x4xf32> to vector<4xf32>
    %165 = vector.shape_cast %164 : vector<4xf32> to vector<1x4xf32>
    %cst_176 = arith.constant 0.001953125 : f32
    %166 = vector.broadcast %cst_176 : f32 to vector<1x4xf32>
    %167 = arith.mulf %165, %166 : vector<1x4xf32>
    %c0_177 = arith.constant 0 : index
    %c0_178 = arith.constant 0 : index
    %168 = vector.load %arg5[%c0_177, %c0_178] : memref<1x4xf32, #tpu.memory_space<vmem>>, vector<1x4xf32>
    %cst_179 = arith.constant 9.99999974E-6 : f32
    %169 = vector.broadcast %cst_179 : f32 to vector<1x4xf32>
    %170 = arith.addf %167, %169 : vector<1x4xf32>
    %171 = math.rsqrt %170 : vector<1x4xf32>
    %172 = arith.mulf %168, %171 : vector<1x4xf32>
    %173 = vector.broadcast %172 : vector<1x4xf32> to vector<512x4xf32>
    %174 = arith.mulf %162, %173 : vector<512x4xf32>
    %c0_180 = arith.constant 0 : index
    %c0_181 = arith.constant 0 : index
    %175 = vector.load %arg6[%c0_180, %c0_181] : memref<1x4xf32, #tpu.memory_space<vmem>>, vector<1x4xf32>
    %176 = vector.broadcast %175 : vector<1x4xf32> to vector<512x4xf32>
    %177 = arith.addf %174, %176 : vector<512x4xf32>
    %178 = vector.shape_cast %177 : vector<512x4xf32> to vector<2x16x16x4xf32>
    %c0_182 = arith.constant 0 : index
    %c0_183 = arith.constant 0 : index
    %c0_184 = arith.constant 0 : index
    %c0_185 = arith.constant 0 : index
    %179 = vector.load %arg0[%c0_182, %c0_183, %c0_184, %c0_185] : memref<2x16x16x4xf32, #tpu.memory_space<vmem>>, vector<2x16x16x4xf32>
    %180 = arith.addf %178, %179 : vector<2x16x16x4xf32>
    %cst_186 = arith.constant 0.000000e+00 : f32
    %181 = vector.broadcast %cst_186 : f32 to vector<2x16x16x4xf32>
    %182 = arith.maximumf %180, %181 : vector<2x16x16x4xf32>
    %c0_187 = arith.constant 0 : index
    %c0_188 = arith.constant 0 : index
    %c0_189 = arith.constant 0 : index
    %c0_190 = arith.constant 0 : index
    %183 = vector.load %arg7[%c0_187, %c0_188, %c0_189, %c0_190] : memref<2x16x16x4xf32, #tpu.memory_space<vmem>>, vector<2x16x16x4xf32>
    tpu.vector_store %arg7[%c0_187, %c0_188, %c0_189, %c0_190], %182 {strides = array<i32>} : memref<2x16x16x4xf32, #tpu.memory_space<vmem>>, vector<2x16x16x4xf32>,
    return
  }
}

</mosaic_0001>

<llo_original>
// kernel: residual_block.1
$region0: #{residual_block.1}
  #allocation0 [shape = 'u32[]', space=smem, size = 0x4, offset = 0x4, fixed_abs, tag = 'smem constant byte address 0x4 - core index']
  #allocation1 [shape = 'u32[144,128]{1,0:T(1,128)}', space=vmem, size = 0x12000, scoped, tag = 'internal scratch']
  #allocation2 [shape = 'f32[2,18,18,4]{3,2,1,0:T(8,128)}', space=vmem, size = 0x6c000, scoped, tag = 'scratch operand']
  %s0 = inlined_call_operand.vmem [shape: f32[2,16,16,4], index: 0, kind: input, shape index: {}]
  %s1 = inlined_call_operand.vmem [shape: bf16[9,4,4], index: 1, kind: input, shape index: {}]
  %s2 = inlined_call_operand.vmem [shape: f32[1,4], index: 2, kind: input, shape index: {}]
  %s3 = inlined_call_operand.vmem [shape: f32[1,4], index: 3, kind: input, shape index: {}]
  %s4 = inlined_call_operand.vmem [shape: bf16[9,4,4], index: 4, kind: input, shape index: {}]
  %s5 = inlined_call_operand.vmem [shape: f32[1,4], index: 5, kind: input, shape index: {}]
  %s6 = inlined_call_operand.vmem [shape: f32[1,4], index: 6, kind: input, shape index: {}]
  %s7 = inlined_call_operand.vmem [shape: f32[2,16,16,4], index: 7, kind: output, shape index: {}]
  %s8 = sld [smem:[#allocation0]]
  $region38: #{residual_block.1} parent=0
    _
  %s10 = ssub.s32 1, %s8
  %s11 = scalar_select 0, %s10, %s8
  // Predicated region
  $region2: #{residual_block.1} parent=0 // pred_check
    _
  $region3: #{residual_block.1} parent=0 // pred_check_branch
    %13 = sbr.rel (0) target = $region5
  $region4: #{residual_block.1} parent=0 // pred_region
    _
  $region5: #{residual_block.1} parent=0 // pred_fallthru
    _
  // Predicated region
  $region6: #{residual_block.1} parent=0 // pred_check
    _
  $region7: #{residual_block.1} parent=0 // pred_check_branch
    %15 = sbr.rel (0) target = $region9
  $region8: #{residual_block.1} parent=0 // pred_region
    _
  $region9: #{residual_block.1} parent=0 // pred_fallthru
    _
  // Predicated region
  $region10: #{residual_block.1} parent=0 // pred_check
    _
  $region11: #{residual_block.1} parent=0 // pred_check_branch
    %17 = sbr.rel (0) target = $region13
  $region12: #{residual_block.1} parent=0 // pred_region
    _
  $region13: #{residual_block.1} parent=0 // pred_fallthru
    _
  // Predicated region
  $region14: #{residual_block.1} parent=0 // pred_check
    _
  $region15: #{residual_block.1} parent=0 // pred_check_branch
    %19 = sbr.rel (0) target = $region17
  $region16: #{residual_block.1} parent=0 // pred_region
    _
  $region17: #{residual_block.1} parent=0 // pred_fallthru
    _
  // Predicated region
  $region18: #{residual_block.1} parent=0 // pred_check
    _
  $region19: #{residual_block.1} parent=0 // pred_check_branch
    %21 = sbr.rel (0) target = $region21
  $region20: #{residual_block.1} parent=0 // pred_region
    _
  $region21: #{residual_block.1} parent=0 // pred_fallthru
    _
  // Predicated region
  $region22: #{residual_block.1} parent=0 // pred_check
    _
  $region23: #{residual_block.1} parent=0 // pred_check_branch
    %23 = sbr.rel (0) target = $region25
  $region24: #{residual_block.1} parent=0 // pred_region
    _
  $region25: #{residual_block.1} parent=0 // pred_fallthru
    _
  // Predicated region
  $region26: #{residual_block.1} parent=0 // pred_check
    _
  $region27: #{residual_block.1} parent=0 // pred_check_branch
    %25 = sbr.rel (0) target = $region29
  $region28: #{residual_block.1} parent=0 // pred_region
    _
  $region29: #{residual_block.1} parent=0 // pred_fallthru
    _
  %vm27 = vcmask 31744
  %28 = vst.msk [vmem:[#allocation2] sm:$0xff] %vm27, 0.0
  %29 = vst.msk [vmem:[#allocation2 + $0x8] sm:$0xff] %vm27, 0.0
  %vm30 = vcmask 25600
  %31 = vst.msk [vmem:[#allocation2 + $0x10] sm:$0x3] %vm30, 0.0
  %32 = vst.msk [vmem:[#allocation2 + $0x1b0] sm:$0xff] %vm27, 0.0
  %33 = vst.msk [vmem:[#allocation2 + $0x1b8] sm:$0xff] %vm27, 0.0
  %34 = vst.msk [vmem:[#allocation2 + $0x1c0] sm:$0x3] %vm30, 0.0
  %s35 = scalar_lea.vmem [#allocation2], 408
  %36 = vst.msk [vmem:[%s35] sm:$0xff] %vm27, 0.0
  %37 = vst.msk [vmem:[%s35 + $0x8] sm:$0xff] %vm27, 0.0
  %38 = vst.msk [vmem:[%s35 + $0x10] sm:$0x3] %vm30, 0.0
  %39 = vst.msk [vmem:[%s35 + $0x1b0] sm:$0xff] %vm27, 0.0
  %40 = vst.msk [vmem:[%s35 + $0x1b8] sm:$0xff] %vm27, 0.0
  %41 = vst.msk [vmem:[%s35 + $0x1c0] sm:$0x3] %vm30, 0.0
  %vm42 = vcmask 24576
  %43 = vst.msk [vmem:[#allocation2] sm:$0x1] %vm42, 0.0
  %44 = vst.msk [vmem:[#allocation2 + $0x18] sm:$0x1] %vm42, 0.0
  %45 = vst.msk [vmem:[#allocation2 + $0x30] sm:$0x1] %vm42, 0.0
  %46 = vst.msk [vmem:[#allocation2 + $0x48] sm:$0x1] %vm42, 0.0
  %47 = vst.msk [vmem:[#allocation2 + $0x60] sm:$0x1] %vm42, 0.0
  %48 = vst.msk [vmem:[#allocation2 + $0x78] sm:$0x1] %vm42, 0.0
  %49 = vst.msk [vmem:[#allocation2 + $0x90] sm:$0x1] %vm42, 0.0
  %50 = vst.msk [vmem:[#allocation2 + $0xa8] sm:$0x1] %vm42, 0.0
  %51 = vst.msk [vmem:[#allocation2 + $0xc0] sm:$0x1] %vm42, 0.0
  %52 = vst.msk [vmem:[#allocation2 + $0xd8] sm:$0x1] %vm42, 0.0
  %53 = vst.msk [vmem:[#allocation2 + $0xf0] sm:$0x1] %vm42, 0.0
  %54 = vst.msk [vmem:[#allocation2 + $0x108] sm:$0x1] %vm42, 0.0
  %55 = vst.msk [vmem:[#allocation2 + $0x120] sm:$0x1] %vm42, 0.0
  %56 = vst.msk [vmem:[#allocation2 + $0x138] sm:$0x1] %vm42, 0.0
  %57 = vst.msk [vmem:[#allocation2 + $0x150] sm:$0x1] %vm42, 0.0
  %58 = vst.msk [vmem:[#allocation2 + $0x168] sm:$0x1] %vm42, 0.0
  %59 = vst.msk [vmem:[#allocation2 + $0x180] sm:$0x1] %vm42, 0.0
  %60 = vst.msk [vmem:[#allocation2 + $0x198] sm:$0x1] %vm42, 0.0
  %61 = vst.msk [vmem:[#allocation2 + $0x1b0] sm:$0x1] %vm42, 0.0
  %62 = vst.msk [vmem:[#allocation2 + $0x1c8] sm:$0x1] %vm42, 0.0
  %63 = vst.msk [vmem:[#allocation2 + $0x1e0] sm:$0x1] %vm42, 0.0
  %64 = vst.msk [vmem:[#allocation2 + $0x1f8] sm:$0x1] %vm42, 0.0
  %65 = vst.msk [vmem:[#allocation2 + $0x210] sm:$0x1] %vm42, 0.0
  %66 = vst.msk [vmem:[#allocation2 + $0x228] sm:$0x1] %vm42, 0.0
  %67 = vst.msk [vmem:[#allocation2 + $0x240] sm:$0x1] %vm42, 0.0
  %68 = vst.msk [vmem:[#allocation2 + $0x258] sm:$0x1] %vm42, 0.0
  %69 = vst.msk [vmem:[#allocation2 + $0x270] sm:$0x1] %vm42, 0.0
  %70 = vst.msk [vmem:[#allocation2 + $0x288] sm:$0x1] %vm42, 0.0
  %71 = vst.msk [vmem:[#allocation2 + $0x2a0] sm:$0x1] %vm42, 0.0
  %72 = vst.msk [vmem:[#allocation2 + $0x2b8] sm:$0x1] %vm42, 0.0
  %73 = vst.msk [vmem:[#allocation2 + $0x2d0] sm:$0x1] %vm42, 0.0
  %74 = vst.msk [vmem:[#allocation2 + $0x2e8] sm:$0x1] %vm42, 0.0
  %75 = vst.msk [vmem:[#allocation2 + $0x300] sm:$0x1] %vm42, 0.0
  %76 = vst.msk [vmem:[#allocation2 + $0x318] sm:$0x1] %vm42, 0.0
  %77 = vst.msk [vmem:[#allocation2 + $0x330] sm:$0x1] %vm42, 0.0
  %78 = vst.msk [vmem:[#allocation2 + $0x348] sm:$0x1] %vm42, 0.0
  %79 = vst.msk [vmem:[#allocation2 + $0x11] sm:$0x1] %vm42, 0.0
  %80 = vst.msk [vmem:[#allocation2 + $0x29] sm:$0x1] %vm42, 0.0
  %81 = vst.msk [vmem:[#allocation2 + $0x41] sm:$0x1] %vm42, 0.0
  %82 = vst.msk [vmem:[#allocation2 + $0x59] sm:$0x1] %vm42, 0.0
  %83 = vst.msk [vmem:[#allocation2 + $0x71] sm:$0x1] %vm42, 0.0
  %84 = vst.msk [vmem:[#allocation2 + $0x89] sm:$0x1] %vm42, 0.0
  %85 = vst.msk [vmem:[#allocation2 + $0xa1] sm:$0x1] %vm42, 0.0
  %86 = vst.msk [vmem:[#allocation2 + $0xb9] sm:$0x1] %vm42, 0.0
  %87 = vst.msk [vmem:[#allocation2 + $0xd1] sm:$0x1] %vm42, 0.0
  %88 = vst.msk [vmem:[#allocation2 + $0xe9] sm:$0x1] %vm42, 0.0
  %89 = vst.msk [vmem:[#allocation2 + $0x101] sm:$0x1] %vm42, 0.0
  %90 = vst.msk [vmem:[#allocation2 + $0x119] sm:$0x1] %vm42, 0.0
  %91 = vst.msk [vmem:[#allocation2 + $0x131] sm:$0x1] %vm42, 0.0
  %92 = vst.msk [vmem:[#allocation2 + $0x149] sm:$0x1] %vm42, 0.0
  %93 = vst.msk [vmem:[#allocation2 + $0x161] sm:$0x1] %vm42, 0.0
  %94 = vst.msk [vmem:[#allocation2 + $0x179] sm:$0x1] %vm42, 0.0
  %95 = vst.msk [vmem:[#allocation2 + $0x191] sm:$0x1] %vm42, 0.0
  %96 = vst.msk [vmem:[#allocation2 + $0x1a9] sm:$0x1] %vm42, 0.0
  %97 = vst.msk [vmem:[#allocation2 + $0x1c1] sm:$0x1] %vm42, 0.0
  %98 = vst.msk [vmem:[#allocation2 + $0x1d9] sm:$0x1] %vm42, 0.0
  %99 = vst.msk [vmem:[#allocation2 + $0x1f1] sm:$0x1] %vm42, 0.0
  %100 = vst.msk [vmem:[#allocation2 + $0x209] sm:$0x1] %vm42, 0.0
  %101 = vst.msk [vmem:[#allocation2 + $0x221] sm:$0x1] %vm42, 0.0
  %102 = vst.msk [vmem:[#allocation2 + $0x239] sm:$0x1] %vm42, 0.0
  %103 = vst.msk [vmem:[#allocation2 + $0x251] sm:$0x1] %vm42, 0.0
  %104 = vst.msk [vmem:[#allocation2 + $0x269] sm:$0x1] %vm42, 0.0
  %105 = vst.msk [vmem:[#allocation2 + $0x281] sm:$0x1] %vm42, 0.0
  %106 = vst.msk [vmem:[#allocation2 + $0x299] sm:$0x1] %vm42, 0.0
  %107 = vst.msk [vmem:[#allocation2 + $0x2b1] sm:$0x1] %vm42, 0.0
  %108 = vst.msk [vmem:[#allocation2 + $0x2c9] sm:$0x1] %vm42, 0.0
  %109 = vst.msk [vmem:[#allocation2 + $0x2e1] sm:$0x1] %vm42, 0.0
  %110 = vst.msk [vmem:[#allocation2 + $0x2f9] sm:$0x1] %vm42, 0.0
  %111 = vst.msk [vmem:[#allocation2 + $0x311] sm:$0x1] %vm42, 0.0
  %112 = vst.msk [vmem:[#allocation2 + $0x329] sm:$0x1] %vm42, 0.0
  %113 = vst.msk [vmem:[#allocation2 + $0x341] sm:$0x1] %vm42, 0.0
  %114 = vst.msk [vmem:[#allocation2 + $0x359] sm:$0x1] %vm42, 0.0
  %v115 = vld [vmem:[%s0] sm:$0xff]
  %v116 = vld [vmem:[%s0 + $0x8] sm:$0xff]
  %v117 = vld [vmem:[%s0 + $0x10] sm:$0xff]
  %v118 = vld [vmem:[%s0 + $0x18] sm:$0xff]
  %v119 = vld [vmem:[%s0 + $0x20] sm:$0xff]
  %v120 = vld [vmem:[%s0 + $0x28] sm:$0xff]
  %v121 = vld [vmem:[%s0 + $0x30] sm:$0xff]
  %v122 = vld [vmem:[%s0 + $0x38] sm:$0xff]
  %v123 = vld [vmem:[%s0 + $0x40] sm:$0xff]
  %v124 = vld [vmem:[%s0 + $0x48] sm:$0xff]
  %v125 = vld [vmem:[%s0 + $0x50] sm:$0xff]
  %v126 = vld [vmem:[%s0 + $0x58] sm:$0xff]
  %v127 = vld [vmem:[%s0 + $0x60] sm:$0xff]
  %v128 = vld [vmem:[%s0 + $0x68] sm:$0xff]
  %v129 = vld [vmem:[%s0 + $0x70] sm:$0xff]
  %v130 = vld [vmem:[%s0 + $0x78] sm:$0xff]
  %v131 = vld [vmem:[%s0 + $0x80] sm:$0xff]
  %v132 = vld [vmem:[%s0 + $0x88] sm:$0xff]
  %v133 = vld [vmem:[%s0 + $0x90] sm:$0xff]
  %v134 = vld [vmem:[%s0 + $0x98] sm:$0xff]
  %v135 = vld [vmem:[%s0 + $0xa0] sm:$0xff]
  %v136 = vld [vmem:[%s0 + $0xa8] sm:$0xff]
  %v137 = vld [vmem:[%s0 + $0xb0] sm:$0xff]
  %v138 = vld [vmem:[%s0 + $0xb8] sm:$0xff]
  %v139 = vld [vmem:[%s0 + $0xc0] sm:$0xff]
  %v140 = vld [vmem:[%s0 + $0xc8] sm:$0xff]
  %v141 = vld [vmem:[%s0 + $0xd0] sm:$0xff]
  %v142 = vld [vmem:[%s0 + $0xd8] sm:$0xff]
  %v143 = vld [vmem:[%s0 + $0xe0] sm:$0xff]
  %v144 = vld [vmem:[%s0 + $0xe8] sm:$0xff]
  %v145 = vld [vmem:[%s0 + $0xf0] sm:$0xff]
  %v146 = vld [vmem:[%s0 + $0xf8] sm:$0xff]
  %v147 = vld [vmem:[%s0 + $0x100] sm:$0xff]
  %v148 = vld [vmem:[%s0 + $0x108] sm:$0xff]
  %v149 = vld [vmem:[%s0 + $0x110] sm:$0xff]
  %v150 = vld [vmem:[%s0 + $0x118] sm:$0xff]
  %v151 = vld [vmem:[%s0 + $0x120] sm:$0xff]
  %v152 = vld [vmem:[%s0 + $0x128] sm:$0xff]
  %v153 = vld [vmem:[%s0 + $0x130] sm:$0xff]
  %v154 = vld [vmem:[%s0 + $0x138] sm:$0xff]
  %v155 = vld [vmem:[%s0 + $0x140] sm:$0xff]
  %v156 = vld [vmem:[%s0 + $0x148] sm:$0xff]
  %v157 = vld [vmem:[%s0 + $0x150] sm:$0xff]
  %v158 = vld [vmem:[%s0 + $0x158] sm:$0xff]
  %v159 = vld [vmem:[%s0 + $0x160] sm:$0xff]
  %v160 = vld [vmem:[%s0 + $0x168] sm:$0xff]
  %v161 = vld [vmem:[%s0 + $0x170] sm:$0xff]
  %v162 = vld [vmem:[%s0 + $0x178] sm:$0xff]
  %v163 = vld [vmem:[%s0 + $0x180] sm:$0xff]
  %v164 = vld [vmem:[%s0 + $0x188] sm:$0xff]
  %v165 = vld [vmem:[%s0 + $0x190] sm:$0xff]
  %v166 = vld [vmem:[%s0 + $0x198] sm:$0xff]
  %v167 = vld [vmem:[%s0 + $0x1a0] sm:$0xff]
  %v168 = vld [vmem:[%s0 + $0x1a8] sm:$0xff]
  %v169 = vld [vmem:[%s0 + $0x1b0] sm:$0xff]
  %v170 = vld [vmem:[%s0 + $0x1b8] sm:$0xff]
  %v171 = vld [vmem:[%s0 + $0x1c0] sm:$0xff]
  %v172 = vld [vmem:[%s0 + $0x1c8] sm:$0xff]
  %v173 = vld [vmem:[%s0 + $0x1d0] sm:$0xff]
  %v174 = vld [vmem:[%s0 + $0x1d8] sm:$0xff]
  %v175 = vld [vmem:[%s0 + $0x1e0] sm:$0xff]
  %v176 = vld [vmem:[%s0 + $0x1e8] sm:$0xff]
  %v177 = vld [vmem:[%s0 + $0x1f0] sm:$0xff]
  %v178 = vld [vmem:[%s0 + $0x1f8] sm:$0xff]
  %s179 = scalar_lea.vmem [#allocation2], 24
  %180 = vst.msk [vmem:[%s179 + $0x1] sm:$0xff] %vm27, %v115
  %181 = vst.msk [vmem:[%s179 + $0x9] sm:$0xff] %vm27, %v116
  %182 = vst.msk [vmem:[%s179 + $0x19] sm:$0xff] %vm27, %v117
  %183 = vst.msk [vmem:[%s179 + $0x21] sm:$0xff] %vm27, %v118
  %184 = vst.msk [vmem:[%s179 + $0x31] sm:$0xff] %vm27, %v119
  %185 = vst.msk [vmem:[%s179 + $0x39] sm:$0xff] %vm27, %v120
  %186 = vst.msk [vmem:[%s179 + $0x49] sm:$0xff] %vm27, %v121
  %187 = vst.msk [vmem:[%s179 + $0x51] sm:$0xff] %vm27, %v122
  %188 = vst.msk [vmem:[%s179 + $0x61] sm:$0xff] %vm27, %v123
  %189 = vst.msk [vmem:[%s179 + $0x69] sm:$0xff] %vm27, %v124
  %190 = vst.msk [vmem:[%s179 + $0x79] sm:$0xff] %vm27, %v125
  %191 = vst.msk [vmem:[%s179 + $0x81] sm:$0xff] %vm27, %v126
  %192 = vst.msk [vmem:[%s179 + $0x91] sm:$0xff] %vm27, %v127
  %193 = vst.msk [vmem:[%s179 + $0x99] sm:$0xff] %vm27, %v128
  %194 = vst.msk [vmem:[%s179 + $0xa9] sm:$0xff] %vm27, %v129
  %195 = vst.msk [vmem:[%s179 + $0xb1] sm:$0xff] %vm27, %v130
  %196 = vst.msk [vmem:[%s179 + $0xc1] sm:$0xff] %vm27, %v131
  %197 = vst.msk [vmem:[%s179 + $0xc9] sm:$0xff] %vm27, %v132
  %198 = vst.msk [vmem:[%s179 + $0xd9] sm:$0xff] %vm27, %v133
  %199 = vst.msk [vmem:[%s179 + $0xe1] sm:$0xff] %vm27, %v134
  %200 = vst.msk [vmem:[%s179 + $0xf1] sm:$0xff] %vm27, %v135
  %201 = vst.msk [vmem:[%s179 + $0xf9] sm:$0xff] %vm27, %v136
  %202 = vst.msk [vmem:[%s179 + $0x109] sm:$0xff] %vm27, %v137
  %203 = vst.msk [vmem:[%s179 + $0x111] sm:$0xff] %vm27, %v138
  %204 = vst.msk [vmem:[%s179 + $0x121] sm:$0xff] %vm27, %v139
  %205 = vst.msk [vmem:[%s179 + $0x129] sm:$0xff] %vm27, %v140
  %206 = vst.msk [vmem:[%s179 + $0x139] sm:$0xff] %vm27, %v141
  %207 = vst.msk [vmem:[%s179 + $0x141] sm:$0xff] %vm27, %v142
  %208 = vst.msk [vmem:[%s179 + $0x151] sm:$0xff] %vm27, %v143
  %209 = vst.msk [vmem:[%s179 + $0x159] sm:$0xff] %vm27, %v144
  %210 = vst.msk [vmem:[%s179 + $0x169] sm:$0xff] %vm27, %v145
  %211 = vst.msk [vmem:[%s179 + $0x171] sm:$0xff] %vm27, %v146
  %212 = vst.msk [vmem:[%s179 + $0x1b1] sm:$0xff] %vm27, %v147
  %213 = vst.msk [vmem:[%s179 + $0x1b9] sm:$0xff] %vm27, %v148
  %214 = vst.msk [vmem:[%s179 + $0x1c9] sm:$0xff] %vm27, %v149
  %215 = vst.msk [vmem:[%s179 + $0x1d1] sm:$0xff] %vm27, %v150
  %216 = vst.msk [vmem:[%s179 + $0x1e1] sm:$0xff] %vm27, %v151
  %217 = vst.msk [vmem:[%s179 + $0x1e9] sm:$0xff] %vm27, %v152
  %218 = vst.msk [vmem:[%s179 + $0x1f9] sm:$0xff] %vm27, %v153
  %219 = vst.msk [vmem:[%s179 + $0x201] sm:$0xff] %vm27, %v154
  %220 = vst.msk [vmem:[%s179 + $0x211] sm:$0xff] %vm27, %v155
  %221 = vst.msk [vmem:[%s179 + $0x219] sm:$0xff] %vm27, %v156
  %222 = vst.msk [vmem:[%s179 + $0x229] sm:$0xff] %vm27, %v157
  %223 = vst.msk [vmem:[%s179 + $0x231] sm:$0xff] %vm27, %v158
  %224 = vst.msk [vmem:[%s179 + $0x241] sm:$0xff] %vm27, %v159
  %225 = vst.msk [vmem:[%s179 + $0x249] sm:$0xff] %vm27, %v160
  %226 = vst.msk [vmem:[%s179 + $0x259] sm:$0xff] %vm27, %v161
  %227 = vst.msk [vmem:[%s179 + $0x261] sm:$0xff] %vm27, %v162
  %228 = vst.msk [vmem:[%s179 + $0x271] sm:$0xff] %vm27, %v163
  %229 = vst.msk [vmem:[%s179 + $0x279] sm:$0xff] %vm27, %v164
  %230 = vst.msk [vmem:[%s179 + $0x289] sm:$0xff] %vm27, %v165
  %231 = vst.msk [vmem:[%s179 + $0x291] sm:$0xff] %vm27, %v166
  %232 = vst.msk [vmem:[%s179 + $0x2a1] sm:$0xff] %vm27, %v167
  %233 = vst.msk [vmem:[%s179 + $0x2a9] sm:$0xff] %vm27, %v168
  %234 = vst.msk [vmem:[%s179 + $0x2b9] sm:$0xff] %vm27, %v169
  %235 = vst.msk [vmem:[%s179 + $0x2c1] sm:$0xff] %vm27, %v170
  %236 = vst.msk [vmem:[%s179 + $0x2d1] sm:$0xff] %vm27, %v171
  %237 = vst.msk [vmem:[%s179 + $0x2d9] sm:$0xff] %vm27, %v172
  %238 = vst.msk [vmem:[%s179 + $0x2e9] sm:$0xff] %vm27, %v173
  %239 = vst.msk [vmem:[%s179 + $0x2f1] sm:$0xff] %vm27, %v174
  %240 = vst.msk [vmem:[%s179 + $0x301] sm:$0xff] %vm27, %v175
  %241 = vst.msk [vmem:[%s179 + $0x309] sm:$0xff] %vm27, %v176
  %242 = vst.msk [vmem:[%s179 + $0x319] sm:$0xff] %vm27, %v177
  %243 = vst.msk [vmem:[%s179 + $0x321] sm:$0xff] %vm27, %v178
  %v244 = vld [vmem:[#allocation2] sm:$0xff]
  %v245 = vld [vmem:[#allocation2 + $0x8] sm:$0xff]
  %v246 = vld [vmem:[#allocation2 + $0x18] sm:$0xff]
  %v247 = vld [vmem:[#allocation2 + $0x20] sm:$0xff]
  %v248 = vld [vmem:[#allocation2 + $0x30] sm:$0xff]
  %v249 = vld [vmem:[#allocation2 + $0x38] sm:$0xff]
  %v250 = vld [vmem:[#allocation2 + $0x48] sm:$0xff]
  %v251 = vld [vmem:[#allocation2 + $0x50] sm:$0xff]
  %v252 = vld [vmem:[#allocation2 + $0x60] sm:$0xff]
  %v253 = vld [vmem:[#allocation2 + $0x68] sm:$0xff]
  %v254 = vld [vmem:[#allocation2 + $0x78] sm:$0xff]
  %v255 = vld [vmem:[#allocation2 + $0x80] sm:$0xff]
  %v256 = vld [vmem:[#allocation2 + $0x90] sm:$0xff]
  %v257 = vld [vmem:[#allocation2 + $0x98] sm:$0xff]
  %v258 = vld [vmem:[#allocation2 + $0xa8] sm:$0xff]
  %v259 = vld [vmem:[#allocation2 + $0xb0] sm:$0xff]
  %v260 = vld [vmem:[#allocation2 + $0xc0] sm:$0xff]
  %v261 = vld [vmem:[#allocation2 + $0xc8] sm:$0xff]
  %v262 = vld [vmem:[#allocation2 + $0xd8] sm:$0xff]
  %v263 = vld [vmem:[#allocation2 + $0xe0] sm:$0xff]
  %v264 = vld [vmem:[#allocation2 + $0xf0] sm:$0xff]
  %v265 = vld [vmem:[#allocation2 + $0xf8] sm:$0xff]
  %v266 = vld [vmem:[#allocation2 + $0x108] sm:$0xff]
  %v267 = vld [vmem:[#allocation2 + $0x110] sm:$0xff]
  %v268 = vld [vmem:[#allocation2 + $0x120] sm:$0xff]
  %v269 = vld [vmem:[#allocation2 + $0x128] sm:$0xff]
  %v270 = vld [vmem:[#allocation2 + $0x138] sm:$0xff]
  %v271 = vld [vmem:[#allocation2 + $0x140] sm:$0xff]
  %v272 = vld [vmem:[#allocation2 + $0x150] sm:$0xff]
  %v273 = vld [vmem:[#allocation2 + $0x158] sm:$0xff]
  %v274 = vld [vmem:[#allocation2 + $0x168] sm:$0xff]
  %v275 = vld [vmem:[#allocation2 + $0x170] sm:$0xff]
  %v276 = vld [vmem:[#allocation2 + $0x1b0] sm:$0xff]
  %v277 = vld [vmem:[#allocation2 + $0x1b8] sm:$0xff]
  %v278 = vld [vmem:[#allocation2 + $0x1c8] sm:$0xff]
  %v279 = vld [vmem:[#allocation2 + $0x1d0] sm:$0xff]
  %v280 = vld [vmem:[#allocation2 + $0x1e0] sm:$0xff]
  %v281 = vld [vmem:[#allocation2 + $0x1e8] sm:$0xff]
  %v282 = vld [vmem:[#allocation2 + $0x1f8] sm:$0xff]
  %v283 = vld [vmem:[#allocation2 + $0x200] sm:$0xff]
  %v284 = vld [vmem:[#allocation2 + $0x210] sm:$0xff]
  %v285 = vld [vmem:[#allocation2 + $0x218] sm:$0xff]
  %v286 = vld [vmem:[#allocation2 + $0x228] sm:$0xff]
  %v287 = vld [vmem:[#allocation2 + $0x230] sm:$0xff]
  %v288 = vld [vmem:[#allocation2 + $0x240] sm:$0xff]
  %v289 = vld [vmem:[#allocation2 + $0x248] sm:$0xff]
  %v290 = vld [vmem:[#allocation2 + $0x258] sm:$0xff]
  %v291 = vld [vmem:[#allocation2 + $0x260] sm:$0xff]
  %v292 = vld [vmem:[#allocation2 + $0x270] sm:$0xff]
  %v293 = vld [vmem:[#allocation2 + $0x278] sm:$0xff]
  %v294 = vld [vmem:[#allocation2 + $0x288] sm:$0xff]
  %v295 = vld [vmem:[#allocation2 + $0x290] sm:$0xff]
  %v296 = vld [vmem:[#allocation2 + $0x2a0] sm:$0xff]
  %v297 = vld [vmem:[#allocation2 + $0x2a8] sm:$0xff]
  %v298 = vld [vmem:[#allocation2 + $0x2b8] sm:$0xff]
  %v299 = vld [vmem:[#allocation2 + $0x2c0] sm:$0xff]
  %v300 = vld [vmem:[#allocation2 + $0x2d0] sm:$0xff]
  %v301 = vld [vmem:[#allocation2 + $0x2d8] sm:$0xff]
  %v302 = vld [vmem:[#allocation2 + $0x2e8] sm:$0xff]
  %v303 = vld [vmem:[#allocation2 + $0x2f0] sm:$0xff]
  %v304 = vld [vmem:[#allocation2 + $0x300] sm:$0xff]
  %v305 = vld [vmem:[#allocation2 + $0x308] sm:$0xff]
  %v306 = vld [vmem:[#allocation2 + $0x318] sm:$0xff]
  %v307 = vld [vmem:[#allocation2 + $0x320] sm:$0xff]
  %v308 = vpack.c.bf16 %v245, %v244
  %v309 = vpack.c.bf16 %v247, %v246
  %v310 = vpack.c.bf16 %v249, %v248
  %v311 = vpack.c.bf16 %v251, %v250
  %v312 = vpack.c.bf16 %v253, %v252
  %v313 = vpack.c.bf16 %v255, %v254
  %v314 = vpack.c.bf16 %v257, %v256
  %v315 = vpack.c.bf16 %v259, %v258
  %v316 = vpack.c.bf16 %v261, %v260
  %v317 = vpack.c.bf16 %v263, %v262
  %v318 = vpack.c.bf16 %v265, %v264
  %v319 = vpack.c.bf16 %v267, %v266
  %v320 = vpack.c.bf16 %v269, %v268
  %v321 = vpack.c.bf16 %v271, %v270
  %v322 = vpack.c.bf16 %v273, %v272
  %v323 = vpack.c.bf16 %v275, %v274
  %v324 = vpack.c.bf16 %v277, %v276
  %v325 = vpack.c.bf16 %v279, %v278
  %v326 = vpack.c.bf16 %v281, %v280
  %v327 = vpack.c.bf16 %v283, %v282
  %v328 = vpack.c.bf16 %v285, %v284
  %v329 = vpack.c.bf16 %v287, %v286
  %v330 = vpack.c.bf16 %v289, %v288
  %v331 = vpack.c.bf16 %v291, %v290
  %v332 = vpack.c.bf16 %v293, %v292
  %v333 = vpack.c.bf16 %v295, %v294
  %v334 = vpack.c.bf16 %v297, %v296
  %v335 = vpack.c.bf16 %v299, %v298
  %v336 = vpack.c.bf16 %v301, %v300
  %v337 = vpack.c.bf16 %v303, %v302
  %v338 = vpack.c.bf16 %v305, %v304
  %v339 = vpack.c.bf16 %v307, %v306
  %v340 = vld [vmem:[%s1] sm:$0x3]
  %v341 = vld [vmem:[#allocation2 + $0x1] sm:$0xff]
  %v342 = vld [vmem:[#allocation2 + $0x9] sm:$0xff]
  %v343 = vld [vmem:[#allocation2 + $0x19] sm:$0xff]
  %v344 = vld [vmem:[#allocation2 + $0x21] sm:$0xff]
  %v345 = vld [vmem:[#allocation2 + $0x31] sm:$0xff]
  %v346 = vld [vmem:[#allocation2 + $0x39] sm:$0xff]
  %v347 = vld [vmem:[#allocation2 + $0x49] sm:$0xff]
  %v348 = vld [vmem:[#allocation2 + $0x51] sm:$0xff]
  %v349 = vld [vmem:[#allocation2 + $0x61] sm:$0xff]
  %v350 = vld [vmem:[#allocation2 + $0x69] sm:$0xff]
  %v351 = vld [vmem:[#allocation2 + $0x79] sm:$0xff]
  %v352 = vld [vmem:[#allocation2 + $0x81] sm:$0xff]
  %v353 = vld [vmem:[#allocation2 + $0x91] sm:$0xff]
  %v354 = vld [vmem:[#allocation2 + $0x99] sm:$0xff]
  %v355 = vld [vmem:[#allocation2 + $0xa9] sm:$0xff]
  %v356 = vld [vmem:[#allocation2 + $0xb1] sm:$0xff]
  %v357 = vld [vmem:[#allocation2 + $0xc1] sm:$0xff]
  %v358 = vld [vmem:[#allocation2 + $0xc9] sm:$0xff]
  %v359 = vld [vmem:[#allocation2 + $0xd9] sm:$0xff]
  %v360 = vld [vmem:[#allocation2 + $0xe1] sm:$0xff]
  %v361 = vld [vmem:[#allocation2 + $0xf1] sm:$0xff]
  %v362 = vld [vmem:[#allocation2 + $0xf9] sm:$0xff]
  %v363 = vld [vmem:[#allocation2 + $0x109] sm:$0xff]
  %v364 = vld [vmem:[#allocation2 + $0x111] sm:$0xff]
  %v365 = vld [vmem:[#allocation2 + $0x121] sm:$0xff]
  %v366 = vld [vmem:[#allocation2 + $0x129] sm:$0xff]
  %v367 = vld [vmem:[#allocation2 + $0x139] sm:$0xff]
  %v368 = vld [vmem:[#allocation2 + $0x141] sm:$0xff]
  %v369 = vld [vmem:[#allocation2 + $0x151] sm:$0xff]
  %v370 = vld [vmem:[#allocation2 + $0x159] sm:$0xff]
  %v371 = vld [vmem:[#allocation2 + $0x169] sm:$0xff]
  %v372 = vld [vmem:[#allocation2 + $0x171] sm:$0xff]
  %v373 = vld [vmem:[#allocation2 + $0x1b1] sm:$0xff]
  %v374 = vld [vmem:[#allocation2 + $0x1b9] sm:$0xff]
  %v375 = vld [vmem:[#allocation2 + $0x1c9] sm:$0xff]
  %v376 = vld [vmem:[#allocation2 + $0x1d1] sm:$0xff]
  %v377 = vld [vmem:[#allocation2 + $0x1e1] sm:$0xff]
  %v378 = vld [vmem:[#allocation2 + $0x1e9] sm:$0xff]
  %v379 = vld [vmem:[#allocation2 + $0x1f9] sm:$0xff]
  %v380 = vld [vmem:[#allocation2 + $0x201] sm:$0xff]
  %v381 = vld [vmem:[#allocation2 + $0x211] sm:$0xff]
  %v382 = vld [vmem:[#allocation2 + $0x219] sm:$0xff]
  %v383 = vld [vmem:[#allocation2 + $0x229] sm:$0xff]
  %v384 = vld [vmem:[#allocation2 + $0x231] sm:$0xff]
  %v385 = vld [vmem:[#allocation2 + $0x241] sm:$0xff]
  %v386 = vld [vmem:[#allocation2 + $0x249] sm:$0xff]
  %v387 = vld [vmem:[#allocation2 + $0x259] sm:$0xff]
  %v388 = vld [vmem:[#allocation2 + $0x261] sm:$0xff]
  %v389 = vld [vmem:[#allocation2 + $0x271] sm:$0xff]
  %v390 = vld [vmem:[#allocation2 + $0x279] sm:$0xff]
  %v391 = vld [vmem:[#allocation2 + $0x289] sm:$0xff]
  %v392 = vld [vmem:[#allocation2 + $0x291] sm:$0xff]
  %v393 = vld [vmem:[#allocation2 + $0x2a1] sm:$0xff]
  %v394 = vld [vmem:[#allocation2 + $0x2a9] sm:$0xff]
  %v395 = vld [vmem:[#allocation2 + $0x2b9] sm:$0xff]
  %v396 = vld [vmem:[#allocation2 + $0x2c1] sm:$0xff]
  %v397 = vld [vmem:[#allocation2 + $0x2d1] sm:$0xff]
  %v398 = vld [vmem:[#allocation2 + $0x2d9] sm:$0xff]
  %v399 = vld [vmem:[#allocation2 + $0x2e9] sm:$0xff]
  %v400 = vld [vmem:[#allocation2 + $0x2f1] sm:$0xff]
  %v401 = vld [vmem:[#allocation2 + $0x301] sm:$0xff]
  %v402 = vld [vmem:[#allocation2 + $0x309] sm:$0xff]
  %v403 = vld [vmem:[#allocation2 + $0x319] sm:$0xff]
  %v404 = vld [vmem:[#allocation2 + $0x321] sm:$0xff]
  %v405 = vpack.c.bf16 %v342, %v341
  %v406 = vpack.c.bf16 %v344, %v343
  %v407 = vpack.c.bf16 %v346, %v345
  %v408 = vpack.c.bf16 %v348, %v347
  %v409 = vpack.c.bf16 %v350, %v349
  %v410 = vpack.c.bf16 %v352, %v351
  %v411 = vpack.c.bf16 %v354, %v353
  %v412 = vpack.c.bf16 %v356, %v355
  %v413 = vpack.c.bf16 %v358, %v357
  %v414 = vpack.c.bf16 %v360, %v359
  %v415 = vpack.c.bf16 %v362, %v361
  %v416 = vpack.c.bf16 %v364, %v363
  %v417 = vpack.c.bf16 %v366, %v365
  %v418 = vpack.c.bf16 %v368, %v367
  %v419 = vpack.c.bf16 %v370, %v369
  %v420 = vpack.c.bf16 %v372, %v371
  %v421 = vpack.c.bf16 %v374, %v373
  %v422 = vpack.c.bf16 %v376, %v375
  %v423 = vpack.c.bf16 %v378, %v377
  %v424 = vpack.c.bf16 %v380, %v379
  %v425 = vpack.c.bf16 %v382, %v381
  %v426 = vpack.c.bf16 %v384, %v383
  %v427 = vpack.c.bf16 %v386, %v385
  %v428 = vpack.c.bf16 %v388, %v387
  %v429 = vpack.c.bf16 %v390, %v389
  %v430 = vpack.c.bf16 %v392, %v391
  %v431 = vpack.c.bf16 %v394, %v393
  %v432 = vpack.c.bf16 %v396, %v395
  %v433 = vpack.c.bf16 %v398, %v397
  %v434 = vpack.c.bf16 %v400, %v399
  %v435 = vpack.c.bf16 %v402, %v401
  %v436 = vpack.c.bf16 %v404, %v403
  %s437 = scalar_lea.vmem %s1, 2
  %v438 = vld [vmem:[%s437] sm:$0x3]
  %v440 = vsel %vm27, %v405, 0
  %v443 = vsel %vm27, %v406, 0
  %v446 = vsel %vm27, %v407, 0
  %v449 = vsel %vm27, %v408, 0
  %v452 = vsel %vm27, %v409, 0
  %v455 = vsel %vm27, %v410, 0
  %v458 = vsel %vm27, %v411, 0
  %v461 = vsel %vm27, %v412, 0
  %v464 = vsel %vm27, %v413, 0
  %v467 = vsel %vm27, %v414, 0
  %v470 = vsel %vm27, %v415, 0
  %v473 = vsel %vm27, %v416, 0
  %v476 = vsel %vm27, %v417, 0
  %v479 = vsel %vm27, %v418, 0
  %v482 = vsel %vm27, %v419, 0
  %v485 = vsel %vm27, %v420, 0
  %v488 = vsel %vm27, %v421, 0
  %v491 = vsel %vm27, %v422, 0
  %v494 = vsel %vm27, %v423, 0
  %v497 = vsel %vm27, %v424, 0
  %v500 = vsel %vm27, %v425, 0
  %v503 = vsel %vm27, %v426, 0
  %v506 = vsel %vm27, %v427, 0
  %v509 = vsel %vm27, %v428, 0
  %v512 = vsel %vm27, %v429, 0
  %v515 = vsel %vm27, %v430, 0
  %v518 = vsel %vm27, %v431, 0
  %v521 = vsel %vm27, %v432, 0
  %v524 = vsel %vm27, %v433, 0
  %v527 = vsel %vm27, %v434, 0
  %v530 = vsel %vm27, %v435, 0
  %v533 = vsel %vm27, %v436, 0
  %vm535 = vcmask 1041408
  %v537 = vsel %vm535, %v438, 0
  %539 = vmatprep.subr.bf16.mxu0 0
  %540 = vmatpush1.bf16.msra.mxu0 %v537
  %541 = vmatprep.subr.bf16.mxu0 0
  %542 = vmatpush1.bf16.msra.mxu0 0
  %543 = vmatprep.subr.bf16.mxu0 0
  %544 = vmatpush1.bf16.msra.mxu0 0
  %545 = vmatprep.subr.bf16.mxu0 0
  %546 = vmatpush1.bf16.msra.mxu0 0
  %547 = vmatprep.subr.bf16.mxu0 0
  %548 = vmatpush1.bf16.msra.mxu0 0
  %549 = vmatprep.subr.bf16.mxu0 0
  %550 = vmatpush1.bf16.msra.mxu0 0
  %551 = vmatprep.subr.bf16.mxu0 0
  %552 = vmatpush1.bf16.msra.mxu0 0
  %553 = vmatprep.subr.bf16.mxu0 0
  %554 = vmatpush1.bf16.msra.mxu0 0
  %555 = vmatprep.subr.bf16.mxu0 0
  %556 = vmatpush1.bf16.msra.mxu0 0
  %557 = vmatprep.subr.bf16.mxu0 0
  %558 = vmatpush1.bf16.msra.mxu0 0
  %559 = vmatprep.subr.bf16.mxu0 0
  %560 = vmatpush1.bf16.msra.mxu0 0
  %561 = vmatprep.subr.bf16.mxu0 0
  %562 = vmatpush1.bf16.msra.mxu0 0
  %563 = vmatprep.subr.bf16.mxu0 0
  %564 = vmatpush1.bf16.msra.mxu0 0
  %565 = vmatprep.subr.bf16.mxu0 0
  %566 = vmatpush1.bf16.msra.mxu0 0
  %567 = vmatprep.subr.bf16.mxu0 0
  %568 = vmatpush1.bf16.msra.mxu0 0
  %569 = vmatprep.subr.bf16.mxu0 0
  %570 = vmatpush1.bf16.msra.mxu0 0
  %571 = vmatprep.mubr.bf16.mxu0 0
  %572 = vmatmul.mubr.bf16.gmra.mrb[0].mxu0 %v440
  %v573 = vpop.f32.mrb[0].mxu0
  %v574 = vadd.f32 0.0, %v573
  %v575 = vpop.f32.mrb[0].mxu0
  %v576 = vpop.f32.mrb[0].mxu0
  %v577 = vadd.f32 0.0, %v576
  %v578 = vpop.f32.mrb[0].mxu0
  %579 = vmatprep.mubr.bf16.mxu0 0
  %580 = vmatmul.mubr.bf16.gmra.mrb[0].mxu0 %v443
  %v581 = vpop.f32.mrb[0].mxu0
  %v582 = vadd.f32 0.0, %v581
  %v583 = vpop.f32.mrb[0].mxu0
  %v584 = vpop.f32.mrb[0].mxu0
  %v585 = vadd.f32 0.0, %v584
  %v586 = vpop.f32.mrb[0].mxu0
  %587 = vmatprep.mubr.bf16.mxu0 0
  %588 = vmatmul.mubr.bf16.gmra.mrb[0].mxu0 %v446
  %v589 = vpop.f32.mrb[0].mxu0
  %v590 = vadd.f32 0.0, %v589
  %v591 = vpop.f32.mrb[0].mxu0
  %v592 = vpop.f32.mrb[0].mxu0
  %v593 = vadd.f32 0.0, %v592
  %v594 = vpop.f32.mrb[0].mxu0
  %595 = vmatprep.mubr.bf16.mxu0 0
  %596 = vmatmul.mubr.bf16.gmra.mrb[0].mxu0 %v449
  %v597 = vpop.f32.mrb[0].mxu0
  %v598 = vadd.f32 0.0, %v597
  %v599 = vpop.f32.mrb[0].mxu0
  %v600 = vpop.f32.mrb[0].mxu0
  %v601 = vadd.f32 0.0, %v600
  %v602 = vpop.f32.mrb[0].mxu0
  %603 = vmatprep.mubr.bf16.mxu0 0
  %604 = vmatmul.mubr.bf16.gmra.mrb[0].mxu0 %v452
  %v605 = vpop.f32.mrb[0].mxu0
  %v606 = vadd.f32 0.0, %v605
  %v607 = vpop.f32.mrb[0].mxu0
  %v608 = vpop.f32.mrb[0].mxu0
  %v609 = vadd.f32 0.0, %v608
  %v610 = vpop.f32.mrb[0].mxu0
  %611 = vmatprep.mubr.bf16.mxu0 0
  %612 = vmatmul.mubr.bf16.gmra.mrb[0].mxu0 %v455
  %v613 = vpop.f32.mrb[0].mxu0
  %v614 = vadd.f32 0.0, %v613
  %v615 = vpop.f32.mrb[0].mxu0
  %v616 = vpop.f32.mrb[0].mxu0
  %v617 = vadd.f32 0.0, %v616
  %v618 = vpop.f32.mrb[0].mxu0
  %619 = vmatprep.mubr.bf16.mxu0 0
  %620 = vmatmul.mubr.bf16.gmra.mrb[0].mxu0 %v458
  %v621 = vpop.f32.mrb[0].mxu0
  %v622 = vadd.f32 0.0, %v621
  %v623 = vpop.f32.mrb[0].mxu0
  %v624 = vpop.f32.mrb[0].mxu0
  %v625 = vadd.f32 0.0, %v624
  %v626 = vpop.f32.mrb[0].mxu0
  %627 = vmatprep.mubr.bf16.mxu0 0
  %628 = vmatmul.mubr.bf16.gmra.mrb[0].mxu0 %v461
  %v629 = vpop.f32.mrb[0].mxu0
  %v630 = vadd.f32 0.0, %v629
  %v631 = vpop.f32.mrb[0].mxu0
  %v632 = vpop.f32.mrb[0].mxu0
  %v633 = vadd.f32 0.0, %v632
  %v634 = vpop.f32.mrb[0].mxu0
  %635 = vmatprep.mubr.bf16.mxu0 0
  %636 = vmatmul.mubr.bf16.gmra.mrb[0].mxu0 %v464
  %v637 = vpop.f32.mrb[0].mxu0
  %v638 = vadd.f32 0.0, %v637
  %v639 = vpop.f32.mrb[0].mxu0
  %v640 = vpop.f32.mrb[0].mxu0
  %v641 = vadd.f32 0.0, %v640
  %v642 = vpop.f32.mrb[0].mxu0
  %643 = vmatprep.mubr.bf16.mxu0 0
  %644 = vmatmul.mubr.bf16.gmra.mrb[0].mxu0 %v467
  %v645 = vpop.f32.mrb[0].mxu0
  %v646 = vadd.f32 0.0, %v645
  %v647 = vpop.f32.mrb[0].mxu0
  %v648 = vpop.f32.mrb[0].mxu0
  %v649 = vadd.f32 0.0, %v648
  %v650 = vpop.f32.mrb[0].mxu0
  %651 = vmatprep.mubr.bf16.mxu0 0
  %652 = vmatmul.mubr.bf16.gmra.mrb[0].mxu0 %v470
  %v653 = vpop.f32.mrb[0].mxu0
  %v654 = vadd.f32 0.0, %v653
  %v655 = vpop.f32.mrb[0].mxu0
  %v656 = vpop.f32.mrb[0].mxu0
  %v657 = vadd.f32 0.0, %v656
  %v658 = vpop.f32.mrb[0].mxu0
  %659 = vmatprep.mubr.bf16.mxu0 0
  %660 = vmatmul.mubr.bf16.gmra.mrb[0].mxu0 %v473
  %v661 = vpop.f32.mrb[0].mxu0
  %v662 = vadd.f32 0.0, %v661
  %v663 = vpop.f32.mrb[0].mxu0
  %v664 = vpop.f32.mrb[0].mxu0
  %v665 = vadd.f32 0.0, %v664
  %v666 = vpop.f32.mrb[0].mxu0
  %667 = vmatprep.mubr.bf16.mxu0 0
  %668 = vmatmul.mubr.bf16.gmra.mrb[0].mxu0 %v476
  %v669 = vpop.f32.mrb[0].mxu0
  %v670 = vadd.f32 0.0, %v669
  %v671 = vpop.f32.mrb[0].mxu0
  %v672 = vpop.f32.mrb[0].mxu0
  %v673 = vadd.f32 0.0, %v672
  %v674 = vpop.f32.mrb[0].mxu0
  %675 = vmatprep.mubr.bf16.mxu0 0
  %676 = vmatmul.mubr.bf16.gmra.mrb[0].mxu0 %v479
  %v677 = vpop.f32.mrb[0].mxu0
  %v678 = vadd.f32 0.0, %v677
  %v679 = vpop.f32.mrb[0].mxu0
  %v680 = vpop.f32.mrb[0].mxu0
  %v681 = vadd.f32 0.0, %v680
  %v682 = vpop.f32.mrb[0].mxu0
  %683 = vmatprep.mubr.bf16.mxu0 0
  %684 = vmatmul.mubr.bf16.gmra.mrb[0].mxu0 %v482
  %v685 = vpop.f32.mrb[0].mxu0
  %v686 = vadd.f32 0.0, %v685
  %v687 = vpop.f32.mrb[0].mxu0
  %v688 = vpop.f32.mrb[0].mxu0
  %v689 = vadd.f32 0.0, %v688
  %v690 = vpop.f32.mrb[0].mxu0
  %691 = vmatprep.mubr.bf16.mxu0 0
  %692 = vmatmul.mubr.bf16.gmra.mrb[0].mxu0 %v485
  %v693 = vpop.f32.mrb[0].mxu0
  %v694 = vadd.f32 0.0, %v693
  %v695 = vpop.f32.mrb[0].mxu0
  %v696 = vpop.f32.mrb[0].mxu0
  %v697 = vadd.f32 0.0, %v696
  %v698 = vpop.f32.mrb[0].mxu0
  %699 = vmatprep.mubr.bf16.mxu0 0
  %700 = vmatmul.mubr.bf16.gmra.mrb[0].mxu0 %v488
  %v701 = vpop.f32.mrb[0].mxu0
  %v702 = vadd.f32 0.0, %v701
  %v703 = vpop.f32.mrb[0].mxu0
  %v704 = vpop.f32.mrb[0].mxu0
  %v705 = vadd.f32 0.0, %v704
  %v706 = vpop.f32.mrb[0].mxu0
  %707 = vmatprep.mubr.bf16.mxu0 0
  %708 = vmatmul.mubr.bf16.gmra.mrb[0].mxu0 %v491
  %v709 = vpop.f32.mrb[0].mxu0
  %v710 = vadd.f32 0.0, %v709
  %v711 = vpop.f32.mrb[0].mxu0
  %v712 = vpop.f32.mrb[0].mxu0
  %v713 = vadd.f32 0.0, %v712
  %v714 = vpop.f32.mrb[0].mxu0
  %715 = vmatprep.mubr.bf16.mxu0 0
  %716 = vmatmul.mubr.bf16.gmra.mrb[0].mxu0 %v494
  %v717 = vpop.f32.mrb[0].mxu0
  %v718 = vadd.f32 0.0, %v717
  %v719 = vpop.f32.mrb[0].mxu0
  %v720 = vpop.f32.mrb[0].mxu0
  %v721 = vadd.f32 0.0, %v720
  %v722 = vpop.f32.mrb[0].mxu0
  %723 = vmatprep.mubr.bf16.mxu0 0
  %724 = vmatmul.mubr.bf16.gmra.mrb[0].mxu0 %v497
  %v725 = vpop.f32.mrb[0].mxu0
  %v726 = vadd.f32 0.0, %v725
  %v727 = vpop.f32.mrb[0].mxu0
  %v728 = vpop.f32.mrb[0].mxu0
  %v729 = vadd.f32 0.0, %v728
  %v730 = vpop.f32.mrb[0].mxu0
  %731 = vmatprep.mubr.bf16.mxu0 0
  %732 = vmatmul.mubr.bf16.gmra.mrb[0].mxu0 %v500
  %v733 = vpop.f32.mrb[0].mxu0
  %v734 = vadd.f32 0.0, %v733
  %v735 = vpop.f32.mrb[0].mxu0
  %v736 = vpop.f32.mrb[0].mxu0
  %v737 = vadd.f32 0.0, %v736
  %v738 = vpop.f32.mrb[0].mxu0
  %739 = vmatprep.mubr.bf16.mxu0 0
  %740 = vmatmul.mubr.bf16.gmra.mrb[0].mxu0 %v503
  %v741 = vpop.f32.mrb[0].mxu0
  %v742 = vadd.f32 0.0, %v741
  %v743 = vpop.f32.mrb[0].mxu0
  %v744 = vpop.f32.mrb[0].mxu0
  %v745 = vadd.f32 0.0, %v744
  %v746 = vpop.f32.mrb[0].mxu0
  %747 = vmatprep.mubr.bf16.mxu0 0
  %748 = vmatmul.mubr.bf16.gmra.mrb[0].mxu0 %v506
  %v749 = vpop.f32.mrb[0].mxu0
  %v750 = vadd.f32 0.0, %v749
  %v751 = vpop.f32.mrb[0].mxu0
  %v752 = vpop.f32.mrb[0].mxu0
  %v753 = vadd.f32 0.0, %v752
  %v754 = vpop.f32.mrb[0].mxu0
  %755 = vmatprep.mubr.bf16.mxu0 0
  %756 = vmatmul.mubr.bf16.gmra.mrb[0].mxu0 %v509
  %v757 = vpop.f32.mrb[0].mxu0
  %v758 = vadd.f32 0.0, %v757
  %v759 = vpop.f32.mrb[0].mxu0
  %v760 = vpop.f32.mrb[0].mxu0
  %v761 = vadd.f32 0.0, %v760
  %v762 = vpop.f32.mrb[0].mxu0
  %763 = vmatprep.mubr.bf16.mxu0 0
  %764 = vmatmul.mubr.bf16.gmra.mrb[0].mxu0 %v512
  %v765 = vpop.f32.mrb[0].mxu0
  %v766 = vadd.f32 0.0, %v765
  %v767 = vpop.f32.mrb[0].mxu0
  %v768 = vpop.f32.mrb[0].mxu0
  %v769 = vadd.f32 0.0, %v768
  %v770 = vpop.f32.mrb[0].mxu0
  %771 = vmatprep.mubr.bf16.mxu0 0
  %772 = vmatmul.mubr.bf16.gmra.mrb[0].mxu0 %v515
  %v773 = vpop.f32.mrb[0].mxu0
  %v774 = vadd.f32 0.0, %v773
  %v775 = vpop.f32.mrb[0].mxu0
  %v776 = vpop.f32.mrb[0].mxu0
  %v777 = vadd.f32 0.0, %v776
  %v778 = vpop.f32.mrb[0].mxu0
  %779 = vmatprep.mubr.bf16.mxu0 0
  %780 = vmatmul.mubr.bf16.gmra.mrb[0].mxu0 %v518
  %v781 = vpop.f32.mrb[0].mxu0
  %v782 = vadd.f32 0.0, %v781
  %v783 = vpop.f32.mrb[0].mxu0
  %v784 = vpop.f32.mrb[0].mxu0
  %v785 = vadd.f32 0.0, %v784
  %v786 = vpop.f32.mrb[0].mxu0
  %787 = vmatprep.mubr.bf16.mxu0 0
  %788 = vmatmul.mubr.bf16.gmra.mrb[0].mxu0 %v521
  %v789 = vpop.f32.mrb[0].mxu0
  %v790 = vadd.f32 0.0, %v789
  %v791 = vpop.f32.mrb[0].mxu0
  %v792 = vpop.f32.mrb[0].mxu0
  %v793 = vadd.f32 0.0, %v792
  %v794 = vpop.f32.mrb[0].mxu0
  %795 = vmatprep.mubr.bf16.mxu0 0
  %796 = vmatmul.mubr.bf16.gmra.mrb[0].mxu0 %v524
  %v797 = vpop.f32.mrb[0].mxu0
  %v798 = vadd.f32 0.0, %v797
  %v799 = vpop.f32.mrb[0].mxu0
  %v800 = vpop.f32.mrb[0].mxu0
  %v801 = vadd.f32 0.0, %v800
  %v802 = vpop.f32.mrb[0].mxu0
  %803 = vmatprep.mubr.bf16.mxu0 0
  %804 = vmatmul.mubr.bf16.gmra.mrb[0].mxu0 %v527
  %v805 = vpop.f32.mrb[0].mxu0
  %v806 = vadd.f32 0.0, %v805
  %v807 = vpop.f32.mrb[0].mxu0
  %v808 = vpop.f32.mrb[0].mxu0
  %v809 = vadd.f32 0.0, %v808
  %v810 = vpop.f32.mrb[0].mxu0
  %811 = vmatprep.mubr.bf16.mxu0 0
  %812 = vmatmul.mubr.bf16.gmra.mrb[0].mxu0 %v530
  %v813 = vpop.f32.mrb[0].mxu0
  %v814 = vadd.f32 0.0, %v813
  %v815 = vpop.f32.mrb[0].mxu0
  %v816 = vpop.f32.mrb[0].mxu0
  %v817 = vadd.f32 0.0, %v816
  %v818 = vpop.f32.mrb[0].mxu0
  %819 = vmatprep.mubr.bf16.mxu0 0
  %820 = vmatmul.mubr.bf16.gmra.mrb[0].mxu0 %v533
  %v821 = vpop.f32.mrb[0].mxu0
  %v822 = vadd.f32 0.0, %v821
  %v823 = vpop.f32.mrb[0].mxu0
  %v824 = vpop.f32.mrb[0].mxu0
  %v825 = vadd.f32 0.0, %v824
  %v826 = vpop.f32.mrb[0].mxu0
  %827 = vdwg.mxu0
  %v829 = vsel %vm27, %v308, 0
  %v832 = vsel %vm27, %v309, 0
  %v835 = vsel %vm27, %v310, 0
  %v838 = vsel %vm27, %v311, 0
  %v841 = vsel %vm27, %v312, 0
  %v844 = vsel %vm27, %v313, 0
  %v847 = vsel %vm27, %v314, 0
  %v850 = vsel %vm27, %v315, 0
  %v853 = vsel %vm27, %v316, 0
  %v856 = vsel %vm27, %v317, 0
  %v859 = vsel %vm27, %v318, 0
  %v862 = vsel %vm27, %v319, 0
  %v865 = vsel %vm27, %v320, 0
  %v868 = vsel %vm27, %v321, 0
  %v871 = vsel %vm27, %v322, 0
  %v874 = vsel %vm27, %v323, 0
  %v877 = vsel %vm27, %v324, 0
  %v880 = vsel %vm27, %v325, 0
  %v883 = vsel %vm27, %v326, 0
  %v886 = vsel %vm27, %v327, 0
  %v889 = vsel %vm27, %v328, 0
  %v892 = vsel %vm27, %v329, 0
  %v895 = vsel %vm27, %v330, 0
  %v898 = vsel %vm27, %v331, 0
  %v901 = vsel %vm27, %v332, 0
  %v904 = vsel %vm27, %v333, 0
  %v907 = vsel %vm27, %v334, 0
  %v910 = vsel %vm27, %v335, 0
  %v913 = vsel %vm27, %v336, 0
  %v916 = vsel %vm27, %v337, 0
  %v919 = vsel %vm27, %v338, 0
  %v922 = vsel %vm27, %v339, 0
  %v925 = vsel %vm535, %v340, 0
  %927 = vmatprep.subr.bf16.mxu0 0
  %928 = vmatpush1.bf16.msra.mxu0 %v925
  %929 = vmatprep.subr.bf16.mxu0 0
  %930 = vmatpush1.bf16.msra.mxu0 0
  %931 = vmatprep.subr.bf16.mxu0 0
  %932 = vmatpush1.bf16.msra.mxu0 0
  %933 = vmatprep.subr.bf16.mxu0 0
  %934 = vmatpush1.bf16.msra.mxu0 0
  %935 = vmatprep.subr.bf16.mxu0 0
  %936 = vmatpush1.bf16.msra.mxu0 0
  %937 = vmatprep.subr.bf16.mxu0 0
  %938 = vmatpush1.bf16.msra.mxu0 0
  %939 = vmatprep.subr.bf16.mxu0 0
  %940 = vmatpush1.bf16.msra.mxu0 0
  %941 = vmatprep.subr.bf16.mxu0 0
  %942 = vmatpush1.bf16.msra.mxu0 0
  %943 = vmatprep.subr.bf16.mxu0 0
  %944 = vmatpush1.bf16.msra.mxu0 0
  %945 = vmatprep.subr.bf16.mxu0 0
  %946 = vmatpush1.bf16.msra.mxu0 0
  %947 = vmatprep.subr.bf16.mxu0 0
  %948 = vmatpush1.bf16.msra.mxu0 0
  %949 = vmatprep.subr.bf16.mxu0 0
  %950 = vmatpush1.bf16.msra.mxu0 0
  %951 = vmatprep.subr.bf16.mxu0 0
  %952 = vmatpush1.bf16.msra.mxu0 0
  %953 = vmatprep.subr.bf16.mxu0 0
  %954 = vmatpush1.bf16.msra.mxu0 0
  %955 = vmatprep.subr.bf16.mxu0 0
  %956 = vmatpush1.bf16.msra.mxu0 0
  %957 = vmatprep.subr.bf16.mxu0 0
  %958 = vmatpush1.bf16.msra.mxu0 0
  %959 = vmatprep.mubr.bf16.mxu0 0
  %960 = vmatmul.mubr.bf16.gmra.mrb[0].mxu0 %v829
  %v961 = vpop.f32.mrb[0].mxu0
  %v962 = vadd.f32 %v574, %v961
  %v963 = vpop.f32.mrb[0].mxu0
  %v964 = vpop.f32.mrb[0].mxu0
  %v965 = vadd.f32 %v577, %v964
  %v966 = vpop.f32.mrb[0].mxu0
  %967 = vmatprep.mubr.bf16.mxu0 0
  %968 = vmatmul.mubr.bf16.gmra.mrb[0].mxu0 %v832
  %v969 = vpop.f32.mrb[0].mxu0
  %v970 = vadd.f32 %v582, %v969
  %v971 = vpop.f32.mrb[0].mxu0
  %v972 = vpop.f32.mrb[0].mxu0
  %v973 = vadd.f32 %v585, %v972
  %v974 = vpop.f32.mrb[0].mxu0
  %975 = vmatprep.mubr.bf16.mxu0 0
  %976 = vmatmul.mubr.bf16.gmra.mrb[0].mxu0 %v835
  %v977 = vpop.f32.mrb[0].mxu0
  %v978 = vadd.f32 %v590, %v977
  %v979 = vpop.f32.mrb[0].mxu0
  %v980 = vpop.f32.mrb[0].mxu0
  %v981 = vadd.f32 %v593, %v980
  %v982 = vpop.f32.mrb[0].mxu0
  %983 = vmatprep.mubr.bf16.mxu0 0
  %984 = vmatmul.mubr.bf16.gmra.mrb[0].mxu0 %v838
  %v985 = vpop.f32.mrb[0].mxu0
  %v986 = vadd.f32 %v598, %v985
  %v987 = vpop.f32.mrb[0].mxu0
  %v988 = vpop.f32.mrb[0].mxu0
  %v989 = vadd.f32 %v601, %v988
  %v990 = vpop.f32.mrb[0].mxu0
  %991 = vmatprep.mubr.bf16.mxu0 0
  %992 = vmatmul.mubr.bf16.gmra.mrb[0].mxu0 %v841
  %v993 = vpop.f32.mrb[0].mxu0
  %v994 = vadd.f32 %v606, %v993
  %v995 = vpop.f32.mrb[0].mxu0
  %v996 = vpop.f32.mrb[0].mxu0
  %v997 = vadd.f32 %v609, %v996
  %v998 = vpop.f32.mrb[0].mxu0
  %999 = vmatprep.mubr.bf16.mxu0 0
  %1000 = vmatmul.mubr.bf16.gmra.mrb[0].mxu0 %v844
  %v1001 = vpop.f32.mrb[0].mxu0
  %v1002 = vadd.f32 %v614, %v1001
  %v1003 = vpop.f32.mrb[0].mxu0
  %v1004 = vpop.f32.mrb[0].mxu0
  %v1005 = vadd.f32 %v617, %v1004
  %v1006 = vpop.f32.mrb[0].mxu0
  %1007 = vmatprep.mubr.bf16.mxu0 0
  %1008 = vmatmul.mubr.bf16.gmra.mrb[0].mxu0 %v847
  %v1009 = vpop.f32.mrb[0].mxu0
  %v1010 = vadd.f32 %v622, %v1009
  %v1011 = vpop.f32.mrb[0].mxu0
  %v1012 = vpop.f32.mrb[0].mxu0
  %v1013 = vadd.f32 %v625, %v1012
  %v1014 = vpop.f32.mrb[0].mxu0
  %1015 = vmatprep.mubr.bf16.mxu0 0
  %1016 = vmatmul.mubr.bf16.gmra.mrb[0].mxu0 %v850
  %v1017 = vpop.f32.mrb[0].mxu0
  %v1018 = vadd.f32 %v630, %v1017
  %v1019 = vpop.f32.mrb[0].mxu0
  %v1020 = vpop.f32.mrb[0].mxu0
  %v1021 = vadd.f32 %v633, %v1020
  %v1022 = vpop.f32.mrb[0].mxu0
  %1023 = vmatprep.mubr.bf16.mxu0 0
  %1024 = vmatmul.mubr.bf16.gmra.mrb[0].mxu0 %v853
  %v1025 = vpop.f32.mrb[0].mxu0
  %v1026 = vadd.f32 %v638, %v1025
  %v1027 = vpop.f32.mrb[0].mxu0
  %v1028 = vpop.f32.mrb[0].mxu0
  %v1029 = vadd.f32 %v641, %v1028
  %v1030 = vpop.f32.mrb[0].mxu0
  %1031 = vmatprep.mubr.bf16.mxu0 0
  %1032 = vmatmul.mubr.bf16.gmra.mrb[0].mxu0 %v856
  %v1033 = vpop.f32.mrb[0].mxu0
  %v1034 = vadd.f32 %v646, %v1033
  %v1035 = vpop.f32.mrb[0].mxu0
  %v1036 = vpop.f32.mrb[0].mxu0
  %v1037 = vadd.f32 %v649, %v1036
  %v1038 = vpop.f32.mrb[0].mxu0
  %1039 = vmatprep.mubr.bf16.mxu0 0
  %1040 = vmatmul.mubr.bf16.gmra.mrb[0].mxu0 %v859
  %v1041 = vpop.f32.mrb[0].mxu0
  %v1042 = vadd.f32 %v654, %v1041
  %v1043 = vpop.f32.mrb[0].mxu0
  %v1044 = vpop.f32.mrb[0].mxu0
  %v1045 = vadd.f32 %v657, %v1044
  %v1046 = vpop.f32.mrb[0].mxu0
  %1047 = vmatprep.mubr.bf16.mxu0 0
  %1048 = vmatmul.mubr.bf16.gmra.mrb[0].mxu0 %v862
  %v1049 = vpop.f32.mrb[0].mxu0
  %v1050 = vadd.f32 %v662, %v1049
  %v1051 = vpop.f32.mrb[0].mxu0
  %v1052 = vpop.f32.mrb[0].mxu0
  %v1053 = vadd.f32 %v665, %v1052
  %v1054 = vpop.f32.mrb[0].mxu0
  %1055 = vmatprep.mubr.bf16.mxu0 0
  %1056 = vmatmul.mubr.bf16.gmra.mrb[0].mxu0 %v865
  %v1057 = vpop.f32.mrb[0].mxu0
  %v1058 = vadd.f32 %v670, %v1057
  %v1059 = vpop.f32.mrb[0].mxu0
  %v1060 = vpop.f32.mrb[0].mxu0
  %v1061 = vadd.f32 %v673, %v1060
  %v1062 = vpop.f32.mrb[0].mxu0
  %1063 = vmatprep.mubr.bf16.mxu0 0
  %1064 = vmatmul.mubr.bf16.gmra.mrb[0].mxu0 %v868
  %v1065 = vpop.f32.mrb[0].mxu0
  %v1066 = vadd.f32 %v678, %v1065
  %v1067 = vpop.f32.mrb[0].mxu0
  %v1068 = vpop.f32.mrb[0].mxu0
  %v1069 = vadd.f32 %v681, %v1068
  %v1070 = vpop.f32.mrb[0].mxu0
  %1071 = vmatprep.mubr.bf16.mxu0 0
  %1072 = vmatmul.mubr.bf16.gmra.mrb[0].mxu0 %v871
  %v1073 = vpop.f32.mrb[0].mxu0
  %v1074 = vadd.f32 %v686, %v1073
  %v1075 = vpop.f32.mrb[0].mxu0
  %v1076 = vpop.f32.mrb[0].mxu0
  %v1077 = vadd.f32 %v689, %v1076
  %v1078 = vpop.f32.mrb[0].mxu0
  %1079 = vmatprep.mubr.bf16.mxu0 0
  %1080 = vmatmul.mubr.bf16.gmra.mrb[0].mxu0 %v874
  %v1081 = vpop.f32.mrb[0].mxu0
  %v1082 = vadd.f32 %v694, %v1081
  %v1083 = vpop.f32.mrb[0].mxu0
  %v1084 = vpop.f32.mrb[0].mxu0
  %v1085 = vadd.f32 %v697, %v1084
  %v1086 = vpop.f32.mrb[0].mxu0
  %1087 = vmatprep.mubr.bf16.mxu0 0
  %1088 = vmatmul.mubr.bf16.gmra.mrb[0].mxu0 %v877
  %v1089 = vpop.f32.mrb[0].mxu0
  %v1090 = vadd.f32 %v702, %v1089
  %v1091 = vpop.f32.mrb[0].mxu0
  %v1092 = vpop.f32.mrb[0].mxu0
  %v1093 = vadd.f32 %v705, %v1092
  %v1094 = vpop.f32.mrb[0].mxu0
  %1095 = vmatprep.mubr.bf16.mxu0 0
  %1096 = vmatmul.mubr.bf16.gmra.mrb[0].mxu0 %v880
  %v1097 = vpop.f32.mrb[0].mxu0
  %v1098 = vadd.f32 %v710, %v1097
  %v1099 = vpop.f32.mrb[0].mxu0
  %v1100 = vpop.f32.mrb[0].mxu0
  %v1101 = vadd.f32 %v713, %v1100
  %v1102 = vpop.f32.mrb[0].mxu0
  %1103 = vmatprep.mubr.bf16.mxu0 0
  %1104 = vmatmul.mubr.bf16.gmra.mrb[0].mxu0 %v883
  %v1105 = vpop.f32.mrb[0].mxu0
  %v1106 = vadd.f32 %v718, %v1105
  %v1107 = vpop.f32.mrb[0].mxu0
  %v1108 = vpop.f32.mrb[0].mxu0
  %v1109 = vadd.f32 %v721, %v1108
  %v1110 = vpop.f32.mrb[0].mxu0
  %1111 = vmatprep.mubr.bf16.mxu0 0
  %1112 = vmatmul.mubr.bf16.gmra.mrb[0].mxu0 %v886
  %v1113 = vpop.f32.mrb[0].mxu0
  %v1114 = vadd.f32 %v726, %v1113
  %v1115 = vpop.f32.mrb[0].mxu0
  %v1116 = vpop.f32.mrb[0].mxu0
  %v1117 = vadd.f32 %v729, %v1116
  %v1118 = vpop.f32.mrb[0].mxu0
  %1119 = vmatprep.mubr.bf16.mxu0 0
  %1120 = vmatmul.mubr.bf16.gmra.mrb[0].mxu0 %v889
  %v1121 = vpop.f32.mrb[0].mxu0
  %v1122 = vadd.f32 %v734, %v1121
  %v1123 = vpop.f32.mrb[0].mxu0
  %v1124 = vpop.f32.mrb[0].mxu0
  %v1125 = vadd.f32 %v737, %v1124
  %v1126 = vpop.f32.mrb[0].mxu0
  %1127 = vmatprep.mubr.bf16.mxu0 0
  %1128 = vmatmul.mubr.bf16.gmra.mrb[0].mxu0 %v892
  %v1129 = vpop.f32.mrb[0].mxu0
  %v1130 = vadd.f32 %v742, %v1129
  %v1131 = vpop.f32.mrb[0].mxu0
  %v1132 = vpop.f32.mrb[0].mxu0
  %v1133 = vadd.f32 %v745, %v1132
  %v1134 = vpop.f32.mrb[0].mxu0
  %1135 = vmatprep.mubr.bf16.mxu0 0
  %1136 = vmatmul.mubr.bf16.gmra.mrb[0].mxu0 %v895
  %v1137 = vpop.f32.mrb[0].mxu0
  %v1138 = vadd.f32 %v750, %v1137
  %v1139 = vpop.f32.mrb[0].mxu0
  %v1140 = vpop.f32.mrb[0].mxu0
  %v1141 = vadd.f32 %v753, %v1140
  %v1142 = vpop.f32.mrb[0].mxu0
  %1143 = vmatprep.mubr.bf16.mxu0 0
  %1144 = vmatmul.mubr.bf16.gmra.mrb[0].mxu0 %v898
  %v1145 = vpop.f32.mrb[0].mxu0
  %v1146 = vadd.f32 %v758, %v1145
  %v1147 = vpop.f32.mrb[0].mxu0
  %v1148 = vpop.f32.mrb[0].mxu0
  %v1149 = vadd.f32 %v761, %v1148
  %v1150 = vpop.f32.mrb[0].mxu0
  %1151 = vmatprep.mubr.bf16.mxu0 0
  %1152 = vmatmul.mubr.bf16.gmra.mrb[0].mxu0 %v901
  %v1153 = vpop.f32.mrb[0].mxu0
  %v1154 = vadd.f32 %v766, %v1153
  %v1155 = vpop.f32.mrb[0].mxu0
  %v1156 = vpop.f32.mrb[0].mxu0
  %v1157 = vadd.f32 %v769, %v1156
  %v1158 = vpop.f32.mrb[0].mxu0
  %1159 = vmatprep.mubr.bf16.mxu0 0
  %1160 = vmatmul.mubr.bf16.gmra.mrb[0].mxu0 %v904
  %v1161 = vpop.f32.mrb[0].mxu0
  %v1162 = vadd.f32 %v774, %v1161
  %v1163 = vpop.f32.mrb[0].mxu0
  %v1164 = vpop.f32.mrb[0].mxu0
  %v1165 = vadd.f32 %v777, %v1164
  %v1166 = vpop.f32.mrb[0].mxu0
  %1167 = vmatprep.mubr.bf16.mxu0 0
  %1168 = vmatmul.mubr.bf16.gmra.mrb[0].mxu0 %v907
  %v1169 = vpop.f32.mrb[0].mxu0
  %v1170 = vadd.f32 %v782, %v1169
  %v1171 = vpop.f32.mrb[0].mxu0
  %v1172 = vpop.f32.mrb[0].mxu0
  %v1173 = vadd.f32 %v785, %v1172
  %v1174 = vpop.f32.mrb[0].mxu0
  %1175 = vmatprep.mubr.bf16.mxu0 0
  %1176 = vmatmul.mubr.bf16.gmra.mrb[0].mxu0 %v910
  %v1177 = vpop.f32.mrb[0].mxu0
  %v1178 = vadd.f32 %v790, %v1177
  %v1179 = vpop.f32.mrb[0].mxu0
  %v1180 = vpop.f32.mrb[0].mxu0
  %v1181 = vadd.f32 %v793, %v1180
  %v1182 = vpop.f32.mrb[0].mxu0
  %1183 = vmatprep.mubr.bf16.mxu0 0
  %1184 = vmatmul.mubr.bf16.gmra.mrb[0].mxu0 %v913
  %v1185 = vpop.f32.mrb[0].mxu0
  %v1186 = vadd.f32 %v798, %v1185
  %v1187 = vpop.f32.mrb[0].mxu0
  %v1188 = vpop.f32.mrb[0].mxu0
  %v1189 = vadd.f32 %v801, %v1188
  %v1190 = vpop.f32.mrb[0].mxu0
  %1191 = vmatprep.mubr.bf16.mxu0 0
  %1192 = vmatmul.mubr.bf16.gmra.mrb[0].mxu0 %v916
  %v1193 = vpop.f32.mrb[0].mxu0
  %v1194 = vadd.f32 %v806, %v1193
  %v1195 = vpop.f32.mrb[0].mxu0
  %v1196 = vpop.f32.mrb[0].mxu0
  %v1197 = vadd.f32 %v809, %v1196
  %v1198 = vpop.f32.mrb[0].mxu0
  %1199 = vmatprep.mubr.bf16.mxu0 0
  %1200 = vmatmul.mubr.bf16.gmra.mrb[0].mxu0 %v919
  %v1201 = vpop.f32.mrb[0].mxu0
  %v1202 = vadd.f32 %v814, %v1201
  %v1203 = vpop.f32.mrb[0].mxu0
  %v1204 = vpop.f32.mrb[0].mxu0
  %v1205 = vadd.f32 %v817, %v1204
  %v1206 = vpop.f32.mrb[0].mxu0
  %1207 = vmatprep.mubr.bf16.mxu0 0
  %1208 = vmatmul.mubr.bf16.gmra.mrb[0].mxu0 %v922
  %v1209 = vpop.f32.mrb[0].mxu0
  %v1210 = vadd.f32 %v822, %v1209
  %v1211 = vpop.f32.mrb[0].mxu0
  %v1212 = vpop.f32.mrb[0].mxu0
  %v1213 = vadd.f32 %v825, %v1212
  %v1214 = vpop.f32.mrb[0].mxu0
  %1215 = vdwg.mxu0
  %v1216 = vld [vmem:[#allocation2 + $0x2] sm:$0xff]
  %v1217 = vld [vmem:[#allocation2 + $0xa] sm:$0xff]
  %v1218 = vld [vmem:[#allocation2 + $0x1a] sm:$0xff]
  %v1219 = vld [vmem:[#allocation2 + $0x22] sm:$0xff]
  %v1220 = vld [vmem:[#allocation2 + $0x32] sm:$0xff]
  %v1221 = vld [vmem:[#allocation2 + $0x3a] sm:$0xff]
  %v1222 = vld [vmem:[#allocation2 + $0x4a] sm:$0xff]
  %v1223 = vld [vmem:[#allocation2 + $0x52] sm:$0xff]
  %v1224 = vld [vmem:[#allocation2 + $0x62] sm:$0xff]
  %v1225 = vld [vmem:[#allocation2 + $0x6a] sm:$0xff]
  %v1226 = vld [vmem:[#allocation2 + $0x7a] sm:$0xff]
  %v1227 = vld [vmem:[#allocation2 + $0x82] sm:$0xff]
  %v1228 = vld [vmem:[#allocation2 + $0x92] sm:$0xff]
  %v1229 = vld [vmem:[#allocation2 + $0x9a] sm:$0xff]
  %v1230 = vld [vmem:[#allocation2 + $0xaa] sm:$0xff]
  %v1231 = vld [vmem:[#allocation2 + $0xb2] sm:$0xff]
  %v1232 = vld [vmem:[#allocation2 + $0xc2] sm:$0xff]
  %v1233 = vld [vmem:[#allocation2 + $0xca] sm:$0xff]
  %v1234 = vld [vmem:[#allocation2 + $0xda] sm:$0xff]
  %v1235 = vld [vmem:[#allocation2 + $0xe2] sm:$0xff]
  %v1236 = vld [vmem:[#allocation2 + $0xf2] sm:$0xff]
  %v1237 = vld [vmem:[#allocation2 + $0xfa] sm:$0xff]
  %v1238 = vld [vmem:[#allocation2 + $0x10a] sm:$0xff]
  %v1239 = vld [vmem:[#allocation2 + $0x112] sm:$0xff]
  %v1240 = vld [vmem:[#allocation2 + $0x122] sm:$0xff]
  %v1241 = vld [vmem:[#allocation2 + $0x12a] sm:$0xff]
  %v1242 = vld [vmem:[#allocation2 + $0x13a] sm:$0xff]
  %v1243 = vld [vmem:[#allocation2 + $0x142] sm:$0xff]
  %v1244 = vld [vmem:[#allocation2 + $0x152] sm:$0xff]
  %v1245 = vld [vmem:[#allocation2 + $0x15a] sm:$0xff]
  %v1246 = vld [vmem:[#allocation2 + $0x16a] sm:$0xff]
  %v1247 = vld [vmem:[#allocation2 + $0x172] sm:$0xff]
  %v1248 = vld [vmem:[#allocation2 + $0x1b2] sm:$0xff]
  %v1249 = vld [vmem:[#allocation2 + $0x1ba] sm:$0xff]
  %v1250 = vld [vmem:[#allocation2 + $0x1ca] sm:$0xff]
  %v1251 = vld [vmem:[#allocation2 + $0x1d2] sm:$0xff]
  %v1252 = vld [vmem:[#allocation2 + $0x1e2] sm:$0xff]
  %v1253 = vld [vmem:[#allocation2 + $0x1ea] sm:$0xff]
  %v1254 = vld [vmem:[#allocation2 + $0x1fa] sm:$0xff]
  %v1255 = vld [vmem:[#allocation2 + $0x202] sm:$0xff]
  %v1256 = vld [vmem:[#allocation2 + $0x212] sm:$0xff]
  %v1257 = vld [vmem:[#allocation2 + $0x21a] sm:$0xff]
  %v1258 = vld [vmem:[#allocation2 + $0x22a] sm:$0xff]
  %v1259 = vld [vmem:[#allocation2 + $0x232] sm:$0xff]
  %v1260 = vld [vmem:[#allocation2 + $0x242] sm:$0xff]
  %v1261 = vld [vmem:[#allocation2 + $0x24a] sm:$0xff]
  %v1262 = vld [vmem:[#allocation2 + $0x25a] sm:$0xff]
  %v1263 = vld [vmem:[#allocation2 + $0x262] sm:$0xff]
  %v1264 = vld [vmem:[#allocation2 + $0x272] sm:$0xff]
  %v1265 = vld [vmem:[#allocation2 + $0x27a] sm:$0xff]
  %v1266 = vld [vmem:[#allocation2 + $0x28a] sm:$0xff]
  %v1267 = vld [vmem:[#allocation2 + $0x292] sm:$0xff]
  %v1268 = vld [vmem:[#allocation2 + $0x2a2] sm:$0xff]
  %v1269 = vld [vmem:[#allocation2 + $0x2aa] sm:$0xff]
  %v1270 = vld [vmem:[#allocation2 + $0x2ba] sm:$0xff]
  %v1271 = vld [vmem:[#allocation2 + $0x2c2] sm:$0xff]
  %v1272 = vld [vmem:[#allocation2 + $0x2d2] sm:$0xff]
  %v1273 = vld [vmem:[#allocation2 + $0x2da] sm:$0xff]
  %v1274 = vld [vmem:[#allocation2 + $0x2ea] sm:$0xff]
  %v1275 = vld [vmem:[#allocation2 + $0x2f2] sm:$0xff]
  %v1276 = vld [vmem:[#allocation2 + $0x302] sm:$0xff]
  %v1277 = vld [vmem:[#allocation2 + $0x30a] sm:$0xff]
  %v1278 = vld [vmem:[#allocation2 + $0x31a] sm:$0xff]
  %v1279 = vld [vmem:[#allocation2 + $0x322] sm:$0xff]
  %v1280 = vpack.c.bf16 %v1217, %v1216
  %v1281 = vpack.c.bf16 %v1219, %v1218
  %v1282 = vpack.c.bf16 %v1221, %v1220
  %v1283 = vpack.c.bf16 %v1223, %v1222
  %v1284 = vpack.c.bf16 %v1225, %v1224
  %v1285 = vpack.c.bf16 %v1227, %v1226
  %v1286 = vpack.c.bf16 %v1229, %v1228
  %v1287 = vpack.c.bf16 %v1231, %v1230
  %v1288 = vpack.c.bf16 %v1233, %v1232
  %v1289 = vpack.c.bf16 %v1235, %v1234
  %v1290 = vpack.c.bf16 %v1237, %v1236
  %v1291 = vpack.c.bf16 %v1239, %v1238
  %v1292 = vpack.c.bf16 %v1241, %v1240
  %v1293 = vpack.c.bf16 %v1243, %v1242
  %v1294 = vpack.c.bf16 %v1245, %v1244
  %v1295 = vpack.c.bf16 %v1247, %v1246
  %v1296 = vpack.c.bf16 %v1249, %v1248
  %v1297 = vpack.c.bf16 %v1251, %v1250
  %v1298 = vpack.c.bf16 %v1253, %v1252
  %v1299 = vpack.c.bf16 %v1255, %v1254
  %v1300 = vpack.c.bf16 %v1257, %v1256
  %v1301 = vpack.c.bf16 %v1259, %v1258
  %v1302 = vpack.c.bf16 %v1261, %v1260
  %v1303 = vpack.c.bf16 %v1263, %v1262
  %v1304 = vpack.c.bf16 %v1265, %v1264
  %v1305 = vpack.c.bf16 %v1267, %v1266
  %v1306 = vpack.c.bf16 %v1269, %v1268
  %v1307 = vpack.c.bf16 %v1271, %v1270
  %v1308 = vpack.c.bf16 %v1273, %v1272
  %v1309 = vpack.c.bf16 %v1275, %v1274
  %v1310 = vpack.c.bf16 %v1277, %v1276
  %v1311 = vpack.c.bf16 %v1279, %v1278
  %s1312 = scalar_lea.vmem %s1, 4
  %v1313 = vld [vmem:[%s1312] sm:$0x3]
  %v1315 = vsel %vm27, %v1280, 0
  %v1318 = vsel %vm27, %v1281, 0
  %v1321 = vsel %vm27, %v1282, 0
  %v1324 = vsel %vm27, %v1283, 0
  %v1327 = vsel %vm27, %v1284, 0
  %v1330 = vsel %vm27, %v1285, 0
  %v1333 = vsel %vm27, %v1286, 0
  %v1336 = vsel %vm27, %v1287, 0
  %v1339 = vsel %vm27, %v1288, 0
  %v1342 = vsel %vm27, %v1289, 0
  %v1345 = vsel %vm27, %v1290, 0
  %v1348 = vsel %vm27, %v1291, 0
  %v1351 = vsel %vm27, %v1292, 0
  %v1354 = vsel %vm27, %v1293, 0
  %v1357 = vsel %vm27, %v1294, 0
  %v1360 = vsel %vm27, %v1295, 0
  %v1363 = vsel %vm27, %v1296, 0
  %v1366 = vsel %vm27, %v1297, 0
  %v1369 = vsel %vm27, %v1298, 0
  %v1372 = vsel %vm27, %v1299, 0
  %v1375 = vsel %vm27, %v1300, 0
  %v1378 = vsel %vm27, %v1301, 0
  %v1381 = vsel %vm27, %v1302, 0
  %v1384 = vsel %vm27, %v1303, 0
  %v1387 = vsel %vm27, %v1304, 0
  %v1390 = vsel %vm27, %v1305, 0
  %v1393 = vsel %vm27, %v1306, 0
  %v1396 = vsel %vm27, %v1307, 0
  %v1399 = vsel %vm27, %v1308, 0
  %v1402 = vsel %vm27, %v1309, 0
  %v1405 = vsel %vm27, %v1310, 0
  %v1408 = vsel %vm27, %v1311, 0
  %v1411 = vsel %vm535, %v1313, 0
  %1413 = vmatprep.subr.bf16.mxu0 0
  %1414 = vmatpush1.bf16.msra.mxu0 %v1411
  %1415 = vmatprep.subr.bf16.mxu0 0
  %1416 = vmatpush1.bf16.msra.mxu0 0
  %1417 = vmatprep.subr.bf16.mxu0 0
  %1418 = vmatpush1.bf16.msra.mxu0 0
  %1419 = vmatprep.subr.bf16.mxu0 0
  %1420 = vmatpush1.bf16.msra.mxu0 0
  %1421 = vmatprep.subr.bf16.mxu0 0
  %1422 = vmatpush1.bf16.msra.mxu0 0
  %1423 = vmatprep.subr.bf16.mxu0 0
  %1424 = vmatpush1.bf16.msra.mxu0 0
  %1425 = vmatprep.subr.bf16.mxu0 0
  %1426 = vmatpush1.bf16.msra.mxu0 0
  %1427 = vmatprep.subr.bf16.mxu0 0
  %1428 = vmatpush1.bf16.msra.mxu0 0
  %1429 = vmatprep.subr.bf16.mxu0 0
  %1430 = vmatpush1.bf16.msra.mxu0 0
  %1431 = vmatprep.subr.bf16.mxu0 0
  %1432 = vmatpush1.bf16.msra.mxu0 0
  %1433 = vmatprep.subr.bf16.mxu0 0
  %1434 = vmatpush1.bf16.msra.mxu0 0
  %1435 = vmatprep.subr.bf16.mxu0 0
  %1436 = vmatpush1.bf16.msra.mxu0 0
  %1437 = vmatprep.subr.bf16.mxu0 0
  %1438 = vmatpush1.bf16.msra.mxu0 0
  %1439 = vmatprep.subr.bf16.mxu0 0
  %1440 = vmatpush1.bf16.msra.mxu0 0
  %1441 = vmatprep.subr.bf16.mxu0 0
  %1442 = vmatpush1.bf16.msra.mxu0 0
  %1443 = vmatprep.subr.bf16.mxu0 0
  %1444 = vmatpush1.bf16.msra.mxu0 0
  %1445 = vmatprep.mubr.bf16.mxu0 0
  %1446 = vmatmul.mubr.bf16.gmra.mrb[0].mxu0 %v1315
  %v1447 = vpop.f32.mrb[0].mxu0
  %v1448 = vadd.f32 0.0, %v1447
  %v1449 = vpop.f32.mrb[0].mxu0
  %v1450 = vpop.f32.mrb[0].mxu0
  %v1451 = vadd.f32 0.0, %v1450
  %v1452 = vpop.f32.mrb[0].mxu0
  %1453 = vmatprep.mubr.bf16.mxu0 0
  %1454 = vmatmul.mubr.bf16.gmra.mrb[0].mxu0 %v1318
  %v1455 = vpop.f32.mrb[0].mxu0
  %v1456 = vadd.f32 0.0, %v1455
  %v1457 = vpop.f32.mrb[0].mxu0
  %v1458 = vpop.f32.mrb[0].mxu0
  %v1459 = vadd.f32 0.0, %v1458
  %v1460 = vpop.f32.mrb[0].mxu0
  %1461 = vmatprep.mubr.bf16.mxu0 0
  %1462 = vmatmul.mubr.bf16.gmra.mrb[0].mxu0 %v1321
  %v1463 = vpop.f32.mrb[0].mxu0
  %v1464 = vadd.f32 0.0, %v1463
  %v1465 = vpop.f32.mrb[0].mxu0
  %v1466 = vpop.f32.mrb[0].mxu0
  %v1467 = vadd.f32 0.0, %v1466
  %v1468 = vpop.f32.mrb[0].mxu0
  %1469 = vmatprep.mubr.bf16.mxu0 0
  %1470 = vmatmul.mubr.bf16.gmra.mrb[0].mxu0 %v1324
  %v1471 = vpop.f32.mrb[0].mxu0
  %v1472 = vadd.f32 0.0, %v1471
  %v1473 = vpop.f32.mrb[0].mxu0
  %v1474 = vpop.f32.mrb[0].mxu0
  %v1475 = vadd.f32 0.0, %v1474
  %v1476 = vpop.f32.mrb[0].mxu0
  %1477 = vmatprep.mubr.bf16.mxu0 0
  %1478 = vmatmul.mubr.bf16.gmra.mrb[0].mxu0 %v1327
  %v1479 = vpop.f32.mrb[0].mxu0
  %v1480 = vadd.f32 0.0, %v1479
  %v1481 = vpop.f32.mrb[0].mxu0
  %v1482 = vpop.f32.mrb[0].mxu0
  %v1483 = vadd.f32 0.0, %v1482
  %v1484 = vpop.f32.mrb[0].mxu0
  %1485 = vmatprep.mubr.bf16.mxu0 0
  %1486 = vmatmul.mubr.bf16.gmra.mrb[0].mxu0 %v1330
  %v1487 = vpop.f32.mrb[0].mxu0
  %v1488 = vadd.f32 0.0, %v1487
  %v1489 = vpop.f32.mrb[0].mxu0
  %v1490 = vpop.f32.mrb[0].mxu0
  %v1491 = vadd.f32 0.0, %v1490
  %v1492 = vpop.f32.mrb[0].mxu0
  %1493 = vmatprep.mubr.bf16.mxu0 0
  %1494 = vmatmul.mubr.bf16.gmra.mrb[0].mxu0 %v1333
  %v1495 = vpop.f32.mrb[0].mxu0
  %v1496 = vadd.f32 0.0, %v1495
  %v1497 = vpop.f32.mrb[0].mxu0
  %v1498 = vpop.f32.mrb[0].mxu0
  %v1499 = vadd.f32 0.0, %v1498
  %v1500 = vpop.f32.mrb[0].mxu0
  %1501 = vmatprep.mubr.bf16.mxu0 0
  %1502 = vmatmul.mubr.bf16.gmra.mrb[0].mxu0 %v1336
  %v1503 = vpop.f32.mrb[0].mxu0
  %v1504 = vadd.f32 0.0, %v1503
  %v1505 = vpop.f32.mrb[0].mxu0
  %v1506 = vpop.f32.mrb[0].mxu0
  %v1507 = vadd.f32 0.0, %v1506
  %v1508 = vpop.f32.mrb[0].mxu0
  %1509 = vmatprep.mubr.bf16.mxu0 0
  %1510 = vmatmul.mubr.bf16.gmra.mrb[0].mxu0 %v1339
  %v1511 = vpop.f32.mrb[0].mxu0
  %v1512 = vadd.f32 0.0, %v1511
  %v1513 = vpop.f32.mrb[0].mxu0
  %v1514 = vpop.f32.mrb[0].mxu0
  %v1515 = vadd.f32 0.0, %v1514
  %v1516 = vpop.f32.mrb[0].mxu0
  %1517 = vmatprep.mubr.bf16.mxu0 0
  %1518 = vmatmul.mubr.bf16.gmra.mrb[0].mxu0 %v1342
  %v1519 = vpop.f32.mrb[0].mxu0
  %v1520 = vadd.f32 0.0, %v1519
  %v1521 = vpop.f32.mrb[0].mxu0
  %v1522 = vpop.f32.mrb[0].mxu0
  %v1523 = vadd.f32 0.0, %v1522
  %v1524 = vpop.f32.mrb[0].mxu0
  %1525 = vmatprep.mubr.bf16.mxu0 0
  %1526 = vmatmul.mubr.bf16.gmra.mrb[0].mxu0 %v1345
  %v1527 = vpop.f32.mrb[0].mxu0
  %v1528 = vadd.f32 0.0, %v1527
  %v1529 = vpop.f32.mrb[0].mxu0
  %v1530 = vpop.f32.mrb[0].mxu0
  %v1531 = vadd.f32 0.0, %v1530
  %v1532 = vpop.f32.mrb[0].mxu0
  %1533 = vmatprep.mubr.bf16.mxu0 0
  %1534 = vmatmul.mubr.bf16.gmra.mrb[0].mxu0 %v1348
  %v1535 = vpop.f32.mrb[0].mxu0
  %v1536 = vadd.f32 0.0, %v1535
  %v1537 = vpop.f32.mrb[0].mxu0
  %v1538 = vpop.f32.mrb[0].mxu0
  %v1539 = vadd.f32 0.0, %v1538
  %v1540 = vpop.f32.mrb[0].mxu0
  %1541 = vmatprep.mubr.bf16.mxu0 0
  %1542 = vmatmul.mubr.bf16.gmra.mrb[0].mxu0 %v1351
  %v1543 = vpop.f32.mrb[0].mxu0
  %v1544 = vadd.f32 0.0, %v1543
  %v1545 = vpop.f32.mrb[0].mxu0
  %v1546 = vpop.f32.mrb[0].mxu0
  %v1547 = vadd.f32 0.0, %v1546
  %v1548 = vpop.f32.mrb[0].mxu0
  %1549 = vmatprep.mubr.bf16.mxu0 0
  %1550 = vmatmul.mubr.bf16.gmra.mrb[0].mxu0 %v1354
  %v1551 = vpop.f32.mrb[0].mxu0
  %v1552 = vadd.f32 0.0, %v1551
  %v1553 = vpop.f32.mrb[0].mxu0
  %v1554 = vpop.f32.mrb[0].mxu0
  %v1555 = vadd.f32 0.0, %v1554
  %v1556 = vpop.f32.mrb[0].mxu0
  %1557 = vmatprep.mubr.bf16.mxu0 0
  %1558 = vmatmul.mubr.bf16.gmra.mrb[0].mxu0 %v1357
  %v1559 = vpop.f32.mrb[0].mxu0
  %v1560 = vadd.f32 0.0, %v1559
  %v1561 = vpop.f32.mrb[0].mxu0
  %v1562 = vpop.f32.mrb[0].mxu0
  %v1563 = vadd.f32 0.0, %v1562
  %v1564 = vpop.f32.mrb[0].mxu0
  %1565 = vmatprep.mubr.bf16.mxu0 0
  %1566 = vmatmul.mubr.bf16.gmra.mrb[0].mxu0 %v1360
  %v1567 = vpop.f32.mrb[0].mxu0
  %v1568 = vadd.f32 0.0, %v1567
  %v1569 = vpop.f32.mrb[0].mxu0
  %v1570 = vpop.f32.mrb[0].mxu0
  %v1571 = vadd.f32 0.0, %v1570
  %v1572 = vpop.f32.mrb[0].mxu0
  %1573 = vmatprep.mubr.bf16.mxu0 0
  %1574 = vmatmul.mubr.bf16.gmra.mrb[0].mxu0 %v1363
  %v1575 = vpop.f32.mrb[0].mxu0
  %v1576 = vadd.f32 0.0, %v1575
  %v1577 = vpop.f32.mrb[0].mxu0
  %v1578 = vpop.f32.mrb[0].mxu0
  %v1579 = vadd.f32 0.0, %v1578
  %v1580 = vpop.f32.mrb[0].mxu0
  %1581 = vmatprep.mubr.bf16.mxu0 0
  %1582 = vmatmul.mubr.bf16.gmra.mrb[0].mxu0 %v1366
  %v1583 = vpop.f32.mrb[0].mxu0
  %v1584 = vadd.f32 0.0, %v1583
  %v1585 = vpop.f32.mrb[0].mxu0
  %v1586 = vpop.f32.mrb[0].mxu0
  %v1587 = vadd.f32 0.0, %v1586
  %v1588 = vpop.f32.mrb[0].mxu0
  %1589 = vmatprep.mubr.bf16.mxu0 0
  %1590 = vmatmul.mubr.bf16.gmra.mrb[0].mxu0 %v1369
  %v1591 = vpop.f32.mrb[0].mxu0
  %v1592 = vadd.f32 0.0, %v1591
  %v1593 = vpop.f32.mrb[0].mxu0
  %v1594 = vpop.f32.mrb[0].mxu0
  %v1595 = vadd.f32 0.0, %v1594
  %v1596 = vpop.f32.mrb[0].mxu0
  %1597 = vmatprep.mubr.bf16.mxu0 0
  %1598 = vmatmul.mubr.bf16.gmra.mrb[0].mxu0 %v1372
  %v1599 = vpop.f32.mrb[0].mxu0
  %v1600 = vadd.f32 0.0, %v1599
  %v1601 = vpop.f32.mrb[0].mxu0
  %v1602 = vpop.f32.mrb[0].mxu0
  %v1603 = vadd.f32 0.0, %v1602
  %v1604 = vpop.f32.mrb[0].mxu0
  %1605 = vmatprep.mubr.bf16.mxu0 0
  %1606 = vmatmul.mubr.bf16.gmra.mrb[0].mxu0 %v1375
  %v1607 = vpop.f32.mrb[0].mxu0
  %v1608 = vadd.f32 0.0, %v1607
  %v1609 = vpop.f32.mrb[0].mxu0
  %v1610 = vpop.f32.mrb[0].mxu0
  %v1611 = vadd.f32 0.0, %v1610
  %v1612 = vpop.f32.mrb[0].mxu0
  %1613 = vmatprep.mubr.bf16.mxu0 0
  %1614 = vmatmul.mubr.bf16.gmra.mrb[0].mxu0 %v1378
  %v1615 = vpop.f32.mrb[0].mxu0
  %v1616 = vadd.f32 0.0, %v1615
  %v1617 = vpop.f32.mrb[0].mxu0
  %v1618 = vpop.f32.mrb[0].mxu0
  %v1619 = vadd.f32 0.0, %v1618
  %v1620 = vpop.f32.mrb[0].mxu0
  %1621 = vmatprep.mubr.bf16.mxu0 0
  %1622 = vmatmul.mubr.bf16.gmra.mrb[0].mxu0 %v1381
  %v1623 = vpop.f32.mrb[0].mxu0
  %v1624 = vadd.f32 0.0, %v1623
  %v1625 = vpop.f32.mrb[0].mxu0
  %v1626 = vpop.f32.mrb[0].mxu0
  %v1627 = vadd.f32 0.0, %v1626
  %v1628 = vpop.f32.mrb[0].mxu0
  %1629 = vmatprep.mubr.bf16.mxu0 0
  %1630 = vmatmul.mubr.bf16.gmra.mrb[0].mxu0 %v1384
  %v1631 = vpop.f32.mrb[0].mxu0
  %v1632 = vadd.f32 0.0, %v1631
  %v1633 = vpop.f32.mrb[0].mxu0
  %v1634 = vpop.f32.mrb[0].mxu0
  %v1635 = vadd.f32 0.0, %v1634
  %v1636 = vpop.f32.mrb[0].mxu0
  %1637 = vmatprep.mubr.bf16.mxu0 0
  %1638 = vmatmul.mubr.bf16.gmra.mrb[0].mxu0 %v1387
  %v1639 = vpop.f32.mrb[0].mxu0
  %v1640 = vadd.f32 0.0, %v1639
  %v1641 = vpop.f32.mrb[0].mxu0
  %v1642 = vpop.f32.mrb[0].mxu0
  %v1643 = vadd.f32 0.0, %v1642
  %v1644 = vpop.f32.mrb[0].mxu0
  %1645 = vmatprep.mubr.bf16.mxu0 0
  %1646 = vmatmul.mubr.bf16.gmra.mrb[0].mxu0 %v1390
  %v1647 = vpop.f32.mrb[0].mxu0
  %v1648 = vadd.f32 0.0, %v1647
  %v1649 = vpop.f32.mrb[0].mxu0
  %v1650 = vpop.f32.mrb[0].mxu0
  %v1651 = vadd.f32 0.0, %v1650
  %v1652 = vpop.f32.mrb[0].mxu0
  %1653 = vmatprep.mubr.bf16.mxu0 0
  %1654 = vmatmul.mubr.bf16.gmra.mrb[0].mxu0 %v1393
  %v1655 = vpop.f32.mrb[0].mxu0
  %v1656 = vadd.f32 0.0, %v1655
  %v1657 = vpop.f32.mrb[0].mxu0
  %v1658 = vpop.f32.mrb[0].mxu0
  %v1659 = vadd.f32 0.0, %v1658
  %v1660 = vpop.f32.mrb[0].mxu0
  %1661 = vmatprep.mubr.bf16.mxu0 0
  %1662 = vmatmul.mubr.bf16.gmra.mrb[0].mxu0 %v1396
  %v1663 = vpop.f32.mrb[0].mxu0
  %v1664 = vadd.f32 0.0, %v1663
  %v1665 = vpop.f32.mrb[0].mxu0
  %v1666 = vpop.f32.mrb[0].mxu0
  %v1667 = vadd.f32 0.0, %v1666
  %v1668 = vpop.f32.mrb[0].mxu0
  %1669 = vmatprep.mubr.bf16.mxu0 0
  %1670 = vmatmul.mubr.bf16.gmra.mrb[0].mxu0 %v1399
  %v1671 = vpop.f32.mrb[0].mxu0
  %v1672 = vadd.f32 0.0, %v1671
  %v1673 = vpop.f32.mrb[0].mxu0
  %v1674 = vpop.f32.mrb[0].mxu0
  %v1675 = vadd.f32 0.0, %v1674
  %v1676 = vpop.f32.mrb[0].mxu0
  %1677 = vmatprep.mubr.bf16.mxu0 0
  %1678 = vmatmul.mubr.bf16.gmra.mrb[0].mxu0 %v1402
  %v1679 = vpop.f32.mrb[0].mxu0
  %v1680 = vadd.f32 0.0, %v1679
  %v1681 = vpop.f32.mrb[0].mxu0
  %v1682 = vpop.f32.mrb[0].mxu0
  %v1683 = vadd.f32 0.0, %v1682
  %v1684 = vpop.f32.mrb[0].mxu0
  %1685 = vmatprep.mubr.bf16.mxu0 0
  %1686 = vmatmul.mubr.bf16.gmra.mrb[0].mxu0 %v1405
  %v1687 = vpop.f32.mrb[0].mxu0
  %v1688 = vadd.f32 0.0, %v1687
  %v1689 = vpop.f32.mrb[0].mxu0
  %v1690 = vpop.f32.mrb[0].mxu0
  %v1691 = vadd.f32 0.0, %v1690
  %v1692 = vpop.f32.mrb[0].mxu0
  %1693 = vmatprep.mubr.bf16.mxu0 0
  %1694 = vmatmul.mubr.bf16.gmra.mrb[0].mxu0 %v1408
  %v1695 = vpop.f32.mrb[0].mxu0
  %v1696 = vadd.f32 0.0, %v1695
  %v1697 = vpop.f32.mrb[0].mxu0
  %v1698 = vpop.f32.mrb[0].mxu0
  %v1699 = vadd.f32 0.0, %v1698
  %v1700 = vpop.f32.mrb[0].mxu0
  %1701 = vdwg.mxu0
  %v1702 = vadd.f32 %v962, %v1448
  %v1703 = vadd.f32 %v965, %v1451
  %v1704 = vadd.f32 %v970, %v1456
  %v1705 = vadd.f32 %v973, %v1459
  %v1706 = vadd.f32 %v978, %v1464
  %v1707 = vadd.f32 %v981, %v1467
  %v1708 = vadd.f32 %v986, %v1472
  %v1709 = vadd.f32 %v989, %v1475
  %v1710 = vadd.f32 %v994, %v1480
  %v1711 = vadd.f32 %v997, %v1483
  %v1712 = vadd.f32 %v1002, %v1488
  %v1713 = vadd.f32 %v1005, %v1491
  %v1714 = vadd.f32 %v1010, %v1496
  %v1715 = vadd.f32 %v1013, %v1499
  %v1716 = vadd.f32 %v1018, %v1504
  %v1717 = vadd.f32 %v1021, %v1507
  %v1718 = vadd.f32 %v1026, %v1512
  %v1719 = vadd.f32 %v1029, %v1515
  %v1720 = vadd.f32 %v1034, %v1520
  %v1721 = vadd.f32 %v1037, %v1523
  %v1722 = vadd.f32 %v1042, %v1528
  %v1723 = vadd.f32 %v1045, %v1531
  %v1724 = vadd.f32 %v1050, %v1536
  %v1725 = vadd.f32 %v1053, %v1539
  %v1726 = vadd.f32 %v1058, %v1544
  %v1727 = vadd.f32 %v1061, %v1547
  %v1728 = vadd.f32 %v1066, %v1552
  %v1729 = vadd.f32 %v1069, %v1555
  %v1730 = vadd.f32 %v1074, %v1560
  %v1731 = vadd.f32 %v1077, %v1563
  %v1732 = vadd.f32 %v1082, %v1568
  %v1733 = vadd.f32 %v1085, %v1571
  %v1734 = vadd.f32 %v1090, %v1576
  %v1735 = vadd.f32 %v1093, %v1579
  %v1736 = vadd.f32 %v1098, %v1584
  %v1737 = vadd.f32 %v1101, %v1587
  %v1738 = vadd.f32 %v1106, %v1592
  %v1739 = vadd.f32 %v1109, %v1595
  %v1740 = vadd.f32 %v1114, %v1600
  %v1741 = vadd.f32 %v1117, %v1603
  %v1742 = vadd.f32 %v1122, %v1608
  %v1743 = vadd.f32 %v1125, %v1611
  %v1744 = vadd.f32 %v1130, %v1616
  %v1745 = vadd.f32 %v1133, %v1619
  %v1746 = vadd.f32 %v1138, %v1624
  %v1747 = vadd.f32 %v1141, %v1627
  %v1748 = vadd.f32 %v1146, %v1632
  %v1749 = vadd.f32 %v1149, %v1635
  %v1750 = vadd.f32 %v1154, %v1640
  %v1751 = vadd.f32 %v1157, %v1643
  %v1752 = vadd.f32 %v1162, %v1648
  %v1753 = vadd.f32 %v1165, %v1651
  %v1754 = vadd.f32 %v1170, %v1656
  %v1755 = vadd.f32 %v1173, %v1659
  %v1756 = vadd.f32 %v1178, %v1664
  %v1757 = vadd.f32 %v1181, %v1667
  %v1758 = vadd.f32 %v1186, %v1672
  %v1759 = vadd.f32 %v1189, %v1675
  %v1760 = vadd.f32 %v1194, %v1680
  %v1761 = vadd.f32 %v1197, %v1683
  %v1762 = vadd.f32 %v1202, %v1688
  %v1763 = vadd.f32 %v1205, %v1691
  %v1764 = vadd.f32 %v1210, %v1696
  %v1765 = vadd.f32 %v1213, %v1699
  %v1766 = vld [vmem:[%s179] sm:$0xff]
  %v1767 = vld [vmem:[%s179 + $0x8] sm:$0xff]
  %v1768 = vld [vmem:[%s179 + $0x18] sm:$0xff]
  %v1769 = vld [vmem:[%s179 + $0x20] sm:$0xff]
  %v1770 = vld [vmem:[%s179 + $0x30] sm:$0xff]
  %v1771 = vld [vmem:[%s179 + $0x38] sm:$0xff]
  %v1772 = vld [vmem:[%s179 + $0x48] sm:$0xff]
  %v1773 = vld [vmem:[%s179 + $0x50] sm:$0xff]
  %v1774 = vld [vmem:[%s179 + $0x60] sm:$0xff]
  %v1775 = vld [vmem:[%s179 + $0x68] sm:$0xff]
  %v1776 = vld [vmem:[%s179 + $0x78] sm:$0xff]
  %v1777 = vld [vmem:[%s179 + $0x80] sm:$0xff]
  %v1778 = vld [vmem:[%s179 + $0x90] sm:$0xff]
  %v1779 = vld [vmem:[%s179 + $0x98] sm:$0xff]
  %v1780 = vld [vmem:[%s179 + $0xa8] sm:$0xff]
  %v1781 = vld [vmem:[%s179 + $0xb0] sm:$0xff]
  %v1782 = vld [vmem:[%s179 + $0xc0] sm:$0xff]
  %v1783 = vld [vmem:[%s179 + $0xc8] sm:$0xff]
  %v1784 = vld [vmem:[%s179 + $0xd8] sm:$0xff]
  %v1785 = vld [vmem:[%s179 + $0xe0] sm:$0xff]
  %v1786 = vld [vmem:[%s179 + $0xf0] sm:$0xff]
  %v1787 = vld [vmem:[%s179 + $0xf8] sm:$0xff]
  %v1788 = vld [vmem:[%s179 + $0x108] sm:$0xff]
  %v1789 = vld [vmem:[%s179 + $0x110] sm:$0xff]
  %v1790 = vld [vmem:[%s179 + $0x120] sm:$0xff]
  %v1791 = vld [vmem:[%s179 + $0x128] sm:$0xff]
  %v1792 = vld [vmem:[%s179 + $0x138] sm:$0xff]
  %v1793 = vld [vmem:[%s179 + $0x140] sm:$0xff]
  %v1794 = vld [vmem:[%s179 + $0x150] sm:$0xff]
  %v1795 = vld [vmem:[%s179 + $0x158] sm:$0xff]
  %v1796 = vld [vmem:[%s179 + $0x168] sm:$0xff]
  %v1797 = vld [vmem:[%s179 + $0x170] sm:$0xff]
  %v1798 = vld [vmem:[%s179 + $0x1b0] sm:$0xff]
  %v1799 = vld [vmem:[%s179 + $0x1b8] sm:$0xff]
  %v1800 = vld [vmem:[%s179 + $0x1c8] sm:$0xff]
  %v1801 = vld [vmem:[%s179 + $0x1d0] sm:$0xff]
  %v1802 = vld [vmem:[%s179 + $0x1e0] sm:$0xff]
  %v1803 = vld [vmem:[%s179 + $0x1e8] sm:$0xff]
  %v1804 = vld [vmem:[%s179 + $0x1f8] sm:$0xff]
  %v1805 = vld [vmem:[%s179 + $0x200] sm:$0xff]
  %v1806 = vld [vmem:[%s179 + $0x210] sm:$0xff]
  %v1807 = vld [vmem:[%s179 + $0x218] sm:$0xff]
  %v1808 = vld [vmem:[%s179 + $0x228] sm:$0xff]
  %v1809 = vld [vmem:[%s179 + $0x230] sm:$0xff]
  %v1810 = vld [vmem:[%s179 + $0x240] sm:$0xff]
  %v1811 = vld [vmem:[%s179 + $0x248] sm:$0xff]
  %v1812 = vld [vmem:[%s179 + $0x258] sm:$0xff]
  %v1813 = vld [vmem:[%s179 + $0x260] sm:$0xff]
  %v1814 = vld [vmem:[%s179 + $0x270] sm:$0xff]
  %v1815 = vld [vmem:[%s179 + $0x278] sm:$0xff]
  %v1816 = vld [vmem:[%s179 + $0x288] sm:$0xff]
  %v1817 = vld [vmem:[%s179 + $0x290] sm:$0xff]
  %v1818 = vld [vmem:[%s179 + $0x2a0] sm:$0xff]
  %v1819 = vld [vmem:[%s179 + $0x2a8] sm:$0xff]
  %v1820 = vld [vmem:[%s179 + $0x2b8] sm:$0xff]
  %v1821 = vld [vmem:[%s179 + $0x2c0] sm:$0xff]
  %v1822 = vld [vmem:[%s179 + $0x2d0] sm:$0xff]
  %v1823 = vld [vmem:[%s179 + $0x2d8] sm:$0xff]
  %v1824 = vld [vmem:[%s179 + $0x2e8] sm:$0xff]
  %v1825 = vld [vmem:[%s179 + $0x2f0] sm:$0xff]
  %v1826 = vld [vmem:[%s179 + $0x300] sm:$0xff]
  %v1827 = vld [vmem:[%s179 + $0x308] sm:$0xff]
  %v1828 = vld [vmem:[%s179 + $0x318] sm:$0xff]
  %v1829 = vld [vmem:[%s179 + $0x320] sm:$0xff]
  %v1830 = vpack.c.bf16 %v1767, %v1766
  %v1831 = vpack.c.bf16 %v1769, %v1768
  %v1832 = vpack.c.bf16 %v1771, %v1770
  %v1833 = vpack.c.bf16 %v1773, %v1772
  %v1834 = vpack.c.bf16 %v1775, %v1774
  %v1835 = vpack.c.bf16 %v1777, %v1776
  %v1836 = vpack.c.bf16 %v1779, %v1778
  %v1837 = vpack.c.bf16 %v1781, %v1780
  %v1838 = vpack.c.bf16 %v1783, %v1782
  %v1839 = vpack.c.bf16 %v1785, %v1784
  %v1840 = vpack.c.bf16 %v1787, %v1786
  %v1841 = vpack.c.bf16 %v1789, %v1788
  %v1842 = vpack.c.bf16 %v1791, %v1790
  %v1843 = vpack.c.bf16 %v1793, %v1792
  %v1844 = vpack.c.bf16 %v1795, %v1794
  %v1845 = vpack.c.bf16 %v1797, %v1796
  %v1846 = vpack.c.bf16 %v1799, %v1798
  %v1847 = vpack.c.bf16 %v1801, %v1800
  %v1848 = vpack.c.bf16 %v1803, %v1802
  %v1849 = vpack.c.bf16 %v1805, %v1804
  %v1850 = vpack.c.bf16 %v1807, %v1806
  %v1851 = vpack.c.bf16 %v1809, %v1808
  %v1852 = vpack.c.bf16 %v1811, %v1810
  %v1853 = vpack.c.bf16 %v1813, %v1812
  %v1854 = vpack.c.bf16 %v1815, %v1814
  %v1855 = vpack.c.bf16 %v1817, %v1816
  %v1856 = vpack.c.bf16 %v1819, %v1818
  %v1857 = vpack.c.bf16 %v1821, %v1820
  %v1858 = vpack.c.bf16 %v1823, %v1822
  %v1859 = vpack.c.bf16 %v1825, %v1824
  %v1860 = vpack.c.bf16 %v1827, %v1826
  %v1861 = vpack.c.bf16 %v1829, %v1828
  %s1862 = scalar_lea.vmem %s1, 6
  %v1863 = vld [vmem:[%s1862] sm:$0x3]
  %v1865 = vsel %vm27, %v1830, 0
  %v1868 = vsel %vm27, %v1831, 0
  %v1871 = vsel %vm27, %v1832, 0
  %v1874 = vsel %vm27, %v1833, 0
  %v1877 = vsel %vm27, %v1834, 0
  %v1880 = vsel %vm27, %v1835, 0
  %v1883 = vsel %vm27, %v1836, 0
  %v1886 = vsel %vm27, %v1837, 0
  %v1889 = vsel %vm27, %v1838, 0
  %v1892 = vsel %vm27, %v1839, 0
  %v1895 = vsel %vm27, %v1840, 0
  %v1898 = vsel %vm27, %v1841, 0
  %v1901 = vsel %vm27, %v1842, 0
  %v1904 = vsel %vm27, %v1843, 0
  %v1907 = vsel %vm27, %v1844, 0
  %v1910 = vsel %vm27, %v1845, 0
  %v1913 = vsel %vm27, %v1846, 0
  %v1916 = vsel %vm27, %v1847, 0
  %v1919 = vsel %vm27, %v1848, 0
  %v1922 = vsel %vm27, %v1849, 0
  %v1925 = vsel %vm27, %v1850, 0
  %v1928 = vsel %vm27, %v1851, 0
  %v1931 = vsel %vm27, %v1852, 0
  %v1934 = vsel %vm27, %v1853, 0
  %v1937 = vsel %vm27, %v1854, 0
  %v1940 = vsel %vm27, %v1855, 0
  %v1943 = vsel %vm27, %v1856, 0
  %v1946 = vsel %vm27, %v1857, 0
  %v1949 = vsel %vm27, %v1858, 0
  %v1952 = vsel %vm27, %v1859, 0
  %v1955 = vsel %vm27, %v1860, 0
  %v1958 = vsel %vm27, %v1861, 0
  %v1961 = vsel %vm535, %v1863, 0
  %1963 = vmatprep.subr.bf16.mxu0 0
  %1964 = vmatpush1.bf16.msra.mxu0 %v1961
  %1965 = vmatprep.subr.bf16.mxu0 0
  %1966 = vmatpush1.bf16.msra.mxu0 0
  %1967 = vmatprep.subr.bf16.mxu0 0
  %1968 = vmatpush1.bf16.msra.mxu0 0
  %1969 = vmatprep.subr.bf16.mxu0 0
  %1970 = vmatpush1.bf16.msra.mxu0 0
  %1971 = vmatprep.subr.bf16.mxu0 0
  %1972 = vmatpush1.bf16.msra.mxu0 0
  %1973 = vmatprep.subr.bf16.mxu0 0
  %1974 = vmatpush1.bf16.msra.mxu0 0
  %1975 = vmatprep.subr.bf16.mxu0 0
  %1976 = vmatpush1.bf16.msra.mxu0 0
  %1977 = vmatprep.subr.bf16.mxu0 0
  %1978 = vmatpush1.bf16.msra.mxu0 0
  %1979 = vmatprep.subr.bf16.mxu0 0
  %1980 = vmatpush1.bf16.msra.mxu0 0
  %1981 = vmatprep.subr.bf16.mxu0 0
  %1982 = vmatpush1.bf16.msra.mxu0 0
  %1983 = vmatprep.subr.bf16.mxu0 0
  %1984 = vmatpush1.bf16.msra.mxu0 0
  %1985 = vmatprep.subr.bf16.mxu0 0
  %1986 = vmatpush1.bf16.msra.mxu0 0
  %1987 = vmatprep.subr.bf16.mxu0 0
  %1988 = vmatpush1.bf16.msra.mxu0 0
  %1989 = vmatprep.subr.bf16.mxu0 0
  %1990 = vmatpush1.bf16.msra.mxu0 0
  %1991 = vmatprep.subr.bf16.mxu0 0
  %1992 = vmatpush1.bf16.msra.mxu0 0
  %1993 = vmatprep.subr.bf16.mxu0 0
  %1994 = vmatpush1.bf16.msra.mxu0 0
  %1995 = vmatprep.mubr.bf16.mxu0 0
  %1996 = vmatmul.mubr.bf16.gmra.mrb[0].mxu0 %v1865
  %v1997 = vpop.f32.mrb[0].mxu0
  %v1998 = vadd.f32 0.0, %v1997
  %v1999 = vpop.f32.mrb[0].mxu0
  %v2000 = vpop.f32.mrb[0].mxu0
  %v2001 = vadd.f32 0.0, %v2000
  %v2002 = vpop.f32.mrb[0].mxu0
  %2003 = vmatprep.mubr.bf16.mxu0 0
  %2004 = vmatmul.mubr.bf16.gmra.mrb[0].mxu0 %v1868
  %v2005 = vpop.f32.mrb[0].mxu0
  %v2006 = vadd.f32 0.0, %v2005
  %v2007 = vpop.f32.mrb[0].mxu0
  %v2008 = vpop.f32.mrb[0].mxu0
  %v2009 = vadd.f32 0.0, %v2008
  %v2010 = vpop.f32.mrb[0].mxu0
  %2011 = vmatprep.mubr.bf16.mxu0 0
  %2012 = vmatmul.mubr.bf16.gmra.mrb[0].mxu0 %v1871
  %v2013 = vpop.f32.mrb[0].mxu0
  %v2014 = vadd.f32 0.0, %v2013
  %v2015 = vpop.f32.mrb[0].mxu0
  %v2016 = vpop.f32.mrb[0].mxu0
  %v2017 = vadd.f32 0.0, %v2016
  %v2018 = vpop.f32.mrb[0].mxu0
  %2019 = vmatprep.mubr.bf16.mxu0 0
  %2020 = vmatmul.mubr.bf16.gmra.mrb[0].mxu0 %v1874
  %v2021 = vpop.f32.mrb[0].mxu0
  %v2022 = vadd.f32 0.0, %v2021
  %v2023 = vpop.f32.mrb[0].mxu0
  %v2024 = vpop.f32.mrb[0].mxu0
  %v2025 = vadd.f32 0.0, %v2024
  %v2026 = vpop.f32.mrb[0].mxu0
  %2027 = vmatprep.mubr.bf16.mxu0 0
  %2028 = vmatmul.mubr.bf16.gmra.mrb[0].mxu0 %v1877
  %v2029 = vpop.f32.mrb[0].mxu0
  %v2030 = vadd.f32 0.0, %v2029
  %v2031 = vpop.f32.mrb[0].mxu0
  %v2032 = vpop.f32.mrb[0].mxu0
  %v2033 = vadd.f32 0.0, %v2032
  %v2034 = vpop.f32.mrb[0].mxu0
  %2035 = vmatprep.mubr.bf16.mxu0 0
  %2036 = vmatmul.mubr.bf16.gmra.mrb[0].mxu0 %v1880
  %v2037 = vpop.f32.mrb[0].mxu0
  %v2038 = vadd.f32 0.0, %v2037
  %v2039 = vpop.f32.mrb[0].mxu0
  %v2040 = vpop.f32.mrb[0].mxu0
  %v2041 = vadd.f32 0.0, %v2040
  %v2042 = vpop.f32.mrb[0].mxu0
  %2043 = vmatprep.mubr.bf16.mxu0 0
  %2044 = vmatmul.mubr.bf16.gmra.mrb[0].mxu0 %v1883
  %v2045 = vpop.f32.mrb[0].mxu0
  %v2046 = vadd.f32 0.0, %v2045
  %v2047 = vpop.f32.mrb[0].mxu0
  %v2048 = vpop.f32.mrb[0].mxu0
  %v2049 = vadd.f32 0.0, %v2048
  %v2050 = vpop.f32.mrb[0].mxu0
  %2051 = vmatprep.mubr.bf16.mxu0 0
  %2052 = vmatmul.mubr.bf16.gmra.mrb[0].mxu0 %v1886
  %v2053 = vpop.f32.mrb[0].mxu0
  %v2054 = vadd.f32 0.0, %v2053
  %v2055 = vpop.f32.mrb[0].mxu0
  %v2056 = vpop.f32.mrb[0].mxu0
  %v2057 = vadd.f32 0.0, %v2056
  %v2058 = vpop.f32.mrb[0].mxu0
  %2059 = vmatprep.mubr.bf16.mxu0 0
  %2060 = vmatmul.mubr.bf16.gmra.mrb[0].mxu0 %v1889
  %v2061 = vpop.f32.mrb[0].mxu0
  %v2062 = vadd.f32 0.0, %v2061
  %v2063 = vpop.f32.mrb[0].mxu0
  %v2064 = vpop.f32.mrb[0].mxu0
  %v2065 = vadd.f32 0.0, %v2064
  %v2066 = vpop.f32.mrb[0].mxu0
  %2067 = vmatprep.mubr.bf16.mxu0 0
  %2068 = vmatmul.mubr.bf16.gmra.mrb[0].mxu0 %v1892
  %v2069 = vpop.f32.mrb[0].mxu0
  %v2070 = vadd.f32 0.0, %v2069
  %v2071 = vpop.f32.mrb[0].mxu0
  %v2072 = vpop.f32.mrb[0].mxu0
  %v2073 = vadd.f32 0.0, %v2072
  %v2074 = vpop.f32.mrb[0].mxu0
  %2075 = vmatprep.mubr.bf16.mxu0 0
  %2076 = vmatmul.mubr.bf16.gmra.mrb[0].mxu0 %v1895
  %v2077 = vpop.f32.mrb[0].mxu0
  %v2078 = vadd.f32 0.0, %v2077
  %v2079 = vpop.f32.mrb[0].mxu0
  %v2080 = vpop.f32.mrb[0].mxu0
  %v2081 = vadd.f32 0.0, %v2080
  %v2082 = vpop.f32.mrb[0].mxu0
  %2083 = vmatprep.mubr.bf16.mxu0 0
  %2084 = vmatmul.mubr.bf16.gmra.mrb[0].mxu0 %v1898
  %v2085 = vpop.f32.mrb[0].mxu0
  %v2086 = vadd.f32 0.0, %v2085
  %v2087 = vpop.f32.mrb[0].mxu0
  %v2088 = vpop.f32.mrb[0].mxu0
  %v2089 = vadd.f32 0.0, %v2088
  %v2090 = vpop.f32.mrb[0].mxu0
  %2091 = vmatprep.mubr.bf16.mxu0 0
  %2092 = vmatmul.mubr.bf16.gmra.mrb[0].mxu0 %v1901
  %v2093 = vpop.f32.mrb[0].mxu0
  %v2094 = vadd.f32 0.0, %v2093
  %v2095 = vpop.f32.mrb[0].mxu0
  %v2096 = vpop.f32.mrb[0].mxu0
  %v2097 = vadd.f32 0.0, %v2096
  %v2098 = vpop.f32.mrb[0].mxu0
  %2099 = vmatprep.mubr.bf16.mxu0 0
  %2100 = vmatmul.mubr.bf16.gmra.mrb[0].mxu0 %v1904
  %v2101 = vpop.f32.mrb[0].mxu0
  %v2102 = vadd.f32 0.0, %v2101
  %v2103 = vpop.f32.mrb[0].mxu0
  %v2104 = vpop.f32.mrb[0].mxu0
  %v2105 = vadd.f32 0.0, %v2104
  %v2106 = vpop.f32.mrb[0].mxu0
  %2107 = vmatprep.mubr.bf16.mxu0 0
  %2108 = vmatmul.mubr.bf16.gmra.mrb[0].mxu0 %v1907
  %v2109 = vpop.f32.mrb[0].mxu0
  %v2110 = vadd.f32 0.0, %v2109
  %v2111 = vpop.f32.mrb[0].mxu0
  %v2112 = vpop.f32.mrb[0].mxu0
  %v2113 = vadd.f32 0.0, %v2112
  %v2114 = vpop.f32.mrb[0].mxu0
  %2115 = vmatprep.mubr.bf16.mxu0 0
  %2116 = vmatmul.mubr.bf16.gmra.mrb[0].mxu0 %v1910
  %v2117 = vpop.f32.mrb[0].mxu0
  %v2118 = vadd.f32 0.0, %v2117
  %v2119 = vpop.f32.mrb[0].mxu0
  %v2120 = vpop.f32.mrb[0].mxu0
  %v2121 = vadd.f32 0.0, %v2120
  %v2122 = vpop.f32.mrb[0].mxu0
  %2123 = vmatprep.mubr.bf16.mxu0 0
  %2124 = vmatmul.mubr.bf16.gmra.mrb[0].mxu0 %v1913
  %v2125 = vpop.f32.mrb[0].mxu0
  %v2126 = vadd.f32 0.0, %v2125
  %v2127 = vpop.f32.mrb[0].mxu0
  %v2128 = vpop.f32.mrb[0].mxu0
  %v2129 = vadd.f32 0.0, %v2128
  %v2130 = vpop.f32.mrb[0].mxu0
  %2131 = vmatprep.mubr.bf16.mxu0 0
  %2132 = vmatmul.mubr.bf16.gmra.mrb[0].mxu0 %v1916
  %v2133 = vpop.f32.mrb[0].mxu0
  %v2134 = vadd.f32 0.0, %v2133
  %v2135 = vpop.f32.mrb[0].mxu0
  %v2136 = vpop.f32.mrb[0].mxu0
  %v2137 = vadd.f32 0.0, %v2136
  %v2138 = vpop.f32.mrb[0].mxu0
  %2139 = vmatprep.mubr.bf16.mxu0 0
  %2140 = vmatmul.mubr.bf16.gmra.mrb[0].mxu0 %v1919
  %v2141 = vpop.f32.mrb[0].mxu0
  %v2142 = vadd.f32 0.0, %v2141
  %v2143 = vpop.f32.mrb[0].mxu0
  %v2144 = vpop.f32.mrb[0].mxu0
  %v2145 = vadd.f32 0.0, %v2144
  %v2146 = vpop.f32.mrb[0].mxu0
  %2147 = vmatprep.mubr.bf16.mxu0 0
  %2148 = vmatmul.mubr.bf16.gmra.mrb[0].mxu0 %v1922
  %v2149 = vpop.f32.mrb[0].mxu0
  %v2150 = vadd.f32 0.0, %v2149
  %v2151 = vpop.f32.mrb[0].mxu0
  %v2152 = vpop.f32.mrb[0].mxu0
  %v2153 = vadd.f32 0.0, %v2152
  %v2154 = vpop.f32.mrb[0].mxu0
  %2155 = vmatprep.mubr.bf16.mxu0 0
  %2156 = vmatmul.mubr.bf16.gmra.mrb[0].mxu0 %v1925
  %v2157 = vpop.f32.mrb[0].mxu0
  %v2158 = vadd.f32 0.0, %v2157
  %v2159 = vpop.f32.mrb[0].mxu0
  %v2160 = vpop.f32.mrb[0].mxu0
  %v2161 = vadd.f32 0.0, %v2160
  %v2162 = vpop.f32.mrb[0].mxu0
  %2163 = vmatprep.mubr.bf16.mxu0 0
  %2164 = vmatmul.mubr.bf16.gmra.mrb[0].mxu0 %v1928
  %v2165 = vpop.f32.mrb[0].mxu0
  %v2166 = vadd.f32 0.0, %v2165
  %v2167 = vpop.f32.mrb[0].mxu0
  %v2168 = vpop.f32.mrb[0].mxu0
  %v2169 = vadd.f32 0.0, %v2168
  %v2170 = vpop.f32.mrb[0].mxu0
  %2171 = vmatprep.mubr.bf16.mxu0 0
  %2172 = vmatmul.mubr.bf16.gmra.mrb[0].mxu0 %v1931
  %v2173 = vpop.f32.mrb[0].mxu0
  %v2174 = vadd.f32 0.0, %v2173
  %v2175 = vpop.f32.mrb[0].mxu0
  %v2176 = vpop.f32.mrb[0].mxu0
  %v2177 = vadd.f32 0.0, %v2176
  %v2178 = vpop.f32.mrb[0].mxu0
  %2179 = vmatprep.mubr.bf16.mxu0 0
  %2180 = vmatmul.mubr.bf16.gmra.mrb[0].mxu0 %v1934
  %v2181 = vpop.f32.mrb[0].mxu0
  %v2182 = vadd.f32 0.0, %v2181
  %v2183 = vpop.f32.mrb[0].mxu0
  %v2184 = vpop.f32.mrb[0].mxu0
  %v2185 = vadd.f32 0.0, %v2184
  %v2186 = vpop.f32.mrb[0].mxu0
  %2187 = vmatprep.mubr.bf16.mxu0 0
  %2188 = vmatmul.mubr.bf16.gmra.mrb[0].mxu0 %v1937
  %v2189 = vpop.f32.mrb[0].mxu0
  %v2190 = vadd.f32 0.0, %v2189
  %v2191 = vpop.f32.mrb[0].mxu0
  %v2192 = vpop.f32.mrb[0].mxu0
  %v2193 = vadd.f32 0.0, %v2192
  %v2194 = vpop.f32.mrb[0].mxu0
  %2195 = vmatprep.mubr.bf16.mxu0 0
  %2196 = vmatmul.mubr.bf16.gmra.mrb[0].mxu0 %v1940
  %v2197 = vpop.f32.mrb[0].mxu0
  %v2198 = vadd.f32 0.0, %v2197
  %v2199 = vpop.f32.mrb[0].mxu0
  %v2200 = vpop.f32.mrb[0].mxu0
  %v2201 = vadd.f32 0.0, %v2200
  %v2202 = vpop.f32.mrb[0].mxu0
  %2203 = vmatprep.mubr.bf16.mxu0 0
  %2204 = vmatmul.mubr.bf16.gmra.mrb[0].mxu0 %v1943
  %v2205 = vpop.f32.mrb[0].mxu0
  %v2206 = vadd.f32 0.0, %v2205
  %v2207 = vpop.f32.mrb[0].mxu0
  %v2208 = vpop.f32.mrb[0].mxu0
  %v2209 = vadd.f32 0.0, %v2208
  %v2210 = vpop.f32.mrb[0].mxu0
  %2211 = vmatprep.mubr.bf16.mxu0 0
  %2212 = vmatmul.mubr.bf16.gmra.mrb[0].mxu0 %v1946
  %v2213 = vpop.f32.mrb[0].mxu0
  %v2214 = vadd.f32 0.0, %v2213
  %v2215 = vpop.f32.mrb[0].mxu0
  %v2216 = vpop.f32.mrb[0].mxu0
  %v2217 = vadd.f32 0.0, %v2216
  %v2218 = vpop.f32.mrb[0].mxu0
  %2219 = vmatprep.mubr.bf16.mxu0 0
  %2220 = vmatmul.mubr.bf16.gmra.mrb[0].mxu0 %v1949
  %v2221 = vpop.f32.mrb[0].mxu0
  %v2222 = vadd.f32 0.0, %v2221
  %v2223 = vpop.f32.mrb[0].mxu0
  %v2224 = vpop.f32.mrb[0].mxu0
  %v2225 = vadd.f32 0.0, %v2224
  %v2226 = vpop.f32.mrb[0].mxu0
  %2227 = vmatprep.mubr.bf16.mxu0 0
  %2228 = vmatmul.mubr.bf16.gmra.mrb[0].mxu0 %v1952
  %v2229 = vpop.f32.mrb[0].mxu0
  %v2230 = vadd.f32 0.0, %v2229
  %v2231 = vpop.f32.mrb[0].mxu0
  %v2232 = vpop.f32.mrb[0].mxu0
  %v2233 = vadd.f32 0.0, %v2232
  %v2234 = vpop.f32.mrb[0].mxu0
  %2235 = vmatprep.mubr.bf16.mxu0 0
  %2236 = vmatmul.mubr.bf16.gmra.mrb[0].mxu0 %v1955
  %v2237 = vpop.f32.mrb[0].mxu0
  %v2238 = vadd.f32 0.0, %v2237
  %v2239 = vpop.f32.mrb[0].mxu0
  %v2240 = vpop.f32.mrb[0].mxu0
  %v2241 = vadd.f32 0.0, %v2240
  %v2242 = vpop.f32.mrb[0].mxu0
  %2243 = vmatprep.mubr.bf16.mxu0 0
  %2244 = vmatmul.mubr.bf16.gmra.mrb[0].mxu0 %v1958
  %v2245 = vpop.f32.mrb[0].mxu0
  %v2246 = vadd.f32 0.0, %v2245
  %v2247 = vpop.f32.mrb[0].mxu0
  %v2248 = vpop.f32.mrb[0].mxu0
  %v2249 = vadd.f32 0.0, %v2248
  %v2250 = vpop.f32.mrb[0].mxu0
  %2251 = vdwg.mxu0
  %v2252 = vadd.f32 %v1702, %v1998
  %v2253 = vadd.f32 %v1703, %v2001
  %v2254 = vadd.f32 %v1704, %v2006
  %v2255 = vadd.f32 %v1705, %v2009
  %v2256 = vadd.f32 %v1706, %v2014
  %v2257 = vadd.f32 %v1707, %v2017
  %v2258 = vadd.f32 %v1708, %v2022
  %v2259 = vadd.f32 %v1709, %v2025
  %v2260 = vadd.f32 %v1710, %v2030
  %v2261 = vadd.f32 %v1711, %v2033
  %v2262 = vadd.f32 %v1712, %v2038
  %v2263 = vadd.f32 %v1713, %v2041
  %v2264 = vadd.f32 %v1714, %v2046
  %v2265 = vadd.f32 %v1715, %v2049
  %v2266 = vadd.f32 %v1716, %v2054
  %v2267 = vadd.f32 %v1717, %v2057
  %v2268 = vadd.f32 %v1718, %v2062
  %v2269 = vadd.f32 %v1719, %v2065
  %v2270 = vadd.f32 %v1720, %v2070
  %v2271 = vadd.f32 %v1721, %v2073
  %v2272 = vadd.f32 %v1722, %v2078
  %v2273 = vadd.f32 %v1723, %v2081
  %v2274 = vadd.f32 %v1724, %v2086
  %v2275 = vadd.f32 %v1725, %v2089
  %v2276 = vadd.f32 %v1726, %v2094
  %v2277 = vadd.f32 %v1727, %v2097
  %v2278 = vadd.f32 %v1728, %v2102
  %v2279 = vadd.f32 %v1729, %v2105
  %v2280 = vadd.f32 %v1730, %v2110
  %v2281 = vadd.f32 %v1731, %v2113
  %v2282 = vadd.f32 %v1732, %v2118
  %v2283 = vadd.f32 %v1733, %v2121
  %v2284 = vadd.f32 %v1734, %v2126
  %v2285 = vadd.f32 %v1735, %v2129
  %v2286 = vadd.f32 %v1736, %v2134
  %v2287 = vadd.f32 %v1737, %v2137
  %v2288 = vadd.f32 %v1738, %v2142
  %v2289 = vadd.f32 %v1739, %v2145
  %v2290 = vadd.f32 %v1740, %v2150
  %v2291 = vadd.f32 %v1741, %v2153
  %v2292 = vadd.f32 %v1742, %v2158
  %v2293 = vadd.f32 %v1743, %v2161
  %v2294 = vadd.f32 %v1744, %v2166
  %v2295 = vadd.f32 %v1745, %v2169
  %v2296 = vadd.f32 %v1746, %v2174
  %v2297 = vadd.f32 %v1747, %v2177
  %v2298 = vadd.f32 %v1748, %v2182
  %v2299 = vadd.f32 %v1749, %v2185
  %v2300 = vadd.f32 %v1750, %v2190
  %v2301 = vadd.f32 %v1751, %v2193
  %v2302 = vadd.f32 %v1752, %v2198
  %v2303 = vadd.f32 %v1753, %v2201
  %v2304 = vadd.f32 %v1754, %v2206
  %v2305 = vadd.f32 %v1755, %v2209
  %v2306 = vadd.f32 %v1756, %v2214
  %v2307 = vadd.f32 %v1757, %v2217
  %v2308 = vadd.f32 %v1758, %v2222
  %v2309 = vadd.f32 %v1759, %v2225
  %v2310 = vadd.f32 %v1760, %v2230
  %v2311 = vadd.f32 %v1761, %v2233
  %v2312 = vadd.f32 %v1762, %v2238
  %v2313 = vadd.f32 %v1763, %v2241
  %v2314 = vadd.f32 %v1764, %v2246
  %v2315 = vadd.f32 %v1765, %v2249
  %v2316 = vld [vmem:[%s179 + $0x1] sm:$0xff]
  %v2317 = vld [vmem:[%s179 + $0x9] sm:$0xff]
  %v2318 = vld [vmem:[%s179 + $0x19] sm:$0xff]
  %v2319 = vld [vmem:[%s179 + $0x21] sm:$0xff]
  %v2320 = vld [vmem:[%s179 + $0x31] sm:$0xff]
  %v2321 = vld [vmem:[%s179 + $0x39] sm:$0xff]
  %v2322 = vld [vmem:[%s179 + $0x49] sm:$0xff]
  %v2323 = vld [vmem:[%s179 + $0x51] sm:$0xff]
  %v2324 = vld [vmem:[%s179 + $0x61] sm:$0xff]
  %v2325 = vld [vmem:[%s179 + $0x69] sm:$0xff]
  %v2326 = vld [vmem:[%s179 + $0x79] sm:$0xff]
  %v2327 = vld [vmem:[%s179 + $0x81] sm:$0xff]
  %v2328 = vld [vmem:[%s179 + $0x91] sm:$0xff]
  %v2329 = vld [vmem:[%s179 + $0x99] sm:$0xff]
  %v2330 = vld [vmem:[%s179 + $0xa9] sm:$0xff]
  %v2331 = vld [vmem:[%s179 + $0xb1] sm:$0xff]
  %v2332 = vld [vmem:[%s179 + $0xc1] sm:$0xff]
  %v2333 = vld [vmem:[%s179 + $0xc9] sm:$0xff]
  %v2334 = vld [vmem:[%s179 + $0xd9] sm:$0xff]
  %v2335 = vld [vmem:[%s179 + $0xe1] sm:$0xff]
  %v2336 = vld [vmem:[%s179 + $0xf1] sm:$0xff]
  %v2337 = vld [vmem:[%s179 + $0xf9] sm:$0xff]
  %v2338 = vld [vmem:[%s179 + $0x109] sm:$0xff]
  %v2339 = vld [vmem:[%s179 + $0x111] sm:$0xff]
  %v2340 = vld [vmem:[%s179 + $0x121] sm:$0xff]
  %v2341 = vld [vmem:[%s179 + $0x129] sm:$0xff]
  %v2342 = vld [vmem:[%s179 + $0x139] sm:$0xff]
  %v2343 = vld [vmem:[%s179 + $0x141] sm:$0xff]
  %v2344 = vld [vmem:[%s179 + $0x151] sm:$0xff]
  %v2345 = vld [vmem:[%s179 + $0x159] sm:$0xff]
  %v2346 = vld [vmem:[%s179 + $0x169] sm:$0xff]
  %v2347 = vld [vmem:[%s179 + $0x171] sm:$0xff]
  %v2348 = vld [vmem:[%s179 + $0x1b1] sm:$0xff]
  %v2349 = vld [vmem:[%s179 + $0x1b9] sm:$0xff]
  %v2350 = vld [vmem:[%s179 + $0x1c9] sm:$0xff]
  %v2351 = vld [vmem:[%s179 + $0x1d1] sm:$0xff]
  %v2352 = vld [vmem:[%s179 + $0x1e1] sm:$0xff]
  %v2353 = vld [vmem:[%s179 + $0x1e9] sm:$0xff]
  %v2354 = vld [vmem:[%s179 + $0x1f9] sm:$0xff]
  %v2355 = vld [vmem:[%s179 + $0x201] sm:$0xff]
  %v2356 = vld [vmem:[%s179 + $0x211] sm:$0xff]
  %v2357 = vld [vmem:[%s179 + $0x219] sm:$0xff]
  %v2358 = vld [vmem:[%s179 + $0x229] sm:$0xff]
  %v2359 = vld [vmem:[%s179 + $0x231] sm:$0xff]
  %v2360 = vld [vmem:[%s179 + $0x241] sm:$0xff]
  %v2361 = vld [vmem:[%s179 + $0x249] sm:$0xff]
  %v2362 = vld [vmem:[%s179 + $0x259] sm:$0xff]
  %v2363 = vld [vmem:[%s179 + $0x261] sm:$0xff]
  %v2364 = vld [vmem:[%s179 + $0x271] sm:$0xff]
  %v2365 = vld [vmem:[%s179 + $0x279] sm:$0xff]
  %v2366 = vld [vmem:[%s179 + $0x289] sm:$0xff]
  %v2367 = vld [vmem:[%s179 + $0x291] sm:$0xff]
  %v2368 = vld [vmem:[%s179 + $0x2a1] sm:$0xff]
  %v2369 = vld [vmem:[%s179 + $0x2a9] sm:$0xff]
  %v2370 = vld [vmem:[%s179 + $0x2b9] sm:$0xff]
  %v2371 = vld [vmem:[%s179 + $0x2c1] sm:$0xff]
  %v2372 = vld [vmem:[%s179 + $0x2d1] sm:$0xff]
  %v2373 = vld [vmem:[%s179 + $0x2d9] sm:$0xff]
  %v2374 = vld [vmem:[%s179 + $0x2e9] sm:$0xff]
  %v2375 = vld [vmem:[%s179 + $0x2f1] sm:$0xff]
  %v2376 = vld [vmem:[%s179 + $0x301] sm:$0xff]
  %v2377 = vld [vmem:[%s179 + $0x309] sm:$0xff]
  %v2378 = vld [vmem:[%s179 + $0x319] sm:$0xff]
  %v2379 = vld [vmem:[%s179 + $0x321] sm:$0xff]
  %v2380 = vpack.c.bf16 %v2317, %v2316
  %v2381 = vpack.c.bf16 %v2319, %v2318
  %v2382 = vpack.c.bf16 %v2321, %v2320
  %v2383 = vpack.c.bf16 %v2323, %v2322
  %v2384 = vpack.c.bf16 %v2325, %v2324
  %v2385 = vpack.c.bf16 %v2327, %v2326
  %v2386 = vpack.c.bf16 %v2329, %v2328
  %v2387 = vpack.c.bf16 %v2331, %v2330
  %v2388 = vpack.c.bf16 %v2333, %v2332
  %v2389 = vpack.c.bf16 %v2335, %v2334
  %v2390 = vpack.c.bf16 %v2337, %v2336
  %v2391 = vpack.c.bf16 %v2339, %v2338
  %v2392 = vpack.c.bf16 %v2341, %v2340
  %v2393 = vpack.c.bf16 %v2343, %v2342
  %v2394 = vpack.c.bf16 %v2345, %v2344
  %v2395 = vpack.c.bf16 %v2347, %v2346
  %v2396 = vpack.c.bf16 %v2349, %v2348
  %v2397 = vpack.c.bf16 %v2351, %v2350
  %v2398 = vpack.c.bf16 %v2353, %v2352
  %v2399 = vpack.c.bf16 %v2355, %v2354
  %v2400 = vpack.c.bf16 %v2357, %v2356
  %v2401 = vpack.c.bf16 %v2359, %v2358
  %v2402 = vpack.c.bf16 %v2361, %v2360
  %v2403 = vpack.c.bf16 %v2363, %v2362
  %v2404 = vpack.c.bf16 %v2365, %v2364
  %v2405 = vpack.c.bf16 %v2367, %v2366
  %v2406 = vpack.c.bf16 %v2369, %v2368
  %v2407 = vpack.c.bf16 %v2371, %v2370
  %v2408 = vpack.c.bf16 %v2373, %v2372
  %v2409 = vpack.c.bf16 %v2375, %v2374
  %v2410 = vpack.c.bf16 %v2377, %v2376
  %v2411 = vpack.c.bf16 %v2379, %v2378
  %s2412 = scalar_lea.vmem %s1, 8
  %v2413 = vld [vmem:[%s2412] sm:$0x3]
  %v2415 = vsel %vm27, %v2380, 0
  %v2418 = vsel %vm27, %v2381, 0
  %v2421 = vsel %vm27, %v2382, 0
  %v2424 = vsel %vm27, %v2383, 0
  %v2427 = vsel %vm27, %v2384, 0
  %v2430 = vsel %vm27, %v2385, 0
  %v2433 = vsel %vm27, %v2386, 0
  %v2436 = vsel %vm27, %v2387, 0
  %v2439 = vsel %vm27, %v2388, 0
  %v2442 = vsel %vm27, %v2389, 0
  %v2445 = vsel %vm27, %v2390, 0
  %v2448 = vsel %vm27, %v2391, 0
  %v2451 = vsel %vm27, %v2392, 0
  %v2454 = vsel %vm27, %v2393, 0
  %v2457 = vsel %vm27, %v2394, 0
  %v2460 = vsel %vm27, %v2395, 0
  %v2463 = vsel %vm27, %v2396, 0
  %v2466 = vsel %vm27, %v2397, 0
  %v2469 = vsel %vm27, %v2398, 0
  %v2472 = vsel %vm27, %v2399, 0
  %v2475 = vsel %vm27, %v2400, 0
  %v2478 = vsel %vm27, %v2401, 0
  %v2481 = vsel %vm27, %v2402, 0
  %v2484 = vsel %vm27, %v2403, 0
  %v2487 = vsel %vm27, %v2404, 0
  %v2490 = vsel %vm27, %v2405, 0
  %v2493 = vsel %vm27, %v2406, 0
  %v2496 = vsel %vm27, %v2407, 0
  %v2499 = vsel %vm27, %v2408, 0
  %v2502 = vsel %vm27, %v2409, 0
  %v2505 = vsel %vm27, %v2410, 0
  %v2508 = vsel %vm27, %v2411, 0
  %v2511 = vsel %vm535, %v2413, 0
  %2513 = vmatprep.subr.bf16.mxu0 0
  %2514 = vmatpush1.bf16.msra.mxu0 %v2511
  %2515 = vmatprep.subr.bf16.mxu0 0
  %2516 = vmatpush1.bf16.msra.mxu0 0
  %2517 = vmatprep.subr.bf16.mxu0 0
  %2518 = vmatpush1.bf16.msra.mxu0 0
  %2519 = vmatprep.subr.bf16.mxu0 0
  %2520 = vmatpush1.bf16.msra.mxu0 0
  %2521 = vmatprep.subr.bf16.mxu0 0
  %2522 = vmatpush1.bf16.msra.mxu0 0
  %2523 = vmatprep.subr.bf16.mxu0 0
  %2524 = vmatpush1.bf16.msra.mxu0 0
  %2525 = vmatprep.subr.bf16.mxu0 0
  %2526 = vmatpush1.bf16.msra.mxu0 0
  %2527 = vmatprep.subr.bf16.mxu0 0
  %2528 = vmatpush1.bf16.msra.mxu0 0
  %2529 = vmatprep.subr.bf16.mxu0 0
  %2530 = vmatpush1.bf16.msra.mxu0 0
  %2531 = vmatprep.subr.bf16.mxu0 0
  %2532 = vmatpush1.bf16.msra.mxu0 0
  %2533 = vmatprep.subr.bf16.mxu0 0
  %2534 = vmatpush1.bf16.msra.mxu0 0
  %2535 = vmatprep.subr.bf16.mxu0 0
  %2536 = vmatpush1.bf16.msra.mxu0 0
  %2537 = vmatprep.subr.bf16.mxu0 0
  %2538 = vmatpush1.bf16.msra.mxu0 0
  %2539 = vmatprep.subr.bf16.mxu0 0
  %2540 = vmatpush1.bf16.msra.mxu0 0
  %2541 = vmatprep.subr.bf16.mxu0 0
  %2542 = vmatpush1.bf16.msra.mxu0 0
  %2543 = vmatprep.subr.bf16.mxu0 0
  %2544 = vmatpush1.bf16.msra.mxu0 0
  %2545 = vmatprep.mubr.bf16.mxu0 0
  %2546 = vmatmul.mubr.bf16.gmra.mrb[0].mxu0 %v2415
  %v2547 = vpop.f32.mrb[0].mxu0
  %v2548 = vadd.f32 0.0, %v2547
  %v2549 = vpop.f32.mrb[0].mxu0
  %v2550 = vpop.f32.mrb[0].mxu0
  %v2551 = vadd.f32 0.0, %v2550
  %v2552 = vpop.f32.mrb[0].mxu0
  %2553 = vmatprep.mubr.bf16.mxu0 0
  %2554 = vmatmul.mubr.bf16.gmra.mrb[0].mxu0 %v2418
  %v2555 = vpop.f32.mrb[0].mxu0
  %v2556 = vadd.f32 0.0, %v2555
  %v2557 = vpop.f32.mrb[0].mxu0
  %v2558 = vpop.f32.mrb[0].mxu0
  %v2559 = vadd.f32 0.0, %v2558
  %v2560 = vpop.f32.mrb[0].mxu0
  %2561 = vmatprep.mubr.bf16.mxu0 0
  %2562 = vmatmul.mubr.bf16.gmra.mrb[0].mxu0 %v2421
  %v2563 = vpop.f32.mrb[0].mxu0
  %v2564 = vadd.f32 0.0, %v2563
  %v2565 = vpop.f32.mrb[0].mxu0
  %v2566 = vpop.f32.mrb[0].mxu0
  %v2567 = vadd.f32 0.0, %v2566
  %v2568 = vpop.f32.mrb[0].mxu0
  %2569 = vmatprep.mubr.bf16.mxu0 0
  %2570 = vmatmul.mubr.bf16.gmra.mrb[0].mxu0 %v2424
  %v2571 = vpop.f32.mrb[0].mxu0
  %v2572 = vadd.f32 0.0, %v2571
  %v2573 = vpop.f32.mrb[0].mxu0
  %v2574 = vpop.f32.mrb[0].mxu0
  %v2575 = vadd.f32 0.0, %v2574
  %v2576 = vpop.f32.mrb[0].mxu0
  %2577 = vmatprep.mubr.bf16.mxu0 0
  %2578 = vmatmul.mubr.bf16.gmra.mrb[0].mxu0 %v2427
  %v2579 = vpop.f32.mrb[0].mxu0
  %v2580 = vadd.f32 0.0, %v2579
  %v2581 = vpop.f32.mrb[0].mxu0
  %v2582 = vpop.f32.mrb[0].mxu0
  %v2583 = vadd.f32 0.0, %v2582
  %v2584 = vpop.f32.mrb[0].mxu0
  %2585 = vmatprep.mubr.bf16.mxu0 0
  %2586 = vmatmul.mubr.bf16.gmra.mrb[0].mxu0 %v2430
  %v2587 = vpop.f32.mrb[0].mxu0
  %v2588 = vadd.f32 0.0, %v2587
  %v2589 = vpop.f32.mrb[0].mxu0
  %v2590 = vpop.f32.mrb[0].mxu0
  %v2591 = vadd.f32 0.0, %v2590
  %v2592 = vpop.f32.mrb[0].mxu0
  %2593 = vmatprep.mubr.bf16.mxu0 0
  %2594 = vmatmul.mubr.bf16.gmra.mrb[0].mxu0 %v2433
  %v2595 = vpop.f32.mrb[0].mxu0
  %v2596 = vadd.f32 0.0, %v2595
  %v2597 = vpop.f32.mrb[0].mxu0
  %v2598 = vpop.f32.mrb[0].mxu0
  %v2599 = vadd.f32 0.0, %v2598
  %v2600 = vpop.f32.mrb[0].mxu0
  %2601 = vmatprep.mubr.bf16.mxu0 0
  %2602 = vmatmul.mubr.bf16.gmra.mrb[0].mxu0 %v2436
  %v2603 = vpop.f32.mrb[0].mxu0
  %v2604 = vadd.f32 0.0, %v2603
  %v2605 = vpop.f32.mrb[0].mxu0
  %v2606 = vpop.f32.mrb[0].mxu0
  %v2607 = vadd.f32 0.0, %v2606
  %v2608 = vpop.f32.mrb[0].mxu0
  %2609 = vmatprep.mubr.bf16.mxu0 0
  %2610 = vmatmul.mubr.bf16.gmra.mrb[0].mxu0 %v2439
  %v2611 = vpop.f32.mrb[0].mxu0
  %v2612 = vadd.f32 0.0, %v2611
  %v2613 = vpop.f32.mrb[0].mxu0
  %v2614 = vpop.f32.mrb[0].mxu0
  %v2615 = vadd.f32 0.0, %v2614
  %v2616 = vpop.f32.mrb[0].mxu0
  %2617 = vmatprep.mubr.bf16.mxu0 0
  %2618 = vmatmul.mubr.bf16.gmra.mrb[0].mxu0 %v2442
  %v2619 = vpop.f32.mrb[0].mxu0
  %v2620 = vadd.f32 0.0, %v2619
  %v2621 = vpop.f32.mrb[0].mxu0
  %v2622 = vpop.f32.mrb[0].mxu0
  %v2623 = vadd.f32 0.0, %v2622
  %v2624 = vpop.f32.mrb[0].mxu0
  %2625 = vmatprep.mubr.bf16.mxu0 0
  %2626 = vmatmul.mubr.bf16.gmra.mrb[0].mxu0 %v2445
  %v2627 = vpop.f32.mrb[0].mxu0
  %v2628 = vadd.f32 0.0, %v2627
  %v2629 = vpop.f32.mrb[0].mxu0
  %v2630 = vpop.f32.mrb[0].mxu0
  %v2631 = vadd.f32 0.0, %v2630
  %v2632 = vpop.f32.mrb[0].mxu0
  %2633 = vmatprep.mubr.bf16.mxu0 0
  %2634 = vmatmul.mubr.bf16.gmra.mrb[0].mxu0 %v2448
  %v2635 = vpop.f32.mrb[0].mxu0
  %v2636 = vadd.f32 0.0, %v2635
  %v2637 = vpop.f32.mrb[0].mxu0
  %v2638 = vpop.f32.mrb[0].mxu0
  %v2639 = vadd.f32 0.0, %v2638
  %v2640 = vpop.f32.mrb[0].mxu0
  %2641 = vmatprep.mubr.bf16.mxu0 0
  %2642 = vmatmul.mubr.bf16.gmra.mrb[0].mxu0 %v2451
  %v2643 = vpop.f32.mrb[0].mxu0
  %v2644 = vadd.f32 0.0, %v2643
  %v2645 = vpop.f32.mrb[0].mxu0
  %v2646 = vpop.f32.mrb[0].mxu0
  %v2647 = vadd.f32 0.0, %v2646
  %v2648 = vpop.f32.mrb[0].mxu0
  %2649 = vmatprep.mubr.bf16.mxu0 0
  %2650 = vmatmul.mubr.bf16.gmra.mrb[0].mxu0 %v2454
  %v2651 = vpop.f32.mrb[0].mxu0
  %v2652 = vadd.f32 0.0, %v2651
  %v2653 = vpop.f32.mrb[0].mxu0
  %v2654 = vpop.f32.mrb[0].mxu0
  %v2655 = vadd.f32 0.0, %v2654
  %v2656 = vpop.f32.mrb[0].mxu0
  %2657 = vmatprep.mubr.bf16.mxu0 0
  %2658 = vmatmul.mubr.bf16.gmra.mrb[0].mxu0 %v2457
  %v2659 = vpop.f32.mrb[0].mxu0
  %v2660 = vadd.f32 0.0, %v2659
  %v2661 = vpop.f32.mrb[0].mxu0
  %v2662 = vpop.f32.mrb[0].mxu0
  %v2663 = vadd.f32 0.0, %v2662
  %v2664 = vpop.f32.mrb[0].mxu0
  %2665 = vmatprep.mubr.bf16.mxu0 0
  %2666 = vmatmul.mubr.bf16.gmra.mrb[0].mxu0 %v2460
  %v2667 = vpop.f32.mrb[0].mxu0
  %v2668 = vadd.f32 0.0, %v2667
  %v2669 = vpop.f32.mrb[0].mxu0
  %v2670 = vpop.f32.mrb[0].mxu0
  %v2671 = vadd.f32 0.0, %v2670
  %v2672 = vpop.f32.mrb[0].mxu0
  %2673 = vmatprep.mubr.bf16.mxu0 0
  %2674 = vmatmul.mubr.bf16.gmra.mrb[0].mxu0 %v2463
  %v2675 = vpop.f32.mrb[0].mxu0
  %v2676 = vadd.f32 0.0, %v2675
  %v2677 = vpop.f32.mrb[0].mxu0
  %v2678 = vpop.f32.mrb[0].mxu0
  %v2679 = vadd.f32 0.0, %v2678
  %v2680 = vpop.f32.mrb[0].mxu0
  %2681 = vmatprep.mubr.bf16.mxu0 0
  %2682 = vmatmul.mubr.bf16.gmra.mrb[0].mxu0 %v2466
  %v2683 = vpop.f32.mrb[0].mxu0
  %v2684 = vadd.f32 0.0, %v2683
  %v2685 = vpop.f32.mrb[0].mxu0
  %v2686 = vpop.f32.mrb[0].mxu0
  %v2687 = vadd.f32 0.0, %v2686
  %v2688 = vpop.f32.mrb[0].mxu0
  %2689 = vmatprep.mubr.bf16.mxu0 0
  %2690 = vmatmul.mubr.bf16.gmra.mrb[0].mxu0 %v2469
  %v2691 = vpop.f32.mrb[0].mxu0
  %v2692 = vadd.f32 0.0, %v2691
  %v2693 = vpop.f32.mrb[0].mxu0
  %v2694 = vpop.f32.mrb[0].mxu0
  %v2695 = vadd.f32 0.0, %v2694
  %v2696 = vpop.f32.mrb[0].mxu0
  %2697 = vmatprep.mubr.bf16.mxu0 0
  %2698 = vmatmul.mubr.bf16.gmra.mrb[0].mxu0 %v2472
  %v2699 = vpop.f32.mrb[0].mxu0
  %v2700 = vadd.f32 0.0, %v2699
  %v2701 = vpop.f32.mrb[0].mxu0
  %v2702 = vpop.f32.mrb[0].mxu0
  %v2703 = vadd.f32 0.0, %v2702
  %v2704 = vpop.f32.mrb[0].mxu0
  %2705 = vmatprep.mubr.bf16.mxu0 0
  %2706 = vmatmul.mubr.bf16.gmra.mrb[0].mxu0 %v2475
  %v2707 = vpop.f32.mrb[0].mxu0
  %v2708 = vadd.f32 0.0, %v2707
  %v2709 = vpop.f32.mrb[0].mxu0
  %v2710 = vpop.f32.mrb[0].mxu0
  %v2711 = vadd.f32 0.0, %v2710
  %v2712 = vpop.f32.mrb[0].mxu0
  %2713 = vmatprep.mubr.bf16.mxu0 0
  %2714 = vmatmul.mubr.bf16.gmra.mrb[0].mxu0 %v2478
  %v2715 = vpop.f32.mrb[0].mxu0
  %v2716 = vadd.f32 0.0, %v2715
  %v2717 = vpop.f32.mrb[0].mxu0
  %v2718 = vpop.f32.mrb[0].mxu0
  %v2719 = vadd.f32 0.0, %v2718
  %v2720 = vpop.f32.mrb[0].mxu0
  %2721 = vmatprep.mubr.bf16.mxu0 0
  %2722 = vmatmul.mubr.bf16.gmra.mrb[0].mxu0 %v2481
  %v2723 = vpop.f32.mrb[0].mxu0
  %v2724 = vadd.f32 0.0, %v2723
  %v2725 = vpop.f32.mrb[0].mxu0
  %v2726 = vpop.f32.mrb[0].mxu0
  %v2727 = vadd.f32 0.0, %v2726
  %v2728 = vpop.f32.mrb[0].mxu0
  %2729 = vmatprep.mubr.bf16.mxu0 0
  %2730 = vmatmul.mubr.bf16.gmra.mrb[0].mxu0 %v2484
  %v2731 = vpop.f32.mrb[0].mxu0
  %v2732 = vadd.f32 0.0, %v2731
  %v2733 = vpop.f32.mrb[0].mxu0
  %v2734 = vpop.f32.mrb[0].mxu0
  %v2735 = vadd.f32 0.0, %v2734
  %v2736 = vpop.f32.mrb[0].mxu0
  %2737 = vmatprep.mubr.bf16.mxu0 0
  %2738 = vmatmul.mubr.bf16.gmra.mrb[0].mxu0 %v2487
  %v2739 = vpop.f32.mrb[0].mxu0
  %v2740 = vadd.f32 0.0, %v2739
  %v2741 = vpop.f32.mrb[0].mxu0
  %v2742 = vpop.f32.mrb[0].mxu0
  %v2743 = vadd.f32 0.0, %v2742
  %v2744 = vpop.f32.mrb[0].mxu0
  %2745 = vmatprep.mubr.bf16.mxu0 0
  %2746 = vmatmul.mubr.bf16.gmra.mrb[0].mxu0 %v2490
  %v2747 = vpop.f32.mrb[0].mxu0
  %v2748 = vadd.f32 0.0, %v2747
  %v2749 = vpop.f32.mrb[0].mxu0
  %v2750 = vpop.f32.mrb[0].mxu0
  %v2751 = vadd.f32 0.0, %v2750
  %v2752 = vpop.f32.mrb[0].mxu0
  %2753 = vmatprep.mubr.bf16.mxu0 0
  %2754 = vmatmul.mubr.bf16.gmra.mrb[0].mxu0 %v2493
  %v2755 = vpop.f32.mrb[0].mxu0
  %v2756 = vadd.f32 0.0, %v2755
  %v2757 = vpop.f32.mrb[0].mxu0
  %v2758 = vpop.f32.mrb[0].mxu0
  %v2759 = vadd.f32 0.0, %v2758
  %v2760 = vpop.f32.mrb[0].mxu0
  %2761 = vmatprep.mubr.bf16.mxu0 0
  %2762 = vmatmul.mubr.bf16.gmra.mrb[0].mxu0 %v2496
  %v2763 = vpop.f32.mrb[0].mxu0
  %v2764 = vadd.f32 0.0, %v2763
  %v2765 = vpop.f32.mrb[0].mxu0
  %v2766 = vpop.f32.mrb[0].mxu0
  %v2767 = vadd.f32 0.0, %v2766
  %v2768 = vpop.f32.mrb[0].mxu0
  %2769 = vmatprep.mubr.bf16.mxu0 0
  %2770 = vmatmul.mubr.bf16.gmra.mrb[0].mxu0 %v2499
  %v2771 = vpop.f32.mrb[0].mxu0
  %v2772 = vadd.f32 0.0, %v2771
  %v2773 = vpop.f32.mrb[0].mxu0
  %v2774 = vpop.f32.mrb[0].mxu0
  %v2775 = vadd.f32 0.0, %v2774
  %v2776 = vpop.f32.mrb[0].mxu0
  %2777 = vmatprep.mubr.bf16.mxu0 0
  %2778 = vmatmul.mubr.bf16.gmra.mrb[0].mxu0 %v2502
  %v2779 = vpop.f32.mrb[0].mxu0
  %v2780 = vadd.f32 0.0, %v2779
  %v2781 = vpop.f32.mrb[0].mxu0
  %v2782 = vpop.f32.mrb[0].mxu0
  %v2783 = vadd.f32 0.0, %v2782
  %v2784 = vpop.f32.mrb[0].mxu0
  %2785 = vmatprep.mubr.bf16.mxu0 0
  %2786 = vmatmul.mubr.bf16.gmra.mrb[0].mxu0 %v2505
  %v2787 = vpop.f32.mrb[0].mxu0
  %v2788 = vadd.f32 0.0, %v2787
  %v2789 = vpop.f32.mrb[0].mxu0
  %v2790 = vpop.f32.mrb[0].mxu0
  %v2791 = vadd.f32 0.0, %v2790
  %v2792 = vpop.f32.mrb[0].mxu0
  %2793 = vmatprep.mubr.bf16.mxu0 0
  %2794 = vmatmul.mubr.bf16.gmra.mrb[0].mxu0 %v2508
  %v2795 = vpop.f32.mrb[0].mxu0
  %v2796 = vadd.f32 0.0, %v2795
  %v2797 = vpop.f32.mrb[0].mxu0
  %v2798 = vpop.f32.mrb[0].mxu0
  %v2799 = vadd.f32 0.0, %v2798
  %v2800 = vpop.f32.mrb[0].mxu0
  %2801 = vdwg.mxu0
  %v2802 = vadd.f32 %v2252, %v2548
  %v2803 = vadd.f32 %v2253, %v2551
  %v2804 = vadd.f32 %v2254, %v2556
  %v2805 = vadd.f32 %v2255, %v2559
  %v2806 = vadd.f32 %v2256, %v2564
  %v2807 = vadd.f32 %v2257, %v2567
  %v2808 = vadd.f32 %v2258, %v2572
  %v2809 = vadd.f32 %v2259, %v2575
  %v2810 = vadd.f32 %v2260, %v2580
  %v2811 = vadd.f32 %v2261, %v2583
  %v2812 = vadd.f32 %v2262, %v2588
  %v2813 = vadd.f32 %v2263, %v2591
  %v2814 = vadd.f32 %v2264, %v2596
  %v2815 = vadd.f32 %v2265, %v2599
  %v2816 = vadd.f32 %v2266, %v2604
  %v2817 = vadd.f32 %v2267, %v2607
  %v2818 = vadd.f32 %v2268, %v2612
  %v2819 = vadd.f32 %v2269, %v2615
  %v2820 = vadd.f32 %v2270, %v2620
  %v2821 = vadd.f32 %v2271, %v2623
  %v2822 = vadd.f32 %v2272, %v2628
  %v2823 = vadd.f32 %v2273, %v2631
  %v2824 = vadd.f32 %v2274, %v2636
  %v2825 = vadd.f32 %v2275, %v2639
  %v2826 = vadd.f32 %v2276, %v2644
  %v2827 = vadd.f32 %v2277, %v2647
  %v2828 = vadd.f32 %v2278, %v2652
  %v2829 = vadd.f32 %v2279, %v2655
  %v2830 = vadd.f32 %v2280, %v2660
  %v2831 = vadd.f32 %v2281, %v2663
  %v2832 = vadd.f32 %v2282, %v2668
  %v2833 = vadd.f32 %v2283, %v2671
  %v2834 = vadd.f32 %v2284, %v2676
  %v2835 = vadd.f32 %v2285, %v2679
  %v2836 = vadd.f32 %v2286, %v2684
  %v2837 = vadd.f32 %v2287, %v2687
  %v2838 = vadd.f32 %v2288, %v2692
  %v2839 = vadd.f32 %v2289, %v2695
  %v2840 = vadd.f32 %v2290, %v2700
  %v2841 = vadd.f32 %v2291, %v2703
  %v2842 = vadd.f32 %v2292, %v2708
  %v2843 = vadd.f32 %v2293, %v2711
  %v2844 = vadd.f32 %v2294, %v2716
  %v2845 = vadd.f32 %v2295, %v2719
  %v2846 = vadd.f32 %v2296, %v2724
  %v2847 = vadd.f32 %v2297, %v2727
  %v2848 = vadd.f32 %v2298, %v2732
  %v2849 = vadd.f32 %v2299, %v2735
  %v2850 = vadd.f32 %v2300, %v2740
  %v2851 = vadd.f32 %v2301, %v2743
  %v2852 = vadd.f32 %v2302, %v2748
  %v2853 = vadd.f32 %v2303, %v2751
  %v2854 = vadd.f32 %v2304, %v2756
  %v2855 = vadd.f32 %v2305, %v2759
  %v2856 = vadd.f32 %v2306, %v2764
  %v2857 = vadd.f32 %v2307, %v2767
  %v2858 = vadd.f32 %v2308, %v2772
  %v2859 = vadd.f32 %v2309, %v2775
  %v2860 = vadd.f32 %v2310, %v2780
  %v2861 = vadd.f32 %v2311, %v2783
  %v2862 = vadd.f32 %v2312, %v2788
  %v2863 = vadd.f32 %v2313, %v2791
  %v2864 = vadd.f32 %v2314, %v2796
  %v2865 = vadd.f32 %v2315, %v2799
  %v2866 = vld [vmem:[%s179 + $0x2] sm:$0xff]
  %v2867 = vld [vmem:[%s179 + $0xa] sm:$0xff]
  %v2868 = vld [vmem:[%s179 + $0x1a] sm:$0xff]
  %v2869 = vld [vmem:[%s179 + $0x22] sm:$0xff]
  %v2870 = vld [vmem:[%s179 + $0x32] sm:$0xff]
  %v2871 = vld [vmem:[%s179 + $0x3a] sm:$0xff]
  %v2872 = vld [vmem:[%s179 + $0x4a] sm:$0xff]
  %v2873 = vld [vmem:[%s179 + $0x52] sm:$0xff]
  %v2874 = vld [vmem:[%s179 + $0x62] sm:$0xff]
  %v2875 = vld [vmem:[%s179 + $0x6a] sm:$0xff]
  %v2876 = vld [vmem:[%s179 + $0x7a] sm:$0xff]
  %v2877 = vld [vmem:[%s179 + $0x82] sm:$0xff]
  %v2878 = vld [vmem:[%s179 + $0x92] sm:$0xff]
  %v2879 = vld [vmem:[%s179 + $0x9a] sm:$0xff]
  %v2880 = vld [vmem:[%s179 + $0xaa] sm:$0xff]
  %v2881 = vld [vmem:[%s179 + $0xb2] sm:$0xff]
  %v2882 = vld [vmem:[%s179 + $0xc2] sm:$0xff]
  %v2883 = vld [vmem:[%s179 + $0xca] sm:$0xff]
  %v2884 = vld [vmem:[%s179 + $0xda] sm:$0xff]
  %v2885 = vld [vmem:[%s179 + $0xe2] sm:$0xff]
  %v2886 = vld [vmem:[%s179 + $0xf2] sm:$0xff]
  %v2887 = vld [vmem:[%s179 + $0xfa] sm:$0xff]
  %v2888 = vld [vmem:[%s179 + $0x10a] sm:$0xff]
  %v2889 = vld [vmem:[%s179 + $0x112] sm:$0xff]
  %v2890 = vld [vmem:[%s179 + $0x122] sm:$0xff]
  %v2891 = vld [vmem:[%s179 + $0x12a] sm:$0xff]
  %v2892 = vld [vmem:[%s179 + $0x13a] sm:$0xff]
  %v2893 = vld [vmem:[%s179 + $0x142] sm:$0xff]
  %v2894 = vld [vmem:[%s179 + $0x152] sm:$0xff]
  %v2895 = vld [vmem:[%s179 + $0x15a] sm:$0xff]
  %v2896 = vld [vmem:[%s179 + $0x16a] sm:$0xff]
  %v2897 = vld [vmem:[%s179 + $0x172] sm:$0xff]
  %v2898 = vld [vmem:[%s179 + $0x1b2] sm:$0xff]
  %v2899 = vld [vmem:[%s179 + $0x1ba] sm:$0xff]
  %v2900 = vld [vmem:[%s179 + $0x1ca] sm:$0xff]
  %v2901 = vld [vmem:[%s179 + $0x1d2] sm:$0xff]
  %v2902 = vld [vmem:[%s179 + $0x1e2] sm:$0xff]
  %v2903 = vld [vmem:[%s179 + $0x1ea] sm:$0xff]
  %v2904 = vld [vmem:[%s179 + $0x1fa] sm:$0xff]
  %v2905 = vld [vmem:[%s179 + $0x202] sm:$0xff]
  %v2906 = vld [vmem:[%s179 + $0x212] sm:$0xff]
  %v2907 = vld [vmem:[%s179 + $0x21a] sm:$0xff]
  %v2908 = vld [vmem:[%s179 + $0x22a] sm:$0xff]
  %v2909 = vld [vmem:[%s179 + $0x232] sm:$0xff]
  %v2910 = vld [vmem:[%s179 + $0x242] sm:$0xff]
  %v2911 = vld [vmem:[%s179 + $0x24a] sm:$0xff]
  %v2912 = vld [vmem:[%s179 + $0x25a] sm:$0xff]
  %v2913 = vld [vmem:[%s179 + $0x262] sm:$0xff]
  %v2914 = vld [vmem:[%s179 + $0x272] sm:$0xff]
  %v2915 = vld [vmem:[%s179 + $0x27a] sm:$0xff]
  %v2916 = vld [vmem:[%s179 + $0x28a] sm:$0xff]
  %v2917 = vld [vmem:[%s179 + $0x292] sm:$0xff]
  %v2918 = vld [vmem:[%s179 + $0x2a2] sm:$0xff]
  %v2919 = vld [vmem:[%s179 + $0x2aa] sm:$0xff]
  %v2920 = vld [vmem:[%s179 + $0x2ba] sm:$0xff]
  %v2921 = vld [vmem:[%s179 + $0x2c2] sm:$0xff]
  %v2922 = vld [vmem:[%s179 + $0x2d2] sm:$0xff]
  %v2923 = vld [vmem:[%s179 + $0x2da] sm:$0xff]
  %v2924 = vld [vmem:[%s179 + $0x2ea] sm:$0xff]
  %v2925 = vld [vmem:[%s179 + $0x2f2] sm:$0xff]
  %v2926 = vld [vmem:[%s179 + $0x302] sm:$0xff]
  %v2927 = vld [vmem:[%s179 + $0x30a] sm:$0xff]
  %v2928 = vld [vmem:[%s179 + $0x31a] sm:$0xff]
  %v2929 = vld [vmem:[%s179 + $0x322] sm:$0xff]
  %v2930 = vpack.c.bf16 %v2867, %v2866
  %v2931 = vpack.c.bf16 %v2869, %v2868
  %v2932 = vpack.c.bf16 %v2871, %v2870
  %v2933 = vpack.c.bf16 %v2873, %v2872
  %v2934 = vpack.c.bf16 %v2875, %v2874
  %v2935 = vpack.c.bf16 %v2877, %v2876
  %v2936 = vpack.c.bf16 %v2879, %v2878
  %v2937 = vpack.c.bf16 %v2881, %v2880
  %v2938 = vpack.c.bf16 %v2883, %v2882
  %v2939 = vpack.c.bf16 %v2885, %v2884
  %v2940 = vpack.c.bf16 %v2887, %v2886
  %v2941 = vpack.c.bf16 %v2889, %v2888
  %v2942 = vpack.c.bf16 %v2891, %v2890
  %v2943 = vpack.c.bf16 %v2893, %v2892
  %v2944 = vpack.c.bf16 %v2895, %v2894
  %v2945 = vpack.c.bf16 %v2897, %v2896
  %v2946 = vpack.c.bf16 %v2899, %v2898
  %v2947 = vpack.c.bf16 %v2901, %v2900
  %v2948 = vpack.c.bf16 %v2903, %v2902
  %v2949 = vpack.c.bf16 %v2905, %v2904
  %v2950 = vpack.c.bf16 %v2907, %v2906
  %v2951 = vpack.c.bf16 %v2909, %v2908
  %v2952 = vpack.c.bf16 %v2911, %v2910
  %v2953 = vpack.c.bf16 %v2913, %v2912
  %v2954 = vpack.c.bf16 %v2915, %v2914
  %v2955 = vpack.c.bf16 %v2917, %v2916
  %v2956 = vpack.c.bf16 %v2919, %v2918
  %v2957 = vpack.c.bf16 %v2921, %v2920
  %v2958 = vpack.c.bf16 %v2923, %v2922
  %v2959 = vpack.c.bf16 %v2925, %v2924
  %v2960 = vpack.c.bf16 %v2927, %v2926
  %v2961 = vpack.c.bf16 %v2929, %v2928
  %s2962 = scalar_lea.vmem %s1, 10
  %v2963 = vld [vmem:[%s2962] sm:$0x3]
  %v2965 = vsel %vm27, %v2930, 0
  %v2968 = vsel %vm27, %v2931, 0
  %v2971 = vsel %vm27, %v2932, 0
  %v2974 = vsel %vm27, %v2933, 0
  %v2977 = vsel %vm27, %v2934, 0
  %v2980 = vsel %vm27, %v2935, 0
  %v2983 = vsel %vm27, %v2936, 0
  %v2986 = vsel %vm27, %v2937, 0
  %v2989 = vsel %vm27, %v2938, 0
  %v2992 = vsel %vm27, %v2939, 0
  %v2995 = vsel %vm27, %v2940, 0
  %v2998 = vsel %vm27, %v2941, 0
  %v3001 = vsel %vm27, %v2942, 0
  %v3004 = vsel %vm27, %v2943, 0
  %v3007 = vsel %vm27, %v2944, 0
  %v3010 = vsel %vm27, %v2945, 0
  %v3013 = vsel %vm27, %v2946, 0
  %v3016 = vsel %vm27, %v2947, 0
  %v3019 = vsel %vm27, %v2948, 0
  %v3022 = vsel %vm27, %v2949, 0
  %v3025 = vsel %vm27, %v2950, 0
  %v3028 = vsel %vm27, %v2951, 0
  %v3031 = vsel %vm27, %v2952, 0
  %v3034 = vsel %vm27, %v2953, 0
  %v3037 = vsel %vm27, %v2954, 0
  %v3040 = vsel %vm27, %v2955, 0
  %v3043 = vsel %vm27, %v2956, 0
  %v3046 = vsel %vm27, %v2957, 0
  %v3049 = vsel %vm27, %v2958, 0
  %v3052 = vsel %vm27, %v2959, 0
  %v3055 = vsel %vm27, %v2960, 0
  %v3058 = vsel %vm27, %v2961, 0
  %v3061 = vsel %vm535, %v2963, 0
  %3063 = vmatprep.subr.bf16.mxu0 0
  %3064 = vmatpush1.bf16.msra.mxu0 %v3061
  %3065 = vmatprep.subr.bf16.mxu0 0
  %3066 = vmatpush1.bf16.msra.mxu0 0
  %3067 = vmatprep.subr.bf16.mxu0 0
  %3068 = vmatpush1.bf16.msra.mxu0 0
  %3069 = vmatprep.subr.bf16.mxu0 0
  %3070 = vmatpush1.bf16.msra.mxu0 0
  %3071 = vmatprep.subr.bf16.mxu0 0
  %3072 = vmatpush1.bf16.msra.mxu0 0
  %3073 = vmatprep.subr.bf16.mxu0 0
  %3074 = vmatpush1.bf16.msra.mxu0 0
  %3075 = vmatprep.subr.bf16.mxu0 0
  %3076 = vmatpush1.bf16.msra.mxu0 0
  %3077 = vmatprep.subr.bf16.mxu0 0
  %3078 = vmatpush1.bf16.msra.mxu0 0
  %3079 = vmatprep.subr.bf16.mxu0 0
  %3080 = vmatpush1.bf16.msra.mxu0 0
  %3081 = vmatprep.subr.bf16.mxu0 0
  %3082 = vmatpush1.bf16.msra.mxu0 0
  %3083 = vmatprep.subr.bf16.mxu0 0
  %3084 = vmatpush1.bf16.msra.mxu0 0
  %3085 = vmatprep.subr.bf16.mxu0 0
  %3086 = vmatpush1.bf16.msra.mxu0 0
  %3087 = vmatprep.subr.bf16.mxu0 0
  %3088 = vmatpush1.bf16.msra.mxu0 0
  %3089 = vmatprep.subr.bf16.mxu0 0
  %3090 = vmatpush1.bf16.msra.mxu0 0
  %3091 = vmatprep.subr.bf16.mxu0 0
  %3092 = vmatpush1.bf16.msra.mxu0 0
  %3093 = vmatprep.subr.bf16.mxu0 0
  %3094 = vmatpush1.bf16.msra.mxu0 0
  %3095 = vmatprep.mubr.bf16.mxu0 0
  %3096 = vmatmul.mubr.bf16.gmra.mrb[0].mxu0 %v2965
  %v3097 = vpop.f32.mrb[0].mxu0
  %v3098 = vadd.f32 0.0, %v3097
  %v3099 = vpop.f32.mrb[0].mxu0
  %v3100 = vpop.f32.mrb[0].mxu0
  %v3101 = vadd.f32 0.0, %v3100
  %v3102 = vpop.f32.mrb[0].mxu0
  %3103 = vmatprep.mubr.bf16.mxu0 0
  %3104 = vmatmul.mubr.bf16.gmra.mrb[0].mxu0 %v2968
  %v3105 = vpop.f32.mrb[0].mxu0
  %v3106 = vadd.f32 0.0, %v3105
  %v3107 = vpop.f32.mrb[0].mxu0
  %v3108 = vpop.f32.mrb[0].mxu0
  %v3109 = vadd.f32 0.0, %v3108
  %v3110 = vpop.f32.mrb[0].mxu0
  %3111 = vmatprep.mubr.bf16.mxu0 0
  %3112 = vmatmul.mubr.bf16.gmra.mrb[0].mxu0 %v2971
  %v3113 = vpop.f32.mrb[0].mxu0
  %v3114 = vadd.f32 0.0, %v3113
  %v3115 = vpop.f32.mrb[0].mxu0
  %v3116 = vpop.f32.mrb[0].mxu0
  %v3117 = vadd.f32 0.0, %v3116
  %v3118 = vpop.f32.mrb[0].mxu0
  %3119 = vmatprep.mubr.bf16.mxu0 0
  %3120 = vmatmul.mubr.bf16.gmra.mrb[0].mxu0 %v2974
  %v3121 = vpop.f32.mrb[0].mxu0
  %v3122 = vadd.f32 0.0, %v3121
  %v3123 = vpop.f32.mrb[0].mxu0
  %v3124 = vpop.f32.mrb[0].mxu0
  %v3125 = vadd.f32 0.0, %v3124
  %v3126 = vpop.f32.mrb[0].mxu0
  %3127 = vmatprep.mubr.bf16.mxu0 0
  %3128 = vmatmul.mubr.bf16.gmra.mrb[0].mxu0 %v2977
  %v3129 = vpop.f32.mrb[0].mxu0
  %v3130 = vadd.f32 0.0, %v3129
  %v3131 = vpop.f32.mrb[0].mxu0
  %v3132 = vpop.f32.mrb[0].mxu0
  %v3133 = vadd.f32 0.0, %v3132
  %v3134 = vpop.f32.mrb[0].mxu0
  %3135 = vmatprep.mubr.bf16.mxu0 0
  %3136 = vmatmul.mubr.bf16.gmra.mrb[0].mxu0 %v2980
  %v3137 = vpop.f32.mrb[0].mxu0
  %v3138 = vadd.f32 0.0, %v3137
  %v3139 = vpop.f32.mrb[0].mxu0
  %v3140 = vpop.f32.mrb[0].mxu0
  %v3141 = vadd.f32 0.0, %v3140
  %v3142 = vpop.f32.mrb[0].mxu0
  %3143 = vmatprep.mubr.bf16.mxu0 0
  %3144 = vmatmul.mubr.bf16.gmra.mrb[0].mxu0 %v2983
  %v3145 = vpop.f32.mrb[0].mxu0
  %v3146 = vadd.f32 0.0, %v3145
  %v3147 = vpop.f32.mrb[0].mxu0
  %v3148 = vpop.f32.mrb[0].mxu0
  %v3149 = vadd.f32 0.0, %v3148
  %v3150 = vpop.f32.mrb[0].mxu0
  %3151 = vmatprep.mubr.bf16.mxu0 0
  %3152 = vmatmul.mubr.bf16.gmra.mrb[0].mxu0 %v2986
  %v3153 = vpop.f32.mrb[0].mxu0
  %v3154 = vadd.f32 0.0, %v3153
  %v3155 = vpop.f32.mrb[0].mxu0
  %v3156 = vpop.f32.mrb[0].mxu0
  %v3157 = vadd.f32 0.0, %v3156
  %v3158 = vpop.f32.mrb[0].mxu0
  %3159 = vmatprep.mubr.bf16.mxu0 0
  %3160 = vmatmul.mubr.bf16.gmra.mrb[0].mxu0 %v2989
  %v3161 = vpop.f32.mrb[0].mxu0
  %v3162 = vadd.f32 0.0, %v3161
  %v3163 = vpop.f32.mrb[0].mxu0
  %v3164 = vpop.f32.mrb[0].mxu0
  %v3165 = vadd.f32 0.0, %v3164
  %v3166 = vpop.f32.mrb[0].mxu0
  %3167 = vmatprep.mubr.bf16.mxu0 0
  %3168 = vmatmul.mubr.bf16.gmra.mrb[0].mxu0 %v2992
  %v3169 = vpop.f32.mrb[0].mxu0
  %v3170 = vadd.f32 0.0, %v3169
  %v3171 = vpop.f32.mrb[0].mxu0
  %v3172 = vpop.f32.mrb[0].mxu0
  %v3173 = vadd.f32 0.0, %v3172
  %v3174 = vpop.f32.mrb[0].mxu0
  %3175 = vmatprep.mubr.bf16.mxu0 0
  %3176 = vmatmul.mubr.bf16.gmra.mrb[0].mxu0 %v2995
  %v3177 = vpop.f32.mrb[0].mxu0
  %v3178 = vadd.f32 0.0, %v3177
  %v3179 = vpop.f32.mrb[0].mxu0
  %v3180 = vpop.f32.mrb[0].mxu0
  %v3181 = vadd.f32 0.0, %v3180
  %v3182 = vpop.f32.mrb[0].mxu0
  %3183 = vmatprep.mubr.bf16.mxu0 0
  %3184 = vmatmul.mubr.bf16.gmra.mrb[0].mxu0 %v2998
  %v3185 = vpop.f32.mrb[0].mxu0
  %v3186 = vadd.f32 0.0, %v3185
  %v3187 = vpop.f32.mrb[0].mxu0
  %v3188 = vpop.f32.mrb[0].mxu0
  %v3189 = vadd.f32 0.0, %v3188
  %v3190 = vpop.f32.mrb[0].mxu0
  %3191 = vmatprep.mubr.bf16.mxu0 0
  %3192 = vmatmul.mubr.bf16.gmra.mrb[0].mxu0 %v3001
  %v3193 = vpop.f32.mrb[0].mxu0
  %v3194 = vadd.f32 0.0, %v3193
  %v3195 = vpop.f32.mrb[0].mxu0
  %v3196 = vpop.f32.mrb[0].mxu0
  %v3197 = vadd.f32 0.0, %v3196
  %v3198 = vpop.f32.mrb[0].mxu0
  %3199 = vmatprep.mubr.bf16.mxu0 0
  %3200 = vmatmul.mubr.bf16.gmra.mrb[0].mxu0 %v3004
  %v3201 = vpop.f32.mrb[0].mxu0
  %v3202 = vadd.f32 0.0, %v3201
  %v3203 = vpop.f32.mrb[0].mxu0
  %v3204 = vpop.f32.mrb[0].mxu0
  %v3205 = vadd.f32 0.0, %v3204
  %v3206 = vpop.f32.mrb[0].mxu0
  %3207 = vmatprep.mubr.bf16.mxu0 0
  %3208 = vmatmul.mubr.bf16.gmra.mrb[0].mxu0 %v3007
  %v3209 = vpop.f32.mrb[0].mxu0
  %v3210 = vadd.f32 0.0, %v3209
  %v3211 = vpop.f32.mrb[0].mxu0
  %v3212 = vpop.f32.mrb[0].mxu0
  %v3213 = vadd.f32 0.0, %v3212
  %v3214 = vpop.f32.mrb[0].mxu0
  %3215 = vmatprep.mubr.bf16.mxu0 0
  %3216 = vmatmul.mubr.bf16.gmra.mrb[0].mxu0 %v3010
  %v3217 = vpop.f32.mrb[0].mxu0
  %v3218 = vadd.f32 0.0, %v3217
  %v3219 = vpop.f32.mrb[0].mxu0
  %v3220 = vpop.f32.mrb[0].mxu0
  %v3221 = vadd.f32 0.0, %v3220
  %v3222 = vpop.f32.mrb[0].mxu0
  %3223 = vmatprep.mubr.bf16.mxu0 0
  %3224 = vmatmul.mubr.bf16.gmra.mrb[0].mxu0 %v3013
  %v3225 = vpop.f32.mrb[0].mxu0
  %v3226 = vadd.f32 0.0, %v3225
  %v3227 = vpop.f32.mrb[0].mxu0
  %v3228 = vpop.f32.mrb[0].mxu0
  %v3229 = vadd.f32 0.0, %v3228
  %v3230 = vpop.f32.mrb[0].mxu0
  %3231 = vmatprep.mubr.bf16.mxu0 0
  %3232 = vmatmul.mubr.bf16.gmra.mrb[0].mxu0 %v3016
  %v3233 = vpop.f32.mrb[0].mxu0
  %v3234 = vadd.f32 0.0, %v3233
  %v3235 = vpop.f32.mrb[0].mxu0
  %v3236 = vpop.f32.mrb[0].mxu0
  %v3237 = vadd.f32 0.0, %v3236
  %v3238 = vpop.f32.mrb[0].mxu0
  %3239 = vmatprep.mubr.bf16.mxu0 0
  %3240 = vmatmul.mubr.bf16.gmra.mrb[0].mxu0 %v3019
  %v3241 = vpop.f32.mrb[0].mxu0
  %v3242 = vadd.f32 0.0, %v3241
  %v3243 = vpop.f32.mrb[0].mxu0
  %v3244 = vpop.f32.mrb[0].mxu0
  %v3245 = vadd.f32 0.0, %v3244
  %v3246 = vpop.f32.mrb[0].mxu0
  %3247 = vmatprep.mubr.bf16.mxu0 0
  %3248 = vmatmul.mubr.bf16.gmra.mrb[0].mxu0 %v3022
  %v3249 = vpop.f32.mrb[0].mxu0
  %v3250 = vadd.f32 0.0, %v3249
  %v3251 = vpop.f32.mrb[0].mxu0
  %v3252 = vpop.f32.mrb[0].mxu0
  %v3253 = vadd.f32 0.0, %v3252
  %v3254 = vpop.f32.mrb[0].mxu0
  %3255 = vmatprep.mubr.bf16.mxu0 0
  %3256 = vmatmul.mubr.bf16.gmra.mrb[0].mxu0 %v3025
  %v3257 = vpop.f32.mrb[0].mxu0
  %v3258 = vadd.f32 0.0, %v3257
  %v3259 = vpop.f32.mrb[0].mxu0
  %v3260 = vpop.f32.mrb[0].mxu0
  %v3261 = vadd.f32 0.0, %v3260
  %v3262 = vpop.f32.mrb[0].mxu0
  %3263 = vmatprep.mubr.bf16.mxu0 0
  %3264 = vmatmul.mubr.bf16.gmra.mrb[0].mxu0 %v3028
  %v3265 = vpop.f32.mrb[0].mxu0
  %v3266 = vadd.f32 0.0, %v3265
  %v3267 = vpop.f32.mrb[0].mxu0
  %v3268 = vpop.f32.mrb[0].mxu0
  %v3269 = vadd.f32 0.0, %v3268
  %v3270 = vpop.f32.mrb[0].mxu0
  %3271 = vmatprep.mubr.bf16.mxu0 0
  %3272 = vmatmul.mubr.bf16.gmra.mrb[0].mxu0 %v3031
  %v3273 = vpop.f32.mrb[0].mxu0
  %v3274 = vadd.f32 0.0, %v3273
  %v3275 = vpop.f32.mrb[0].mxu0
  %v3276 = vpop.f32.mrb[0].mxu0
  %v3277 = vadd.f32 0.0, %v3276
  %v3278 = vpop.f32.mrb[0].mxu0
  %3279 = vmatprep.mubr.bf16.mxu0 0
  %3280 = vmatmul.mubr.bf16.gmra.mrb[0].mxu0 %v3034
  %v3281 = vpop.f32.mrb[0].mxu0
  %v3282 = vadd.f32 0.0, %v3281
  %v3283 = vpop.f32.mrb[0].mxu0
  %v3284 = vpop.f32.mrb[0].mxu0
  %v3285 = vadd.f32 0.0, %v3284
  %v3286 = vpop.f32.mrb[0].mxu0
  %3287 = vmatprep.mubr.bf16.mxu0 0
  %3288 = vmatmul.mubr.bf16.gmra.mrb[0].mxu0 %v3037
  %v3289 = vpop.f32.mrb[0].mxu0
  %v3290 = vadd.f32 0.0, %v3289
  %v3291 = vpop.f32.mrb[0].mxu0
  %v3292 = vpop.f32.mrb[0].mxu0
  %v3293 = vadd.f32 0.0, %v3292
  %v3294 = vpop.f32.mrb[0].mxu0
  %3295 = vmatprep.mubr.bf16.mxu0 0
  %3296 = vmatmul.mubr.bf16.gmra.mrb[0].mxu0 %v3040
  %v3297 = vpop.f32.mrb[0].mxu0
  %v3298 = vadd.f32 0.0, %v3297
  %v3299 = vpop.f32.mrb[0].mxu0
  %v3300 = vpop.f32.mrb[0].mxu0
  %v3301 = vadd.f32 0.0, %v3300
  %v3302 = vpop.f32.mrb[0].mxu0
  %3303 = vmatprep.mubr.bf16.mxu0 0
  %3304 = vmatmul.mubr.bf16.gmra.mrb[0].mxu0 %v3043
  %v3305 = vpop.f32.mrb[0].mxu0
  %v3306 = vadd.f32 0.0, %v3305
  %v3307 = vpop.f32.mrb[0].mxu0
  %v3308 = vpop.f32.mrb[0].mxu0
  %v3309 = vadd.f32 0.0, %v3308
  %v3310 = vpop.f32.mrb[0].mxu0
  %3311 = vmatprep.mubr.bf16.mxu0 0
  %3312 = vmatmul.mubr.bf16.gmra.mrb[0].mxu0 %v3046
  %v3313 = vpop.f32.mrb[0].mxu0
  %v3314 = vadd.f32 0.0, %v3313
  %v3315 = vpop.f32.mrb[0].mxu0
  %v3316 = vpop.f32.mrb[0].mxu0
  %v3317 = vadd.f32 0.0, %v3316
  %v3318 = vpop.f32.mrb[0].mxu0
  %3319 = vmatprep.mubr.bf16.mxu0 0
  %3320 = vmatmul.mubr.bf16.gmra.mrb[0].mxu0 %v3049
  %v3321 = vpop.f32.mrb[0].mxu0
  %v3322 = vadd.f32 0.0, %v3321
  %v3323 = vpop.f32.mrb[0].mxu0
  %v3324 = vpop.f32.mrb[0].mxu0
  %v3325 = vadd.f32 0.0, %v3324
  %v3326 = vpop.f32.mrb[0].mxu0
  %3327 = vmatprep.mubr.bf16.mxu0 0
  %3328 = vmatmul.mubr.bf16.gmra.mrb[0].mxu0 %v3052
  %v3329 = vpop.f32.mrb[0].mxu0
  %v3330 = vadd.f32 0.0, %v3329
  %v3331 = vpop.f32.mrb[0].mxu0
  %v3332 = vpop.f32.mrb[0].mxu0
  %v3333 = vadd.f32 0.0, %v3332
  %v3334 = vpop.f32.mrb[0].mxu0
  %3335 = vmatprep.mubr.bf16.mxu0 0
  %3336 = vmatmul.mubr.bf16.gmra.mrb[0].mxu0 %v3055
  %v3337 = vpop.f32.mrb[0].mxu0
  %v3338 = vadd.f32 0.0, %v3337
  %v3339 = vpop.f32.mrb[0].mxu0
  %v3340 = vpop.f32.mrb[0].mxu0
  %v3341 = vadd.f32 0.0, %v3340
  %v3342 = vpop.f32.mrb[0].mxu0
  %3343 = vmatprep.mubr.bf16.mxu0 0
  %3344 = vmatmul.mubr.bf16.gmra.mrb[0].mxu0 %v3058
  %v3345 = vpop.f32.mrb[0].mxu0
  %v3346 = vadd.f32 0.0, %v3345
  %v3347 = vpop.f32.mrb[0].mxu0
  %v3348 = vpop.f32.mrb[0].mxu0
  %v3349 = vadd.f32 0.0, %v3348
  %v3350 = vpop.f32.mrb[0].mxu0
  %3351 = vdwg.mxu0
  %v3352 = vadd.f32 %v2802, %v3098
  %v3353 = vadd.f32 %v2803, %v3101
  %v3354 = vadd.f32 %v2804, %v3106
  %v3355 = vadd.f32 %v2805, %v3109
  %v3356 = vadd.f32 %v2806, %v3114
  %v3357 = vadd.f32 %v2807, %v3117
  %v3358 = vadd.f32 %v2808, %v3122
  %v3359 = vadd.f32 %v2809, %v3125
  %v3360 = vadd.f32 %v2810, %v3130
  %v3361 = vadd.f32 %v2811, %v3133
  %v3362 = vadd.f32 %v2812, %v3138
  %v3363 = vadd.f32 %v2813, %v3141
  %v3364 = vadd.f32 %v2814, %v3146
  %v3365 = vadd.f32 %v2815, %v3149
  %v3366 = vadd.f32 %v2816, %v3154
  %v3367 = vadd.f32 %v2817, %v3157
  %v3368 = vadd.f32 %v2818, %v3162
  %v3369 = vadd.f32 %v2819, %v3165
  %v3370 = vadd.f32 %v2820, %v3170
  %v3371 = vadd.f32 %v2821, %v3173
  %v3372 = vadd.f32 %v2822, %v3178
  %v3373 = vadd.f32 %v2823, %v3181
  %v3374 = vadd.f32 %v2824, %v3186
  %v3375 = vadd.f32 %v2825, %v3189
  %v3376 = vadd.f32 %v2826, %v3194
  %v3377 = vadd.f32 %v2827, %v3197
  %v3378 = vadd.f32 %v2828, %v3202
  %v3379 = vadd.f32 %v2829, %v3205
  %v3380 = vadd.f32 %v2830, %v3210
  %v3381 = vadd.f32 %v2831, %v3213
  %v3382 = vadd.f32 %v2832, %v3218
  %v3383 = vadd.f32 %v2833, %v3221
  %v3384 = vadd.f32 %v2834, %v3226
  %v3385 = vadd.f32 %v2835, %v3229
  %v3386 = vadd.f32 %v2836, %v3234
  %v3387 = vadd.f32 %v2837, %v3237
  %v3388 = vadd.f32 %v2838, %v3242
  %v3389 = vadd.f32 %v2839, %v3245
  %v3390 = vadd.f32 %v2840, %v3250
  %v3391 = vadd.f32 %v2841, %v3253
  %v3392 = vadd.f32 %v2842, %v3258
  %v3393 = vadd.f32 %v2843, %v3261
  %v3394 = vadd.f32 %v2844, %v3266
  %v3395 = vadd.f32 %v2845, %v3269
  %v3396 = vadd.f32 %v2846, %v3274
  %v3397 = vadd.f32 %v2847, %v3277
  %v3398 = vadd.f32 %v2848, %v3282
  %v3399 = vadd.f32 %v2849, %v3285
  %v3400 = vadd.f32 %v2850, %v3290
  %v3401 = vadd.f32 %v2851, %v3293
  %v3402 = vadd.f32 %v2852, %v3298
  %v3403 = vadd.f32 %v2853, %v3301
  %v3404 = vadd.f32 %v2854, %v3306
  %v3405 = vadd.f32 %v2855, %v3309
  %v3406 = vadd.f32 %v2856, %v3314
  %v3407 = vadd.f32 %v2857, %v3317
  %v3408 = vadd.f32 %v2858, %v3322
  %v3409 = vadd.f32 %v2859, %v3325
  %v3410 = vadd.f32 %v2860, %v3330
  %v3411 = vadd.f32 %v2861, %v3333
  %v3412 = vadd.f32 %v2862, %v3338
  %v3413 = vadd.f32 %v2863, %v3341
  %v3414 = vadd.f32 %v2864, %v3346
  %v3415 = vadd.f32 %v2865, %v3349
  %s3416 = scalar_lea.vmem [#allocation2], 48
  %v3417 = vld [vmem:[%s3416] sm:$0xff]
  %v3418 = vld [vmem:[%s3416 + $0x8] sm:$0xff]
  %v3419 = vld [vmem:[%s3416 + $0x18] sm:$0xff]
  %v3420 = vld [vmem:[%s3416 + $0x20] sm:$0xff]
  %v3421 = vld [vmem:[%s3416 + $0x30] sm:$0xff]
  %v3422 = vld [vmem:[%s3416 + $0x38] sm:$0xff]
  %v3423 = vld [vmem:[%s3416 + $0x48] sm:$0xff]
  %v3424 = vld [vmem:[%s3416 + $0x50] sm:$0xff]
  %v3425 = vld [vmem:[%s3416 + $0x60] sm:$0xff]
  %v3426 = vld [vmem:[%s3416 + $0x68] sm:$0xff]
  %v3427 = vld [vmem:[%s3416 + $0x78] sm:$0xff]
  %v3428 = vld [vmem:[%s3416 + $0x80] sm:$0xff]
  %v3429 = vld [vmem:[%s3416 + $0x90] sm:$0xff]
  %v3430 = vld [vmem:[%s3416 + $0x98] sm:$0xff]
  %v3431 = vld [vmem:[%s3416 + $0xa8] sm:$0xff]
  %v3432 = vld [vmem:[%s3416 + $0xb0] sm:$0xff]
  %v3433 = vld [vmem:[%s3416 + $0xc0] sm:$0xff]
  %v3434 = vld [vmem:[%s3416 + $0xc8] sm:$0xff]
  %v3435 = vld [vmem:[%s3416 + $0xd8] sm:$0xff]
  %v3436 = vld [vmem:[%s3416 + $0xe0] sm:$0xff]
  %v3437 = vld [vmem:[%s3416 + $0xf0] sm:$0xff]
  %v3438 = vld [vmem:[%s3416 + $0xf8] sm:$0xff]
  %v3439 = vld [vmem:[%s3416 + $0x108] sm:$0xff]
  %v3440 = vld [vmem:[%s3416 + $0x110] sm:$0xff]
  %v3441 = vld [vmem:[%s3416 + $0x120] sm:$0xff]
  %v3442 = vld [vmem:[%s3416 + $0x128] sm:$0xff]
  %v3443 = vld [vmem:[%s3416 + $0x138] sm:$0xff]
  %v3444 = vld [vmem:[%s3416 + $0x140] sm:$0xff]
  %v3445 = vld [vmem:[%s3416 + $0x150] sm:$0xff]
  %v3446 = vld [vmem:[%s3416 + $0x158] sm:$0xff]
  %v3447 = vld [vmem:[%s3416 + $0x168] sm:$0xff]
  %v3448 = vld [vmem:[%s3416 + $0x170] sm:$0xff]
  %v3449 = vld [vmem:[%s3416 + $0x1b0] sm:$0xff]
  %v3450 = vld [vmem:[%s3416 + $0x1b8] sm:$0xff]
  %v3451 = vld [vmem:[%s3416 + $0x1c8] sm:$0xff]
  %v3452 = vld [vmem:[%s3416 + $0x1d0] sm:$0xff]
  %v3453 = vld [vmem:[%s3416 + $0x1e0] sm:$0xff]
  %v3454 = vld [vmem:[%s3416 + $0x1e8] sm:$0xff]
  %v3455 = vld [vmem:[%s3416 + $0x1f8] sm:$0xff]
  %v3456 = vld [vmem:[%s3416 + $0x200] sm:$0xff]
  %v3457 = vld [vmem:[%s3416 + $0x210] sm:$0xff]
  %v3458 = vld [vmem:[%s3416 + $0x218] sm:$0xff]
  %v3459 = vld [vmem:[%s3416 + $0x228] sm:$0xff]
  %v3460 = vld [vmem:[%s3416 + $0x230] sm:$0xff]
  %v3461 = vld [vmem:[%s3416 + $0x240] sm:$0xff]
  %v3462 = vld [vmem:[%s3416 + $0x248] sm:$0xff]
  %v3463 = vld [vmem:[%s3416 + $0x258] sm:$0xff]
  %v3464 = vld [vmem:[%s3416 + $0x260] sm:$0xff]
  %v3465 = vld [vmem:[%s3416 + $0x270] sm:$0xff]
  %v3466 = vld [vmem:[%s3416 + $0x278] sm:$0xff]
  %v3467 = vld [vmem:[%s3416 + $0x288] sm:$0xff]
  %v3468 = vld [vmem:[%s3416 + $0x290] sm:$0xff]
  %v3469 = vld [vmem:[%s3416 + $0x2a0] sm:$0xff]
  %v3470 = vld [vmem:[%s3416 + $0x2a8] sm:$0xff]
  %v3471 = vld [vmem:[%s3416 + $0x2b8] sm:$0xff]
  %v3472 = vld [vmem:[%s3416 + $0x2c0] sm:$0xff]
  %v3473 = vld [vmem:[%s3416 + $0x2d0] sm:$0xff]
  %v3474 = vld [vmem:[%s3416 + $0x2d8] sm:$0xff]
  %v3475 = vld [vmem:[%s3416 + $0x2e8] sm:$0xff]
  %v3476 = vld [vmem:[%s3416 + $0x2f0] sm:$0xff]
  %v3477 = vld [vmem:[%s3416 + $0x300] sm:$0xff]
  %v3478 = vld [vmem:[%s3416 + $0x308] sm:$0xff]
  %v3479 = vld [vmem:[%s3416 + $0x318] sm:$0xff]
  %v3480 = vld [vmem:[%s3416 + $0x320] sm:$0xff]
  %v3481 = vpack.c.bf16 %v3418, %v3417
  %v3482 = vpack.c.bf16 %v3420, %v3419
  %v3483 = vpack.c.bf16 %v3422, %v3421
  %v3484 = vpack.c.bf16 %v3424, %v3423
  %v3485 = vpack.c.bf16 %v3426, %v3425
  %v3486 = vpack.c.bf16 %v3428, %v3427
  %v3487 = vpack.c.bf16 %v3430, %v3429
  %v3488 = vpack.c.bf16 %v3432, %v3431
  %v3489 = vpack.c.bf16 %v3434, %v3433
  %v3490 = vpack.c.bf16 %v3436, %v3435
  %v3491 = vpack.c.bf16 %v3438, %v3437
  %v3492 = vpack.c.bf16 %v3440, %v3439
  %v3493 = vpack.c.bf16 %v3442, %v3441
  %v3494 = vpack.c.bf16 %v3444, %v3443
  %v3495 = vpack.c.bf16 %v3446, %v3445
  %v3496 = vpack.c.bf16 %v3448, %v3447
  %v3497 = vpack.c.bf16 %v3450, %v3449
  %v3498 = vpack.c.bf16 %v3452, %v3451
  %v3499 = vpack.c.bf16 %v3454, %v3453
  %v3500 = vpack.c.bf16 %v3456, %v3455
  %v3501 = vpack.c.bf16 %v3458, %v3457
  %v3502 = vpack.c.bf16 %v3460, %v3459
  %v3503 = vpack.c.bf16 %v3462, %v3461
  %v3504 = vpack.c.bf16 %v3464, %v3463
  %v3505 = vpack.c.bf16 %v3466, %v3465
  %v3506 = vpack.c.bf16 %v3468, %v3467
  %v3507 = vpack.c.bf16 %v3470, %v3469
  %v3508 = vpack.c.bf16 %v3472, %v3471
  %v3509 = vpack.c.bf16 %v3474, %v3473
  %v3510 = vpack.c.bf16 %v3476, %v3475
  %v3511 = vpack.c.bf16 %v3478, %v3477
  %v3512 = vpack.c.bf16 %v3480, %v3479
  %s3513 = scalar_lea.vmem %s1, 12
  %v3514 = vld [vmem:[%s3513] sm:$0x3]
  %v3516 = vsel %vm27, %v3481, 0
  %v3519 = vsel %vm27, %v3482, 0
  %v3522 = vsel %vm27, %v3483, 0
  %v3525 = vsel %vm27, %v3484, 0
  %v3528 = vsel %vm27, %v3485, 0
  %v3531 = vsel %vm27, %v3486, 0
  %v3534 = vsel %vm27, %v3487, 0
  %v3537 = vsel %vm27, %v3488, 0
  %v3540 = vsel %vm27, %v3489, 0
  %v3543 = vsel %vm27, %v3490, 0
  %v3546 = vsel %vm27, %v3491, 0
  %v3549 = vsel %vm27, %v3492, 0
  %v3552 = vsel %vm27, %v3493, 0
  %v3555 = vsel %vm27, %v3494, 0
  %v3558 = vsel %vm27, %v3495, 0
  %v3561 = vsel %vm27, %v3496, 0
  %v3564 = vsel %vm27, %v3497, 0
  %v3567 = vsel %vm27, %v3498, 0
  %v3570 = vsel %vm27, %v3499, 0
  %v3573 = vsel %vm27, %v3500, 0
  %v3576 = vsel %vm27, %v3501, 0
  %v3579 = vsel %vm27, %v3502, 0
  %v3582 = vsel %vm27, %v3503, 0
  %v3585 = vsel %vm27, %v3504, 0
  %v3588 = vsel %vm27, %v3505, 0
  %v3591 = vsel %vm27, %v3506, 0
  %v3594 = vsel %vm27, %v3507, 0
  %v3597 = vsel %vm27, %v3508, 0
  %v3600 = vsel %vm27, %v3509, 0
  %v3603 = vsel %vm27, %v3510, 0
  %v3606 = vsel %vm27, %v3511, 0
  %v3609 = vsel %vm27, %v3512, 0
  %v3612 = vsel %vm535, %v3514, 0
  %3614 = vmatprep.subr.bf16.mxu0 0
  %3615 = vmatpush1.bf16.msra.mxu0 %v3612
  %3616 = vmatprep.subr.bf16.mxu0 0
  %3617 = vmatpush1.bf16.msra.mxu0 0
  %3618 = vmatprep.subr.bf16.mxu0 0
  %3619 = vmatpush1.bf16.msra.mxu0 0
  %3620 = vmatprep.subr.bf16.mxu0 0
  %3621 = vmatpush1.bf16.msra.mxu0 0
  %3622 = vmatprep.subr.bf16.mxu0 0
  %3623 = vmatpush1.bf16.msra.mxu0 0
  %3624 = vmatprep.subr.bf16.mxu0 0
  %3625 = vmatpush1.bf16.msra.mxu0 0
  %3626 = vmatprep.subr.bf16.mxu0 0
  %3627 = vmatpush1.bf16.msra.mxu0 0
  %3628 = vmatprep.subr.bf16.mxu0 0
  %3629 = vmatpush1.bf16.msra.mxu0 0
  %3630 = vmatprep.subr.bf16.mxu0 0
  %3631 = vmatpush1.bf16.msra.mxu0 0
  %3632 = vmatprep.subr.bf16.mxu0 0
  %3633 = vmatpush1.bf16.msra.mxu0 0
  %3634 = vmatprep.subr.bf16.mxu0 0
  %3635 = vmatpush1.bf16.msra.mxu0 0
  %3636 = vmatprep.subr.bf16.mxu0 0
  %3637 = vmatpush1.bf16.msra.mxu0 0
  %3638 = vmatprep.subr.bf16.mxu0 0
  %3639 = vmatpush1.bf16.msra.mxu0 0
  %3640 = vmatprep.subr.bf16.mxu0 0
  %3641 = vmatpush1.bf16.msra.mxu0 0
  %3642 = vmatprep.subr.bf16.mxu0 0
  %3643 = vmatpush1.bf16.msra.mxu0 0
  %3644 = vmatprep.subr.bf16.mxu0 0
  %3645 = vmatpush1.bf16.msra.mxu0 0
  %3646 = vmatprep.mubr.bf16.mxu0 0
  %3647 = vmatmul.mubr.bf16.gmra.mrb[0].mxu0 %v3516
  %v3648 = vpop.f32.mrb[0].mxu0
  %v3649 = vadd.f32 0.0, %v3648
  %v3650 = vpop.f32.mrb[0].mxu0
  %v3651 = vpop.f32.mrb[0].mxu0
  %v3652 = vadd.f32 0.0, %v3651
  %v3653 = vpop.f32.mrb[0].mxu0
  %3654 = vmatprep.mubr.bf16.mxu0 0
  %3655 = vmatmul.mubr.bf16.gmra.mrb[0].mxu0 %v3519
  %v3656 = vpop.f32.mrb[0].mxu0
  %v3657 = vadd.f32 0.0, %v3656
  %v3658 = vpop.f32.mrb[0].mxu0
  %v3659 = vpop.f32.mrb[0].mxu0
  %v3660 = vadd.f32 0.0, %v3659
  %v3661 = vpop.f32.mrb[0].mxu0
  %3662 = vmatprep.mubr.bf16.mxu0 0
  %3663 = vmatmul.mubr.bf16.gmra.mrb[0].mxu0 %v3522
  %v3664 = vpop.f32.mrb[0].mxu0
  %v3665 = vadd.f32 0.0, %v3664
  %v3666 = vpop.f32.mrb[0].mxu0
  %v3667 = vpop.f32.mrb[0].mxu0
  %v3668 = vadd.f32 0.0, %v3667
  %v3669 = vpop.f32.mrb[0].mxu0
  %3670 = vmatprep.mubr.bf16.mxu0 0
  %3671 = vmatmul.mubr.bf16.gmra.mrb[0].mxu0 %v3525
  %v3672 = vpop.f32.mrb[0].mxu0
  %v3673 = vadd.f32 0.0, %v3672
  %v3674 = vpop.f32.mrb[0].mxu0
  %v3675 = vpop.f32.mrb[0].mxu0
  %v3676 = vadd.f32 0.0, %v3675
  %v3677 = vpop.f32.mrb[0].mxu0
  %3678 = vmatprep.mubr.bf16.mxu0 0
  %3679 = vmatmul.mubr.bf16.gmra.mrb[0].mxu0 %v3528
  %v3680 = vpop.f32.mrb[0].mxu0
  %v3681 = vadd.f32 0.0, %v3680
  %v3682 = vpop.f32.mrb[0].mxu0
  %v3683 = vpop.f32.mrb[0].mxu0
  %v3684 = vadd.f32 0.0, %v3683
  %v3685 = vpop.f32.mrb[0].mxu0
  %3686 = vmatprep.mubr.bf16.mxu0 0
  %3687 = vmatmul.mubr.bf16.gmra.mrb[0].mxu0 %v3531
  %v3688 = vpop.f32.mrb[0].mxu0
  %v3689 = vadd.f32 0.0, %v3688
  %v3690 = vpop.f32.mrb[0].mxu0
  %v3691 = vpop.f32.mrb[0].mxu0
  %v3692 = vadd.f32 0.0, %v3691
  %v3693 = vpop.f32.mrb[0].mxu0
  %3694 = vmatprep.mubr.bf16.mxu0 0
  %3695 = vmatmul.mubr.bf16.gmra.mrb[0].mxu0 %v3534
  %v3696 = vpop.f32.mrb[0].mxu0
  %v3697 = vadd.f32 0.0, %v3696
  %v3698 = vpop.f32.mrb[0].mxu0
  %v3699 = vpop.f32.mrb[0].mxu0
  %v3700 = vadd.f32 0.0, %v3699
  %v3701 = vpop.f32.mrb[0].mxu0
  %3702 = vmatprep.mubr.bf16.mxu0 0
  %3703 = vmatmul.mubr.bf16.gmra.mrb[0].mxu0 %v3537
  %v3704 = vpop.f32.mrb[0].mxu0
  %v3705 = vadd.f32 0.0, %v3704
  %v3706 = vpop.f32.mrb[0].mxu0
  %v3707 = vpop.f32.mrb[0].mxu0
  %v3708 = vadd.f32 0.0, %v3707
  %v3709 = vpop.f32.mrb[0].mxu0
  %3710 = vmatprep.mubr.bf16.mxu0 0
  %3711 = vmatmul.mubr.bf16.gmra.mrb[0].mxu0 %v3540
  %v3712 = vpop.f32.mrb[0].mxu0
  %v3713 = vadd.f32 0.0, %v3712
  %v3714 = vpop.f32.mrb[0].mxu0
  %v3715 = vpop.f32.mrb[0].mxu0
  %v3716 = vadd.f32 0.0, %v3715
  %v3717 = vpop.f32.mrb[0].mxu0
  %3718 = vmatprep.mubr.bf16.mxu0 0
  %3719 = vmatmul.mubr.bf16.gmra.mrb[0].mxu0 %v3543
  %v3720 = vpop.f32.mrb[0].mxu0
  %v3721 = vadd.f32 0.0, %v3720
  %v3722 = vpop.f32.mrb[0].mxu0
  %v3723 = vpop.f32.mrb[0].mxu0
  %v3724 = vadd.f32 0.0, %v3723
  %v3725 = vpop.f32.mrb[0].mxu0
  %3726 = vmatprep.mubr.bf16.mxu0 0
  %3727 = vmatmul.mubr.bf16.gmra.mrb[0].mxu0 %v3546
  %v3728 = vpop.f32.mrb[0].mxu0
  %v3729 = vadd.f32 0.0, %v3728
  %v3730 = vpop.f32.mrb[0].mxu0
  %v3731 = vpop.f32.mrb[0].mxu0
  %v3732 = vadd.f32 0.0, %v3731
  %v3733 = vpop.f32.mrb[0].mxu0
  %3734 = vmatprep.mubr.bf16.mxu0 0
  %3735 = vmatmul.mubr.bf16.gmra.mrb[0].mxu0 %v3549
  %v3736 = vpop.f32.mrb[0].mxu0
  %v3737 = vadd.f32 0.0, %v3736
  %v3738 = vpop.f32.mrb[0].mxu0
  %v3739 = vpop.f32.mrb[0].mxu0
  %v3740 = vadd.f32 0.0, %v3739
  %v3741 = vpop.f32.mrb[0].mxu0
  %3742 = vmatprep.mubr.bf16.mxu0 0
  %3743 = vmatmul.mubr.bf16.gmra.mrb[0].mxu0 %v3552
  %v3744 = vpop.f32.mrb[0].mxu0
  %v3745 = vadd.f32 0.0, %v3744
  %v3746 = vpop.f32.mrb[0].mxu0
  %v3747 = vpop.f32.mrb[0].mxu0
  %v3748 = vadd.f32 0.0, %v3747
  %v3749 = vpop.f32.mrb[0].mxu0
  %3750 = vmatprep.mubr.bf16.mxu0 0
  %3751 = vmatmul.mubr.bf16.gmra.mrb[0].mxu0 %v3555
  %v3752 = vpop.f32.mrb[0].mxu0
  %v3753 = vadd.f32 0.0, %v3752
  %v3754 = vpop.f32.mrb[0].mxu0
  %v3755 = vpop.f32.mrb[0].mxu0
  %v3756 = vadd.f32 0.0, %v3755
  %v3757 = vpop.f32.mrb[0].mxu0
  %3758 = vmatprep.mubr.bf16.mxu0 0
  %3759 = vmatmul.mubr.bf16.gmra.mrb[0].mxu0 %v3558
  %v3760 = vpop.f32.mrb[0].mxu0
  %v3761 = vadd.f32 0.0, %v3760
  %v3762 = vpop.f32.mrb[0].mxu0
  %v3763 = vpop.f32.mrb[0].mxu0
  %v3764 = vadd.f32 0.0, %v3763
  %v3765 = vpop.f32.mrb[0].mxu0
  %3766 = vmatprep.mubr.bf16.mxu0 0
  %3767 = vmatmul.mubr.bf16.gmra.mrb[0].mxu0 %v3561
  %v3768 = vpop.f32.mrb[0].mxu0
  %v3769 = vadd.f32 0.0, %v3768
  %v3770 = vpop.f32.mrb[0].mxu0
  %v3771 = vpop.f32.mrb[0].mxu0
  %v3772 = vadd.f32 0.0, %v3771
  %v3773 = vpop.f32.mrb[0].mxu0
  %3774 = vmatprep.mubr.bf16.mxu0 0
  %3775 = vmatmul.mubr.bf16.gmra.mrb[0].mxu0 %v3564
  %v3776 = vpop.f32.mrb[0].mxu0
  %v3777 = vadd.f32 0.0, %v3776
  %v3778 = vpop.f32.mrb[0].mxu0
  %v3779 = vpop.f32.mrb[0].mxu0
  %v3780 = vadd.f32 0.0, %v3779
  %v3781 = vpop.f32.mrb[0].mxu0
  %3782 = vmatprep.mubr.bf16.mxu0 0
  %3783 = vmatmul.mubr.bf16.gmra.mrb[0].mxu0 %v3567
  %v3784 = vpop.f32.mrb[0].mxu0
  %v3785 = vadd.f32 0.0, %v3784
  %v3786 = vpop.f32.mrb[0].mxu0
  %v3787 = vpop.f32.mrb[0].mxu0
  %v3788 = vadd.f32 0.0, %v3787
  %v3789 = vpop.f32.mrb[0].mxu0
  %3790 = vmatprep.mubr.bf16.mxu0 0
  %3791 = vmatmul.mubr.bf16.gmra.mrb[0].mxu0 %v3570
  %v3792 = vpop.f32.mrb[0].mxu0
  %v3793 = vadd.f32 0.0, %v3792
  %v3794 = vpop.f32.mrb[0].mxu0
  %v3795 = vpop.f32.mrb[0].mxu0
  %v3796 = vadd.f32 0.0, %v3795
  %v3797 = vpop.f32.mrb[0].mxu0
  %3798 = vmatprep.mubr.bf16.mxu0 0
  %3799 = vmatmul.mubr.bf16.gmra.mrb[0].mxu0 %v3573
  %v3800 = vpop.f32.mrb[0].mxu0
  %v3801 = vadd.f32 0.0, %v3800
  %v3802 = vpop.f32.mrb[0].mxu0
  %v3803 = vpop.f32.mrb[0].mxu0
  %v3804 = vadd.f32 0.0, %v3803
  %v3805 = vpop.f32.mrb[0].mxu0
  %3806 = vmatprep.mubr.bf16.mxu0 0
  %3807 = vmatmul.mubr.bf16.gmra.mrb[0].mxu0 %v3576
  %v3808 = vpop.f32.mrb[0].mxu0
  %v3809 = vadd.f32 0.0, %v3808
  %v3810 = vpop.f32.mrb[0].mxu0
  %v3811 = vpop.f32.mrb[0].mxu0
  %v3812 = vadd.f32 0.0, %v3811
  %v3813 = vpop.f32.mrb[0].mxu0
  %3814 = vmatprep.mubr.bf16.mxu0 0
  %3815 = vmatmul.mubr.bf16.gmra.mrb[0].mxu0 %v3579
  %v3816 = vpop.f32.mrb[0].mxu0
  %v3817 = vadd.f32 0.0, %v3816
  %v3818 = vpop.f32.mrb[0].mxu0
  %v3819 = vpop.f32.mrb[0].mxu0
  %v3820 = vadd.f32 0.0, %v3819
  %v3821 = vpop.f32.mrb[0].mxu0
  %3822 = vmatprep.mubr.bf16.mxu0 0
  %3823 = vmatmul.mubr.bf16.gmra.mrb[0].mxu0 %v3582
  %v3824 = vpop.f32.mrb[0].mxu0
  %v3825 = vadd.f32 0.0, %v3824
  %v3826 = vpop.f32.mrb[0].mxu0
  %v3827 = vpop.f32.mrb[0].mxu0
  %v3828 = vadd.f32 0.0, %v3827
  %v3829 = vpop.f32.mrb[0].mxu0
  %3830 = vmatprep.mubr.bf16.mxu0 0
  %3831 = vmatmul.mubr.bf16.gmra.mrb[0].mxu0 %v3585
  %v3832 = vpop.f32.mrb[0].mxu0
  %v3833 = vadd.f32 0.0, %v3832
  %v3834 = vpop.f32.mrb[0].mxu0
  %v3835 = vpop.f32.mrb[0].mxu0
  %v3836 = vadd.f32 0.0, %v3835
  %v3837 = vpop.f32.mrb[0].mxu0
  %3838 = vmatprep.mubr.bf16.mxu0 0
  %3839 = vmatmul.mubr.bf16.gmra.mrb[0].mxu0 %v3588
  %v3840 = vpop.f32.mrb[0].mxu0
  %v3841 = vadd.f32 0.0, %v3840
  %v3842 = vpop.f32.mrb[0].mxu0
  %v3843 = vpop.f32.mrb[0].mxu0
  %v3844 = vadd.f32 0.0, %v3843
  %v3845 = vpop.f32.mrb[0].mxu0
  %3846 = vmatprep.mubr.bf16.mxu0 0
  %3847 = vmatmul.mubr.bf16.gmra.mrb[0].mxu0 %v3591
  %v3848 = vpop.f32.mrb[0].mxu0
  %v3849 = vadd.f32 0.0, %v3848
  %v3850 = vpop.f32.mrb[0].mxu0
  %v3851 = vpop.f32.mrb[0].mxu0
  %v3852 = vadd.f32 0.0, %v3851
  %v3853 = vpop.f32.mrb[0].mxu0
  %3854 = vmatprep.mubr.bf16.mxu0 0
  %3855 = vmatmul.mubr.bf16.gmra.mrb[0].mxu0 %v3594
  %v3856 = vpop.f32.mrb[0].mxu0
  %v3857 = vadd.f32 0.0, %v3856
  %v3858 = vpop.f32.mrb[0].mxu0
  %v3859 = vpop.f32.mrb[0].mxu0
  %v3860 = vadd.f32 0.0, %v3859
  %v3861 = vpop.f32.mrb[0].mxu0
  %3862 = vmatprep.mubr.bf16.mxu0 0
  %3863 = vmatmul.mubr.bf16.gmra.mrb[0].mxu0 %v3597
  %v3864 = vpop.f32.mrb[0].mxu0
  %v3865 = vadd.f32 0.0, %v3864
  %v3866 = vpop.f32.mrb[0].mxu0
  %v3867 = vpop.f32.mrb[0].mxu0
  %v3868 = vadd.f32 0.0, %v3867
  %v3869 = vpop.f32.mrb[0].mxu0
  %3870 = vmatprep.mubr.bf16.mxu0 0
  %3871 = vmatmul.mubr.bf16.gmra.mrb[0].mxu0 %v3600
  %v3872 = vpop.f32.mrb[0].mxu0
  %v3873 = vadd.f32 0.0, %v3872
  %v3874 = vpop.f32.mrb[0].mxu0
  %v3875 = vpop.f32.mrb[0].mxu0
  %v3876 = vadd.f32 0.0, %v3875
  %v3877 = vpop.f32.mrb[0].mxu0
  %3878 = vmatprep.mubr.bf16.mxu0 0
  %3879 = vmatmul.mubr.bf16.gmra.mrb[0].mxu0 %v3603
  %v3880 = vpop.f32.mrb[0].mxu0
  %v3881 = vadd.f32 0.0, %v3880
  %v3882 = vpop.f32.mrb[0].mxu0
  %v3883 = vpop.f32.mrb[0].mxu0
  %v3884 = vadd.f32 0.0, %v3883
  %v3885 = vpop.f32.mrb[0].mxu0
  %3886 = vmatprep.mubr.bf16.mxu0 0
  %3887 = vmatmul.mubr.bf16.gmra.mrb[0].mxu0 %v3606
  %v3888 = vpop.f32.mrb[0].mxu0
  %v3889 = vadd.f32 0.0, %v3888
  %v3890 = vpop.f32.mrb[0].mxu0
  %v3891 = vpop.f32.mrb[0].mxu0
  %v3892 = vadd.f32 0.0, %v3891
  %v3893 = vpop.f32.mrb[0].mxu0
  %3894 = vmatprep.mubr.bf16.mxu0 0
  %3895 = vmatmul.mubr.bf16.gmra.mrb[0].mxu0 %v3609
  %v3896 = vpop.f32.mrb[0].mxu0
  %v3897 = vadd.f32 0.0, %v3896
  %v3898 = vpop.f32.mrb[0].mxu0
  %v3899 = vpop.f32.mrb[0].mxu0
  %v3900 = vadd.f32 0.0, %v3899
  %v3901 = vpop.f32.mrb[0].mxu0
  %3902 = vdwg.mxu0
  %v3903 = vadd.f32 %v3352, %v3649
  %v3904 = vadd.f32 %v3353, %v3652
  %v3905 = vadd.f32 %v3354, %v3657
  %v3906 = vadd.f32 %v3355, %v3660
  %v3907 = vadd.f32 %v3356, %v3665
  %v3908 = vadd.f32 %v3357, %v3668
  %v3909 = vadd.f32 %v3358, %v3673
  %v3910 = vadd.f32 %v3359, %v3676
  %v3911 = vadd.f32 %v3360, %v3681
  %v3912 = vadd.f32 %v3361, %v3684
  %v3913 = vadd.f32 %v3362, %v3689
  %v3914 = vadd.f32 %v3363, %v3692
  %v3915 = vadd.f32 %v3364, %v3697
  %v3916 = vadd.f32 %v3365, %v3700
  %v3917 = vadd.f32 %v3366, %v3705
  %v3918 = vadd.f32 %v3367, %v3708
  %v3919 = vadd.f32 %v3368, %v3713
  %v3920 = vadd.f32 %v3369, %v3716
  %v3921 = vadd.f32 %v3370, %v3721
  %v3922 = vadd.f32 %v3371, %v3724
  %v3923 = vadd.f32 %v3372, %v3729
  %v3924 = vadd.f32 %v3373, %v3732
  %v3925 = vadd.f32 %v3374, %v3737
  %v3926 = vadd.f32 %v3375, %v3740
  %v3927 = vadd.f32 %v3376, %v3745
  %v3928 = vadd.f32 %v3377, %v3748
  %v3929 = vadd.f32 %v3378, %v3753
  %v3930 = vadd.f32 %v3379, %v3756
  %v3931 = vadd.f32 %v3380, %v3761
  %v3932 = vadd.f32 %v3381, %v3764
  %v3933 = vadd.f32 %v3382, %v3769
  %v3934 = vadd.f32 %v3383, %v3772
  %v3935 = vadd.f32 %v3384, %v3777
  %v3936 = vadd.f32 %v3385, %v3780
  %v3937 = vadd.f32 %v3386, %v3785
  %v3938 = vadd.f32 %v3387, %v3788
  %v3939 = vadd.f32 %v3388, %v3793
  %v3940 = vadd.f32 %v3389, %v3796
  %v3941 = vadd.f32 %v3390, %v3801
  %v3942 = vadd.f32 %v3391, %v3804
  %v3943 = vadd.f32 %v3392, %v3809
  %v3944 = vadd.f32 %v3393, %v3812
  %v3945 = vadd.f32 %v3394, %v3817
  %v3946 = vadd.f32 %v3395, %v3820
  %v3947 = vadd.f32 %v3396, %v3825
  %v3948 = vadd.f32 %v3397, %v3828
  %v3949 = vadd.f32 %v3398, %v3833
  %v3950 = vadd.f32 %v3399, %v3836
  %v3951 = vadd.f32 %v3400, %v3841
  %v3952 = vadd.f32 %v3401, %v3844
  %v3953 = vadd.f32 %v3402, %v3849
  %v3954 = vadd.f32 %v3403, %v3852
  %v3955 = vadd.f32 %v3404, %v3857
  %v3956 = vadd.f32 %v3405, %v3860
  %v3957 = vadd.f32 %v3406, %v3865
  %v3958 = vadd.f32 %v3407, %v3868
  %v3959 = vadd.f32 %v3408, %v3873
  %v3960 = vadd.f32 %v3409, %v3876
  %v3961 = vadd.f32 %v3410, %v3881
  %v3962 = vadd.f32 %v3411, %v3884
  %v3963 = vadd.f32 %v3412, %v3889
  %v3964 = vadd.f32 %v3413, %v3892
  %v3965 = vadd.f32 %v3414, %v3897
  %v3966 = vadd.f32 %v3415, %v3900
  %v3967 = vld [vmem:[%s3416 + $0x1] sm:$0xff]
  %v3968 = vld [vmem:[%s3416 + $0x9] sm:$0xff]
  %v3969 = vld [vmem:[%s3416 + $0x19] sm:$0xff]
  %v3970 = vld [vmem:[%s3416 + $0x21] sm:$0xff]
  %v3971 = vld [vmem:[%s3416 + $0x31] sm:$0xff]
  %v3972 = vld [vmem:[%s3416 + $0x39] sm:$0xff]
  %v3973 = vld [vmem:[%s3416 + $0x49] sm:$0xff]
  %v3974 = vld [vmem:[%s3416 + $0x51] sm:$0xff]
  %v3975 = vld [vmem:[%s3416 + $0x61] sm:$0xff]
  %v3976 = vld [vmem:[%s3416 + $0x69] sm:$0xff]
  %v3977 = vld [vmem:[%s3416 + $0x79] sm:$0xff]
  %v3978 = vld [vmem:[%s3416 + $0x81] sm:$0xff]
  %v3979 = vld [vmem:[%s3416 + $0x91] sm:$0xff]
  %v3980 = vld [vmem:[%s3416 + $0x99] sm:$0xff]
  %v3981 = vld [vmem:[%s3416 + $0xa9] sm:$0xff]
  %v3982 = vld [vmem:[%s3416 + $0xb1] sm:$0xff]
  %v3983 = vld [vmem:[%s3416 + $0xc1] sm:$0xff]
  %v3984 = vld [vmem:[%s3416 + $0xc9] sm:$0xff]
  %v3985 = vld [vmem:[%s3416 + $0xd9] sm:$0xff]
  %v3986 = vld [vmem:[%s3416 + $0xe1] sm:$0xff]
  %v3987 = vld [vmem:[%s3416 + $0xf1] sm:$0xff]
  %v3988 = vld [vmem:[%s3416 + $0xf9] sm:$0xff]
  %v3989 = vld [vmem:[%s3416 + $0x109] sm:$0xff]
  %v3990 = vld [vmem:[%s3416 + $0x111] sm:$0xff]
  %v3991 = vld [vmem:[%s3416 + $0x121] sm:$0xff]
  %v3992 = vld [vmem:[%s3416 + $0x129] sm:$0xff]
  %v3993 = vld [vmem:[%s3416 + $0x139] sm:$0xff]
  %v3994 = vld [vmem:[%s3416 + $0x141] sm:$0xff]
  %v3995 = vld [vmem:[%s3416 + $0x151] sm:$0xff]
  %v3996 = vld [vmem:[%s3416 + $0x159] sm:$0xff]
  %v3997 = vld [vmem:[%s3416 + $0x169] sm:$0xff]
  %v3998 = vld [vmem:[%s3416 + $0x171] sm:$0xff]
  %v3999 = vld [vmem:[%s3416 + $0x1b1] sm:$0xff]
  %v4000 = vld [vmem:[%s3416 + $0x1b9] sm:$0xff]
  %v4001 = vld [vmem:[%s3416 + $0x1c9] sm:$0xff]
  %v4002 = vld [vmem:[%s3416 + $0x1d1] sm:$0xff]
  %v4003 = vld [vmem:[%s3416 + $0x1e1] sm:$0xff]
  %v4004 = vld [vmem:[%s3416 + $0x1e9] sm:$0xff]
  %v4005 = vld [vmem:[%s3416 + $0x1f9] sm:$0xff]
  %v4006 = vld [vmem:[%s3416 + $0x201] sm:$0xff]
  %v4007 = vld [vmem:[%s3416 + $0x211] sm:$0xff]
  %v4008 = vld [vmem:[%s3416 + $0x219] sm:$0xff]
  %v4009 = vld [vmem:[%s3416 + $0x229] sm:$0xff]
  %v4010 = vld [vmem:[%s3416 + $0x231] sm:$0xff]
  %v4011 = vld [vmem:[%s3416 + $0x241] sm:$0xff]
  %v4012 = vld [vmem:[%s3416 + $0x249] sm:$0xff]
  %v4013 = vld [vmem:[%s3416 + $0x259] sm:$0xff]
  %v4014 = vld [vmem:[%s3416 + $0x261] sm:$0xff]
  %v4015 = vld [vmem:[%s3416 + $0x271] sm:$0xff]
  %v4016 = vld [vmem:[%s3416 + $0x279] sm:$0xff]
  %v4017 = vld [vmem:[%s3416 + $0x289] sm:$0xff]
  %v4018 = vld [vmem:[%s3416 + $0x291] sm:$0xff]
  %v4019 = vld [vmem:[%s3416 + $0x2a1] sm:$0xff]
  %v4020 = vld [vmem:[%s3416 + $0x2a9] sm:$0xff]
  %v4021 = vld [vmem:[%s3416 + $0x2b9] sm:$0xff]
  %v4022 = vld [vmem:[%s3416 + $0x2c1] sm:$0xff]
  %v4023 = vld [vmem:[%s3416 + $0x2d1] sm:$0xff]
  %v4024 = vld [vmem:[%s3416 + $0x2d9] sm:$0xff]
  %v4025 = vld [vmem:[%s3416 + $0x2e9] sm:$0xff]
  %v4026 = vld [vmem:[%s3416 + $0x2f1] sm:$0xff]
  %v4027 = vld [vmem:[%s3416 + $0x301] sm:$0xff]
  %v4028 = vld [vmem:[%s3416 + $0x309] sm:$0xff]
  %v4029 = vld [vmem:[%s3416 + $0x319] sm:$0xff]
  %v4030 = vld [vmem:[%s3416 + $0x321] sm:$0xff]
  %v4031 = vpack.c.bf16 %v3968, %v3967
  %v4032 = vpack.c.bf16 %v3970, %v3969
  %v4033 = vpack.c.bf16 %v3972, %v3971
  %v4034 = vpack.c.bf16 %v3974, %v3973
  %v4035 = vpack.c.bf16 %v3976, %v3975
  %v4036 = vpack.c.bf16 %v3978, %v3977
  %v4037 = vpack.c.bf16 %v3980, %v3979
  %v4038 = vpack.c.bf16 %v3982, %v3981
  %v4039 = vpack.c.bf16 %v3984, %v3983
  %v4040 = vpack.c.bf16 %v3986, %v3985
  %v4041 = vpack.c.bf16 %v3988, %v3987
  %v4042 = vpack.c.bf16 %v3990, %v3989
  %v4043 = vpack.c.bf16 %v3992, %v3991
  %v4044 = vpack.c.bf16 %v3994, %v3993
  %v4045 = vpack.c.bf16 %v3996, %v3995
  %v4046 = vpack.c.bf16 %v3998, %v3997
  %v4047 = vpack.c.bf16 %v4000, %v3999
  %v4048 = vpack.c.bf16 %v4002, %v4001
  %v4049 = vpack.c.bf16 %v4004, %v4003
  %v4050 = vpack.c.bf16 %v4006, %v4005
  %v4051 = vpack.c.bf16 %v4008, %v4007
  %v4052 = vpack.c.bf16 %v4010, %v4009
  %v4053 = vpack.c.bf16 %v4012, %v4011
  %v4054 = vpack.c.bf16 %v4014, %v4013
  %v4055 = vpack.c.bf16 %v4016, %v4015
  %v4056 = vpack.c.bf16 %v4018, %v4017
  %v4057 = vpack.c.bf16 %v4020, %v4019
  %v4058 = vpack.c.bf16 %v4022, %v4021
  %v4059 = vpack.c.bf16 %v4024, %v4023
  %v4060 = vpack.c.bf16 %v4026, %v4025
  %v4061 = vpack.c.bf16 %v4028, %v4027
  %v4062 = vpack.c.bf16 %v4030, %v4029
  %s4063 = scalar_lea.vmem %s1, 14
  %v4064 = vld [vmem:[%s4063] sm:$0x3]
  %v4066 = vsel %vm27, %v4031, 0
  %v4069 = vsel %vm27, %v4032, 0
  %v4072 = vsel %vm27, %v4033, 0
  %v4075 = vsel %vm27, %v4034, 0
  %v4078 = vsel %vm27, %v4035, 0
  %v4081 = vsel %vm27, %v4036, 0
  %v4084 = vsel %vm27, %v4037, 0
  %v4087 = vsel %vm27, %v4038, 0
  %v4090 = vsel %vm27, %v4039, 0
  %v4093 = vsel %vm27, %v4040, 0
  %v4096 = vsel %vm27, %v4041, 0
  %v4099 = vsel %vm27, %v4042, 0
  %v4102 = vsel %vm27, %v4043, 0
  %v4105 = vsel %vm27, %v4044, 0
  %v4108 = vsel %vm27, %v4045, 0
  %v4111 = vsel %vm27, %v4046, 0
  %v4114 = vsel %vm27, %v4047, 0
  %v4117 = vsel %vm27, %v4048, 0
  %v4120 = vsel %vm27, %v4049, 0
  %v4123 = vsel %vm27, %v4050, 0
  %v4126 = vsel %vm27, %v4051, 0
  %v4129 = vsel %vm27, %v4052, 0
  %v4132 = vsel %vm27, %v4053, 0
  %v4135 = vsel %vm27, %v4054, 0
  %v4138 = vsel %vm27, %v4055, 0
  %v4141 = vsel %vm27, %v4056, 0
  %v4144 = vsel %vm27, %v4057, 0
  %v4147 = vsel %vm27, %v4058, 0
  %v4150 = vsel %vm27, %v4059, 0
  %v4153 = vsel %vm27, %v4060, 0
  %v4156 = vsel %vm27, %v4061, 0
  %v4159 = vsel %vm27, %v4062, 0
  %v4162 = vsel %vm535, %v4064, 0
  %4164 = vmatprep.subr.bf16.mxu0 0
  %4165 = vmatpush1.bf16.msra.mxu0 %v4162
  %4166 = vmatprep.subr.bf16.mxu0 0
  %4167 = vmatpush1.bf16.msra.mxu0 0
  %4168 = vmatprep.subr.bf16.mxu0 0
  %4169 = vmatpush1.bf16.msra.mxu0 0
  %4170 = vmatprep.subr.bf16.mxu0 0
  %4171 = vmatpush1.bf16.msra.mxu0 0
  %4172 = vmatprep.subr.bf16.mxu0 0
  %4173 = vmatpush1.bf16.msra.mxu0 0
  %4174 = vmatprep.subr.bf16.mxu0 0
  %4175 = vmatpush1.bf16.msra.mxu0 0
  %4176 = vmatprep.subr.bf16.mxu0 0
  %4177 = vmatpush1.bf16.msra.mxu0 0
  %4178 = vmatprep.subr.bf16.mxu0 0
  %4179 = vmatpush1.bf16.msra.mxu0 0
  %4180 = vmatprep.subr.bf16.mxu0 0
  %4181 = vmatpush1.bf16.msra.mxu0 0
  %4182 = vmatprep.subr.bf16.mxu0 0
  %4183 = vmatpush1.bf16.msra.mxu0 0
  %4184 = vmatprep.subr.bf16.mxu0 0
  %4185 = vmatpush1.bf16.msra.mxu0 0
  %4186 = vmatprep.subr.bf16.mxu0 0
  %4187 = vmatpush1.bf16.msra.mxu0 0
  %4188 = vmatprep.subr.bf16.mxu0 0
  %4189 = vmatpush1.bf16.msra.mxu0 0
  %4190 = vmatprep.subr.bf16.mxu0 0
  %4191 = vmatpush1.bf16.msra.mxu0 0
  %4192 = vmatprep.subr.bf16.mxu0 0
  %4193 = vmatpush1.bf16.msra.mxu0 0
  %4194 = vmatprep.subr.bf16.mxu0 0
  %4195 = vmatpush1.bf16.msra.mxu0 0
  %4196 = vmatprep.mubr.bf16.mxu0 0
  %4197 = vmatmul.mubr.bf16.gmra.mrb[0].mxu0 %v4066
  %v4198 = vpop.f32.mrb[0].mxu0
  %v4199 = vadd.f32 0.0, %v4198
  %v4200 = vpop.f32.mrb[0].mxu0
  %v4201 = vpop.f32.mrb[0].mxu0
  %v4202 = vadd.f32 0.0, %v4201
  %v4203 = vpop.f32.mrb[0].mxu0
  %4204 = vmatprep.mubr.bf16.mxu0 0
  %4205 = vmatmul.mubr.bf16.gmra.mrb[0].mxu0 %v4069
  %v4206 = vpop.f32.mrb[0].mxu0
  %v4207 = vadd.f32 0.0, %v4206
  %v4208 = vpop.f32.mrb[0].mxu0
  %v4209 = vpop.f32.mrb[0].mxu0
  %v4210 = vadd.f32 0.0, %v4209
  %v4211 = vpop.f32.mrb[0].mxu0
  %4212 = vmatprep.mubr.bf16.mxu0 0
  %4213 = vmatmul.mubr.bf16.gmra.mrb[0].mxu0 %v4072
  %v4214 = vpop.f32.mrb[0].mxu0
  %v4215 = vadd.f32 0.0, %v4214
  %v4216 = vpop.f32.mrb[0].mxu0
  %v4217 = vpop.f32.mrb[0].mxu0
  %v4218 = vadd.f32 0.0, %v4217
  %v4219 = vpop.f32.mrb[0].mxu0
  %4220 = vmatprep.mubr.bf16.mxu0 0
  %4221 = vmatmul.mubr.bf16.gmra.mrb[0].mxu0 %v4075
  %v4222 = vpop.f32.mrb[0].mxu0
  %v4223 = vadd.f32 0.0, %v4222
  %v4224 = vpop.f32.mrb[0].mxu0
  %v4225 = vpop.f32.mrb[0].mxu0
  %v4226 = vadd.f32 0.0, %v4225
  %v4227 = vpop.f32.mrb[0].mxu0
  %4228 = vmatprep.mubr.bf16.mxu0 0
  %4229 = vmatmul.mubr.bf16.gmra.mrb[0].mxu0 %v4078
  %v4230 = vpop.f32.mrb[0].mxu0
  %v4231 = vadd.f32 0.0, %v4230
  %v4232 = vpop.f32.mrb[0].mxu0
  %v4233 = vpop.f32.mrb[0].mxu0
  %v4234 = vadd.f32 0.0, %v4233
  %v4235 = vpop.f32.mrb[0].mxu0
  %4236 = vmatprep.mubr.bf16.mxu0 0
  %4237 = vmatmul.mubr.bf16.gmra.mrb[0].mxu0 %v4081
  %v4238 = vpop.f32.mrb[0].mxu0
  %v4239 = vadd.f32 0.0, %v4238
  %v4240 = vpop.f32.mrb[0].mxu0
  %v4241 = vpop.f32.mrb[0].mxu0
  %v4242 = vadd.f32 0.0, %v4241
  %v4243 = vpop.f32.mrb[0].mxu0
  %4244 = vmatprep.mubr.bf16.mxu0 0
  %4245 = vmatmul.mubr.bf16.gmra.mrb[0].mxu0 %v4084
  %v4246 = vpop.f32.mrb[0].mxu0
  %v4247 = vadd.f32 0.0, %v4246
  %v4248 = vpop.f32.mrb[0].mxu0
  %v4249 = vpop.f32.mrb[0].mxu0
  %v4250 = vadd.f32 0.0, %v4249
  %v4251 = vpop.f32.mrb[0].mxu0
  %4252 = vmatprep.mubr.bf16.mxu0 0
  %4253 = vmatmul.mubr.bf16.gmra.mrb[0].mxu0 %v4087
  %v4254 = vpop.f32.mrb[0].mxu0
  %v4255 = vadd.f32 0.0, %v4254
  %v4256 = vpop.f32.mrb[0].mxu0
  %v4257 = vpop.f32.mrb[0].mxu0
  %v4258 = vadd.f32 0.0, %v4257
  %v4259 = vpop.f32.mrb[0].mxu0
  %4260 = vmatprep.mubr.bf16.mxu0 0
  %4261 = vmatmul.mubr.bf16.gmra.mrb[0].mxu0 %v4090
  %v4262 = vpop.f32.mrb[0].mxu0
  %v4263 = vadd.f32 0.0, %v4262
  %v4264 = vpop.f32.mrb[0].mxu0
  %v4265 = vpop.f32.mrb[0].mxu0
  %v4266 = vadd.f32 0.0, %v4265
  %v4267 = vpop.f32.mrb[0].mxu0
  %4268 = vmatprep.mubr.bf16.mxu0 0
  %4269 = vmatmul.mubr.bf16.gmra.mrb[0].mxu0 %v4093
  %v4270 = vpop.f32.mrb[0].mxu0
  %v4271 = vadd.f32 0.0, %v4270
  %v4272 = vpop.f32.mrb[0].mxu0
  %v4273 = vpop.f32.mrb[0].mxu0
  %v4274 = vadd.f32 0.0, %v4273
  %v4275 = vpop.f32.mrb[0].mxu0
  %4276 = vmatprep.mubr.bf16.mxu0 0
  %4277 = vmatmul.mubr.bf16.gmra.mrb[0].mxu0 %v4096
  %v4278 = vpop.f32.mrb[0].mxu0
  %v4279 = vadd.f32 0.0, %v4278
  %v4280 = vpop.f32.mrb[0].mxu0
  %v4281 = vpop.f32.mrb[0].mxu0
  %v4282 = vadd.f32 0.0, %v4281
  %v4283 = vpop.f32.mrb[0].mxu0
  %4284 = vmatprep.mubr.bf16.mxu0 0
  %4285 = vmatmul.mubr.bf16.gmra.mrb[0].mxu0 %v4099
  %v4286 = vpop.f32.mrb[0].mxu0
  %v4287 = vadd.f32 0.0, %v4286
  %v4288 = vpop.f32.mrb[0].mxu0
  %v4289 = vpop.f32.mrb[0].mxu0
  %v4290 = vadd.f32 0.0, %v4289
  %v4291 = vpop.f32.mrb[0].mxu0
  %4292 = vmatprep.mubr.bf16.mxu0 0
  %4293 = vmatmul.mubr.bf16.gmra.mrb[0].mxu0 %v4102
  %v4294 = vpop.f32.mrb[0].mxu0
  %v4295 = vadd.f32 0.0, %v4294
  %v4296 = vpop.f32.mrb[0].mxu0
  %v4297 = vpop.f32.mrb[0].mxu0
  %v4298 = vadd.f32 0.0, %v4297
  %v4299 = vpop.f32.mrb[0].mxu0
  %4300 = vmatprep.mubr.bf16.mxu0 0
  %4301 = vmatmul.mubr.bf16.gmra.mrb[0].mxu0 %v4105
  %v4302 = vpop.f32.mrb[0].mxu0
  %v4303 = vadd.f32 0.0, %v4302
  %v4304 = vpop.f32.mrb[0].mxu0
  %v4305 = vpop.f32.mrb[0].mxu0
  %v4306 = vadd.f32 0.0, %v4305
  %v4307 = vpop.f32.mrb[0].mxu0
  %4308 = vmatprep.mubr.bf16.mxu0 0
  %4309 = vmatmul.mubr.bf16.gmra.mrb[0].mxu0 %v4108
  %v4310 = vpop.f32.mrb[0].mxu0
  %v4311 = vadd.f32 0.0, %v4310
  %v4312 = vpop.f32.mrb[0].mxu0
  %v4313 = vpop.f32.mrb[0].mxu0
  %v4314 = vadd.f32 0.0, %v4313
  %v4315 = vpop.f32.mrb[0].mxu0
  %4316 = vmatprep.mubr.bf16.mxu0 0
  %4317 = vmatmul.mubr.bf16.gmra.mrb[0].mxu0 %v4111
  %v4318 = vpop.f32.mrb[0].mxu0
  %v4319 = vadd.f32 0.0, %v4318
  %v4320 = vpop.f32.mrb[0].mxu0
  %v4321 = vpop.f32.mrb[0].mxu0
  %v4322 = vadd.f32 0.0, %v4321
  %v4323 = vpop.f32.mrb[0].mxu0
  %4324 = vmatprep.mubr.bf16.mxu0 0
  %4325 = vmatmul.mubr.bf16.gmra.mrb[0].mxu0 %v4114
  %v4326 = vpop.f32.mrb[0].mxu0
  %v4327 = vadd.f32 0.0, %v4326
  %v4328 = vpop.f32.mrb[0].mxu0
  %v4329 = vpop.f32.mrb[0].mxu0
  %v4330 = vadd.f32 0.0, %v4329
  %v4331 = vpop.f32.mrb[0].mxu0
  %4332 = vmatprep.mubr.bf16.mxu0 0
  %4333 = vmatmul.mubr.bf16.gmra.mrb[0].mxu0 %v4117
  %v4334 = vpop.f32.mrb[0].mxu0
  %v4335 = vadd.f32 0.0, %v4334
  %v4336 = vpop.f32.mrb[0].mxu0
  %v4337 = vpop.f32.mrb[0].mxu0
  %v4338 = vadd.f32 0.0, %v4337
  %v4339 = vpop.f32.mrb[0].mxu0
  %4340 = vmatprep.mubr.bf16.mxu0 0
  %4341 = vmatmul.mubr.bf16.gmra.mrb[0].mxu0 %v4120
  %v4342 = vpop.f32.mrb[0].mxu0
  %v4343 = vadd.f32 0.0, %v4342
  %v4344 = vpop.f32.mrb[0].mxu0
  %v4345 = vpop.f32.mrb[0].mxu0
  %v4346 = vadd.f32 0.0, %v4345
  %v4347 = vpop.f32.mrb[0].mxu0
  %4348 = vmatprep.mubr.bf16.mxu0 0
  %4349 = vmatmul.mubr.bf16.gmra.mrb[0].mxu0 %v4123
  %v4350 = vpop.f32.mrb[0].mxu0
  %v4351 = vadd.f32 0.0, %v4350
  %v4352 = vpop.f32.mrb[0].mxu0
  %v4353 = vpop.f32.mrb[0].mxu0
  %v4354 = vadd.f32 0.0, %v4353
  %v4355 = vpop.f32.mrb[0].mxu0
  %4356 = vmatprep.mubr.bf16.mxu0 0
  %4357 = vmatmul.mubr.bf16.gmra.mrb[0].mxu0 %v4126
  %v4358 = vpop.f32.mrb[0].mxu0
  %v4359 = vadd.f32 0.0, %v4358
  %v4360 = vpop.f32.mrb[0].mxu0
  %v4361 = vpop.f32.mrb[0].mxu0
  %v4362 = vadd.f32 0.0, %v4361
  %v4363 = vpop.f32.mrb[0].mxu0
  %4364 = vmatprep.mubr.bf16.mxu0 0
  %4365 = vmatmul.mubr.bf16.gmra.mrb[0].mxu0 %v4129
  %v4366 = vpop.f32.mrb[0].mxu0
  %v4367 = vadd.f32 0.0, %v4366
  %v4368 = vpop.f32.mrb[0].mxu0
  %v4369 = vpop.f32.mrb[0].mxu0
  %v4370 = vadd.f32 0.0, %v4369
  %v4371 = vpop.f32.mrb[0].mxu0
  %4372 = vmatprep.mubr.bf16.mxu0 0
  %4373 = vmatmul.mubr.bf16.gmra.mrb[0].mxu0 %v4132
  %v4374 = vpop.f32.mrb[0].mxu0
  %v4375 = vadd.f32 0.0, %v4374
  %v4376 = vpop.f32.mrb[0].mxu0
  %v4377 = vpop.f32.mrb[0].mxu0
  %v4378 = vadd.f32 0.0, %v4377
  %v4379 = vpop.f32.mrb[0].mxu0
  %4380 = vmatprep.mubr.bf16.mxu0 0
  %4381 = vmatmul.mubr.bf16.gmra.mrb[0].mxu0 %v4135
  %v4382 = vpop.f32.mrb[0].mxu0
  %v4383 = vadd.f32 0.0, %v4382
  %v4384 = vpop.f32.mrb[0].mxu0
  %v4385 = vpop.f32.mrb[0].mxu0
  %v4386 = vadd.f32 0.0, %v4385
  %v4387 = vpop.f32.mrb[0].mxu0
  %4388 = vmatprep.mubr.bf16.mxu0 0
  %4389 = vmatmul.mubr.bf16.gmra.mrb[0].mxu0 %v4138
  %v4390 = vpop.f32.mrb[0].mxu0
  %v4391 = vadd.f32 0.0, %v4390
  %v4392 = vpop.f32.mrb[0].mxu0
  %v4393 = vpop.f32.mrb[0].mxu0
  %v4394 = vadd.f32 0.0, %v4393
  %v4395 = vpop.f32.mrb[0].mxu0
  %4396 = vmatprep.mubr.bf16.mxu0 0
  %4397 = vmatmul.mubr.bf16.gmra.mrb[0].mxu0 %v4141
  %v4398 = vpop.f32.mrb[0].mxu0
  %v4399 = vadd.f32 0.0, %v4398
  %v4400 = vpop.f32.mrb[0].mxu0
  %v4401 = vpop.f32.mrb[0].mxu0
  %v4402 = vadd.f32 0.0, %v4401
  %v4403 = vpop.f32.mrb[0].mxu0
  %4404 = vmatprep.mubr.bf16.mxu0 0
  %4405 = vmatmul.mubr.bf16.gmra.mrb[0].mxu0 %v4144
  %v4406 = vpop.f32.mrb[0].mxu0
  %v4407 = vadd.f32 0.0, %v4406
  %v4408 = vpop.f32.mrb[0].mxu0
  %v4409 = vpop.f32.mrb[0].mxu0
  %v4410 = vadd.f32 0.0, %v4409
  %v4411 = vpop.f32.mrb[0].mxu0
  %4412 = vmatprep.mubr.bf16.mxu0 0
  %4413 = vmatmul.mubr.bf16.gmra.mrb[0].mxu0 %v4147
  %v4414 = vpop.f32.mrb[0].mxu0
  %v4415 = vadd.f32 0.0, %v4414
  %v4416 = vpop.f32.mrb[0].mxu0
  %v4417 = vpop.f32.mrb[0].mxu0
  %v4418 = vadd.f32 0.0, %v4417
  %v4419 = vpop.f32.mrb[0].mxu0
  %4420 = vmatprep.mubr.bf16.mxu0 0
  %4421 = vmatmul.mubr.bf16.gmra.mrb[0].mxu0 %v4150
  %v4422 = vpop.f32.mrb[0].mxu0
  %v4423 = vadd.f32 0.0, %v4422
  %v4424 = vpop.f32.mrb[0].mxu0
  %v4425 = vpop.f32.mrb[0].mxu0
  %v4426 = vadd.f32 0.0, %v4425
  %v4427 = vpop.f32.mrb[0].mxu0
  %4428 = vmatprep.mubr.bf16.mxu0 0
  %4429 = vmatmul.mubr.bf16.gmra.mrb[0].mxu0 %v4153
  %v4430 = vpop.f32.mrb[0].mxu0
  %v4431 = vadd.f32 0.0, %v4430
  %v4432 = vpop.f32.mrb[0].mxu0
  %v4433 = vpop.f32.mrb[0].mxu0
  %v4434 = vadd.f32 0.0, %v4433
  %v4435 = vpop.f32.mrb[0].mxu0
  %4436 = vmatprep.mubr.bf16.mxu0 0
  %4437 = vmatmul.mubr.bf16.gmra.mrb[0].mxu0 %v4156
  %v4438 = vpop.f32.mrb[0].mxu0
  %v4439 = vadd.f32 0.0, %v4438
  %v4440 = vpop.f32.mrb[0].mxu0
  %v4441 = vpop.f32.mrb[0].mxu0
  %v4442 = vadd.f32 0.0, %v4441
  %v4443 = vpop.f32.mrb[0].mxu0
  %4444 = vmatprep.mubr.bf16.mxu0 0
  %4445 = vmatmul.mubr.bf16.gmra.mrb[0].mxu0 %v4159
  %v4446 = vpop.f32.mrb[0].mxu0
  %v4447 = vadd.f32 0.0, %v4446
  %v4448 = vpop.f32.mrb[0].mxu0
  %v4449 = vpop.f32.mrb[0].mxu0
  %v4450 = vadd.f32 0.0, %v4449
  %v4451 = vpop.f32.mrb[0].mxu0
  %4452 = vdwg.mxu0
  %v4453 = vadd.f32 %v3903, %v4199
  %v4454 = vadd.f32 %v3904, %v4202
  %v4455 = vadd.f32 %v3905, %v4207
  %v4456 = vadd.f32 %v3906, %v4210
  %v4457 = vadd.f32 %v3907, %v4215
  %v4458 = vadd.f32 %v3908, %v4218
  %v4459 = vadd.f32 %v3909, %v4223
  %v4460 = vadd.f32 %v3910, %v4226
  %v4461 = vadd.f32 %v3911, %v4231
  %v4462 = vadd.f32 %v3912, %v4234
  %v4463 = vadd.f32 %v3913, %v4239
  %v4464 = vadd.f32 %v3914, %v4242
  %v4465 = vadd.f32 %v3915, %v4247
  %v4466 = vadd.f32 %v3916, %v4250
  %v4467 = vadd.f32 %v3917, %v4255
  %v4468 = vadd.f32 %v3918, %v4258
  %v4469 = vadd.f32 %v3919, %v4263
  %v4470 = vadd.f32 %v3920, %v4266
  %v4471 = vadd.f32 %v3921, %v4271
  %v4472 = vadd.f32 %v3922, %v4274
  %v4473 = vadd.f32 %v3923, %v4279
  %v4474 = vadd.f32 %v3924, %v4282
  %v4475 = vadd.f32 %v3925, %v4287
  %v4476 = vadd.f32 %v3926, %v4290
  %v4477 = vadd.f32 %v3927, %v4295
  %v4478 = vadd.f32 %v3928, %v4298
  %v4479 = vadd.f32 %v3929, %v4303
  %v4480 = vadd.f32 %v3930, %v4306
  %v4481 = vadd.f32 %v3931, %v4311
  %v4482 = vadd.f32 %v3932, %v4314
  %v4483 = vadd.f32 %v3933, %v4319
  %v4484 = vadd.f32 %v3934, %v4322
  %v4485 = vadd.f32 %v3935, %v4327
  %v4486 = vadd.f32 %v3936, %v4330
  %v4487 = vadd.f32 %v3937, %v4335
  %v4488 = vadd.f32 %v3938, %v4338
  %v4489 = vadd.f32 %v3939, %v4343
  %v4490 = vadd.f32 %v3940, %v4346
  %v4491 = vadd.f32 %v3941, %v4351
  %v4492 = vadd.f32 %v3942, %v4354
  %v4493 = vadd.f32 %v3943, %v4359
  %v4494 = vadd.f32 %v3944, %v4362
  %v4495 = vadd.f32 %v3945, %v4367
  %v4496 = vadd.f32 %v3946, %v4370
  %v4497 = vadd.f32 %v3947, %v4375
  %v4498 = vadd.f32 %v3948, %v4378
  %v4499 = vadd.f32 %v3949, %v4383
  %v4500 = vadd.f32 %v3950, %v4386
  %v4501 = vadd.f32 %v3951, %v4391
  %v4502 = vadd.f32 %v3952, %v4394
  %v4503 = vadd.f32 %v3953, %v4399
  %v4504 = vadd.f32 %v3954, %v4402
  %v4505 = vadd.f32 %v3955, %v4407
  %v4506 = vadd.f32 %v3956, %v4410
  %v4507 = vadd.f32 %v3957, %v4415
  %v4508 = vadd.f32 %v3958, %v4418
  %v4509 = vadd.f32 %v3959, %v4423
  %v4510 = vadd.f32 %v3960, %v4426
  %v4511 = vadd.f32 %v3961, %v4431
  %v4512 = vadd.f32 %v3962, %v4434
  %v4513 = vadd.f32 %v3963, %v4439
  %v4514 = vadd.f32 %v3964, %v4442
  %v4515 = vadd.f32 %v3965, %v4447
  %v4516 = vadd.f32 %v3966, %v4450
  %v4517 = vld [vmem:[%s3416 + $0x2] sm:$0xff]
  %v4518 = vld [vmem:[%s3416 + $0xa] sm:$0xff]
  %v4519 = vld [vmem:[%s3416 + $0x1a] sm:$0xff]
  %v4520 = vld [vmem:[%s3416 + $0x22] sm:$0xff]
  %v4521 = vld [vmem:[%s3416 + $0x32] sm:$0xff]
  %v4522 = vld [vmem:[%s3416 + $0x3a] sm:$0xff]
  %v4523 = vld [vmem:[%s3416 + $0x4a] sm:$0xff]
  %v4524 = vld [vmem:[%s3416 + $0x52] sm:$0xff]
  %v4525 = vld [vmem:[%s3416 + $0x62] sm:$0xff]
  %v4526 = vld [vmem:[%s3416 + $0x6a] sm:$0xff]
  %v4527 = vld [vmem:[%s3416 + $0x7a] sm:$0xff]
  %v4528 = vld [vmem:[%s3416 + $0x82] sm:$0xff]
  %v4529 = vld [vmem:[%s3416 + $0x92] sm:$0xff]
  %v4530 = vld [vmem:[%s3416 + $0x9a] sm:$0xff]
  %v4531 = vld [vmem:[%s3416 + $0xaa] sm:$0xff]
  %v4532 = vld [vmem:[%s3416 + $0xb2] sm:$0xff]
  %v4533 = vld [vmem:[%s3416 + $0xc2] sm:$0xff]
  %v4534 = vld [vmem:[%s3416 + $0xca] sm:$0xff]
  %v4535 = vld [vmem:[%s3416 + $0xda] sm:$0xff]
  %v4536 = vld [vmem:[%s3416 + $0xe2] sm:$0xff]
  %v4537 = vld [vmem:[%s3416 + $0xf2] sm:$0xff]
  %v4538 = vld [vmem:[%s3416 + $0xfa] sm:$0xff]
  %v4539 = vld [vmem:[%s3416 + $0x10a] sm:$0xff]
  %v4540 = vld [vmem:[%s3416 + $0x112] sm:$0xff]
  %v4541 = vld [vmem:[%s3416 + $0x122] sm:$0xff]
  %v4542 = vld [vmem:[%s3416 + $0x12a] sm:$0xff]
  %v4543 = vld [vmem:[%s3416 + $0x13a] sm:$0xff]
  %v4544 = vld [vmem:[%s3416 + $0x142] sm:$0xff]
  %v4545 = vld [vmem:[%s3416 + $0x152] sm:$0xff]
  %v4546 = vld [vmem:[%s3416 + $0x15a] sm:$0xff]
  %v4547 = vld [vmem:[%s3416 + $0x16a] sm:$0xff]
  %v4548 = vld [vmem:[%s3416 + $0x172] sm:$0xff]
  %v4549 = vld [vmem:[%s3416 + $0x1b2] sm:$0xff]
  %v4550 = vld [vmem:[%s3416 + $0x1ba] sm:$0xff]
  %v4551 = vld [vmem:[%s3416 + $0x1ca] sm:$0xff]
  %v4552 = vld [vmem:[%s3416 + $0x1d2] sm:$0xff]
  %v4553 = vld [vmem:[%s3416 + $0x1e2] sm:$0xff]
  %v4554 = vld [vmem:[%s3416 + $0x1ea] sm:$0xff]
  %v4555 = vld [vmem:[%s3416 + $0x1fa] sm:$0xff]
  %v4556 = vld [vmem:[%s3416 + $0x202] sm:$0xff]
  %v4557 = vld [vmem:[%s3416 + $0x212] sm:$0xff]
  %v4558 = vld [vmem:[%s3416 + $0x21a] sm:$0xff]
  %v4559 = vld [vmem:[%s3416 + $0x22a] sm:$0xff]
  %v4560 = vld [vmem:[%s3416 + $0x232] sm:$0xff]
  %v4561 = vld [vmem:[%s3416 + $0x242] sm:$0xff]
  %v4562 = vld [vmem:[%s3416 + $0x24a] sm:$0xff]
  %v4563 = vld [vmem:[%s3416 + $0x25a] sm:$0xff]
  %v4564 = vld [vmem:[%s3416 + $0x262] sm:$0xff]
  %v4565 = vld [vmem:[%s3416 + $0x272] sm:$0xff]
  %v4566 = vld [vmem:[%s3416 + $0x27a] sm:$0xff]
  %v4567 = vld [vmem:[%s3416 + $0x28a] sm:$0xff]
  %v4568 = vld [vmem:[%s3416 + $0x292] sm:$0xff]
  %v4569 = vld [vmem:[%s3416 + $0x2a2] sm:$0xff]
  %v4570 = vld [vmem:[%s3416 + $0x2aa] sm:$0xff]
  %v4571 = vld [vmem:[%s3416 + $0x2ba] sm:$0xff]
  %v4572 = vld [vmem:[%s3416 + $0x2c2] sm:$0xff]
  %v4573 = vld [vmem:[%s3416 + $0x2d2] sm:$0xff]
  %v4574 = vld [vmem:[%s3416 + $0x2da] sm:$0xff]
  %v4575 = vld [vmem:[%s3416 + $0x2ea] sm:$0xff]
  %v4576 = vld [vmem:[%s3416 + $0x2f2] sm:$0xff]
  %v4577 = vld [vmem:[%s3416 + $0x302] sm:$0xff]
  %v4578 = vld [vmem:[%s3416 + $0x30a] sm:$0xff]
  %v4579 = vld [vmem:[%s3416 + $0x31a] sm:$0xff]
  %v4580 = vld [vmem:[%s3416 + $0x322] sm:$0xff]
  %v4581 = vpack.c.bf16 %v4518, %v4517
  %v4582 = vpack.c.bf16 %v4520, %v4519
  %v4583 = vpack.c.bf16 %v4522, %v4521
  %v4584 = vpack.c.bf16 %v4524, %v4523
  %v4585 = vpack.c.bf16 %v4526, %v4525
  %v4586 = vpack.c.bf16 %v4528, %v4527
  %v4587 = vpack.c.bf16 %v4530, %v4529
  %v4588 = vpack.c.bf16 %v4532, %v4531
  %v4589 = vpack.c.bf16 %v4534, %v4533
  %v4590 = vpack.c.bf16 %v4536, %v4535
  %v4591 = vpack.c.bf16 %v4538, %v4537
  %v4592 = vpack.c.bf16 %v4540, %v4539
  %v4593 = vpack.c.bf16 %v4542, %v4541
  %v4594 = vpack.c.bf16 %v4544, %v4543
  %v4595 = vpack.c.bf16 %v4546, %v4545
  %v4596 = vpack.c.bf16 %v4548, %v4547
  %v4597 = vpack.c.bf16 %v4550, %v4549
  %v4598 = vpack.c.bf16 %v4552, %v4551
  %v4599 = vpack.c.bf16 %v4554, %v4553
  %v4600 = vpack.c.bf16 %v4556, %v4555
  %v4601 = vpack.c.bf16 %v4558, %v4557
  %v4602 = vpack.c.bf16 %v4560, %v4559
  %v4603 = vpack.c.bf16 %v4562, %v4561
  %v4604 = vpack.c.bf16 %v4564, %v4563
  %v4605 = vpack.c.bf16 %v4566, %v4565
  %v4606 = vpack.c.bf16 %v4568, %v4567
  %v4607 = vpack.c.bf16 %v4570, %v4569
  %v4608 = vpack.c.bf16 %v4572, %v4571
  %v4609 = vpack.c.bf16 %v4574, %v4573
  %v4610 = vpack.c.bf16 %v4576, %v4575
  %v4611 = vpack.c.bf16 %v4578, %v4577
  %v4612 = vpack.c.bf16 %v4580, %v4579
  %s4613 = scalar_lea.vmem %s1, 16
  %v4614 = vld [vmem:[%s4613] sm:$0x3]
  %v4616 = vsel %vm27, %v4581, 0
  %v4619 = vsel %vm27, %v4582, 0
  %v4622 = vsel %vm27, %v4583, 0
  %v4625 = vsel %vm27, %v4584, 0
  %v4628 = vsel %vm27, %v4585, 0
  %v4631 = vsel %vm27, %v4586, 0
  %v4634 = vsel %vm27, %v4587, 0
  %v4637 = vsel %vm27, %v4588, 0
  %v4640 = vsel %vm27, %v4589, 0
  %v4643 = vsel %vm27, %v4590, 0
  %v4646 = vsel %vm27, %v4591, 0
  %v4649 = vsel %vm27, %v4592, 0
  %v4652 = vsel %vm27, %v4593, 0
  %v4655 = vsel %vm27, %v4594, 0
  %v4658 = vsel %vm27, %v4595, 0
  %v4661 = vsel %vm27, %v4596, 0
  %v4664 = vsel %vm27, %v4597, 0
  %v4667 = vsel %vm27, %v4598, 0
  %v4670 = vsel %vm27, %v4599, 0
  %v4673 = vsel %vm27, %v4600, 0
  %v4676 = vsel %vm27, %v4601, 0
  %v4679 = vsel %vm27, %v4602, 0
  %v4682 = vsel %vm27, %v4603, 0
  %v4685 = vsel %vm27, %v4604, 0
  %v4688 = vsel %vm27, %v4605, 0
  %v4691 = vsel %vm27, %v4606, 0
  %v4694 = vsel %vm27, %v4607, 0
  %v4697 = vsel %vm27, %v4608, 0
  %v4700 = vsel %vm27, %v4609, 0
  %v4703 = vsel %vm27, %v4610, 0
  %v4706 = vsel %vm27, %v4611, 0
  %v4709 = vsel %vm27, %v4612, 0
  %v4712 = vsel %vm535, %v4614, 0
  %4714 = vmatprep.subr.bf16.mxu0 0
  %4715 = vmatpush1.bf16.msra.mxu0 %v4712
  %4716 = vmatprep.subr.bf16.mxu0 0
  %4717 = vmatpush1.bf16.msra.mxu0 0
  %4718 = vmatprep.subr.bf16.mxu0 0
  %4719 = vmatpush1.bf16.msra.mxu0 0
  %4720 = vmatprep.subr.bf16.mxu0 0
  %4721 = vmatpush1.bf16.msra.mxu0 0
  %4722 = vmatprep.subr.bf16.mxu0 0
  %4723 = vmatpush1.bf16.msra.mxu0 0
  %4724 = vmatprep.subr.bf16.mxu0 0
  %4725 = vmatpush1.bf16.msra.mxu0 0
  %4726 = vmatprep.subr.bf16.mxu0 0
  %4727 = vmatpush1.bf16.msra.mxu0 0
  %4728 = vmatprep.subr.bf16.mxu0 0
  %4729 = vmatpush1.bf16.msra.mxu0 0
  %4730 = vmatprep.subr.bf16.mxu0 0
  %4731 = vmatpush1.bf16.msra.mxu0 0
  %4732 = vmatprep.subr.bf16.mxu0 0
  %4733 = vmatpush1.bf16.msra.mxu0 0
  %4734 = vmatprep.subr.bf16.mxu0 0
  %4735 = vmatpush1.bf16.msra.mxu0 0
  %4736 = vmatprep.subr.bf16.mxu0 0
  %4737 = vmatpush1.bf16.msra.mxu0 0
  %4738 = vmatprep.subr.bf16.mxu0 0
  %4739 = vmatpush1.bf16.msra.mxu0 0
  %4740 = vmatprep.subr.bf16.mxu0 0
  %4741 = vmatpush1.bf16.msra.mxu0 0
  %4742 = vmatprep.subr.bf16.mxu0 0
  %4743 = vmatpush1.bf16.msra.mxu0 0
  %4744 = vmatprep.subr.bf16.mxu0 0
  %4745 = vmatpush1.bf16.msra.mxu0 0
  %4746 = vmatprep.mubr.bf16.mxu0 0
  %4747 = vmatmul.mubr.bf16.gmra.mrb[0].mxu0 %v4616
  %v4748 = vpop.f32.mrb[0].mxu0
  %v4749 = vadd.f32 0.0, %v4748
  %v4750 = vpop.f32.mrb[0].mxu0
  %v4751 = vpop.f32.mrb[0].mxu0
  %v4752 = vadd.f32 0.0, %v4751
  %v4753 = vpop.f32.mrb[0].mxu0
  %4754 = vmatprep.mubr.bf16.mxu0 0
  %4755 = vmatmul.mubr.bf16.gmra.mrb[0].mxu0 %v4619
  %v4756 = vpop.f32.mrb[0].mxu0
  %v4757 = vadd.f32 0.0, %v4756
  %v4758 = vpop.f32.mrb[0].mxu0
  %v4759 = vpop.f32.mrb[0].mxu0
  %v4760 = vadd.f32 0.0, %v4759
  %v4761 = vpop.f32.mrb[0].mxu0
  %4762 = vmatprep.mubr.bf16.mxu0 0
  %4763 = vmatmul.mubr.bf16.gmra.mrb[0].mxu0 %v4622
  %v4764 = vpop.f32.mrb[0].mxu0
  %v4765 = vadd.f32 0.0, %v4764
  %v4766 = vpop.f32.mrb[0].mxu0
  %v4767 = vpop.f32.mrb[0].mxu0
  %v4768 = vadd.f32 0.0, %v4767
  %v4769 = vpop.f32.mrb[0].mxu0
  %4770 = vmatprep.mubr.bf16.mxu0 0
  %4771 = vmatmul.mubr.bf16.gmra.mrb[0].mxu0 %v4625
  %v4772 = vpop.f32.mrb[0].mxu0
  %v4773 = vadd.f32 0.0, %v4772
  %v4774 = vpop.f32.mrb[0].mxu0
  %v4775 = vpop.f32.mrb[0].mxu0
  %v4776 = vadd.f32 0.0, %v4775
  %v4777 = vpop.f32.mrb[0].mxu0
  %4778 = vmatprep.mubr.bf16.mxu0 0
  %4779 = vmatmul.mubr.bf16.gmra.mrb[0].mxu0 %v4628
  %v4780 = vpop.f32.mrb[0].mxu0
  %v4781 = vadd.f32 0.0, %v4780
  %v4782 = vpop.f32.mrb[0].mxu0
  %v4783 = vpop.f32.mrb[0].mxu0
  %v4784 = vadd.f32 0.0, %v4783
  %v4785 = vpop.f32.mrb[0].mxu0
  %4786 = vmatprep.mubr.bf16.mxu0 0
  %4787 = vmatmul.mubr.bf16.gmra.mrb[0].mxu0 %v4631
  %v4788 = vpop.f32.mrb[0].mxu0
  %v4789 = vadd.f32 0.0, %v4788
  %v4790 = vpop.f32.mrb[0].mxu0
  %v4791 = vpop.f32.mrb[0].mxu0
  %v4792 = vadd.f32 0.0, %v4791
  %v4793 = vpop.f32.mrb[0].mxu0
  %4794 = vmatprep.mubr.bf16.mxu0 0
  %4795 = vmatmul.mubr.bf16.gmra.mrb[0].mxu0 %v4634
  %v4796 = vpop.f32.mrb[0].mxu0
  %v4797 = vadd.f32 0.0, %v4796
  %v4798 = vpop.f32.mrb[0].mxu0
  %v4799 = vpop.f32.mrb[0].mxu0
  %v4800 = vadd.f32 0.0, %v4799
  %v4801 = vpop.f32.mrb[0].mxu0
  %4802 = vmatprep.mubr.bf16.mxu0 0
  %4803 = vmatmul.mubr.bf16.gmra.mrb[0].mxu0 %v4637
  %v4804 = vpop.f32.mrb[0].mxu0
  %v4805 = vadd.f32 0.0, %v4804
  %v4806 = vpop.f32.mrb[0].mxu0
  %v4807 = vpop.f32.mrb[0].mxu0
  %v4808 = vadd.f32 0.0, %v4807
  %v4809 = vpop.f32.mrb[0].mxu0
  %4810 = vmatprep.mubr.bf16.mxu0 0
  %4811 = vmatmul.mubr.bf16.gmra.mrb[0].mxu0 %v4640
  %v4812 = vpop.f32.mrb[0].mxu0
  %v4813 = vadd.f32 0.0, %v4812
  %v4814 = vpop.f32.mrb[0].mxu0
  %v4815 = vpop.f32.mrb[0].mxu0
  %v4816 = vadd.f32 0.0, %v4815
  %v4817 = vpop.f32.mrb[0].mxu0
  %4818 = vmatprep.mubr.bf16.mxu0 0
  %4819 = vmatmul.mubr.bf16.gmra.mrb[0].mxu0 %v4643
  %v4820 = vpop.f32.mrb[0].mxu0
  %v4821 = vadd.f32 0.0, %v4820
  %v4822 = vpop.f32.mrb[0].mxu0
  %v4823 = vpop.f32.mrb[0].mxu0
  %v4824 = vadd.f32 0.0, %v4823
  %v4825 = vpop.f32.mrb[0].mxu0
  %4826 = vmatprep.mubr.bf16.mxu0 0
  %4827 = vmatmul.mubr.bf16.gmra.mrb[0].mxu0 %v4646
  %v4828 = vpop.f32.mrb[0].mxu0
  %v4829 = vadd.f32 0.0, %v4828
  %v4830 = vpop.f32.mrb[0].mxu0
  %v4831 = vpop.f32.mrb[0].mxu0
  %v4832 = vadd.f32 0.0, %v4831
  %v4833 = vpop.f32.mrb[0].mxu0
  %4834 = vmatprep.mubr.bf16.mxu0 0
  %4835 = vmatmul.mubr.bf16.gmra.mrb[0].mxu0 %v4649
  %v4836 = vpop.f32.mrb[0].mxu0
  %v4837 = vadd.f32 0.0, %v4836
  %v4838 = vpop.f32.mrb[0].mxu0
  %v4839 = vpop.f32.mrb[0].mxu0
  %v4840 = vadd.f32 0.0, %v4839
  %v4841 = vpop.f32.mrb[0].mxu0
  %4842 = vmatprep.mubr.bf16.mxu0 0
  %4843 = vmatmul.mubr.bf16.gmra.mrb[0].mxu0 %v4652
  %v4844 = vpop.f32.mrb[0].mxu0
  %v4845 = vadd.f32 0.0, %v4844
  %v4846 = vpop.f32.mrb[0].mxu0
  %v4847 = vpop.f32.mrb[0].mxu0
  %v4848 = vadd.f32 0.0, %v4847
  %v4849 = vpop.f32.mrb[0].mxu0
  %4850 = vmatprep.mubr.bf16.mxu0 0
  %4851 = vmatmul.mubr.bf16.gmra.mrb[0].mxu0 %v4655
  %v4852 = vpop.f32.mrb[0].mxu0
  %v4853 = vadd.f32 0.0, %v4852
  %v4854 = vpop.f32.mrb[0].mxu0
  %v4855 = vpop.f32.mrb[0].mxu0
  %v4856 = vadd.f32 0.0, %v4855
  %v4857 = vpop.f32.mrb[0].mxu0
  %4858 = vmatprep.mubr.bf16.mxu0 0
  %4859 = vmatmul.mubr.bf16.gmra.mrb[0].mxu0 %v4658
  %v4860 = vpop.f32.mrb[0].mxu0
  %v4861 = vadd.f32 0.0, %v4860
  %v4862 = vpop.f32.mrb[0].mxu0
  %v4863 = vpop.f32.mrb[0].mxu0
  %v4864 = vadd.f32 0.0, %v4863
  %v4865 = vpop.f32.mrb[0].mxu0
  %4866 = vmatprep.mubr.bf16.mxu0 0
  %4867 = vmatmul.mubr.bf16.gmra.mrb[0].mxu0 %v4661
  %v4868 = vpop.f32.mrb[0].mxu0
  %v4869 = vadd.f32 0.0, %v4868
  %v4870 = vpop.f32.mrb[0].mxu0
  %v4871 = vpop.f32.mrb[0].mxu0
  %v4872 = vadd.f32 0.0, %v4871
  %v4873 = vpop.f32.mrb[0].mxu0
  %4874 = vmatprep.mubr.bf16.mxu0 0
  %4875 = vmatmul.mubr.bf16.gmra.mrb[0].mxu0 %v4664
  %v4876 = vpop.f32.mrb[0].mxu0
  %v4877 = vadd.f32 0.0, %v4876
  %v4878 = vpop.f32.mrb[0].mxu0
  %v4879 = vpop.f32.mrb[0].mxu0
  %v4880 = vadd.f32 0.0, %v4879
  %v4881 = vpop.f32.mrb[0].mxu0
  %4882 = vmatprep.mubr.bf16.mxu0 0
  %4883 = vmatmul.mubr.bf16.gmra.mrb[0].mxu0 %v4667
  %v4884 = vpop.f32.mrb[0].mxu0
  %v4885 = vadd.f32 0.0, %v4884
  %v4886 = vpop.f32.mrb[0].mxu0
  %v4887 = vpop.f32.mrb[0].mxu0
  %v4888 = vadd.f32 0.0, %v4887
  %v4889 = vpop.f32.mrb[0].mxu0
  %4890 = vmatprep.mubr.bf16.mxu0 0
  %4891 = vmatmul.mubr.bf16.gmra.mrb[0].mxu0 %v4670
  %v4892 = vpop.f32.mrb[0].mxu0
  %v4893 = vadd.f32 0.0, %v4892
  %v4894 = vpop.f32.mrb[0].mxu0
  %v4895 = vpop.f32.mrb[0].mxu0
  %v4896 = vadd.f32 0.0, %v4895
  %v4897 = vpop.f32.mrb[0].mxu0
  %4898 = vmatprep.mubr.bf16.mxu0 0
  %4899 = vmatmul.mubr.bf16.gmra.mrb[0].mxu0 %v4673
  %v4900 = vpop.f32.mrb[0].mxu0
  %v4901 = vadd.f32 0.0, %v4900
  %v4902 = vpop.f32.mrb[0].mxu0
  %v4903 = vpop.f32.mrb[0].mxu0
  %v4904 = vadd.f32 0.0, %v4903
  %v4905 = vpop.f32.mrb[0].mxu0
  %4906 = vmatprep.mubr.bf16.mxu0 0
  %4907 = vmatmul.mubr.bf16.gmra.mrb[0].mxu0 %v4676
  %v4908 = vpop.f32.mrb[0].mxu0
  %v4909 = vadd.f32 0.0, %v4908
  %v4910 = vpop.f32.mrb[0].mxu0
  %v4911 = vpop.f32.mrb[0].mxu0
  %v4912 = vadd.f32 0.0, %v4911
  %v4913 = vpop.f32.mrb[0].mxu0
  %4914 = vmatprep.mubr.bf16.mxu0 0
  %4915 = vmatmul.mubr.bf16.gmra.mrb[0].mxu0 %v4679
  %v4916 = vpop.f32.mrb[0].mxu0
  %v4917 = vadd.f32 0.0, %v4916
  %v4918 = vpop.f32.mrb[0].mxu0
  %v4919 = vpop.f32.mrb[0].mxu0
  %v4920 = vadd.f32 0.0, %v4919
  %v4921 = vpop.f32.mrb[0].mxu0
  %4922 = vmatprep.mubr.bf16.mxu0 0
  %4923 = vmatmul.mubr.bf16.gmra.mrb[0].mxu0 %v4682
  %v4924 = vpop.f32.mrb[0].mxu0
  %v4925 = vadd.f32 0.0, %v4924
  %v4926 = vpop.f32.mrb[0].mxu0
  %v4927 = vpop.f32.mrb[0].mxu0
  %v4928 = vadd.f32 0.0, %v4927
  %v4929 = vpop.f32.mrb[0].mxu0
  %4930 = vmatprep.mubr.bf16.mxu0 0
  %4931 = vmatmul.mubr.bf16.gmra.mrb[0].mxu0 %v4685
  %v4932 = vpop.f32.mrb[0].mxu0
  %v4933 = vadd.f32 0.0, %v4932
  %v4934 = vpop.f32.mrb[0].mxu0
  %v4935 = vpop.f32.mrb[0].mxu0
  %v4936 = vadd.f32 0.0, %v4935
  %v4937 = vpop.f32.mrb[0].mxu0
  %4938 = vmatprep.mubr.bf16.mxu0 0
  %4939 = vmatmul.mubr.bf16.gmra.mrb[0].mxu0 %v4688
  %v4940 = vpop.f32.mrb[0].mxu0
  %v4941 = vadd.f32 0.0, %v4940
  %v4942 = vpop.f32.mrb[0].mxu0
  %v4943 = vpop.f32.mrb[0].mxu0
  %v4944 = vadd.f32 0.0, %v4943
  %v4945 = vpop.f32.mrb[0].mxu0
  %4946 = vmatprep.mubr.bf16.mxu0 0
  %4947 = vmatmul.mubr.bf16.gmra.mrb[0].mxu0 %v4691
  %v4948 = vpop.f32.mrb[0].mxu0
  %v4949 = vadd.f32 0.0, %v4948
  %v4950 = vpop.f32.mrb[0].mxu0
  %v4951 = vpop.f32.mrb[0].mxu0
  %v4952 = vadd.f32 0.0, %v4951
  %v4953 = vpop.f32.mrb[0].mxu0
  %4954 = vmatprep.mubr.bf16.mxu0 0
  %4955 = vmatmul.mubr.bf16.gmra.mrb[0].mxu0 %v4694
  %v4956 = vpop.f32.mrb[0].mxu0
  %v4957 = vadd.f32 0.0, %v4956
  %v4958 = vpop.f32.mrb[0].mxu0
  %v4959 = vpop.f32.mrb[0].mxu0
  %v4960 = vadd.f32 0.0, %v4959
  %v4961 = vpop.f32.mrb[0].mxu0
  %4962 = vmatprep.mubr.bf16.mxu0 0
  %4963 = vmatmul.mubr.bf16.gmra.mrb[0].mxu0 %v4697
  %v4964 = vpop.f32.mrb[0].mxu0
  %v4965 = vadd.f32 0.0, %v4964
  %v4966 = vpop.f32.mrb[0].mxu0
  %v4967 = vpop.f32.mrb[0].mxu0
  %v4968 = vadd.f32 0.0, %v4967
  %v4969 = vpop.f32.mrb[0].mxu0
  %4970 = vmatprep.mubr.bf16.mxu0 0
  %4971 = vmatmul.mubr.bf16.gmra.mrb[0].mxu0 %v4700
  %v4972 = vpop.f32.mrb[0].mxu0
  %v4973 = vadd.f32 0.0, %v4972
  %v4974 = vpop.f32.mrb[0].mxu0
  %v4975 = vpop.f32.mrb[0].mxu0
  %v4976 = vadd.f32 0.0, %v4975
  %v4977 = vpop.f32.mrb[0].mxu0
  %4978 = vmatprep.mubr.bf16.mxu0 0
  %4979 = vmatmul.mubr.bf16.gmra.mrb[0].mxu0 %v4703
  %v4980 = vpop.f32.mrb[0].mxu0
  %v4981 = vadd.f32 0.0, %v4980
  %v4982 = vpop.f32.mrb[0].mxu0
  %v4983 = vpop.f32.mrb[0].mxu0
  %v4984 = vadd.f32 0.0, %v4983
  %v4985 = vpop.f32.mrb[0].mxu0
  %4986 = vmatprep.mubr.bf16.mxu0 0
  %4987 = vmatmul.mubr.bf16.gmra.mrb[0].mxu0 %v4706
  %v4988 = vpop.f32.mrb[0].mxu0
  %v4989 = vadd.f32 0.0, %v4988
  %v4990 = vpop.f32.mrb[0].mxu0
  %v4991 = vpop.f32.mrb[0].mxu0
  %v4992 = vadd.f32 0.0, %v4991
  %v4993 = vpop.f32.mrb[0].mxu0
  %4994 = vmatprep.mubr.bf16.mxu0 0
  %4995 = vmatmul.mubr.bf16.gmra.mrb[0].mxu0 %v4709
  %v4996 = vpop.f32.mrb[0].mxu0
  %v4997 = vadd.f32 0.0, %v4996
  %v4998 = vpop.f32.mrb[0].mxu0
  %v4999 = vpop.f32.mrb[0].mxu0
  %v5000 = vadd.f32 0.0, %v4999
  %v5001 = vpop.f32.mrb[0].mxu0
  %5002 = vdwg.mxu0
  %v5003 = vadd.f32 %v4453, %v4749
  %v5004 = vadd.f32 %v4454, %v4752
  %v5005 = vadd.f32 %v4455, %v4757
  %v5006 = vadd.f32 %v4456, %v4760
  %v5007 = vadd.f32 %v4457, %v4765
  %v5008 = vadd.f32 %v4458, %v4768
  %v5009 = vadd.f32 %v4459, %v4773
  %v5010 = vadd.f32 %v4460, %v4776
  %v5011 = vadd.f32 %v4461, %v4781
  %v5012 = vadd.f32 %v4462, %v4784
  %v5013 = vadd.f32 %v4463, %v4789
  %v5014 = vadd.f32 %v4464, %v4792
  %v5015 = vadd.f32 %v4465, %v4797
  %v5016 = vadd.f32 %v4466, %v4800
  %v5017 = vadd.f32 %v4467, %v4805
  %v5018 = vadd.f32 %v4468, %v4808
  %v5019 = vadd.f32 %v4469, %v4813
  %v5020 = vadd.f32 %v4470, %v4816
  %v5021 = vadd.f32 %v4471, %v4821
  %v5022 = vadd.f32 %v4472, %v4824
  %v5023 = vadd.f32 %v4473, %v4829
  %v5024 = vadd.f32 %v4474, %v4832
  %v5025 = vadd.f32 %v4475, %v4837
  %v5026 = vadd.f32 %v4476, %v4840
  %v5027 = vadd.f32 %v4477, %v4845
  %v5028 = vadd.f32 %v4478, %v4848
  %v5029 = vadd.f32 %v4479, %v4853
  %v5030 = vadd.f32 %v4480, %v4856
  %v5031 = vadd.f32 %v4481, %v4861
  %v5032 = vadd.f32 %v4482, %v4864
  %v5033 = vadd.f32 %v4483, %v4869
  %v5034 = vadd.f32 %v4484, %v4872
  %v5035 = vadd.f32 %v4485, %v4877
  %v5036 = vadd.f32 %v4486, %v4880
  %v5037 = vadd.f32 %v4487, %v4885
  %v5038 = vadd.f32 %v4488, %v4888
  %v5039 = vadd.f32 %v4489, %v4893
  %v5040 = vadd.f32 %v4490, %v4896
  %v5041 = vadd.f32 %v4491, %v4901
  %v5042 = vadd.f32 %v4492, %v4904
  %v5043 = vadd.f32 %v4493, %v4909
  %v5044 = vadd.f32 %v4494, %v4912
  %v5045 = vadd.f32 %v4495, %v4917
  %v5046 = vadd.f32 %v4496, %v4920
  %v5047 = vadd.f32 %v4497, %v4925
  %v5048 = vadd.f32 %v4498, %v4928
  %v5049 = vadd.f32 %v4499, %v4933
  %v5050 = vadd.f32 %v4500, %v4936
  %v5051 = vadd.f32 %v4501, %v4941
  %v5052 = vadd.f32 %v4502, %v4944
  %v5053 = vadd.f32 %v4503, %v4949
  %v5054 = vadd.f32 %v4504, %v4952
  %v5055 = vadd.f32 %v4505, %v4957
  %v5056 = vadd.f32 %v4506, %v4960
  %v5057 = vadd.f32 %v4507, %v4965
  %v5058 = vadd.f32 %v4508, %v4968
  %v5059 = vadd.f32 %v4509, %v4973
  %v5060 = vadd.f32 %v4510, %v4976
  %v5061 = vadd.f32 %v4511, %v4981
  %v5062 = vadd.f32 %v4512, %v4984
  %v5063 = vadd.f32 %v4513, %v4989
  %v5064 = vadd.f32 %v4514, %v4992
  %v5065 = vadd.f32 %v4515, %v4997
  %v5066 = vadd.f32 %v4516, %v5000
  %v5067 = vsel %vm27, %v5003, 0.0
  %v5068 = vsel %vm27, %v5004, 0.0
  %v5069 = vadd.f32 %v5067, %v5068
  %v5070 = vsel %vm27, %v5005, 0.0
  %v5071 = vadd.f32 %v5069, %v5070
  %v5072 = vsel %vm27, %v5006, 0.0
  %v5073 = vadd.f32 %v5071, %v5072
  %v5074 = vsel %vm27, %v5007, 0.0
  %v5075 = vadd.f32 %v5073, %v5074
  %v5076 = vsel %vm27, %v5008, 0.0
  %v5077 = vadd.f32 %v5075, %v5076
  %v5078 = vsel %vm27, %v5009, 0.0
  %v5079 = vadd.f32 %v5077, %v5078
  %v5080 = vsel %vm27, %v5010, 0.0
  %v5081 = vadd.f32 %v5079, %v5080
  %v5082 = vsel %vm27, %v5011, 0.0
  %v5083 = vadd.f32 %v5081, %v5082
  %v5084 = vsel %vm27, %v5012, 0.0
  %v5085 = vadd.f32 %v5083, %v5084
  %v5086 = vsel %vm27, %v5013, 0.0
  %v5087 = vadd.f32 %v5085, %v5086
  %v5088 = vsel %vm27, %v5014, 0.0
  %v5089 = vadd.f32 %v5087, %v5088
  %v5090 = vsel %vm27, %v5015, 0.0
  %v5091 = vadd.f32 %v5089, %v5090
  %v5092 = vsel %vm27, %v5016, 0.0
  %v5093 = vadd.f32 %v5091, %v5092
  %v5094 = vsel %vm27, %v5017, 0.0
  %v5095 = vadd.f32 %v5093, %v5094
  %v5096 = vsel %vm27, %v5018, 0.0
  %v5097 = vadd.f32 %v5095, %v5096
  %v5098 = vsel %vm27, %v5019, 0.0
  %v5099 = vadd.f32 %v5097, %v5098
  %v5100 = vsel %vm27, %v5020, 0.0
  %v5101 = vadd.f32 %v5099, %v5100
  %v5102 = vsel %vm27, %v5021, 0.0
  %v5103 = vadd.f32 %v5101, %v5102
  %v5104 = vsel %vm27, %v5022, 0.0
  %v5105 = vadd.f32 %v5103, %v5104
  %v5106 = vsel %vm27, %v5023, 0.0
  %v5107 = vadd.f32 %v5105, %v5106
  %v5108 = vsel %vm27, %v5024, 0.0
  %v5109 = vadd.f32 %v5107, %v5108
  %v5110 = vsel %vm27, %v5025, 0.0
  %v5111 = vadd.f32 %v5109, %v5110
  %v5112 = vsel %vm27, %v5026, 0.0
  %v5113 = vadd.f32 %v5111, %v5112
  %v5114 = vsel %vm27, %v5027, 0.0
  %v5115 = vadd.f32 %v5113, %v5114
  %v5116 = vsel %vm27, %v5028, 0.0
  %v5117 = vadd.f32 %v5115, %v5116
  %v5118 = vsel %vm27, %v5029, 0.0
  %v5119 = vadd.f32 %v5117, %v5118
  %v5120 = vsel %vm27, %v5030, 0.0
  %v5121 = vadd.f32 %v5119, %v5120
  %v5122 = vsel %vm27, %v5031, 0.0
  %v5123 = vadd.f32 %v5121, %v5122
  %v5124 = vsel %vm27, %v5032, 0.0
  %v5125 = vadd.f32 %v5123, %v5124
  %v5126 = vsel %vm27, %v5033, 0.0
  %v5127 = vadd.f32 %v5125, %v5126
  %v5128 = vsel %vm27, %v5034, 0.0
  %v5129 = vadd.f32 %v5127, %v5128
  %v5130 = vsel %vm27, %v5035, 0.0
  %v5131 = vadd.f32 %v5129, %v5130
  %v5132 = vsel %vm27, %v5036, 0.0
  %v5133 = vadd.f32 %v5131, %v5132
  %v5134 = vsel %vm27, %v5037, 0.0
  %v5135 = vadd.f32 %v5133, %v5134
  %v5136 = vsel %vm27, %v5038, 0.0
  %v5137 = vadd.f32 %v5135, %v5136
  %v5138 = vsel %vm27, %v5039, 0.0
  %v5139 = vadd.f32 %v5137, %v5138
  %v5140 = vsel %vm27, %v5040, 0.0
  %v5141 = vadd.f32 %v5139, %v5140
  %v5142 = vsel %vm27, %v5041, 0.0
  %v5143 = vadd.f32 %v5141, %v5142
  %v5144 = vsel %vm27, %v5042, 0.0
  %v5145 = vadd.f32 %v5143, %v5144
  %v5146 = vsel %vm27, %v5043, 0.0
  %v5147 = vadd.f32 %v5145, %v5146
  %v5148 = vsel %vm27, %v5044, 0.0
  %v5149 = vadd.f32 %v5147, %v5148
  %v5150 = vsel %vm27, %v5045, 0.0
  %v5151 = vadd.f32 %v5149, %v5150
  %v5152 = vsel %vm27, %v5046, 0.0
  %v5153 = vadd.f32 %v5151, %v5152
  %v5154 = vsel %vm27, %v5047, 0.0
  %v5155 = vadd.f32 %v5153, %v5154
  %v5156 = vsel %vm27, %v5048, 0.0
  %v5157 = vadd.f32 %v5155, %v5156
  %v5158 = vsel %vm27, %v5049, 0.0
  %v5159 = vadd.f32 %v5157, %v5158
  %v5160 = vsel %vm27, %v5050, 0.0
  %v5161 = vadd.f32 %v5159, %v5160
  %v5162 = vsel %vm27, %v5051, 0.0
  %v5163 = vadd.f32 %v5161, %v5162
  %v5164 = vsel %vm27, %v5052, 0.0
  %v5165 = vadd.f32 %v5163, %v5164
  %v5166 = vsel %vm27, %v5053, 0.0
  %v5167 = vadd.f32 %v5165, %v5166
  %v5168 = vsel %vm27, %v5054, 0.0
  %v5169 = vadd.f32 %v5167, %v5168
  %v5170 = vsel %vm27, %v5055, 0.0
  %v5171 = vadd.f32 %v5169, %v5170
  %v5172 = vsel %vm27, %v5056, 0.0
  %v5173 = vadd.f32 %v5171, %v5172
  %v5174 = vsel %vm27, %v5057, 0.0
  %v5175 = vadd.f32 %v5173, %v5174
  %v5176 = vsel %vm27, %v5058, 0.0
  %v5177 = vadd.f32 %v5175, %v5176
  %v5178 = vsel %vm27, %v5059, 0.0
  %v5179 = vadd.f32 %v5177, %v5178
  %v5180 = vsel %vm27, %v5060, 0.0
  %v5181 = vadd.f32 %v5179, %v5180
  %v5182 = vsel %vm27, %v5061, 0.0
  %v5183 = vadd.f32 %v5181, %v5182
  %v5184 = vsel %vm27, %v5062, 0.0
  %v5185 = vadd.f32 %v5183, %v5184
  %v5186 = vsel %vm27, %v5063, 0.0
  %v5187 = vadd.f32 %v5185, %v5186
  %v5188 = vsel %vm27, %v5064, 0.0
  %v5189 = vadd.f32 %v5187, %v5188
  %v5190 = vsel %vm27, %v5065, 0.0
  %v5191 = vadd.f32 %v5189, %v5190
  %v5192 = vsel %vm27, %v5066, 0.0
  %v5193 = vadd.f32 %v5191, %v5192
  %v5194 = vrot.slane %v5193, 4
  %v5195 = vadd.f32 %v5193, %v5194
  %v5196 = vrot.slane %v5195, 2
  %v5197 = vadd.f32 %v5195, %v5196
  %v5198 = vrot.slane %v5197, 1
  %v5199 = vadd.f32 %v5197, %v5198
  %v5200 = vmul.f32 %v5199, 0.001953125
  %v5201 = vsub.f32 %v5003, %v5200
  %v5202 = vsub.f32 %v5004, %v5200
  %v5203 = vsub.f32 %v5005, %v5200
  %v5204 = vsub.f32 %v5006, %v5200
  %v5205 = vsub.f32 %v5007, %v5200
  %v5206 = vsub.f32 %v5008, %v5200
  %v5207 = vsub.f32 %v5009, %v5200
  %v5208 = vsub.f32 %v5010, %v5200
  %v5209 = vsub.f32 %v5011, %v5200
  %v5210 = vsub.f32 %v5012, %v5200
  %v5211 = vsub.f32 %v5013, %v5200
  %v5212 = vsub.f32 %v5014, %v5200
  %v5213 = vsub.f32 %v5015, %v5200
  %v5214 = vsub.f32 %v5016, %v5200
  %v5215 = vsub.f32 %v5017, %v5200
  %v5216 = vsub.f32 %v5018, %v5200
  %v5217 = vsub.f32 %v5019, %v5200
  %v5218 = vsub.f32 %v5020, %v5200
  %v5219 = vsub.f32 %v5021, %v5200
  %v5220 = vsub.f32 %v5022, %v5200
  %v5221 = vsub.f32 %v5023, %v5200
  %v5222 = vsub.f32 %v5024, %v5200
  %v5223 = vsub.f32 %v5025, %v5200
  %v5224 = vsub.f32 %v5026, %v5200
  %v5225 = vsub.f32 %v5027, %v5200
  %v5226 = vsub.f32 %v5028, %v5200
  %v5227 = vsub.f32 %v5029, %v5200
  %v5228 = vsub.f32 %v5030, %v5200
  %v5229 = vsub.f32 %v5031, %v5200
  %v5230 = vsub.f32 %v5032, %v5200
  %v5231 = vsub.f32 %v5033, %v5200
  %v5232 = vsub.f32 %v5034, %v5200
  %v5233 = vsub.f32 %v5035, %v5200
  %v5234 = vsub.f32 %v5036, %v5200
  %v5235 = vsub.f32 %v5037, %v5200
  %v5236 = vsub.f32 %v5038, %v5200
  %v5237 = vsub.f32 %v5039, %v5200
  %v5238 = vsub.f32 %v5040, %v5200
  %v5239 = vsub.f32 %v5041, %v5200
  %v5240 = vsub.f32 %v5042, %v5200
  %v5241 = vsub.f32 %v5043, %v5200
  %v5242 = vsub.f32 %v5044, %v5200
  %v5243 = vsub.f32 %v5045, %v5200
  %v5244 = vsub.f32 %v5046, %v5200
  %v5245 = vsub.f32 %v5047, %v5200
  %v5246 = vsub.f32 %v5048, %v5200
  %v5247 = vsub.f32 %v5049, %v5200
  %v5248 = vsub.f32 %v5050, %v5200
  %v5249 = vsub.f32 %v5051, %v5200
  %v5250 = vsub.f32 %v5052, %v5200
  %v5251 = vsub.f32 %v5053, %v5200
  %v5252 = vsub.f32 %v5054, %v5200
  %v5253 = vsub.f32 %v5055, %v5200
  %v5254 = vsub.f32 %v5056, %v5200
  %v5255 = vsub.f32 %v5057, %v5200
  %v5256 = vsub.f32 %v5058, %v5200
  %v5257 = vsub.f32 %v5059, %v5200
  %v5258 = vsub.f32 %v5060, %v5200
  %v5259 = vsub.f32 %v5061, %v5200
  %v5260 = vsub.f32 %v5062, %v5200
  %v5261 = vsub.f32 %v5063, %v5200
  %v5262 = vsub.f32 %v5064, %v5200
  %v5263 = vsub.f32 %v5065, %v5200
  %v5264 = vsub.f32 %v5066, %v5200
  %v5265 = vmul.f32 %v5201, %v5201
  %v5266 = vmul.f32 %v5202, %v5202
  %v5267 = vmul.f32 %v5203, %v5203
  %v5268 = vmul.f32 %v5204, %v5204
  %v5269 = vmul.f32 %v5205, %v5205
  %v5270 = vmul.f32 %v5206, %v5206
  %v5271 = vmul.f32 %v5207, %v5207
  %v5272 = vmul.f32 %v5208, %v5208
  %v5273 = vmul.f32 %v5209, %v5209
  %v5274 = vmul.f32 %v5210, %v5210
  %v5275 = vmul.f32 %v5211, %v5211
  %v5276 = vmul.f32 %v5212, %v5212
  %v5277 = vmul.f32 %v5213, %v5213
  %v5278 = vmul.f32 %v5214, %v5214
  %v5279 = vmul.f32 %v5215, %v5215
  %v5280 = vmul.f32 %v5216, %v5216
  %v5281 = vmul.f32 %v5217, %v5217
  %v5282 = vmul.f32 %v5218, %v5218
  %v5283 = vmul.f32 %v5219, %v5219
  %v5284 = vmul.f32 %v5220, %v5220
  %v5285 = vmul.f32 %v5221, %v5221
  %v5286 = vmul.f32 %v5222, %v5222
  %v5287 = vmul.f32 %v5223, %v5223
  %v5288 = vmul.f32 %v5224, %v5224
  %v5289 = vmul.f32 %v5225, %v5225
  %v5290 = vmul.f32 %v5226, %v5226
  %v5291 = vmul.f32 %v5227, %v5227
  %v5292 = vmul.f32 %v5228, %v5228
  %v5293 = vmul.f32 %v5229, %v5229
  %v5294 = vmul.f32 %v5230, %v5230
  %v5295 = vmul.f32 %v5231, %v5231
  %v5296 = vmul.f32 %v5232, %v5232
  %v5297 = vmul.f32 %v5233, %v5233
  %v5298 = vmul.f32 %v5234, %v5234
  %v5299 = vmul.f32 %v5235, %v5235
  %v5300 = vmul.f32 %v5236, %v5236
  %v5301 = vmul.f32 %v5237, %v5237
  %v5302 = vmul.f32 %v5238, %v5238
  %v5303 = vmul.f32 %v5239, %v5239
  %v5304 = vmul.f32 %v5240, %v5240
  %v5305 = vmul.f32 %v5241, %v5241
  %v5306 = vmul.f32 %v5242, %v5242
  %v5307 = vmul.f32 %v5243, %v5243
  %v5308 = vmul.f32 %v5244, %v5244
  %v5309 = vmul.f32 %v5245, %v5245
  %v5310 = vmul.f32 %v5246, %v5246
  %v5311 = vmul.f32 %v5247, %v5247
  %v5312 = vmul.f32 %v5248, %v5248
  %v5313 = vmul.f32 %v5249, %v5249
  %v5314 = vmul.f32 %v5250, %v5250
  %v5315 = vmul.f32 %v5251, %v5251
  %v5316 = vmul.f32 %v5252, %v5252
  %v5317 = vmul.f32 %v5253, %v5253
  %v5318 = vmul.f32 %v5254, %v5254
  %v5319 = vmul.f32 %v5255, %v5255
  %v5320 = vmul.f32 %v5256, %v5256
  %v5321 = vmul.f32 %v5257, %v5257
  %v5322 = vmul.f32 %v5258, %v5258
  %v5323 = vmul.f32 %v5259, %v5259
  %v5324 = vmul.f32 %v5260, %v5260
  %v5325 = vmul.f32 %v5261, %v5261
  %v5326 = vmul.f32 %v5262, %v5262
  %v5327 = vmul.f32 %v5263, %v5263
  %v5328 = vmul.f32 %v5264, %v5264
  %v5329 = vsel %vm27, %v5265, 0.0
  %v5330 = vsel %vm27, %v5266, 0.0
  %v5331 = vadd.f32 %v5329, %v5330
  %v5332 = vsel %vm27, %v5267, 0.0
  %v5333 = vadd.f32 %v5331, %v5332
  %v5334 = vsel %vm27, %v5268, 0.0
  %v5335 = vadd.f32 %v5333, %v5334
  %v5336 = vsel %vm27, %v5269, 0.0
  %v5337 = vadd.f32 %v5335, %v5336
  %v5338 = vsel %vm27, %v5270, 0.0
  %v5339 = vadd.f32 %v5337, %v5338
  %v5340 = vsel %vm27, %v5271, 0.0
  %v5341 = vadd.f32 %v5339, %v5340
  %v5342 = vsel %vm27, %v5272, 0.0
  %v5343 = vadd.f32 %v5341, %v5342
  %v5344 = vsel %vm27, %v5273, 0.0
  %v5345 = vadd.f32 %v5343, %v5344
  %v5346 = vsel %vm27, %v5274, 0.0
  %v5347 = vadd.f32 %v5345, %v5346
  %v5348 = vsel %vm27, %v5275, 0.0
  %v5349 = vadd.f32 %v5347, %v5348
  %v5350 = vsel %vm27, %v5276, 0.0
  %v5351 = vadd.f32 %v5349, %v5350
  %v5352 = vsel %vm27, %v5277, 0.0
  %v5353 = vadd.f32 %v5351, %v5352
  %v5354 = vsel %vm27, %v5278, 0.0
  %v5355 = vadd.f32 %v5353, %v5354
  %v5356 = vsel %vm27, %v5279, 0.0
  %v5357 = vadd.f32 %v5355, %v5356
  %v5358 = vsel %vm27, %v5280, 0.0
  %v5359 = vadd.f32 %v5357, %v5358
  %v5360 = vsel %vm27, %v5281, 0.0
  %v5361 = vadd.f32 %v5359, %v5360
  %v5362 = vsel %vm27, %v5282, 0.0
  %v5363 = vadd.f32 %v5361, %v5362
  %v5364 = vsel %vm27, %v5283, 0.0
  %v5365 = vadd.f32 %v5363, %v5364
  %v5366 = vsel %vm27, %v5284, 0.0
  %v5367 = vadd.f32 %v5365, %v5366
  %v5368 = vsel %vm27, %v5285, 0.0
  %v5369 = vadd.f32 %v5367, %v5368
  %v5370 = vsel %vm27, %v5286, 0.0
  %v5371 = vadd.f32 %v5369, %v5370
  %v5372 = vsel %vm27, %v5287, 0.0
  %v5373 = vadd.f32 %v5371, %v5372
  %v5374 = vsel %vm27, %v5288, 0.0
  %v5375 = vadd.f32 %v5373, %v5374
  %v5376 = vsel %vm27, %v5289, 0.0
  %v5377 = vadd.f32 %v5375, %v5376
  %v5378 = vsel %vm27, %v5290, 0.0
  %v5379 = vadd.f32 %v5377, %v5378
  %v5380 = vsel %vm27, %v5291, 0.0
  %v5381 = vadd.f32 %v5379, %v5380
  %v5382 = vsel %vm27, %v5292, 0.0
  %v5383 = vadd.f32 %v5381, %v5382
  %v5384 = vsel %vm27, %v5293, 0.0
  %v5385 = vadd.f32 %v5383, %v5384
  %v5386 = vsel %vm27, %v5294, 0.0
  %v5387 = vadd.f32 %v5385, %v5386
  %v5388 = vsel %vm27, %v5295, 0.0
  %v5389 = vadd.f32 %v5387, %v5388
  %v5390 = vsel %vm27, %v5296, 0.0
  %v5391 = vadd.f32 %v5389, %v5390
  %v5392 = vsel %vm27, %v5297, 0.0
  %v5393 = vadd.f32 %v5391, %v5392
  %v5394 = vsel %vm27, %v5298, 0.0
  %v5395 = vadd.f32 %v5393, %v5394
  %v5396 = vsel %vm27, %v5299, 0.0
  %v5397 = vadd.f32 %v5395, %v5396
  %v5398 = vsel %vm27, %v5300, 0.0
  %v5399 = vadd.f32 %v5397, %v5398
  %v5400 = vsel %vm27, %v5301, 0.0
  %v5401 = vadd.f32 %v5399, %v5400
  %v5402 = vsel %vm27, %v5302, 0.0
  %v5403 = vadd.f32 %v5401, %v5402
  %v5404 = vsel %vm27, %v5303, 0.0
  %v5405 = vadd.f32 %v5403, %v5404
  %v5406 = vsel %vm27, %v5304, 0.0
  %v5407 = vadd.f32 %v5405, %v5406
  %v5408 = vsel %vm27, %v5305, 0.0
  %v5409 = vadd.f32 %v5407, %v5408
  %v5410 = vsel %vm27, %v5306, 0.0
  %v5411 = vadd.f32 %v5409, %v5410
  %v5412 = vsel %vm27, %v5307, 0.0
  %v5413 = vadd.f32 %v5411, %v5412
  %v5414 = vsel %vm27, %v5308, 0.0
  %v5415 = vadd.f32 %v5413, %v5414
  %v5416 = vsel %vm27, %v5309, 0.0
  %v5417 = vadd.f32 %v5415, %v5416
  %v5418 = vsel %vm27, %v5310, 0.0
  %v5419 = vadd.f32 %v5417, %v5418
  %v5420 = vsel %vm27, %v5311, 0.0
  %v5421 = vadd.f32 %v5419, %v5420
  %v5422 = vsel %vm27, %v5312, 0.0
  %v5423 = vadd.f32 %v5421, %v5422
  %v5424 = vsel %vm27, %v5313, 0.0
  %v5425 = vadd.f32 %v5423, %v5424
  %v5426 = vsel %vm27, %v5314, 0.0
  %v5427 = vadd.f32 %v5425, %v5426
  %v5428 = vsel %vm27, %v5315, 0.0
  %v5429 = vadd.f32 %v5427, %v5428
  %v5430 = vsel %vm27, %v5316, 0.0
  %v5431 = vadd.f32 %v5429, %v5430
  %v5432 = vsel %vm27, %v5317, 0.0
  %v5433 = vadd.f32 %v5431, %v5432
  %v5434 = vsel %vm27, %v5318, 0.0
  %v5435 = vadd.f32 %v5433, %v5434
  %v5436 = vsel %vm27, %v5319, 0.0
  %v5437 = vadd.f32 %v5435, %v5436
  %v5438 = vsel %vm27, %v5320, 0.0
  %v5439 = vadd.f32 %v5437, %v5438
  %v5440 = vsel %vm27, %v5321, 0.0
  %v5441 = vadd.f32 %v5439, %v5440
  %v5442 = vsel %vm27, %v5322, 0.0
  %v5443 = vadd.f32 %v5441, %v5442
  %v5444 = vsel %vm27, %v5323, 0.0
  %v5445 = vadd.f32 %v5443, %v5444
  %v5446 = vsel %vm27, %v5324, 0.0
  %v5447 = vadd.f32 %v5445, %v5446
  %v5448 = vsel %vm27, %v5325, 0.0
  %v5449 = vadd.f32 %v5447, %v5448
  %v5450 = vsel %vm27, %v5326, 0.0
  %v5451 = vadd.f32 %v5449, %v5450
  %v5452 = vsel %vm27, %v5327, 0.0
  %v5453 = vadd.f32 %v5451, %v5452
  %v5454 = vsel %vm27, %v5328, 0.0
  %v5455 = vadd.f32 %v5453, %v5454
  %v5456 = vrot.slane %v5455, 4
  %v5457 = vadd.f32 %v5455, %v5456
  %v5458 = vrot.slane %v5457, 2
  %v5459 = vadd.f32 %v5457, %v5458
  %v5460 = vrot.slane %v5459, 1
  %v5461 = vadd.f32 %v5459, %v5460
  %v5462 = vmul.f32 %v5461, 0.001953125
  %v5463 = vld [vmem:[%s2] sm:$0x1]
  %v5464 = vadd.f32 %v5462, 1e-05
  %v5465 = vrsqrt.pop %v5464
  %v5466 = vmul.f32 %v5463, %v5465
  %v5468 = vlaneseq
  %v5469 = vshrl.u32 %v5468, 7
  %v5470 = vsub.s32 0, %v5469
  %v5471 = vrot.slane %v5466, %v5470
  %v5473 = vmul.f32 %v5201, %v5471
  %v5474 = vmul.f32 %v5202, %v5471
  %v5475 = vmul.f32 %v5203, %v5471
  %v5476 = vmul.f32 %v5204, %v5471
  %v5477 = vmul.f32 %v5205, %v5471
  %v5478 = vmul.f32 %v5206, %v5471
  %v5479 = vmul.f32 %v5207, %v5471
  %v5480 = vmul.f32 %v5208, %v5471
  %v5481 = vmul.f32 %v5209, %v5471
  %v5482 = vmul.f32 %v5210, %v5471
  %v5483 = vmul.f32 %v5211, %v5471
  %v5484 = vmul.f32 %v5212, %v5471
  %v5485 = vmul.f32 %v5213, %v5471
  %v5486 = vmul.f32 %v5214, %v5471
  %v5487 = vmul.f32 %v5215, %v5471
  %v5488 = vmul.f32 %v5216, %v5471
  %v5489 = vmul.f32 %v5217, %v5471
  %v5490 = vmul.f32 %v5218, %v5471
  %v5491 = vmul.f32 %v5219, %v5471
  %v5492 = vmul.f32 %v5220, %v5471
  %v5493 = vmul.f32 %v5221, %v5471
  %v5494 = vmul.f32 %v5222, %v5471
  %v5495 = vmul.f32 %v5223, %v5471
  %v5496 = vmul.f32 %v5224, %v5471
  %v5497 = vmul.f32 %v5225, %v5471
  %v5498 = vmul.f32 %v5226, %v5471
  %v5499 = vmul.f32 %v5227, %v5471
  %v5500 = vmul.f32 %v5228, %v5471
  %v5501 = vmul.f32 %v5229, %v5471
  %v5502 = vmul.f32 %v5230, %v5471
  %v5503 = vmul.f32 %v5231, %v5471
  %v5504 = vmul.f32 %v5232, %v5471
  %v5505 = vmul.f32 %v5233, %v5471
  %v5506 = vmul.f32 %v5234, %v5471
  %v5507 = vmul.f32 %v5235, %v5471
  %v5508 = vmul.f32 %v5236, %v5471
  %v5509 = vmul.f32 %v5237, %v5471
  %v5510 = vmul.f32 %v5238, %v5471
  %v5511 = vmul.f32 %v5239, %v5471
  %v5512 = vmul.f32 %v5240, %v5471
  %v5513 = vmul.f32 %v5241, %v5471
  %v5514 = vmul.f32 %v5242, %v5471
  %v5515 = vmul.f32 %v5243, %v5471
  %v5516 = vmul.f32 %v5244, %v5471
  %v5517 = vmul.f32 %v5245, %v5471
  %v5518 = vmul.f32 %v5246, %v5471
  %v5519 = vmul.f32 %v5247, %v5471
  %v5520 = vmul.f32 %v5248, %v5471
  %v5521 = vmul.f32 %v5249, %v5471
  %v5522 = vmul.f32 %v5250, %v5471
  %v5523 = vmul.f32 %v5251, %v5471
  %v5524 = vmul.f32 %v5252, %v5471
  %v5525 = vmul.f32 %v5253, %v5471
  %v5526 = vmul.f32 %v5254, %v5471
  %v5527 = vmul.f32 %v5255, %v5471
  %v5528 = vmul.f32 %v5256, %v5471
  %v5529 = vmul.f32 %v5257, %v5471
  %v5530 = vmul.f32 %v5258, %v5471
  %v5531 = vmul.f32 %v5259, %v5471
  %v5532 = vmul.f32 %v5260, %v5471
  %v5533 = vmul.f32 %v5261, %v5471
  %v5534 = vmul.f32 %v5262, %v5471
  %v5535 = vmul.f32 %v5263, %v5471
  %v5536 = vmul.f32 %v5264, %v5471
  %v5537 = vld [vmem:[%s3] sm:$0x1]
  %v5539 = vlaneseq
  %v5540 = vshrl.u32 %v5539, 7
  %v5541 = vsub.s32 0, %v5540
  %v5542 = vrot.slane %v5537, %v5541
  %v5544 = vadd.f32 %v5473, %v5542
  %v5545 = vadd.f32 %v5474, %v5542
  %v5546 = vadd.f32 %v5475, %v5542
  %v5547 = vadd.f32 %v5476, %v5542
  %v5548 = vadd.f32 %v5477, %v5542
  %v5549 = vadd.f32 %v5478, %v5542
  %v5550 = vadd.f32 %v5479, %v5542
  %v5551 = vadd.f32 %v5480, %v5542
  %v5552 = vadd.f32 %v5481, %v5542
  %v5553 = vadd.f32 %v5482, %v5542
  %v5554 = vadd.f32 %v5483, %v5542
  %v5555 = vadd.f32 %v5484, %v5542
  %v5556 = vadd.f32 %v5485, %v5542
  %v5557 = vadd.f32 %v5486, %v5542
  %v5558 = vadd.f32 %v5487, %v5542
  %v5559 = vadd.f32 %v5488, %v5542
  %v5560 = vadd.f32 %v5489, %v5542
  %v5561 = vadd.f32 %v5490, %v5542
  %v5562 = vadd.f32 %v5491, %v5542
  %v5563 = vadd.f32 %v5492, %v5542
  %v5564 = vadd.f32 %v5493, %v5542
  %v5565 = vadd.f32 %v5494, %v5542
  %v5566 = vadd.f32 %v5495, %v5542
  %v5567 = vadd.f32 %v5496, %v5542
  %v5568 = vadd.f32 %v5497, %v5542
  %v5569 = vadd.f32 %v5498, %v5542
  %v5570 = vadd.f32 %v5499, %v5542
  %v5571 = vadd.f32 %v5500, %v5542
  %v5572 = vadd.f32 %v5501, %v5542
  %v5573 = vadd.f32 %v5502, %v5542
  %v5574 = vadd.f32 %v5503, %v5542
  %v5575 = vadd.f32 %v5504, %v5542
  %v5576 = vadd.f32 %v5505, %v5542
  %v5577 = vadd.f32 %v5506, %v5542
  %v5578 = vadd.f32 %v5507, %v5542
  %v5579 = vadd.f32 %v5508, %v5542
  %v5580 = vadd.f32 %v5509, %v5542
  %v5581 = vadd.f32 %v5510, %v5542
  %v5582 = vadd.f32 %v5511, %v5542
  %v5583 = vadd.f32 %v5512, %v5542
  %v5584 = vadd.f32 %v5513, %v5542
  %v5585 = vadd.f32 %v5514, %v5542
  %v5586 = vadd.f32 %v5515, %v5542
  %v5587 = vadd.f32 %v5516, %v5542
  %v5588 = vadd.f32 %v5517, %v5542
  %v5589 = vadd.f32 %v5518, %v5542
  %v5590 = vadd.f32 %v5519, %v5542
  %v5591 = vadd.f32 %v5520, %v5542
  %v5592 = vadd.f32 %v5521, %v5542
  %v5593 = vadd.f32 %v5522, %v5542
  %v5594 = vadd.f32 %v5523, %v5542
  %v5595 = vadd.f32 %v5524, %v5542
  %v5596 = vadd.f32 %v5525, %v5542
  %v5597 = vadd.f32 %v5526, %v5542
  %v5598 = vadd.f32 %v5527, %v5542
  %v5599 = vadd.f32 %v5528, %v5542
  %v5600 = vadd.f32 %v5529, %v5542
  %v5601 = vadd.f32 %v5530, %v5542
  %v5602 = vadd.f32 %v5531, %v5542
  %v5603 = vadd.f32 %v5532, %v5542
  %v5604 = vadd.f32 %v5533, %v5542
  %v5605 = vadd.f32 %v5534, %v5542
  %v5606 = vadd.f32 %v5535, %v5542
  %v5607 = vadd.f32 %v5536, %v5542
  %v5608 = vmax.f32 %v5544, 0.0
  %v5609 = vmax.f32 %v5545, 0.0
  %v5610 = vmax.f32 %v5546, 0.0
  %v5611 = vmax.f32 %v5547, 0.0
  %v5612 = vmax.f32 %v5548, 0.0
  %v5613 = vmax.f32 %v5549, 0.0
  %v5614 = vmax.f32 %v5550, 0.0
  %v5615 = vmax.f32 %v5551, 0.0
  %v5616 = vmax.f32 %v5552, 0.0
  %v5617 = vmax.f32 %v5553, 0.0
  %v5618 = vmax.f32 %v5554, 0.0
  %v5619 = vmax.f32 %v5555, 0.0
  %v5620 = vmax.f32 %v5556, 0.0
  %v5621 = vmax.f32 %v5557, 0.0
  %v5622 = vmax.f32 %v5558, 0.0
  %v5623 = vmax.f32 %v5559, 0.0
  %v5624 = vmax.f32 %v5560, 0.0
  %v5625 = vmax.f32 %v5561, 0.0
  %v5626 = vmax.f32 %v5562, 0.0
  %v5627 = vmax.f32 %v5563, 0.0
  %v5628 = vmax.f32 %v5564, 0.0
  %v5629 = vmax.f32 %v5565, 0.0
  %v5630 = vmax.f32 %v5566, 0.0
  %v5631 = vmax.f32 %v5567, 0.0
  %v5632 = vmax.f32 %v5568, 0.0
  %v5633 = vmax.f32 %v5569, 0.0
  %v5634 = vmax.f32 %v5570, 0.0
  %v5635 = vmax.f32 %v5571, 0.0
  %v5636 = vmax.f32 %v5572, 0.0
  %v5637 = vmax.f32 %v5573, 0.0
  %v5638 = vmax.f32 %v5574, 0.0
  %v5639 = vmax.f32 %v5575, 0.0
  %v5640 = vmax.f32 %v5576, 0.0
  %v5641 = vmax.f32 %v5577, 0.0
  %v5642 = vmax.f32 %v5578, 0.0
  %v5643 = vmax.f32 %v5579, 0.0
  %v5644 = vmax.f32 %v5580, 0.0
  %v5645 = vmax.f32 %v5581, 0.0
  %v5646 = vmax.f32 %v5582, 0.0
  %v5647 = vmax.f32 %v5583, 0.0
  %v5648 = vmax.f32 %v5584, 0.0
  %v5649 = vmax.f32 %v5585, 0.0
  %v5650 = vmax.f32 %v5586, 0.0
  %v5651 = vmax.f32 %v5587, 0.0
  %v5652 = vmax.f32 %v5588, 0.0
  %v5653 = vmax.f32 %v5589, 0.0
  %v5654 = vmax.f32 %v5590, 0.0
  %v5655 = vmax.f32 %v5591, 0.0
  %v5656 = vmax.f32 %v5592, 0.0
  %v5657 = vmax.f32 %v5593, 0.0
  %v5658 = vmax.f32 %v5594, 0.0
  %v5659 = vmax.f32 %v5595, 0.0
  %v5660 = vmax.f32 %v5596, 0.0
  %v5661 = vmax.f32 %v5597, 0.0
  %v5662 = vmax.f32 %v5598, 0.0
  %v5663 = vmax.f32 %v5599, 0.0
  %v5664 = vmax.f32 %v5600, 0.0
  %v5665 = vmax.f32 %v5601, 0.0
  %v5666 = vmax.f32 %v5602, 0.0
  %v5667 = vmax.f32 %v5603, 0.0
  %v5668 = vmax.f32 %v5604, 0.0
  %v5669 = vmax.f32 %v5605, 0.0
  %v5670 = vmax.f32 %v5606, 0.0
  %v5671 = vmax.f32 %v5607, 0.0
  %5672 = vst.msk [vmem:[%s179 + $0x1] sm:$0xff] %vm27, %v5608
  %5673 = vst.msk [vmem:[%s179 + $0x9] sm:$0xff] %vm27, %v5609
  %5674 = vst.msk [vmem:[%s179 + $0x19] sm:$0xff] %vm27, %v5610
  %5675 = vst.msk [vmem:[%s179 + $0x21] sm:$0xff] %vm27, %v5611
  %5676 = vst.msk [vmem:[%s179 + $0x31] sm:$0xff] %vm27, %v5612
  %5677 = vst.msk [vmem:[%s179 + $0x39] sm:$0xff] %vm27, %v5613
  %5678 = vst.msk [vmem:[%s179 + $0x49] sm:$0xff] %vm27, %v5614
  %5679 = vst.msk [vmem:[%s179 + $0x51] sm:$0xff] %vm27, %v5615
  %5680 = vst.msk [vmem:[%s179 + $0x61] sm:$0xff] %vm27, %v5616
  %5681 = vst.msk [vmem:[%s179 + $0x69] sm:$0xff] %vm27, %v5617
  %5682 = vst.msk [vmem:[%s179 + $0x79] sm:$0xff] %vm27, %v5618
  %5683 = vst.msk [vmem:[%s179 + $0x81] sm:$0xff] %vm27, %v5619
  %5684 = vst.msk [vmem:[%s179 + $0x91] sm:$0xff] %vm27, %v5620
  %5685 = vst.msk [vmem:[%s179 + $0x99] sm:$0xff] %vm27, %v5621
  %5686 = vst.msk [vmem:[%s179 + $0xa9] sm:$0xff] %vm27, %v5622
  %5687 = vst.msk [vmem:[%s179 + $0xb1] sm:$0xff] %vm27, %v5623
  %5688 = vst.msk [vmem:[%s179 + $0xc1] sm:$0xff] %vm27, %v5624
  %5689 = vst.msk [vmem:[%s179 + $0xc9] sm:$0xff] %vm27, %v5625
  %5690 = vst.msk [vmem:[%s179 + $0xd9] sm:$0xff] %vm27, %v5626
  %5691 = vst.msk [vmem:[%s179 + $0xe1] sm:$0xff] %vm27, %v5627
  %5692 = vst.msk [vmem:[%s179 + $0xf1] sm:$0xff] %vm27, %v5628
  %5693 = vst.msk [vmem:[%s179 + $0xf9] sm:$0xff] %vm27, %v5629
  %5694 = vst.msk [vmem:[%s179 + $0x109] sm:$0xff] %vm27, %v5630
  %5695 = vst.msk [vmem:[%s179 + $0x111] sm:$0xff] %vm27, %v5631
  %5696 = vst.msk [vmem:[%s179 + $0x121] sm:$0xff] %vm27, %v5632
  %5697 = vst.msk [vmem:[%s179 + $0x129] sm:$0xff] %vm27, %v5633
  %5698 = vst.msk [vmem:[%s179 + $0x139] sm:$0xff] %vm27, %v5634
  %5699 = vst.msk [vmem:[%s179 + $0x141] sm:$0xff] %vm27, %v5635
  %5700 = vst.msk [vmem:[%s179 + $0x151] sm:$0xff] %vm27, %v5636
  %5701 = vst.msk [vmem:[%s179 + $0x159] sm:$0xff] %vm27, %v5637
  %5702 = vst.msk [vmem:[%s179 + $0x169] sm:$0xff] %vm27, %v5638
  %5703 = vst.msk [vmem:[%s179 + $0x171] sm:$0xff] %vm27, %v5639
  %5704 = vst.msk [vmem:[%s179 + $0x1b1] sm:$0xff] %vm27, %v5640
  %5705 = vst.msk [vmem:[%s179 + $0x1b9] sm:$0xff] %vm27, %v5641
  %5706 = vst.msk [vmem:[%s179 + $0x1c9] sm:$0xff] %vm27, %v5642
  %5707 = vst.msk [vmem:[%s179 + $0x1d1] sm:$0xff] %vm27, %v5643
  %5708 = vst.msk [vmem:[%s179 + $0x1e1] sm:$0xff] %vm27, %v5644
  %5709 = vst.msk [vmem:[%s179 + $0x1e9] sm:$0xff] %vm27, %v5645
  %5710 = vst.msk [vmem:[%s179 + $0x1f9] sm:$0xff] %vm27, %v5646
  %5711 = vst.msk [vmem:[%s179 + $0x201] sm:$0xff] %vm27, %v5647
  %5712 = vst.msk [vmem:[%s179 + $0x211] sm:$0xff] %vm27, %v5648
  %5713 = vst.msk [vmem:[%s179 + $0x219] sm:$0xff] %vm27, %v5649
  %5714 = vst.msk [vmem:[%s179 + $0x229] sm:$0xff] %vm27, %v5650
  %5715 = vst.msk [vmem:[%s179 + $0x231] sm:$0xff] %vm27, %v5651
  %5716 = vst.msk [vmem:[%s179 + $0x241] sm:$0xff] %vm27, %v5652
  %5717 = vst.msk [vmem:[%s179 + $0x249] sm:$0xff] %vm27, %v5653
  %5718 = vst.msk [vmem:[%s179 + $0x259] sm:$0xff] %vm27, %v5654
  %5719 = vst.msk [vmem:[%s179 + $0x261] sm:$0xff] %vm27, %v5655
  %5720 = vst.msk [vmem:[%s179 + $0x271] sm:$0xff] %vm27, %v5656
  %5721 = vst.msk [vmem:[%s179 + $0x279] sm:$0xff] %vm27, %v5657
  %5722 = vst.msk [vmem:[%s179 + $0x289] sm:$0xff] %vm27, %v5658
  %5723 = vst.msk [vmem:[%s179 + $0x291] sm:$0xff] %vm27, %v5659
  %5724 = vst.msk [vmem:[%s179 + $0x2a1] sm:$0xff] %vm27, %v5660
  %5725 = vst.msk [vmem:[%s179 + $0x2a9] sm:$0xff] %vm27, %v5661
  %5726 = vst.msk [vmem:[%s179 + $0x2b9] sm:$0xff] %vm27, %v5662
  %5727 = vst.msk [vmem:[%s179 + $0x2c1] sm:$0xff] %vm27, %v5663
  %5728 = vst.msk [vmem:[%s179 + $0x2d1] sm:$0xff] %vm27, %v5664
  %5729 = vst.msk [vmem:[%s179 + $0x2d9] sm:$0xff] %vm27, %v5665
  %5730 = vst.msk [vmem:[%s179 + $0x2e9] sm:$0xff] %vm27, %v5666
  %5731 = vst.msk [vmem:[%s179 + $0x2f1] sm:$0xff] %vm27, %v5667
  %5732 = vst.msk [vmem:[%s179 + $0x301] sm:$0xff] %vm27, %v5668
  %5733 = vst.msk [vmem:[%s179 + $0x309] sm:$0xff] %vm27, %v5669
  %5734 = vst.msk [vmem:[%s179 + $0x319] sm:$0xff] %vm27, %v5670
  %5735 = vst.msk [vmem:[%s179 + $0x321] sm:$0xff] %vm27, %v5671
  %v5736 = vld [vmem:[#allocation2] sm:$0xff]
  %v5737 = vld [vmem:[#allocation2 + $0x8] sm:$0xff]
  %v5738 = vld [vmem:[#allocation2 + $0x18] sm:$0xff]
  %v5739 = vld [vmem:[#allocation2 + $0x20] sm:$0xff]
  %v5740 = vld [vmem:[#allocation2 + $0x30] sm:$0xff]
  %v5741 = vld [vmem:[#allocation2 + $0x38] sm:$0xff]
  %v5742 = vld [vmem:[#allocation2 + $0x48] sm:$0xff]
  %v5743 = vld [vmem:[#allocation2 + $0x50] sm:$0xff]
  %v5744 = vld [vmem:[#allocation2 + $0x60] sm:$0xff]
  %v5745 = vld [vmem:[#allocation2 + $0x68] sm:$0xff]
  %v5746 = vld [vmem:[#allocation2 + $0x78] sm:$0xff]
  %v5747 = vld [vmem:[#allocation2 + $0x80] sm:$0xff]
  %v5748 = vld [vmem:[#allocation2 + $0x90] sm:$0xff]
  %v5749 = vld [vmem:[#allocation2 + $0x98] sm:$0xff]
  %v5750 = vld [vmem:[#allocation2 + $0xa8] sm:$0xff]
  %v5751 = vld [vmem:[#allocation2 + $0xb0] sm:$0xff]
  %v5752 = vld [vmem:[#allocation2 + $0xc0] sm:$0xff]
  %v5753 = vld [vmem:[#allocation2 + $0xc8] sm:$0xff]
  %v5754 = vld [vmem:[#allocation2 + $0xd8] sm:$0xff]
  %v5755 = vld [vmem:[#allocation2 + $0xe0] sm:$0xff]
  %v5756 = vld [vmem:[#allocation2 + $0xf0] sm:$0xff]
  %v5757 = vld [vmem:[#allocation2 + $0xf8] sm:$0xff]
  %v5758 = vld [vmem:[#allocation2 + $0x108] sm:$0xff]
  %v5759 = vld [vmem:[#allocation2 + $0x110] sm:$0xff]
  %v5760 = vld [vmem:[#allocation2 + $0x120] sm:$0xff]
  %v5761 = vld [vmem:[#allocation2 + $0x128] sm:$0xff]
  %v5762 = vld [vmem:[#allocation2 + $0x138] sm:$0xff]
  %v5763 = vld [vmem:[#allocation2 + $0x140] sm:$0xff]
  %v5764 = vld [vmem:[#allocation2 + $0x150] sm:$0xff]
  %v5765 = vld [vmem:[#allocation2 + $0x158] sm:$0xff]
  %v5766 = vld [vmem:[#allocation2 + $0x168] sm:$0xff]
  %v5767 = vld [vmem:[#allocation2 + $0x170] sm:$0xff]
  %v5768 = vld [vmem:[#allocation2 + $0x1b0] sm:$0xff]
  %v5769 = vld [vmem:[#allocation2 + $0x1b8] sm:$0xff]
  %v5770 = vld [vmem:[#allocation2 + $0x1c8] sm:$0xff]
  %v5771 = vld [vmem:[#allocation2 + $0x1d0] sm:$0xff]
  %v5772 = vld [vmem:[#allocation2 + $0x1e0] sm:$0xff]
  %v5773 = vld [vmem:[#allocation2 + $0x1e8] sm:$0xff]
  %v5774 = vld [vmem:[#allocation2 + $0x1f8] sm:$0xff]
  %v5775 = vld [vmem:[#allocation2 + $0x200] sm:$0xff]
  %v5776 = vld [vmem:[#allocation2 + $0x210] sm:$0xff]
  %v5777 = vld [vmem:[#allocation2 + $0x218] sm:$0xff]
  %v5778 = vld [vmem:[#allocation2 + $0x228] sm:$0xff]
  %v5779 = vld [vmem:[#allocation2 + $0x230] sm:$0xff]
  %v5780 = vld [vmem:[#allocation2 + $0x240] sm:$0xff]
  %v5781 = vld [vmem:[#allocation2 + $0x248] sm:$0xff]
  %v5782 = vld [vmem:[#allocation2 + $0x258] sm:$0xff]
  %v5783 = vld [vmem:[#allocation2 + $0x260] sm:$0xff]
  %v5784 = vld [vmem:[#allocation2 + $0x270] sm:$0xff]
  %v5785 = vld [vmem:[#allocation2 + $0x278] sm:$0xff]
  %v5786 = vld [vmem:[#allocation2 + $0x288] sm:$0xff]
  %v5787 = vld [vmem:[#allocation2 + $0x290] sm:$0xff]
  %v5788 = vld [vmem:[#allocation2 + $0x2a0] sm:$0xff]
  %v5789 = vld [vmem:[#allocation2 + $0x2a8] sm:$0xff]
  %v5790 = vld [vmem:[#allocation2 + $0x2b8] sm:$0xff]
  %v5791 = vld [vmem:[#allocation2 + $0x2c0] sm:$0xff]
  %v5792 = vld [vmem:[#allocation2 + $0x2d0] sm:$0xff]
  %v5793 = vld [vmem:[#allocation2 + $0x2d8] sm:$0xff]
  %v5794 = vld [vmem:[#allocation2 + $0x2e8] sm:$0xff]
  %v5795 = vld [vmem:[#allocation2 + $0x2f0] sm:$0xff]
  %v5796 = vld [vmem:[#allocation2 + $0x300] sm:$0xff]
  %v5797 = vld [vmem:[#allocation2 + $0x308] sm:$0xff]
  %v5798 = vld [vmem:[#allocation2 + $0x318] sm:$0xff]
  %v5799 = vld [vmem:[#allocation2 + $0x320] sm:$0xff]
  %v5800 = vpack.c.bf16 %v5737, %v5736
  %v5801 = vpack.c.bf16 %v5739, %v5738
  %v5802 = vpack.c.bf16 %v5741, %v5740
  %v5803 = vpack.c.bf16 %v5743, %v5742
  %v5804 = vpack.c.bf16 %v5745, %v5744
  %v5805 = vpack.c.bf16 %v5747, %v5746
  %v5806 = vpack.c.bf16 %v5749, %v5748
  %v5807 = vpack.c.bf16 %v5751, %v5750
  %v5808 = vpack.c.bf16 %v5753, %v5752
  %v5809 = vpack.c.bf16 %v5755, %v5754
  %v5810 = vpack.c.bf16 %v5757, %v5756
  %v5811 = vpack.c.bf16 %v5759, %v5758
  %v5812 = vpack.c.bf16 %v5761, %v5760
  %v5813 = vpack.c.bf16 %v5763, %v5762
  %v5814 = vpack.c.bf16 %v5765, %v5764
  %v5815 = vpack.c.bf16 %v5767, %v5766
  %v5816 = vpack.c.bf16 %v5769, %v5768
  %v5817 = vpack.c.bf16 %v5771, %v5770
  %v5818 = vpack.c.bf16 %v5773, %v5772
  %v5819 = vpack.c.bf16 %v5775, %v5774
  %v5820 = vpack.c.bf16 %v5777, %v5776
  %v5821 = vpack.c.bf16 %v5779, %v5778
  %v5822 = vpack.c.bf16 %v5781, %v5780
  %v5823 = vpack.c.bf16 %v5783, %v5782
  %v5824 = vpack.c.bf16 %v5785, %v5784
  %v5825 = vpack.c.bf16 %v5787, %v5786
  %v5826 = vpack.c.bf16 %v5789, %v5788
  %v5827 = vpack.c.bf16 %v5791, %v5790
  %v5828 = vpack.c.bf16 %v5793, %v5792
  %v5829 = vpack.c.bf16 %v5795, %v5794
  %v5830 = vpack.c.bf16 %v5797, %v5796
  %v5831 = vpack.c.bf16 %v5799, %v5798
  %v5832 = vld [vmem:[%s4] sm:$0x3]
  %v5833 = vld [vmem:[#allocation2 + $0x1] sm:$0xff]
  %v5834 = vld [vmem:[#allocation2 + $0x9] sm:$0xff]
  %v5835 = vld [vmem:[#allocation2 + $0x19] sm:$0xff]
  %v5836 = vld [vmem:[#allocation2 + $0x21] sm:$0xff]
  %v5837 = vld [vmem:[#allocation2 + $0x31] sm:$0xff]
  %v5838 = vld [vmem:[#allocation2 + $0x39] sm:$0xff]
  %v5839 = vld [vmem:[#allocation2 + $0x49] sm:$0xff]
  %v5840 = vld [vmem:[#allocation2 + $0x51] sm:$0xff]
  %v5841 = vld [vmem:[#allocation2 + $0x61] sm:$0xff]
  %v5842 = vld [vmem:[#allocation2 + $0x69] sm:$0xff]
  %v5843 = vld [vmem:[#allocation2 + $0x79] sm:$0xff]
  %v5844 = vld [vmem:[#allocation2 + $0x81] sm:$0xff]
  %v5845 = vld [vmem:[#allocation2 + $0x91] sm:$0xff]
  %v5846 = vld [vmem:[#allocation2 + $0x99] sm:$0xff]
  %v5847 = vld [vmem:[#allocation2 + $0xa9] sm:$0xff]
  %v5848 = vld [vmem:[#allocation2 + $0xb1] sm:$0xff]
  %v5849 = vld [vmem:[#allocation2 + $0xc1] sm:$0xff]
  %v5850 = vld [vmem:[#allocation2 + $0xc9] sm:$0xff]
  %v5851 = vld [vmem:[#allocation2 + $0xd9] sm:$0xff]
  %v5852 = vld [vmem:[#allocation2 + $0xe1] sm:$0xff]
  %v5853 = vld [vmem:[#allocation2 + $0xf1] sm:$0xff]
  %v5854 = vld [vmem:[#allocation2 + $0xf9] sm:$0xff]
  %v5855 = vld [vmem:[#allocation2 + $0x109] sm:$0xff]
  %v5856 = vld [vmem:[#allocation2 + $0x111] sm:$0xff]
  %v5857 = vld [vmem:[#allocation2 + $0x121] sm:$0xff]
  %v5858 = vld [vmem:[#allocation2 + $0x129] sm:$0xff]
  %v5859 = vld [vmem:[#allocation2 + $0x139] sm:$0xff]
  %v5860 = vld [vmem:[#allocation2 + $0x141] sm:$0xff]
  %v5861 = vld [vmem:[#allocation2 + $0x151] sm:$0xff]
  %v5862 = vld [vmem:[#allocation2 + $0x159] sm:$0xff]
  %v5863 = vld [vmem:[#allocation2 + $0x169] sm:$0xff]
  %v5864 = vld [vmem:[#allocation2 + $0x171] sm:$0xff]
  %v5865 = vld [vmem:[#allocation2 + $0x1b1] sm:$0xff]
  %v5866 = vld [vmem:[#allocation2 + $0x1b9] sm:$0xff]
  %v5867 = vld [vmem:[#allocation2 + $0x1c9] sm:$0xff]
  %v5868 = vld [vmem:[#allocation2 + $0x1d1] sm:$0xff]
  %v5869 = vld [vmem:[#allocation2 + $0x1e1] sm:$0xff]
  %v5870 = vld [vmem:[#allocation2 + $0x1e9] sm:$0xff]
  %v5871 = vld [vmem:[#allocation2 + $0x1f9] sm:$0xff]
  %v5872 = vld [vmem:[#allocation2 + $0x201] sm:$0xff]
  %v5873 = vld [vmem:[#allocation2 + $0x211] sm:$0xff]
  %v5874 = vld [vmem:[#allocation2 + $0x219] sm:$0xff]
  %v5875 = vld [vmem:[#allocation2 + $0x229] sm:$0xff]
  %v5876 = vld [vmem:[#allocation2 + $0x231] sm:$0xff]
  %v5877 = vld [vmem:[#allocation2 + $0x241] sm:$0xff]
  %v5878 = vld [vmem:[#allocation2 + $0x249] sm:$0xff]
  %v5879 = vld [vmem:[#allocation2 + $0x259] sm:$0xff]
  %v5880 = vld [vmem:[#allocation2 + $0x261] sm:$0xff]
  %v5881 = vld [vmem:[#allocation2 + $0x271] sm:$0xff]
  %v5882 = vld [vmem:[#allocation2 + $0x279] sm:$0xff]
  %v5883 = vld [vmem:[#allocation2 + $0x289] sm:$0xff]
  %v5884 = vld [vmem:[#allocation2 + $0x291] sm:$0xff]
  %v5885 = vld [vmem:[#allocation2 + $0x2a1] sm:$0xff]
  %v5886 = vld [vmem:[#allocation2 + $0x2a9] sm:$0xff]
  %v5887 = vld [vmem:[#allocation2 + $0x2b9] sm:$0xff]
  %v5888 = vld [vmem:[#allocation2 + $0x2c1] sm:$0xff]
  %v5889 = vld [vmem:[#allocation2 + $0x2d1] sm:$0xff]
  %v5890 = vld [vmem:[#allocation2 + $0x2d9] sm:$0xff]
  %v5891 = vld [vmem:[#allocation2 + $0x2e9] sm:$0xff]
  %v5892 = vld [vmem:[#allocation2 + $0x2f1] sm:$0xff]
  %v5893 = vld [vmem:[#allocation2 + $0x301] sm:$0xff]
  %v5894 = vld [vmem:[#allocation2 + $0x309] sm:$0xff]
  %v5895 = vld [vmem:[#allocation2 + $0x319] sm:$0xff]
  %v5896 = vld [vmem:[#allocation2 + $0x321] sm:$0xff]
  %v5897 = vpack.c.bf16 %v5834, %v5833
  %v5898 = vpack.c.bf16 %v5836, %v5835
  %v5899 = vpack.c.bf16 %v5838, %v5837
  %v5900 = vpack.c.bf16 %v5840, %v5839
  %v5901 = vpack.c.bf16 %v5842, %v5841
  %v5902 = vpack.c.bf16 %v5844, %v5843
  %v5903 = vpack.c.bf16 %v5846, %v5845
  %v5904 = vpack.c.bf16 %v5848, %v5847
  %v5905 = vpack.c.bf16 %v5850, %v5849
  %v5906 = vpack.c.bf16 %v5852, %v5851
  %v5907 = vpack.c.bf16 %v5854, %v5853
  %v5908 = vpack.c.bf16 %v5856, %v5855
  %v5909 = vpack.c.bf16 %v5858, %v5857
  %v5910 = vpack.c.bf16 %v5860, %v5859
  %v5911 = vpack.c.bf16 %v5862, %v5861
  %v5912 = vpack.c.bf16 %v5864, %v5863
  %v5913 = vpack.c.bf16 %v5866, %v5865
  %v5914 = vpack.c.bf16 %v5868, %v5867
  %v5915 = vpack.c.bf16 %v5870, %v5869
  %v5916 = vpack.c.bf16 %v5872, %v5871
  %v5917 = vpack.c.bf16 %v5874, %v5873
  %v5918 = vpack.c.bf16 %v5876, %v5875
  %v5919 = vpack.c.bf16 %v5878, %v5877
  %v5920 = vpack.c.bf16 %v5880, %v5879
  %v5921 = vpack.c.bf16 %v5882, %v5881
  %v5922 = vpack.c.bf16 %v5884, %v5883
  %v5923 = vpack.c.bf16 %v5886, %v5885
  %v5924 = vpack.c.bf16 %v5888, %v5887
  %v5925 = vpack.c.bf16 %v5890, %v5889
  %v5926 = vpack.c.bf16 %v5892, %v5891
  %v5927 = vpack.c.bf16 %v5894, %v5893
  %v5928 = vpack.c.bf16 %v5896, %v5895
  %s5929 = scalar_lea.vmem %s4, 2
  %v5930 = vld [vmem:[%s5929] sm:$0x3]
  %v5932 = vsel %vm27, %v5897, 0
  %v5935 = vsel %vm27, %v5898, 0
  %v5938 = vsel %vm27, %v5899, 0
  %v5941 = vsel %vm27, %v5900, 0
  %v5944 = vsel %vm27, %v5901, 0
  %v5947 = vsel %vm27, %v5902, 0
  %v5950 = vsel %vm27, %v5903, 0
  %v5953 = vsel %vm27, %v5904, 0
  %v5956 = vsel %vm27, %v5905, 0
  %v5959 = vsel %vm27, %v5906, 0
  %v5962 = vsel %vm27, %v5907, 0
  %v5965 = vsel %vm27, %v5908, 0
  %v5968 = vsel %vm27, %v5909, 0
  %v5971 = vsel %vm27, %v5910, 0
  %v5974 = vsel %vm27, %v5911, 0
  %v5977 = vsel %vm27, %v5912, 0
  %v5980 = vsel %vm27, %v5913, 0
  %v5983 = vsel %vm27, %v5914, 0
  %v5986 = vsel %vm27, %v5915, 0
  %v5989 = vsel %vm27, %v5916, 0
  %v5992 = vsel %vm27, %v5917, 0
  %v5995 = vsel %vm27, %v5918, 0
  %v5998 = vsel %vm27, %v5919, 0
  %v6001 = vsel %vm27, %v5920, 0
  %v6004 = vsel %vm27, %v5921, 0
  %v6007 = vsel %vm27, %v5922, 0
  %v6010 = vsel %vm27, %v5923, 0
  %v6013 = vsel %vm27, %v5924, 0
  %v6016 = vsel %vm27, %v5925, 0
  %v6019 = vsel %vm27, %v5926, 0
  %v6022 = vsel %vm27, %v5927, 0
  %v6025 = vsel %vm27, %v5928, 0
  %v6028 = vsel %vm535, %v5930, 0
  %6030 = vmatprep.subr.bf16.mxu0 0
  %6031 = vmatpush1.bf16.msra.mxu0 %v6028
  %6032 = vmatprep.subr.bf16.mxu0 0
  %6033 = vmatpush1.bf16.msra.mxu0 0
  %6034 = vmatprep.subr.bf16.mxu0 0
  %6035 = vmatpush1.bf16.msra.mxu0 0
  %6036 = vmatprep.subr.bf16.mxu0 0
  %6037 = vmatpush1.bf16.msra.mxu0 0
  %6038 = vmatprep.subr.bf16.mxu0 0
  %6039 = vmatpush1.bf16.msra.mxu0 0
  %6040 = vmatprep.subr.bf16.mxu0 0
  %6041 = vmatpush1.bf16.msra.mxu0 0
  %6042 = vmatprep.subr.bf16.mxu0 0
  %6043 = vmatpush1.bf16.msra.mxu0 0
  %6044 = vmatprep.subr.bf16.mxu0 0
  %6045 = vmatpush1.bf16.msra.mxu0 0
  %6046 = vmatprep.subr.bf16.mxu0 0
  %6047 = vmatpush1.bf16.msra.mxu0 0
  %6048 = vmatprep.subr.bf16.mxu0 0
  %6049 = vmatpush1.bf16.msra.mxu0 0
  %6050 = vmatprep.subr.bf16.mxu0 0
  %6051 = vmatpush1.bf16.msra.mxu0 0
  %6052 = vmatprep.subr.bf16.mxu0 0
  %6053 = vmatpush1.bf16.msra.mxu0 0
  %6054 = vmatprep.subr.bf16.mxu0 0
  %6055 = vmatpush1.bf16.msra.mxu0 0
  %6056 = vmatprep.subr.bf16.mxu0 0
  %6057 = vmatpush1.bf16.msra.mxu0 0
  %6058 = vmatprep.subr.bf16.mxu0 0
  %6059 = vmatpush1.bf16.msra.mxu0 0
  %6060 = vmatprep.subr.bf16.mxu0 0
  %6061 = vmatpush1.bf16.msra.mxu0 0
  %6062 = vmatprep.mubr.bf16.mxu0 0
  %6063 = vmatmul.mubr.bf16.gmra.mrb[0].mxu0 %v5932
  %v6064 = vpop.f32.mrb[0].mxu0
  %v6065 = vadd.f32 0.0, %v6064
  %v6066 = vpop.f32.mrb[0].mxu0
  %v6067 = vpop.f32.mrb[0].mxu0
  %v6068 = vadd.f32 0.0, %v6067
  %v6069 = vpop.f32.mrb[0].mxu0
  %6070 = vmatprep.mubr.bf16.mxu0 0
  %6071 = vmatmul.mubr.bf16.gmra.mrb[0].mxu0 %v5935
  %v6072 = vpop.f32.mrb[0].mxu0
  %v6073 = vadd.f32 0.0, %v6072
  %v6074 = vpop.f32.mrb[0].mxu0
  %v6075 = vpop.f32.mrb[0].mxu0
  %v6076 = vadd.f32 0.0, %v6075
  %v6077 = vpop.f32.mrb[0].mxu0
  %6078 = vmatprep.mubr.bf16.mxu0 0
  %6079 = vmatmul.mubr.bf16.gmra.mrb[0].mxu0 %v5938
  %v6080 = vpop.f32.mrb[0].mxu0
  %v6081 = vadd.f32 0.0, %v6080
  %v6082 = vpop.f32.mrb[0].mxu0
  %v6083 = vpop.f32.mrb[0].mxu0
  %v6084 = vadd.f32 0.0, %v6083
  %v6085 = vpop.f32.mrb[0].mxu0
  %6086 = vmatprep.mubr.bf16.mxu0 0
  %6087 = vmatmul.mubr.bf16.gmra.mrb[0].mxu0 %v5941
  %v6088 = vpop.f32.mrb[0].mxu0
  %v6089 = vadd.f32 0.0, %v6088
  %v6090 = vpop.f32.mrb[0].mxu0
  %v6091 = vpop.f32.mrb[0].mxu0
  %v6092 = vadd.f32 0.0, %v6091
  %v6093 = vpop.f32.mrb[0].mxu0
  %6094 = vmatprep.mubr.bf16.mxu0 0
  %6095 = vmatmul.mubr.bf16.gmra.mrb[0].mxu0 %v5944
  %v6096 = vpop.f32.mrb[0].mxu0
  %v6097 = vadd.f32 0.0, %v6096
  %v6098 = vpop.f32.mrb[0].mxu0
  %v6099 = vpop.f32.mrb[0].mxu0
  %v6100 = vadd.f32 0.0, %v6099
  %v6101 = vpop.f32.mrb[0].mxu0
  %6102 = vmatprep.mubr.bf16.mxu0 0
  %6103 = vmatmul.mubr.bf16.gmra.mrb[0].mxu0 %v5947
  %v6104 = vpop.f32.mrb[0].mxu0
  %v6105 = vadd.f32 0.0, %v6104
  %v6106 = vpop.f32.mrb[0].mxu0
  %v6107 = vpop.f32.mrb[0].mxu0
  %v6108 = vadd.f32 0.0, %v6107
  %v6109 = vpop.f32.mrb[0].mxu0
  %6110 = vmatprep.mubr.bf16.mxu0 0
  %6111 = vmatmul.mubr.bf16.gmra.mrb[0].mxu0 %v5950
  %v6112 = vpop.f32.mrb[0].mxu0
  %v6113 = vadd.f32 0.0, %v6112
  %v6114 = vpop.f32.mrb[0].mxu0
  %v6115 = vpop.f32.mrb[0].mxu0
  %v6116 = vadd.f32 0.0, %v6115
  %v6117 = vpop.f32.mrb[0].mxu0
  %6118 = vmatprep.mubr.bf16.mxu0 0
  %6119 = vmatmul.mubr.bf16.gmra.mrb[0].mxu0 %v5953
  %v6120 = vpop.f32.mrb[0].mxu0
  %v6121 = vadd.f32 0.0, %v6120
  %v6122 = vpop.f32.mrb[0].mxu0
  %v6123 = vpop.f32.mrb[0].mxu0
  %v6124 = vadd.f32 0.0, %v6123
  %v6125 = vpop.f32.mrb[0].mxu0
  %6126 = vmatprep.mubr.bf16.mxu0 0
  %6127 = vmatmul.mubr.bf16.gmra.mrb[0].mxu0 %v5956
  %v6128 = vpop.f32.mrb[0].mxu0
  %v6129 = vadd.f32 0.0, %v6128
  %v6130 = vpop.f32.mrb[0].mxu0
  %v6131 = vpop.f32.mrb[0].mxu0
  %v6132 = vadd.f32 0.0, %v6131
  %v6133 = vpop.f32.mrb[0].mxu0
  %6134 = vmatprep.mubr.bf16.mxu0 0
  %6135 = vmatmul.mubr.bf16.gmra.mrb[0].mxu0 %v5959
  %v6136 = vpop.f32.mrb[0].mxu0
  %v6137 = vadd.f32 0.0, %v6136
  %v6138 = vpop.f32.mrb[0].mxu0
  %v6139 = vpop.f32.mrb[0].mxu0
  %v6140 = vadd.f32 0.0, %v6139
  %v6141 = vpop.f32.mrb[0].mxu0
  %6142 = vmatprep.mubr.bf16.mxu0 0
  %6143 = vmatmul.mubr.bf16.gmra.mrb[0].mxu0 %v5962
  %v6144 = vpop.f32.mrb[0].mxu0
  %v6145 = vadd.f32 0.0, %v6144
  %v6146 = vpop.f32.mrb[0].mxu0
  %v6147 = vpop.f32.mrb[0].mxu0
  %v6148 = vadd.f32 0.0, %v6147
  %v6149 = vpop.f32.mrb[0].mxu0
  %6150 = vmatprep.mubr.bf16.mxu0 0
  %6151 = vmatmul.mubr.bf16.gmra.mrb[0].mxu0 %v5965
  %v6152 = vpop.f32.mrb[0].mxu0
  %v6153 = vadd.f32 0.0, %v6152
  %v6154 = vpop.f32.mrb[0].mxu0
  %v6155 = vpop.f32.mrb[0].mxu0
  %v6156 = vadd.f32 0.0, %v6155
  %v6157 = vpop.f32.mrb[0].mxu0
  %6158 = vmatprep.mubr.bf16.mxu0 0
  %6159 = vmatmul.mubr.bf16.gmra.mrb[0].mxu0 %v5968
  %v6160 = vpop.f32.mrb[0].mxu0
  %v6161 = vadd.f32 0.0, %v6160
  %v6162 = vpop.f32.mrb[0].mxu0
  %v6163 = vpop.f32.mrb[0].mxu0
  %v6164 = vadd.f32 0.0, %v6163
  %v6165 = vpop.f32.mrb[0].mxu0
  %6166 = vmatprep.mubr.bf16.mxu0 0
  %6167 = vmatmul.mubr.bf16.gmra.mrb[0].mxu0 %v5971
  %v6168 = vpop.f32.mrb[0].mxu0
  %v6169 = vadd.f32 0.0, %v6168
  %v6170 = vpop.f32.mrb[0].mxu0
  %v6171 = vpop.f32.mrb[0].mxu0
  %v6172 = vadd.f32 0.0, %v6171
  %v6173 = vpop.f32.mrb[0].mxu0
  %6174 = vmatprep.mubr.bf16.mxu0 0
  %6175 = vmatmul.mubr.bf16.gmra.mrb[0].mxu0 %v5974
  %v6176 = vpop.f32.mrb[0].mxu0
  %v6177 = vadd.f32 0.0, %v6176
  %v6178 = vpop.f32.mrb[0].mxu0
  %v6179 = vpop.f32.mrb[0].mxu0
  %v6180 = vadd.f32 0.0, %v6179
  %v6181 = vpop.f32.mrb[0].mxu0
  %6182 = vmatprep.mubr.bf16.mxu0 0
  %6183 = vmatmul.mubr.bf16.gmra.mrb[0].mxu0 %v5977
  %v6184 = vpop.f32.mrb[0].mxu0
  %v6185 = vadd.f32 0.0, %v6184
  %v6186 = vpop.f32.mrb[0].mxu0
  %v6187 = vpop.f32.mrb[0].mxu0
  %v6188 = vadd.f32 0.0, %v6187
  %v6189 = vpop.f32.mrb[0].mxu0
  %6190 = vmatprep.mubr.bf16.mxu0 0
  %6191 = vmatmul.mubr.bf16.gmra.mrb[0].mxu0 %v5980
  %v6192 = vpop.f32.mrb[0].mxu0
  %v6193 = vadd.f32 0.0, %v6192
  %v6194 = vpop.f32.mrb[0].mxu0
  %v6195 = vpop.f32.mrb[0].mxu0
  %v6196 = vadd.f32 0.0, %v6195
  %v6197 = vpop.f32.mrb[0].mxu0
  %6198 = vmatprep.mubr.bf16.mxu0 0
  %6199 = vmatmul.mubr.bf16.gmra.mrb[0].mxu0 %v5983
  %v6200 = vpop.f32.mrb[0].mxu0
  %v6201 = vadd.f32 0.0, %v6200
  %v6202 = vpop.f32.mrb[0].mxu0
  %v6203 = vpop.f32.mrb[0].mxu0
  %v6204 = vadd.f32 0.0, %v6203
  %v6205 = vpop.f32.mrb[0].mxu0
  %6206 = vmatprep.mubr.bf16.mxu0 0
  %6207 = vmatmul.mubr.bf16.gmra.mrb[0].mxu0 %v5986
  %v6208 = vpop.f32.mrb[0].mxu0
  %v6209 = vadd.f32 0.0, %v6208
  %v6210 = vpop.f32.mrb[0].mxu0
  %v6211 = vpop.f32.mrb[0].mxu0
  %v6212 = vadd.f32 0.0, %v6211
  %v6213 = vpop.f32.mrb[0].mxu0
  %6214 = vmatprep.mubr.bf16.mxu0 0
  %6215 = vmatmul.mubr.bf16.gmra.mrb[0].mxu0 %v5989
  %v6216 = vpop.f32.mrb[0].mxu0
  %v6217 = vadd.f32 0.0, %v6216
  %v6218 = vpop.f32.mrb[0].mxu0
  %v6219 = vpop.f32.mrb[0].mxu0
  %v6220 = vadd.f32 0.0, %v6219
  %v6221 = vpop.f32.mrb[0].mxu0
  %6222 = vmatprep.mubr.bf16.mxu0 0
  %6223 = vmatmul.mubr.bf16.gmra.mrb[0].mxu0 %v5992
  %v6224 = vpop.f32.mrb[0].mxu0
  %v6225 = vadd.f32 0.0, %v6224
  %v6226 = vpop.f32.mrb[0].mxu0
  %v6227 = vpop.f32.mrb[0].mxu0
  %v6228 = vadd.f32 0.0, %v6227
  %v6229 = vpop.f32.mrb[0].mxu0
  %6230 = vmatprep.mubr.bf16.mxu0 0
  %6231 = vmatmul.mubr.bf16.gmra.mrb[0].mxu0 %v5995
  %v6232 = vpop.f32.mrb[0].mxu0
  %v6233 = vadd.f32 0.0, %v6232
  %v6234 = vpop.f32.mrb[0].mxu0
  %v6235 = vpop.f32.mrb[0].mxu0
  %v6236 = vadd.f32 0.0, %v6235
  %v6237 = vpop.f32.mrb[0].mxu0
  %6238 = vmatprep.mubr.bf16.mxu0 0
  %6239 = vmatmul.mubr.bf16.gmra.mrb[0].mxu0 %v5998
  %v6240 = vpop.f32.mrb[0].mxu0
  %v6241 = vadd.f32 0.0, %v6240
  %v6242 = vpop.f32.mrb[0].mxu0
  %v6243 = vpop.f32.mrb[0].mxu0
  %v6244 = vadd.f32 0.0, %v6243
  %v6245 = vpop.f32.mrb[0].mxu0
  %6246 = vmatprep.mubr.bf16.mxu0 0
  %6247 = vmatmul.mubr.bf16.gmra.mrb[0].mxu0 %v6001
  %v6248 = vpop.f32.mrb[0].mxu0
  %v6249 = vadd.f32 0.0, %v6248
  %v6250 = vpop.f32.mrb[0].mxu0
  %v6251 = vpop.f32.mrb[0].mxu0
  %v6252 = vadd.f32 0.0, %v6251
  %v6253 = vpop.f32.mrb[0].mxu0
  %6254 = vmatprep.mubr.bf16.mxu0 0
  %6255 = vmatmul.mubr.bf16.gmra.mrb[0].mxu0 %v6004
  %v6256 = vpop.f32.mrb[0].mxu0
  %v6257 = vadd.f32 0.0, %v6256
  %v6258 = vpop.f32.mrb[0].mxu0
  %v6259 = vpop.f32.mrb[0].mxu0
  %v6260 = vadd.f32 0.0, %v6259
  %v6261 = vpop.f32.mrb[0].mxu0
  %6262 = vmatprep.mubr.bf16.mxu0 0
  %6263 = vmatmul.mubr.bf16.gmra.mrb[0].mxu0 %v6007
  %v6264 = vpop.f32.mrb[0].mxu0
  %v6265 = vadd.f32 0.0, %v6264
  %v6266 = vpop.f32.mrb[0].mxu0
  %v6267 = vpop.f32.mrb[0].mxu0
  %v6268 = vadd.f32 0.0, %v6267
  %v6269 = vpop.f32.mrb[0].mxu0
  %6270 = vmatprep.mubr.bf16.mxu0 0
  %6271 = vmatmul.mubr.bf16.gmra.mrb[0].mxu0 %v6010
  %v6272 = vpop.f32.mrb[0].mxu0
  %v6273 = vadd.f32 0.0, %v6272
  %v6274 = vpop.f32.mrb[0].mxu0
  %v6275 = vpop.f32.mrb[0].mxu0
  %v6276 = vadd.f32 0.0, %v6275
  %v6277 = vpop.f32.mrb[0].mxu0
  %6278 = vmatprep.mubr.bf16.mxu0 0
  %6279 = vmatmul.mubr.bf16.gmra.mrb[0].mxu0 %v6013
  %v6280 = vpop.f32.mrb[0].mxu0
  %v6281 = vadd.f32 0.0, %v6280
  %v6282 = vpop.f32.mrb[0].mxu0
  %v6283 = vpop.f32.mrb[0].mxu0
  %v6284 = vadd.f32 0.0, %v6283
  %v6285 = vpop.f32.mrb[0].mxu0
  %6286 = vmatprep.mubr.bf16.mxu0 0
  %6287 = vmatmul.mubr.bf16.gmra.mrb[0].mxu0 %v6016
  %v6288 = vpop.f32.mrb[0].mxu0
  %v6289 = vadd.f32 0.0, %v6288
  %v6290 = vpop.f32.mrb[0].mxu0
  %v6291 = vpop.f32.mrb[0].mxu0
  %v6292 = vadd.f32 0.0, %v6291
  %v6293 = vpop.f32.mrb[0].mxu0
  %6294 = vmatprep.mubr.bf16.mxu0 0
  %6295 = vmatmul.mubr.bf16.gmra.mrb[0].mxu0 %v6019
  %v6296 = vpop.f32.mrb[0].mxu0
  %v6297 = vadd.f32 0.0, %v6296
  %v6298 = vpop.f32.mrb[0].mxu0
  %v6299 = vpop.f32.mrb[0].mxu0
  %v6300 = vadd.f32 0.0, %v6299
  %v6301 = vpop.f32.mrb[0].mxu0
  %6302 = vmatprep.mubr.bf16.mxu0 0
  %6303 = vmatmul.mubr.bf16.gmra.mrb[0].mxu0 %v6022
  %v6304 = vpop.f32.mrb[0].mxu0
  %v6305 = vadd.f32 0.0, %v6304
  %v6306 = vpop.f32.mrb[0].mxu0
  %v6307 = vpop.f32.mrb[0].mxu0
  %v6308 = vadd.f32 0.0, %v6307
  %v6309 = vpop.f32.mrb[0].mxu0
  %6310 = vmatprep.mubr.bf16.mxu0 0
  %6311 = vmatmul.mubr.bf16.gmra.mrb[0].mxu0 %v6025
  %v6312 = vpop.f32.mrb[0].mxu0
  %v6313 = vadd.f32 0.0, %v6312
  %v6314 = vpop.f32.mrb[0].mxu0
  %v6315 = vpop.f32.mrb[0].mxu0
  %v6316 = vadd.f32 0.0, %v6315
  %v6317 = vpop.f32.mrb[0].mxu0
  %6318 = vdwg.mxu0
  %v6320 = vsel %vm27, %v5800, 0
  %v6323 = vsel %vm27, %v5801, 0
  %v6326 = vsel %vm27, %v5802, 0
  %v6329 = vsel %vm27, %v5803, 0
  %v6332 = vsel %vm27, %v5804, 0
  %v6335 = vsel %vm27, %v5805, 0
  %v6338 = vsel %vm27, %v5806, 0
  %v6341 = vsel %vm27, %v5807, 0
  %v6344 = vsel %vm27, %v5808, 0
  %v6347 = vsel %vm27, %v5809, 0
  %v6350 = vsel %vm27, %v5810, 0
  %v6353 = vsel %vm27, %v5811, 0
  %v6356 = vsel %vm27, %v5812, 0
  %v6359 = vsel %vm27, %v5813, 0
  %v6362 = vsel %vm27, %v5814, 0
  %v6365 = vsel %vm27, %v5815, 0
  %v6368 = vsel %vm27, %v5816, 0
  %v6371 = vsel %vm27, %v5817, 0
  %v6374 = vsel %vm27, %v5818, 0
  %v6377 = vsel %vm27, %v5819, 0
  %v6380 = vsel %vm27, %v5820, 0
  %v6383 = vsel %vm27, %v5821, 0
  %v6386 = vsel %vm27, %v5822, 0
  %v6389 = vsel %vm27, %v5823, 0
  %v6392 = vsel %vm27, %v5824, 0
  %v6395 = vsel %vm27, %v5825, 0
  %v6398 = vsel %vm27, %v5826, 0
  %v6401 = vsel %vm27, %v5827, 0
  %v6404 = vsel %vm27, %v5828, 0
  %v6407 = vsel %vm27, %v5829, 0
  %v6410 = vsel %vm27, %v5830, 0
  %v6413 = vsel %vm27, %v5831, 0
  %v6416 = vsel %vm535, %v5832, 0
  %6418 = vmatprep.subr.bf16.mxu0 0
  %6419 = vmatpush1.bf16.msra.mxu0 %v6416
  %6420 = vmatprep.subr.bf16.mxu0 0
  %6421 = vmatpush1.bf16.msra.mxu0 0
  %6422 = vmatprep.subr.bf16.mxu0 0
  %6423 = vmatpush1.bf16.msra.mxu0 0
  %6424 = vmatprep.subr.bf16.mxu0 0
  %6425 = vmatpush1.bf16.msra.mxu0 0
  %6426 = vmatprep.subr.bf16.mxu0 0
  %6427 = vmatpush1.bf16.msra.mxu0 0
  %6428 = vmatprep.subr.bf16.mxu0 0
  %6429 = vmatpush1.bf16.msra.mxu0 0
  %6430 = vmatprep.subr.bf16.mxu0 0
  %6431 = vmatpush1.bf16.msra.mxu0 0
  %6432 = vmatprep.subr.bf16.mxu0 0
  %6433 = vmatpush1.bf16.msra.mxu0 0
  %6434 = vmatprep.subr.bf16.mxu0 0
  %6435 = vmatpush1.bf16.msra.mxu0 0
  %6436 = vmatprep.subr.bf16.mxu0 0
  %6437 = vmatpush1.bf16.msra.mxu0 0
  %6438 = vmatprep.subr.bf16.mxu0 0
  %6439 = vmatpush1.bf16.msra.mxu0 0
  %6440 = vmatprep.subr.bf16.mxu0 0
  %6441 = vmatpush1.bf16.msra.mxu0 0
  %6442 = vmatprep.subr.bf16.mxu0 0
  %6443 = vmatpush1.bf16.msra.mxu0 0
  %6444 = vmatprep.subr.bf16.mxu0 0
  %6445 = vmatpush1.bf16.msra.mxu0 0
  %6446 = vmatprep.subr.bf16.mxu0 0
  %6447 = vmatpush1.bf16.msra.mxu0 0
  %6448 = vmatprep.subr.bf16.mxu0 0
  %6449 = vmatpush1.bf16.msra.mxu0 0
  %6450 = vmatprep.mubr.bf16.mxu0 0
  %6451 = vmatmul.mubr.bf16.gmra.mrb[0].mxu0 %v6320
  %v6452 = vpop.f32.mrb[0].mxu0
  %v6453 = vadd.f32 %v6065, %v6452
  %v6454 = vpop.f32.mrb[0].mxu0
  %v6455 = vpop.f32.mrb[0].mxu0
  %v6456 = vadd.f32 %v6068, %v6455
  %v6457 = vpop.f32.mrb[0].mxu0
  %6458 = vmatprep.mubr.bf16.mxu0 0
  %6459 = vmatmul.mubr.bf16.gmra.mrb[0].mxu0 %v6323
  %v6460 = vpop.f32.mrb[0].mxu0
  %v6461 = vadd.f32 %v6073, %v6460
  %v6462 = vpop.f32.mrb[0].mxu0
  %v6463 = vpop.f32.mrb[0].mxu0
  %v6464 = vadd.f32 %v6076, %v6463
  %v6465 = vpop.f32.mrb[0].mxu0
  %6466 = vmatprep.mubr.bf16.mxu0 0
  %6467 = vmatmul.mubr.bf16.gmra.mrb[0].mxu0 %v6326
  %v6468 = vpop.f32.mrb[0].mxu0
  %v6469 = vadd.f32 %v6081, %v6468
  %v6470 = vpop.f32.mrb[0].mxu0
  %v6471 = vpop.f32.mrb[0].mxu0
  %v6472 = vadd.f32 %v6084, %v6471
  %v6473 = vpop.f32.mrb[0].mxu0
  %6474 = vmatprep.mubr.bf16.mxu0 0
  %6475 = vmatmul.mubr.bf16.gmra.mrb[0].mxu0 %v6329
  %v6476 = vpop.f32.mrb[0].mxu0
  %v6477 = vadd.f32 %v6089, %v6476
  %v6478 = vpop.f32.mrb[0].mxu0
  %v6479 = vpop.f32.mrb[0].mxu0
  %v6480 = vadd.f32 %v6092, %v6479
  %v6481 = vpop.f32.mrb[0].mxu0
  %6482 = vmatprep.mubr.bf16.mxu0 0
  %6483 = vmatmul.mubr.bf16.gmra.mrb[0].mxu0 %v6332
  %v6484 = vpop.f32.mrb[0].mxu0
  %v6485 = vadd.f32 %v6097, %v6484
  %v6486 = vpop.f32.mrb[0].mxu0
  %v6487 = vpop.f32.mrb[0].mxu0
  %v6488 = vadd.f32 %v6100, %v6487
  %v6489 = vpop.f32.mrb[0].mxu0
  %6490 = vmatprep.mubr.bf16.mxu0 0
  %6491 = vmatmul.mubr.bf16.gmra.mrb[0].mxu0 %v6335
  %v6492 = vpop.f32.mrb[0].mxu0
  %v6493 = vadd.f32 %v6105, %v6492
  %v6494 = vpop.f32.mrb[0].mxu0
  %v6495 = vpop.f32.mrb[0].mxu0
  %v6496 = vadd.f32 %v6108, %v6495
  %v6497 = vpop.f32.mrb[0].mxu0
  %6498 = vmatprep.mubr.bf16.mxu0 0
  %6499 = vmatmul.mubr.bf16.gmra.mrb[0].mxu0 %v6338
  %v6500 = vpop.f32.mrb[0].mxu0
  %v6501 = vadd.f32 %v6113, %v6500
  %v6502 = vpop.f32.mrb[0].mxu0
  %v6503 = vpop.f32.mrb[0].mxu0
  %v6504 = vadd.f32 %v6116, %v6503
  %v6505 = vpop.f32.mrb[0].mxu0
  %6506 = vmatprep.mubr.bf16.mxu0 0
  %6507 = vmatmul.mubr.bf16.gmra.mrb[0].mxu0 %v6341
  %v6508 = vpop.f32.mrb[0].mxu0
  %v6509 = vadd.f32 %v6121, %v6508
  %v6510 = vpop.f32.mrb[0].mxu0
  %v6511 = vpop.f32.mrb[0].mxu0
  %v6512 = vadd.f32 %v6124, %v6511
  %v6513 = vpop.f32.mrb[0].mxu0
  %6514 = vmatprep.mubr.bf16.mxu0 0
  %6515 = vmatmul.mubr.bf16.gmra.mrb[0].mxu0 %v6344
  %v6516 = vpop.f32.mrb[0].mxu0
  %v6517 = vadd.f32 %v6129, %v6516
  %v6518 = vpop.f32.mrb[0].mxu0
  %v6519 = vpop.f32.mrb[0].mxu0
  %v6520 = vadd.f32 %v6132, %v6519
  %v6521 = vpop.f32.mrb[0].mxu0
  %6522 = vmatprep.mubr.bf16.mxu0 0
  %6523 = vmatmul.mubr.bf16.gmra.mrb[0].mxu0 %v6347
  %v6524 = vpop.f32.mrb[0].mxu0
  %v6525 = vadd.f32 %v6137, %v6524
  %v6526 = vpop.f32.mrb[0].mxu0
  %v6527 = vpop.f32.mrb[0].mxu0
  %v6528 = vadd.f32 %v6140, %v6527
  %v6529 = vpop.f32.mrb[0].mxu0
  %6530 = vmatprep.mubr.bf16.mxu0 0
  %6531 = vmatmul.mubr.bf16.gmra.mrb[0].mxu0 %v6350
  %v6532 = vpop.f32.mrb[0].mxu0
  %v6533 = vadd.f32 %v6145, %v6532
  %v6534 = vpop.f32.mrb[0].mxu0
  %v6535 = vpop.f32.mrb[0].mxu0
  %v6536 = vadd.f32 %v6148, %v6535
  %v6537 = vpop.f32.mrb[0].mxu0
  %6538 = vmatprep.mubr.bf16.mxu0 0
  %6539 = vmatmul.mubr.bf16.gmra.mrb[0].mxu0 %v6353
  %v6540 = vpop.f32.mrb[0].mxu0
  %v6541 = vadd.f32 %v6153, %v6540
  %v6542 = vpop.f32.mrb[0].mxu0
  %v6543 = vpop.f32.mrb[0].mxu0
  %v6544 = vadd.f32 %v6156, %v6543
  %v6545 = vpop.f32.mrb[0].mxu0
  %6546 = vmatprep.mubr.bf16.mxu0 0
  %6547 = vmatmul.mubr.bf16.gmra.mrb[0].mxu0 %v6356
  %v6548 = vpop.f32.mrb[0].mxu0
  %v6549 = vadd.f32 %v6161, %v6548
  %v6550 = vpop.f32.mrb[0].mxu0
  %v6551 = vpop.f32.mrb[0].mxu0
  %v6552 = vadd.f32 %v6164, %v6551
  %v6553 = vpop.f32.mrb[0].mxu0
  %6554 = vmatprep.mubr.bf16.mxu0 0
  %6555 = vmatmul.mubr.bf16.gmra.mrb[0].mxu0 %v6359
  %v6556 = vpop.f32.mrb[0].mxu0
  %v6557 = vadd.f32 %v6169, %v6556
  %v6558 = vpop.f32.mrb[0].mxu0
  %v6559 = vpop.f32.mrb[0].mxu0
  %v6560 = vadd.f32 %v6172, %v6559
  %v6561 = vpop.f32.mrb[0].mxu0
  %6562 = vmatprep.mubr.bf16.mxu0 0
  %6563 = vmatmul.mubr.bf16.gmra.mrb[0].mxu0 %v6362
  %v6564 = vpop.f32.mrb[0].mxu0
  %v6565 = vadd.f32 %v6177, %v6564
  %v6566 = vpop.f32.mrb[0].mxu0
  %v6567 = vpop.f32.mrb[0].mxu0
  %v6568 = vadd.f32 %v6180, %v6567
  %v6569 = vpop.f32.mrb[0].mxu0
  %6570 = vmatprep.mubr.bf16.mxu0 0
  %6571 = vmatmul.mubr.bf16.gmra.mrb[0].mxu0 %v6365
  %v6572 = vpop.f32.mrb[0].mxu0
  %v6573 = vadd.f32 %v6185, %v6572
  %v6574 = vpop.f32.mrb[0].mxu0
  %v6575 = vpop.f32.mrb[0].mxu0
  %v6576 = vadd.f32 %v6188, %v6575
  %v6577 = vpop.f32.mrb[0].mxu0
  %6578 = vmatprep.mubr.bf16.mxu0 0
  %6579 = vmatmul.mubr.bf16.gmra.mrb[0].mxu0 %v6368
  %v6580 = vpop.f32.mrb[0].mxu0
  %v6581 = vadd.f32 %v6193, %v6580
  %v6582 = vpop.f32.mrb[0].mxu0
  %v6583 = vpop.f32.mrb[0].mxu0
  %v6584 = vadd.f32 %v6196, %v6583
  %v6585 = vpop.f32.mrb[0].mxu0
  %6586 = vmatprep.mubr.bf16.mxu0 0
  %6587 = vmatmul.mubr.bf16.gmra.mrb[0].mxu0 %v6371
  %v6588 = vpop.f32.mrb[0].mxu0
  %v6589 = vadd.f32 %v6201, %v6588
  %v6590 = vpop.f32.mrb[0].mxu0
  %v6591 = vpop.f32.mrb[0].mxu0
  %v6592 = vadd.f32 %v6204, %v6591
  %v6593 = vpop.f32.mrb[0].mxu0
  %6594 = vmatprep.mubr.bf16.mxu0 0
  %6595 = vmatmul.mubr.bf16.gmra.mrb[0].mxu0 %v6374
  %v6596 = vpop.f32.mrb[0].mxu0
  %v6597 = vadd.f32 %v6209, %v6596
  %v6598 = vpop.f32.mrb[0].mxu0
  %v6599 = vpop.f32.mrb[0].mxu0
  %v6600 = vadd.f32 %v6212, %v6599
  %v6601 = vpop.f32.mrb[0].mxu0
  %6602 = vmatprep.mubr.bf16.mxu0 0
  %6603 = vmatmul.mubr.bf16.gmra.mrb[0].mxu0 %v6377
  %v6604 = vpop.f32.mrb[0].mxu0
  %v6605 = vadd.f32 %v6217, %v6604
  %v6606 = vpop.f32.mrb[0].mxu0
  %v6607 = vpop.f32.mrb[0].mxu0
  %v6608 = vadd.f32 %v6220, %v6607
  %v6609 = vpop.f32.mrb[0].mxu0
  %6610 = vmatprep.mubr.bf16.mxu0 0
  %6611 = vmatmul.mubr.bf16.gmra.mrb[0].mxu0 %v6380
  %v6612 = vpop.f32.mrb[0].mxu0
  %v6613 = vadd.f32 %v6225, %v6612
  %v6614 = vpop.f32.mrb[0].mxu0
  %v6615 = vpop.f32.mrb[0].mxu0
  %v6616 = vadd.f32 %v6228, %v6615
  %v6617 = vpop.f32.mrb[0].mxu0
  %6618 = vmatprep.mubr.bf16.mxu0 0
  %6619 = vmatmul.mubr.bf16.gmra.mrb[0].mxu0 %v6383
  %v6620 = vpop.f32.mrb[0].mxu0
  %v6621 = vadd.f32 %v6233, %v6620
  %v6622 = vpop.f32.mrb[0].mxu0
  %v6623 = vpop.f32.mrb[0].mxu0
  %v6624 = vadd.f32 %v6236, %v6623
  %v6625 = vpop.f32.mrb[0].mxu0
  %6626 = vmatprep.mubr.bf16.mxu0 0
  %6627 = vmatmul.mubr.bf16.gmra.mrb[0].mxu0 %v6386
  %v6628 = vpop.f32.mrb[0].mxu0
  %v6629 = vadd.f32 %v6241, %v6628
  %v6630 = vpop.f32.mrb[0].mxu0
  %v6631 = vpop.f32.mrb[0].mxu0
  %v6632 = vadd.f32 %v6244, %v6631
  %v6633 = vpop.f32.mrb[0].mxu0
  %6634 = vmatprep.mubr.bf16.mxu0 0
  %6635 = vmatmul.mubr.bf16.gmra.mrb[0].mxu0 %v6389
  %v6636 = vpop.f32.mrb[0].mxu0
  %v6637 = vadd.f32 %v6249, %v6636
  %v6638 = vpop.f32.mrb[0].mxu0
  %v6639 = vpop.f32.mrb[0].mxu0
  %v6640 = vadd.f32 %v6252, %v6639
  %v6641 = vpop.f32.mrb[0].mxu0
  %6642 = vmatprep.mubr.bf16.mxu0 0
  %6643 = vmatmul.mubr.bf16.gmra.mrb[0].mxu0 %v6392
  %v6644 = vpop.f32.mrb[0].mxu0
  %v6645 = vadd.f32 %v6257, %v6644
  %v6646 = vpop.f32.mrb[0].mxu0
  %v6647 = vpop.f32.mrb[0].mxu0
  %v6648 = vadd.f32 %v6260, %v6647
  %v6649 = vpop.f32.mrb[0].mxu0
  %6650 = vmatprep.mubr.bf16.mxu0 0
  %6651 = vmatmul.mubr.bf16.gmra.mrb[0].mxu0 %v6395
  %v6652 = vpop.f32.mrb[0].mxu0
  %v6653 = vadd.f32 %v6265, %v6652
  %v6654 = vpop.f32.mrb[0].mxu0
  %v6655 = vpop.f32.mrb[0].mxu0
  %v6656 = vadd.f32 %v6268, %v6655
  %v6657 = vpop.f32.mrb[0].mxu0
  %6658 = vmatprep.mubr.bf16.mxu0 0
  %6659 = vmatmul.mubr.bf16.gmra.mrb[0].mxu0 %v6398
  %v6660 = vpop.f32.mrb[0].mxu0
  %v6661 = vadd.f32 %v6273, %v6660
  %v6662 = vpop.f32.mrb[0].mxu0
  %v6663 = vpop.f32.mrb[0].mxu0
  %v6664 = vadd.f32 %v6276, %v6663
  %v6665 = vpop.f32.mrb[0].mxu0
  %6666 = vmatprep.mubr.bf16.mxu0 0
  %6667 = vmatmul.mubr.bf16.gmra.mrb[0].mxu0 %v6401
  %v6668 = vpop.f32.mrb[0].mxu0
  %v6669 = vadd.f32 %v6281, %v6668
  %v6670 = vpop.f32.mrb[0].mxu0
  %v6671 = vpop.f32.mrb[0].mxu0
  %v6672 = vadd.f32 %v6284, %v6671
  %v6673 = vpop.f32.mrb[0].mxu0
  %6674 = vmatprep.mubr.bf16.mxu0 0
  %6675 = vmatmul.mubr.bf16.gmra.mrb[0].mxu0 %v6404
  %v6676 = vpop.f32.mrb[0].mxu0
  %v6677 = vadd.f32 %v6289, %v6676
  %v6678 = vpop.f32.mrb[0].mxu0
  %v6679 = vpop.f32.mrb[0].mxu0
  %v6680 = vadd.f32 %v6292, %v6679
  %v6681 = vpop.f32.mrb[0].mxu0
  %6682 = vmatprep.mubr.bf16.mxu0 0
  %6683 = vmatmul.mubr.bf16.gmra.mrb[0].mxu0 %v6407
  %v6684 = vpop.f32.mrb[0].mxu0
  %v6685 = vadd.f32 %v6297, %v6684
  %v6686 = vpop.f32.mrb[0].mxu0
  %v6687 = vpop.f32.mrb[0].mxu0
  %v6688 = vadd.f32 %v6300, %v6687
  %v6689 = vpop.f32.mrb[0].mxu0
  %6690 = vmatprep.mubr.bf16.mxu0 0
  %6691 = vmatmul.mubr.bf16.gmra.mrb[0].mxu0 %v6410
  %v6692 = vpop.f32.mrb[0].mxu0
  %v6693 = vadd.f32 %v6305, %v6692
  %v6694 = vpop.f32.mrb[0].mxu0
  %v6695 = vpop.f32.mrb[0].mxu0
  %v6696 = vadd.f32 %v6308, %v6695
  %v6697 = vpop.f32.mrb[0].mxu0
  %6698 = vmatprep.mubr.bf16.mxu0 0
  %6699 = vmatmul.mubr.bf16.gmra.mrb[0].mxu0 %v6413
  %v6700 = vpop.f32.mrb[0].mxu0
  %v6701 = vadd.f32 %v6313, %v6700
  %v6702 = vpop.f32.mrb[0].mxu0
  %v6703 = vpop.f32.mrb[0].mxu0
  %v6704 = vadd.f32 %v6316, %v6703
  %v6705 = vpop.f32.mrb[0].mxu0
  %6706 = vdwg.mxu0
  %v6707 = vld [vmem:[#allocation2 + $0x2] sm:$0xff]
  %v6708 = vld [vmem:[#allocation2 + $0xa] sm:$0xff]
  %v6709 = vld [vmem:[#allocation2 + $0x1a] sm:$0xff]
  %v6710 = vld [vmem:[#allocation2 + $0x22] sm:$0xff]
  %v6711 = vld [vmem:[#allocation2 + $0x32] sm:$0xff]
  %v6712 = vld [vmem:[#allocation2 + $0x3a] sm:$0xff]
  %v6713 = vld [vmem:[#allocation2 + $0x4a] sm:$0xff]
  %v6714 = vld [vmem:[#allocation2 + $0x52] sm:$0xff]
  %v6715 = vld [vmem:[#allocation2 + $0x62] sm:$0xff]
  %v6716 = vld [vmem:[#allocation2 + $0x6a] sm:$0xff]
  %v6717 = vld [vmem:[#allocation2 + $0x7a] sm:$0xff]
  %v6718 = vld [vmem:[#allocation2 + $0x82] sm:$0xff]
  %v6719 = vld [vmem:[#allocation2 + $0x92] sm:$0xff]
  %v6720 = vld [vmem:[#allocation2 + $0x9a] sm:$0xff]
  %v6721 = vld [vmem:[#allocation2 + $0xaa] sm:$0xff]
  %v6722 = vld [vmem:[#allocation2 + $0xb2] sm:$0xff]
  %v6723 = vld [vmem:[#allocation2 + $0xc2] sm:$0xff]
  %v6724 = vld [vmem:[#allocation2 + $0xca] sm:$0xff]
  %v6725 = vld [vmem:[#allocation2 + $0xda] sm:$0xff]
  %v6726 = vld [vmem:[#allocation2 + $0xe2] sm:$0xff]
  %v6727 = vld [vmem:[#allocation2 + $0xf2] sm:$0xff]
  %v6728 = vld [vmem:[#allocation2 + $0xfa] sm:$0xff]
  %v6729 = vld [vmem:[#allocation2 + $0x10a] sm:$0xff]
  %v6730 = vld [vmem:[#allocation2 + $0x112] sm:$0xff]
  %v6731 = vld [vmem:[#allocation2 + $0x122] sm:$0xff]
  %v6732 = vld [vmem:[#allocation2 + $0x12a] sm:$0xff]
  %v6733 = vld [vmem:[#allocation2 + $0x13a] sm:$0xff]
  %v6734 = vld [vmem:[#allocation2 + $0x142] sm:$0xff]
  %v6735 = vld [vmem:[#allocation2 + $0x152] sm:$0xff]
  %v6736 = vld [vmem:[#allocation2 + $0x15a] sm:$0xff]
  %v6737 = vld [vmem:[#allocation2 + $0x16a] sm:$0xff]
  %v6738 = vld [vmem:[#allocation2 + $0x172] sm:$0xff]
  %v6739 = vld [vmem:[#allocation2 + $0x1b2] sm:$0xff]
  %v6740 = vld [vmem:[#allocation2 + $0x1ba] sm:$0xff]
  %v6741 = vld [vmem:[#allocation2 + $0x1ca] sm:$0xff]
  %v6742 = vld [vmem:[#allocation2 + $0x1d2] sm:$0xff]
  %v6743 = vld [vmem:[#allocation2 + $0x1e2] sm:$0xff]
  %v6744 = vld [vmem:[#allocation2 + $0x1ea] sm:$0xff]
  %v6745 = vld [vmem:[#allocation2 + $0x1fa] sm:$0xff]
  %v6746 = vld [vmem:[#allocation2 + $0x202] sm:$0xff]
  %v6747 = vld [vmem:[#allocation2 + $0x212] sm:$0xff]
  %v6748 = vld [vmem:[#allocation2 + $0x21a] sm:$0xff]
  %v6749 = vld [vmem:[#allocation2 + $0x22a] sm:$0xff]
  %v6750 = vld [vmem:[#allocation2 + $0x232] sm:$0xff]
  %v6751 = vld [vmem:[#allocation2 + $0x242] sm:$0xff]
  %v6752 = vld [vmem:[#allocation2 + $0x24a] sm:$0xff]
  %v6753 = vld [vmem:[#allocation2 + $0x25a] sm:$0xff]
  %v6754 = vld [vmem:[#allocation2 + $0x262] sm:$0xff]
  %v6755 = vld [vmem:[#allocation2 + $0x272] sm:$0xff]
  %v6756 = vld [vmem:[#allocation2 + $0x27a] sm:$0xff]
  %v6757 = vld [vmem:[#allocation2 + $0x28a] sm:$0xff]
  %v6758 = vld [vmem:[#allocation2 + $0x292] sm:$0xff]
  %v6759 = vld [vmem:[#allocation2 + $0x2a2] sm:$0xff]
  %v6760 = vld [vmem:[#allocation2 + $0x2aa] sm:$0xff]
  %v6761 = vld [vmem:[#allocation2 + $0x2ba] sm:$0xff]
  %v6762 = vld [vmem:[#allocation2 + $0x2c2] sm:$0xff]
  %v6763 = vld [vmem:[#allocation2 + $0x2d2] sm:$0xff]
  %v6764 = vld [vmem:[#allocation2 + $0x2da] sm:$0xff]
  %v6765 = vld [vmem:[#allocation2 + $0x2ea] sm:$0xff]
  %v6766 = vld [vmem:[#allocation2 + $0x2f2] sm:$0xff]
  %v6767 = vld [vmem:[#allocation2 + $0x302] sm:$0xff]
  %v6768 = vld [vmem:[#allocation2 + $0x30a] sm:$0xff]
  %v6769 = vld [vmem:[#allocation2 + $0x31a] sm:$0xff]
  %v6770 = vld [vmem:[#allocation2 + $0x322] sm:$0xff]
  %v6771 = vpack.c.bf16 %v6708, %v6707
  %v6772 = vpack.c.bf16 %v6710, %v6709
  %v6773 = vpack.c.bf16 %v6712, %v6711
  %v6774 = vpack.c.bf16 %v6714, %v6713
  %v6775 = vpack.c.bf16 %v6716, %v6715
  %v6776 = vpack.c.bf16 %v6718, %v6717
  %v6777 = vpack.c.bf16 %v6720, %v6719
  %v6778 = vpack.c.bf16 %v6722, %v6721
  %v6779 = vpack.c.bf16 %v6724, %v6723
  %v6780 = vpack.c.bf16 %v6726, %v6725
  %v6781 = vpack.c.bf16 %v6728, %v6727
  %v6782 = vpack.c.bf16 %v6730, %v6729
  %v6783 = vpack.c.bf16 %v6732, %v6731
  %v6784 = vpack.c.bf16 %v6734, %v6733
  %v6785 = vpack.c.bf16 %v6736, %v6735
  %v6786 = vpack.c.bf16 %v6738, %v6737
  %v6787 = vpack.c.bf16 %v6740, %v6739
  %v6788 = vpack.c.bf16 %v6742, %v6741
  %v6789 = vpack.c.bf16 %v6744, %v6743
  %v6790 = vpack.c.bf16 %v6746, %v6745
  %v6791 = vpack.c.bf16 %v6748, %v6747
  %v6792 = vpack.c.bf16 %v6750, %v6749
  %v6793 = vpack.c.bf16 %v6752, %v6751
  %v6794 = vpack.c.bf16 %v6754, %v6753
  %v6795 = vpack.c.bf16 %v6756, %v6755
  %v6796 = vpack.c.bf16 %v6758, %v6757
  %v6797 = vpack.c.bf16 %v6760, %v6759
  %v6798 = vpack.c.bf16 %v6762, %v6761
  %v6799 = vpack.c.bf16 %v6764, %v6763
  %v6800 = vpack.c.bf16 %v6766, %v6765
  %v6801 = vpack.c.bf16 %v6768, %v6767
  %v6802 = vpack.c.bf16 %v6770, %v6769
  %s6803 = scalar_lea.vmem %s4, 4
  %v6804 = vld [vmem:[%s6803] sm:$0x3]
  %v6806 = vsel %vm27, %v6771, 0
  %v6809 = vsel %vm27, %v6772, 0
  %v6812 = vsel %vm27, %v6773, 0
  %v6815 = vsel %vm27, %v6774, 0
  %v6818 = vsel %vm27, %v6775, 0
  %v6821 = vsel %vm27, %v6776, 0
  %v6824 = vsel %vm27, %v6777, 0
  %v6827 = vsel %vm27, %v6778, 0
  %v6830 = vsel %vm27, %v6779, 0
  %v6833 = vsel %vm27, %v6780, 0
  %v6836 = vsel %vm27, %v6781, 0
  %v6839 = vsel %vm27, %v6782, 0
  %v6842 = vsel %vm27, %v6783, 0
  %v6845 = vsel %vm27, %v6784, 0
  %v6848 = vsel %vm27, %v6785, 0
  %v6851 = vsel %vm27, %v6786, 0
  %v6854 = vsel %vm27, %v6787, 0
  %v6857 = vsel %vm27, %v6788, 0
  %v6860 = vsel %vm27, %v6789, 0
  %v6863 = vsel %vm27, %v6790, 0
  %v6866 = vsel %vm27, %v6791, 0
  %v6869 = vsel %vm27, %v6792, 0
  %v6872 = vsel %vm27, %v6793, 0
  %v6875 = vsel %vm27, %v6794, 0
  %v6878 = vsel %vm27, %v6795, 0
  %v6881 = vsel %vm27, %v6796, 0
  %v6884 = vsel %vm27, %v6797, 0
  %v6887 = vsel %vm27, %v6798, 0
  %v6890 = vsel %vm27, %v6799, 0
  %v6893 = vsel %vm27, %v6800, 0
  %v6896 = vsel %vm27, %v6801, 0
  %v6899 = vsel %vm27, %v6802, 0
  %v6902 = vsel %vm535, %v6804, 0
  %6904 = vmatprep.subr.bf16.mxu0 0
  %6905 = vmatpush1.bf16.msra.mxu0 %v6902
  %6906 = vmatprep.subr.bf16.mxu0 0
  %6907 = vmatpush1.bf16.msra.mxu0 0
  %6908 = vmatprep.subr.bf16.mxu0 0
  %6909 = vmatpush1.bf16.msra.mxu0 0
  %6910 = vmatprep.subr.bf16.mxu0 0
  %6911 = vmatpush1.bf16.msra.mxu0 0
  %6912 = vmatprep.subr.bf16.mxu0 0
  %6913 = vmatpush1.bf16.msra.mxu0 0
  %6914 = vmatprep.subr.bf16.mxu0 0
  %6915 = vmatpush1.bf16.msra.mxu0 0
  %6916 = vmatprep.subr.bf16.mxu0 0
  %6917 = vmatpush1.bf16.msra.mxu0 0
  %6918 = vmatprep.subr.bf16.mxu0 0
  %6919 = vmatpush1.bf16.msra.mxu0 0
  %6920 = vmatprep.subr.bf16.mxu0 0
  %6921 = vmatpush1.bf16.msra.mxu0 0
  %6922 = vmatprep.subr.bf16.mxu0 0
  %6923 = vmatpush1.bf16.msra.mxu0 0
  %6924 = vmatprep.subr.bf16.mxu0 0
  %6925 = vmatpush1.bf16.msra.mxu0 0
  %6926 = vmatprep.subr.bf16.mxu0 0
  %6927 = vmatpush1.bf16.msra.mxu0 0
  %6928 = vmatprep.subr.bf16.mxu0 0
  %6929 = vmatpush1.bf16.msra.mxu0 0
  %6930 = vmatprep.subr.bf16.mxu0 0
  %6931 = vmatpush1.bf16.msra.mxu0 0
  %6932 = vmatprep.subr.bf16.mxu0 0
  %6933 = vmatpush1.bf16.msra.mxu0 0
  %6934 = vmatprep.subr.bf16.mxu0 0
  %6935 = vmatpush1.bf16.msra.mxu0 0
  %6936 = vmatprep.mubr.bf16.mxu0 0
  %6937 = vmatmul.mubr.bf16.gmra.mrb[0].mxu0 %v6806
  %v6938 = vpop.f32.mrb[0].mxu0
  %v6939 = vadd.f32 0.0, %v6938
  %v6940 = vpop.f32.mrb[0].mxu0
  %v6941 = vpop.f32.mrb[0].mxu0
  %v6942 = vadd.f32 0.0, %v6941
  %v6943 = vpop.f32.mrb[0].mxu0
  %6944 = vmatprep.mubr.bf16.mxu0 0
  %6945 = vmatmul.mubr.bf16.gmra.mrb[0].mxu0 %v6809
  %v6946 = vpop.f32.mrb[0].mxu0
  %v6947 = vadd.f32 0.0, %v6946
  %v6948 = vpop.f32.mrb[0].mxu0
  %v6949 = vpop.f32.mrb[0].mxu0
  %v6950 = vadd.f32 0.0, %v6949
  %v6951 = vpop.f32.mrb[0].mxu0
  %6952 = vmatprep.mubr.bf16.mxu0 0
  %6953 = vmatmul.mubr.bf16.gmra.mrb[0].mxu0 %v6812
  %v6954 = vpop.f32.mrb[0].mxu0
  %v6955 = vadd.f32 0.0, %v6954
  %v6956 = vpop.f32.mrb[0].mxu0
  %v6957 = vpop.f32.mrb[0].mxu0
  %v6958 = vadd.f32 0.0, %v6957
  %v6959 = vpop.f32.mrb[0].mxu0
  %6960 = vmatprep.mubr.bf16.mxu0 0
  %6961 = vmatmul.mubr.bf16.gmra.mrb[0].mxu0 %v6815
  %v6962 = vpop.f32.mrb[0].mxu0
  %v6963 = vadd.f32 0.0, %v6962
  %v6964 = vpop.f32.mrb[0].mxu0
  %v6965 = vpop.f32.mrb[0].mxu0
  %v6966 = vadd.f32 0.0, %v6965
  %v6967 = vpop.f32.mrb[0].mxu0
  %6968 = vmatprep.mubr.bf16.mxu0 0
  %6969 = vmatmul.mubr.bf16.gmra.mrb[0].mxu0 %v6818
  %v6970 = vpop.f32.mrb[0].mxu0
  %v6971 = vadd.f32 0.0, %v6970
  %v6972 = vpop.f32.mrb[0].mxu0
  %v6973 = vpop.f32.mrb[0].mxu0
  %v6974 = vadd.f32 0.0, %v6973
  %v6975 = vpop.f32.mrb[0].mxu0
  %6976 = vmatprep.mubr.bf16.mxu0 0
  %6977 = vmatmul.mubr.bf16.gmra.mrb[0].mxu0 %v6821
  %v6978 = vpop.f32.mrb[0].mxu0
  %v6979 = vadd.f32 0.0, %v6978
  %v6980 = vpop.f32.mrb[0].mxu0
  %v6981 = vpop.f32.mrb[0].mxu0
  %v6982 = vadd.f32 0.0, %v6981
  %v6983 = vpop.f32.mrb[0].mxu0
  %6984 = vmatprep.mubr.bf16.mxu0 0
  %6985 = vmatmul.mubr.bf16.gmra.mrb[0].mxu0 %v6824
  %v6986 = vpop.f32.mrb[0].mxu0
  %v6987 = vadd.f32 0.0, %v6986
  %v6988 = vpop.f32.mrb[0].mxu0
  %v6989 = vpop.f32.mrb[0].mxu0
  %v6990 = vadd.f32 0.0, %v6989
  %v6991 = vpop.f32.mrb[0].mxu0
  %6992 = vmatprep.mubr.bf16.mxu0 0
  %6993 = vmatmul.mubr.bf16.gmra.mrb[0].mxu0 %v6827
  %v6994 = vpop.f32.mrb[0].mxu0
  %v6995 = vadd.f32 0.0, %v6994
  %v6996 = vpop.f32.mrb[0].mxu0
  %v6997 = vpop.f32.mrb[0].mxu0
  %v6998 = vadd.f32 0.0, %v6997
  %v6999 = vpop.f32.mrb[0].mxu0
  %7000 = vmatprep.mubr.bf16.mxu0 0
  %7001 = vmatmul.mubr.bf16.gmra.mrb[0].mxu0 %v6830
  %v7002 = vpop.f32.mrb[0].mxu0
  %v7003 = vadd.f32 0.0, %v7002
  %v7004 = vpop.f32.mrb[0].mxu0
  %v7005 = vpop.f32.mrb[0].mxu0
  %v7006 = vadd.f32 0.0, %v7005
  %v7007 = vpop.f32.mrb[0].mxu0
  %7008 = vmatprep.mubr.bf16.mxu0 0
  %7009 = vmatmul.mubr.bf16.gmra.mrb[0].mxu0 %v6833
  %v7010 = vpop.f32.mrb[0].mxu0
  %v7011 = vadd.f32 0.0, %v7010
  %v7012 = vpop.f32.mrb[0].mxu0
  %v7013 = vpop.f32.mrb[0].mxu0
  %v7014 = vadd.f32 0.0, %v7013
  %v7015 = vpop.f32.mrb[0].mxu0
  %7016 = vmatprep.mubr.bf16.mxu0 0
  %7017 = vmatmul.mubr.bf16.gmra.mrb[0].mxu0 %v6836
  %v7018 = vpop.f32.mrb[0].mxu0
  %v7019 = vadd.f32 0.0, %v7018
  %v7020 = vpop.f32.mrb[0].mxu0
  %v7021 = vpop.f32.mrb[0].mxu0
  %v7022 = vadd.f32 0.0, %v7021
  %v7023 = vpop.f32.mrb[0].mxu0
  %7024 = vmatprep.mubr.bf16.mxu0 0
  %7025 = vmatmul.mubr.bf16.gmra.mrb[0].mxu0 %v6839
  %v7026 = vpop.f32.mrb[0].mxu0
  %v7027 = vadd.f32 0.0, %v7026
  %v7028 = vpop.f32.mrb[0].mxu0
  %v7029 = vpop.f32.mrb[0].mxu0
  %v7030 = vadd.f32 0.0, %v7029
  %v7031 = vpop.f32.mrb[0].mxu0
  %7032 = vmatprep.mubr.bf16.mxu0 0
  %7033 = vmatmul.mubr.bf16.gmra.mrb[0].mxu0 %v6842
  %v7034 = vpop.f32.mrb[0].mxu0
  %v7035 = vadd.f32 0.0, %v7034
  %v7036 = vpop.f32.mrb[0].mxu0
  %v7037 = vpop.f32.mrb[0].mxu0
  %v7038 = vadd.f32 0.0, %v7037
  %v7039 = vpop.f32.mrb[0].mxu0
  %7040 = vmatprep.mubr.bf16.mxu0 0
  %7041 = vmatmul.mubr.bf16.gmra.mrb[0].mxu0 %v6845
  %v7042 = vpop.f32.mrb[0].mxu0
  %v7043 = vadd.f32 0.0, %v7042
  %v7044 = vpop.f32.mrb[0].mxu0
  %v7045 = vpop.f32.mrb[0].mxu0
  %v7046 = vadd.f32 0.0, %v7045
  %v7047 = vpop.f32.mrb[0].mxu0
  %7048 = vmatprep.mubr.bf16.mxu0 0
  %7049 = vmatmul.mubr.bf16.gmra.mrb[0].mxu0 %v6848
  %v7050 = vpop.f32.mrb[0].mxu0
  %v7051 = vadd.f32 0.0, %v7050
  %v7052 = vpop.f32.mrb[0].mxu0
  %v7053 = vpop.f32.mrb[0].mxu0
  %v7054 = vadd.f32 0.0, %v7053
  %v7055 = vpop.f32.mrb[0].mxu0
  %7056 = vmatprep.mubr.bf16.mxu0 0
  %7057 = vmatmul.mubr.bf16.gmra.mrb[0].mxu0 %v6851
  %v7058 = vpop.f32.mrb[0].mxu0
  %v7059 = vadd.f32 0.0, %v7058
  %v7060 = vpop.f32.mrb[0].mxu0
  %v7061 = vpop.f32.mrb[0].mxu0
  %v7062 = vadd.f32 0.0, %v7061
  %v7063 = vpop.f32.mrb[0].mxu0
  %7064 = vmatprep.mubr.bf16.mxu0 0
  %7065 = vmatmul.mubr.bf16.gmra.mrb[0].mxu0 %v6854
  %v7066 = vpop.f32.mrb[0].mxu0
  %v7067 = vadd.f32 0.0, %v7066
  %v7068 = vpop.f32.mrb[0].mxu0
  %v7069 = vpop.f32.mrb[0].mxu0
  %v7070 = vadd.f32 0.0, %v7069
  %v7071 = vpop.f32.mrb[0].mxu0
  %7072 = vmatprep.mubr.bf16.mxu0 0
  %7073 = vmatmul.mubr.bf16.gmra.mrb[0].mxu0 %v6857
  %v7074 = vpop.f32.mrb[0].mxu0
  %v7075 = vadd.f32 0.0, %v7074
  %v7076 = vpop.f32.mrb[0].mxu0
  %v7077 = vpop.f32.mrb[0].mxu0
  %v7078 = vadd.f32 0.0, %v7077
  %v7079 = vpop.f32.mrb[0].mxu0
  %7080 = vmatprep.mubr.bf16.mxu0 0
  %7081 = vmatmul.mubr.bf16.gmra.mrb[0].mxu0 %v6860
  %v7082 = vpop.f32.mrb[0].mxu0
  %v7083 = vadd.f32 0.0, %v7082
  %v7084 = vpop.f32.mrb[0].mxu0
  %v7085 = vpop.f32.mrb[0].mxu0
  %v7086 = vadd.f32 0.0, %v7085
  %v7087 = vpop.f32.mrb[0].mxu0
  %7088 = vmatprep.mubr.bf16.mxu0 0
  %7089 = vmatmul.mubr.bf16.gmra.mrb[0].mxu0 %v6863
  %v7090 = vpop.f32.mrb[0].mxu0
  %v7091 = vadd.f32 0.0, %v7090
  %v7092 = vpop.f32.mrb[0].mxu0
  %v7093 = vpop.f32.mrb[0].mxu0
  %v7094 = vadd.f32 0.0, %v7093
  %v7095 = vpop.f32.mrb[0].mxu0
  %7096 = vmatprep.mubr.bf16.mxu0 0
  %7097 = vmatmul.mubr.bf16.gmra.mrb[0].mxu0 %v6866
  %v7098 = vpop.f32.mrb[0].mxu0
  %v7099 = vadd.f32 0.0, %v7098
  %v7100 = vpop.f32.mrb[0].mxu0
  %v7101 = vpop.f32.mrb[0].mxu0
  %v7102 = vadd.f32 0.0, %v7101
  %v7103 = vpop.f32.mrb[0].mxu0
  %7104 = vmatprep.mubr.bf16.mxu0 0
  %7105 = vmatmul.mubr.bf16.gmra.mrb[0].mxu0 %v6869
  %v7106 = vpop.f32.mrb[0].mxu0
  %v7107 = vadd.f32 0.0, %v7106
  %v7108 = vpop.f32.mrb[0].mxu0
  %v7109 = vpop.f32.mrb[0].mxu0
  %v7110 = vadd.f32 0.0, %v7109
  %v7111 = vpop.f32.mrb[0].mxu0
  %7112 = vmatprep.mubr.bf16.mxu0 0
  %7113 = vmatmul.mubr.bf16.gmra.mrb[0].mxu0 %v6872
  %v7114 = vpop.f32.mrb[0].mxu0
  %v7115 = vadd.f32 0.0, %v7114
  %v7116 = vpop.f32.mrb[0].mxu0
  %v7117 = vpop.f32.mrb[0].mxu0
  %v7118 = vadd.f32 0.0, %v7117
  %v7119 = vpop.f32.mrb[0].mxu0
  %7120 = vmatprep.mubr.bf16.mxu0 0
  %7121 = vmatmul.mubr.bf16.gmra.mrb[0].mxu0 %v6875
  %v7122 = vpop.f32.mrb[0].mxu0
  %v7123 = vadd.f32 0.0, %v7122
  %v7124 = vpop.f32.mrb[0].mxu0
  %v7125 = vpop.f32.mrb[0].mxu0
  %v7126 = vadd.f32 0.0, %v7125
  %v7127 = vpop.f32.mrb[0].mxu0
  %7128 = vmatprep.mubr.bf16.mxu0 0
  %7129 = vmatmul.mubr.bf16.gmra.mrb[0].mxu0 %v6878
  %v7130 = vpop.f32.mrb[0].mxu0
  %v7131 = vadd.f32 0.0, %v7130
  %v7132 = vpop.f32.mrb[0].mxu0
  %v7133 = vpop.f32.mrb[0].mxu0
  %v7134 = vadd.f32 0.0, %v7133
  %v7135 = vpop.f32.mrb[0].mxu0
  %7136 = vmatprep.mubr.bf16.mxu0 0
  %7137 = vmatmul.mubr.bf16.gmra.mrb[0].mxu0 %v6881
  %v7138 = vpop.f32.mrb[0].mxu0
  %v7139 = vadd.f32 0.0, %v7138
  %v7140 = vpop.f32.mrb[0].mxu0
  %v7141 = vpop.f32.mrb[0].mxu0
  %v7142 = vadd.f32 0.0, %v7141
  %v7143 = vpop.f32.mrb[0].mxu0
  %7144 = vmatprep.mubr.bf16.mxu0 0
  %7145 = vmatmul.mubr.bf16.gmra.mrb[0].mxu0 %v6884
  %v7146 = vpop.f32.mrb[0].mxu0
  %v7147 = vadd.f32 0.0, %v7146
  %v7148 = vpop.f32.mrb[0].mxu0
  %v7149 = vpop.f32.mrb[0].mxu0
  %v7150 = vadd.f32 0.0, %v7149
  %v7151 = vpop.f32.mrb[0].mxu0
  %7152 = vmatprep.mubr.bf16.mxu0 0
  %7153 = vmatmul.mubr.bf16.gmra.mrb[0].mxu0 %v6887
  %v7154 = vpop.f32.mrb[0].mxu0
  %v7155 = vadd.f32 0.0, %v7154
  %v7156 = vpop.f32.mrb[0].mxu0
  %v7157 = vpop.f32.mrb[0].mxu0
  %v7158 = vadd.f32 0.0, %v7157
  %v7159 = vpop.f32.mrb[0].mxu0
  %7160 = vmatprep.mubr.bf16.mxu0 0
  %7161 = vmatmul.mubr.bf16.gmra.mrb[0].mxu0 %v6890
  %v7162 = vpop.f32.mrb[0].mxu0
  %v7163 = vadd.f32 0.0, %v7162
  %v7164 = vpop.f32.mrb[0].mxu0
  %v7165 = vpop.f32.mrb[0].mxu0
  %v7166 = vadd.f32 0.0, %v7165
  %v7167 = vpop.f32.mrb[0].mxu0
  %7168 = vmatprep.mubr.bf16.mxu0 0
  %7169 = vmatmul.mubr.bf16.gmra.mrb[0].mxu0 %v6893
  %v7170 = vpop.f32.mrb[0].mxu0
  %v7171 = vadd.f32 0.0, %v7170
  %v7172 = vpop.f32.mrb[0].mxu0
  %v7173 = vpop.f32.mrb[0].mxu0
  %v7174 = vadd.f32 0.0, %v7173
  %v7175 = vpop.f32.mrb[0].mxu0
  %7176 = vmatprep.mubr.bf16.mxu0 0
  %7177 = vmatmul.mubr.bf16.gmra.mrb[0].mxu0 %v6896
  %v7178 = vpop.f32.mrb[0].mxu0
  %v7179 = vadd.f32 0.0, %v7178
  %v7180 = vpop.f32.mrb[0].mxu0
  %v7181 = vpop.f32.mrb[0].mxu0
  %v7182 = vadd.f32 0.0, %v7181
  %v7183 = vpop.f32.mrb[0].mxu0
  %7184 = vmatprep.mubr.bf16.mxu0 0
  %7185 = vmatmul.mubr.bf16.gmra.mrb[0].mxu0 %v6899
  %v7186 = vpop.f32.mrb[0].mxu0
  %v7187 = vadd.f32 0.0, %v7186
  %v7188 = vpop.f32.mrb[0].mxu0
  %v7189 = vpop.f32.mrb[0].mxu0
  %v7190 = vadd.f32 0.0, %v7189
  %v7191 = vpop.f32.mrb[0].mxu0
  %7192 = vdwg.mxu0
  %v7193 = vadd.f32 %v6453, %v6939
  %v7194 = vadd.f32 %v6456, %v6942
  %v7195 = vadd.f32 %v6461, %v6947
  %v7196 = vadd.f32 %v6464, %v6950
  %v7197 = vadd.f32 %v6469, %v6955
  %v7198 = vadd.f32 %v6472, %v6958
  %v7199 = vadd.f32 %v6477, %v6963
  %v7200 = vadd.f32 %v6480, %v6966
  %v7201 = vadd.f32 %v6485, %v6971
  %v7202 = vadd.f32 %v6488, %v6974
  %v7203 = vadd.f32 %v6493, %v6979
  %v7204 = vadd.f32 %v6496, %v6982
  %v7205 = vadd.f32 %v6501, %v6987
  %v7206 = vadd.f32 %v6504, %v6990
  %v7207 = vadd.f32 %v6509, %v6995
  %v7208 = vadd.f32 %v6512, %v6998
  %v7209 = vadd.f32 %v6517, %v7003
  %v7210 = vadd.f32 %v6520, %v7006
  %v7211 = vadd.f32 %v6525, %v7011
  %v7212 = vadd.f32 %v6528, %v7014
  %v7213 = vadd.f32 %v6533, %v7019
  %v7214 = vadd.f32 %v6536, %v7022
  %v7215 = vadd.f32 %v6541, %v7027
  %v7216 = vadd.f32 %v6544, %v7030
  %v7217 = vadd.f32 %v6549, %v7035
  %v7218 = vadd.f32 %v6552, %v7038
  %v7219 = vadd.f32 %v6557, %v7043
  %v7220 = vadd.f32 %v6560, %v7046
  %v7221 = vadd.f32 %v6565, %v7051
  %v7222 = vadd.f32 %v6568, %v7054
  %v7223 = vadd.f32 %v6573, %v7059
  %v7224 = vadd.f32 %v6576, %v7062
  %v7225 = vadd.f32 %v6581, %v7067
  %v7226 = vadd.f32 %v6584, %v7070
  %v7227 = vadd.f32 %v6589, %v7075
  %v7228 = vadd.f32 %v6592, %v7078
  %v7229 = vadd.f32 %v6597, %v7083
  %v7230 = vadd.f32 %v6600, %v7086
  %v7231 = vadd.f32 %v6605, %v7091
  %v7232 = vadd.f32 %v6608, %v7094
  %v7233 = vadd.f32 %v6613, %v7099
  %v7234 = vadd.f32 %v6616, %v7102
  %v7235 = vadd.f32 %v6621, %v7107
  %v7236 = vadd.f32 %v6624, %v7110
  %v7237 = vadd.f32 %v6629, %v7115
  %v7238 = vadd.f32 %v6632, %v7118
  %v7239 = vadd.f32 %v6637, %v7123
  %v7240 = vadd.f32 %v6640, %v7126
  %v7241 = vadd.f32 %v6645, %v7131
  %v7242 = vadd.f32 %v6648, %v7134
  %v7243 = vadd.f32 %v6653, %v7139
  %v7244 = vadd.f32 %v6656, %v7142
  %v7245 = vadd.f32 %v6661, %v7147
  %v7246 = vadd.f32 %v6664, %v7150
  %v7247 = vadd.f32 %v6669, %v7155
  %v7248 = vadd.f32 %v6672, %v7158
  %v7249 = vadd.f32 %v6677, %v7163
  %v7250 = vadd.f32 %v6680, %v7166
  %v7251 = vadd.f32 %v6685, %v7171
  %v7252 = vadd.f32 %v6688, %v7174
  %v7253 = vadd.f32 %v6693, %v7179
  %v7254 = vadd.f32 %v6696, %v7182
  %v7255 = vadd.f32 %v6701, %v7187
  %v7256 = vadd.f32 %v6704, %v7190
  %v7257 = vld [vmem:[%s179] sm:$0xff]
  %v7258 = vld [vmem:[%s179 + $0x8] sm:$0xff]
  %v7259 = vld [vmem:[%s179 + $0x18] sm:$0xff]
  %v7260 = vld [vmem:[%s179 + $0x20] sm:$0xff]
  %v7261 = vld [vmem:[%s179 + $0x30] sm:$0xff]
  %v7262 = vld [vmem:[%s179 + $0x38] sm:$0xff]
  %v7263 = vld [vmem:[%s179 + $0x48] sm:$0xff]
  %v7264 = vld [vmem:[%s179 + $0x50] sm:$0xff]
  %v7265 = vld [vmem:[%s179 + $0x60] sm:$0xff]
  %v7266 = vld [vmem:[%s179 + $0x68] sm:$0xff]
  %v7267 = vld [vmem:[%s179 + $0x78] sm:$0xff]
  %v7268 = vld [vmem:[%s179 + $0x80] sm:$0xff]
  %v7269 = vld [vmem:[%s179 + $0x90] sm:$0xff]
  %v7270 = vld [vmem:[%s179 + $0x98] sm:$0xff]
  %v7271 = vld [vmem:[%s179 + $0xa8] sm:$0xff]
  %v7272 = vld [vmem:[%s179 + $0xb0] sm:$0xff]
  %v7273 = vld [vmem:[%s179 + $0xc0] sm:$0xff]
  %v7274 = vld [vmem:[%s179 + $0xc8] sm:$0xff]
  %v7275 = vld [vmem:[%s179 + $0xd8] sm:$0xff]
  %v7276 = vld [vmem:[%s179 + $0xe0] sm:$0xff]
  %v7277 = vld [vmem:[%s179 + $0xf0] sm:$0xff]
  %v7278 = vld [vmem:[%s179 + $0xf8] sm:$0xff]
  %v7279 = vld [vmem:[%s179 + $0x108] sm:$0xff]
  %v7280 = vld [vmem:[%s179 + $0x110] sm:$0xff]
  %v7281 = vld [vmem:[%s179 + $0x120] sm:$0xff]
  %v7282 = vld [vmem:[%s179 + $0x128] sm:$0xff]
  %v7283 = vld [vmem:[%s179 + $0x138] sm:$0xff]
  %v7284 = vld [vmem:[%s179 + $0x140] sm:$0xff]
  %v7285 = vld [vmem:[%s179 + $0x150] sm:$0xff]
  %v7286 = vld [vmem:[%s179 + $0x158] sm:$0xff]
  %v7287 = vld [vmem:[%s179 + $0x168] sm:$0xff]
  %v7288 = vld [vmem:[%s179 + $0x170] sm:$0xff]
  %v7289 = vld [vmem:[%s179 + $0x1b0] sm:$0xff]
  %v7290 = vld [vmem:[%s179 + $0x1b8] sm:$0xff]
  %v7291 = vld [vmem:[%s179 + $0x1c8] sm:$0xff]
  %v7292 = vld [vmem:[%s179 + $0x1d0] sm:$0xff]
  %v7293 = vld [vmem:[%s179 + $0x1e0] sm:$0xff]
  %v7294 = vld [vmem:[%s179 + $0x1e8] sm:$0xff]
  %v7295 = vld [vmem:[%s179 + $0x1f8] sm:$0xff]
  %v7296 = vld [vmem:[%s179 + $0x200] sm:$0xff]
  %v7297 = vld [vmem:[%s179 + $0x210] sm:$0xff]
  %v7298 = vld [vmem:[%s179 + $0x218] sm:$0xff]
  %v7299 = vld [vmem:[%s179 + $0x228] sm:$0xff]
  %v7300 = vld [vmem:[%s179 + $0x230] sm:$0xff]
  %v7301 = vld [vmem:[%s179 + $0x240] sm:$0xff]
  %v7302 = vld [vmem:[%s179 + $0x248] sm:$0xff]
  %v7303 = vld [vmem:[%s179 + $0x258] sm:$0xff]
  %v7304 = vld [vmem:[%s179 + $0x260] sm:$0xff]
  %v7305 = vld [vmem:[%s179 + $0x270] sm:$0xff]
  %v7306 = vld [vmem:[%s179 + $0x278] sm:$0xff]
  %v7307 = vld [vmem:[%s179 + $0x288] sm:$0xff]
  %v7308 = vld [vmem:[%s179 + $0x290] sm:$0xff]
  %v7309 = vld [vmem:[%s179 + $0x2a0] sm:$0xff]
  %v7310 = vld [vmem:[%s179 + $0x2a8] sm:$0xff]
  %v7311 = vld [vmem:[%s179 + $0x2b8] sm:$0xff]
  %v7312 = vld [vmem:[%s179 + $0x2c0] sm:$0xff]
  %v7313 = vld [vmem:[%s179 + $0x2d0] sm:$0xff]
  %v7314 = vld [vmem:[%s179 + $0x2d8] sm:$0xff]
  %v7315 = vld [vmem:[%s179 + $0x2e8] sm:$0xff]
  %v7316 = vld [vmem:[%s179 + $0x2f0] sm:$0xff]
  %v7317 = vld [vmem:[%s179 + $0x300] sm:$0xff]
  %v7318 = vld [vmem:[%s179 + $0x308] sm:$0xff]
  %v7319 = vld [vmem:[%s179 + $0x318] sm:$0xff]
  %v7320 = vld [vmem:[%s179 + $0x320] sm:$0xff]
  %v7321 = vpack.c.bf16 %v7258, %v7257
  %v7322 = vpack.c.bf16 %v7260, %v7259
  %v7323 = vpack.c.bf16 %v7262, %v7261
  %v7324 = vpack.c.bf16 %v7264, %v7263
  %v7325 = vpack.c.bf16 %v7266, %v7265
  %v7326 = vpack.c.bf16 %v7268, %v7267
  %v7327 = vpack.c.bf16 %v7270, %v7269
  %v7328 = vpack.c.bf16 %v7272, %v7271
  %v7329 = vpack.c.bf16 %v7274, %v7273
  %v7330 = vpack.c.bf16 %v7276, %v7275
  %v7331 = vpack.c.bf16 %v7278, %v7277
  %v7332 = vpack.c.bf16 %v7280, %v7279
  %v7333 = vpack.c.bf16 %v7282, %v7281
  %v7334 = vpack.c.bf16 %v7284, %v7283
  %v7335 = vpack.c.bf16 %v7286, %v7285
  %v7336 = vpack.c.bf16 %v7288, %v7287
  %v7337 = vpack.c.bf16 %v7290, %v7289
  %v7338 = vpack.c.bf16 %v7292, %v7291
  %v7339 = vpack.c.bf16 %v7294, %v7293
  %v7340 = vpack.c.bf16 %v7296, %v7295
  %v7341 = vpack.c.bf16 %v7298, %v7297
  %v7342 = vpack.c.bf16 %v7300, %v7299
  %v7343 = vpack.c.bf16 %v7302, %v7301
  %v7344 = vpack.c.bf16 %v7304, %v7303
  %v7345 = vpack.c.bf16 %v7306, %v7305
  %v7346 = vpack.c.bf16 %v7308, %v7307
  %v7347 = vpack.c.bf16 %v7310, %v7309
  %v7348 = vpack.c.bf16 %v7312, %v7311
  %v7349 = vpack.c.bf16 %v7314, %v7313
  %v7350 = vpack.c.bf16 %v7316, %v7315
  %v7351 = vpack.c.bf16 %v7318, %v7317
  %v7352 = vpack.c.bf16 %v7320, %v7319
  %s7353 = scalar_lea.vmem %s4, 6
  %v7354 = vld [vmem:[%s7353] sm:$0x3]
  %v7356 = vsel %vm27, %v7321, 0
  %v7359 = vsel %vm27, %v7322, 0
  %v7362 = vsel %vm27, %v7323, 0
  %v7365 = vsel %vm27, %v7324, 0
  %v7368 = vsel %vm27, %v7325, 0
  %v7371 = vsel %vm27, %v7326, 0
  %v7374 = vsel %vm27, %v7327, 0
  %v7377 = vsel %vm27, %v7328, 0
  %v7380 = vsel %vm27, %v7329, 0
  %v7383 = vsel %vm27, %v7330, 0
  %v7386 = vsel %vm27, %v7331, 0
  %v7389 = vsel %vm27, %v7332, 0
  %v7392 = vsel %vm27, %v7333, 0
  %v7395 = vsel %vm27, %v7334, 0
  %v7398 = vsel %vm27, %v7335, 0
  %v7401 = vsel %vm27, %v7336, 0
  %v7404 = vsel %vm27, %v7337, 0
  %v7407 = vsel %vm27, %v7338, 0
  %v7410 = vsel %vm27, %v7339, 0
  %v7413 = vsel %vm27, %v7340, 0
  %v7416 = vsel %vm27, %v7341, 0
  %v7419 = vsel %vm27, %v7342, 0
  %v7422 = vsel %vm27, %v7343, 0
  %v7425 = vsel %vm27, %v7344, 0
  %v7428 = vsel %vm27, %v7345, 0
  %v7431 = vsel %vm27, %v7346, 0
  %v7434 = vsel %vm27, %v7347, 0
  %v7437 = vsel %vm27, %v7348, 0
  %v7440 = vsel %vm27, %v7349, 0
  %v7443 = vsel %vm27, %v7350, 0
  %v7446 = vsel %vm27, %v7351, 0
  %v7449 = vsel %vm27, %v7352, 0
  %v7452 = vsel %vm535, %v7354, 0
  %7454 = vmatprep.subr.bf16.mxu0 0
  %7455 = vmatpush1.bf16.msra.mxu0 %v7452
  %7456 = vmatprep.subr.bf16.mxu0 0
  %7457 = vmatpush1.bf16.msra.mxu0 0
  %7458 = vmatprep.subr.bf16.mxu0 0
  %7459 = vmatpush1.bf16.msra.mxu0 0
  %7460 = vmatprep.subr.bf16.mxu0 0
  %7461 = vmatpush1.bf16.msra.mxu0 0
  %7462 = vmatprep.subr.bf16.mxu0 0
  %7463 = vmatpush1.bf16.msra.mxu0 0
  %7464 = vmatprep.subr.bf16.mxu0 0
  %7465 = vmatpush1.bf16.msra.mxu0 0
  %7466 = vmatprep.subr.bf16.mxu0 0
  %7467 = vmatpush1.bf16.msra.mxu0 0
  %7468 = vmatprep.subr.bf16.mxu0 0
  %7469 = vmatpush1.bf16.msra.mxu0 0
  %7470 = vmatprep.subr.bf16.mxu0 0
  %7471 = vmatpush1.bf16.msra.mxu0 0
  %7472 = vmatprep.subr.bf16.mxu0 0
  %7473 = vmatpush1.bf16.msra.mxu0 0
  %7474 = vmatprep.subr.bf16.mxu0 0
  %7475 = vmatpush1.bf16.msra.mxu0 0
  %7476 = vmatprep.subr.bf16.mxu0 0
  %7477 = vmatpush1.bf16.msra.mxu0 0
  %7478 = vmatprep.subr.bf16.mxu0 0
  %7479 = vmatpush1.bf16.msra.mxu0 0
  %7480 = vmatprep.subr.bf16.mxu0 0
  %7481 = vmatpush1.bf16.msra.mxu0 0
  %7482 = vmatprep.subr.bf16.mxu0 0
  %7483 = vmatpush1.bf16.msra.mxu0 0
  %7484 = vmatprep.subr.bf16.mxu0 0
  %7485 = vmatpush1.bf16.msra.mxu0 0
  %7486 = vmatprep.mubr.bf16.mxu0 0
  %7487 = vmatmul.mubr.bf16.gmra.mrb[0].mxu0 %v7356
  %v7488 = vpop.f32.mrb[0].mxu0
  %v7489 = vadd.f32 0.0, %v7488
  %v7490 = vpop.f32.mrb[0].mxu0
  %v7491 = vpop.f32.mrb[0].mxu0
  %v7492 = vadd.f32 0.0, %v7491
  %v7493 = vpop.f32.mrb[0].mxu0
  %7494 = vmatprep.mubr.bf16.mxu0 0
  %7495 = vmatmul.mubr.bf16.gmra.mrb[0].mxu0 %v7359
  %v7496 = vpop.f32.mrb[0].mxu0
  %v7497 = vadd.f32 0.0, %v7496
  %v7498 = vpop.f32.mrb[0].mxu0
  %v7499 = vpop.f32.mrb[0].mxu0
  %v7500 = vadd.f32 0.0, %v7499
  %v7501 = vpop.f32.mrb[0].mxu0
  %7502 = vmatprep.mubr.bf16.mxu0 0
  %7503 = vmatmul.mubr.bf16.gmra.mrb[0].mxu0 %v7362
  %v7504 = vpop.f32.mrb[0].mxu0
  %v7505 = vadd.f32 0.0, %v7504
  %v7506 = vpop.f32.mrb[0].mxu0
  %v7507 = vpop.f32.mrb[0].mxu0
  %v7508 = vadd.f32 0.0, %v7507
  %v7509 = vpop.f32.mrb[0].mxu0
  %7510 = vmatprep.mubr.bf16.mxu0 0
  %7511 = vmatmul.mubr.bf16.gmra.mrb[0].mxu0 %v7365
  %v7512 = vpop.f32.mrb[0].mxu0
  %v7513 = vadd.f32 0.0, %v7512
  %v7514 = vpop.f32.mrb[0].mxu0
  %v7515 = vpop.f32.mrb[0].mxu0
  %v7516 = vadd.f32 0.0, %v7515
  %v7517 = vpop.f32.mrb[0].mxu0
  %7518 = vmatprep.mubr.bf16.mxu0 0
  %7519 = vmatmul.mubr.bf16.gmra.mrb[0].mxu0 %v7368
  %v7520 = vpop.f32.mrb[0].mxu0
  %v7521 = vadd.f32 0.0, %v7520
  %v7522 = vpop.f32.mrb[0].mxu0
  %v7523 = vpop.f32.mrb[0].mxu0
  %v7524 = vadd.f32 0.0, %v7523
  %v7525 = vpop.f32.mrb[0].mxu0
  %7526 = vmatprep.mubr.bf16.mxu0 0
  %7527 = vmatmul.mubr.bf16.gmra.mrb[0].mxu0 %v7371
  %v7528 = vpop.f32.mrb[0].mxu0
  %v7529 = vadd.f32 0.0, %v7528
  %v7530 = vpop.f32.mrb[0].mxu0
  %v7531 = vpop.f32.mrb[0].mxu0
  %v7532 = vadd.f32 0.0, %v7531
  %v7533 = vpop.f32.mrb[0].mxu0
  %7534 = vmatprep.mubr.bf16.mxu0 0
  %7535 = vmatmul.mubr.bf16.gmra.mrb[0].mxu0 %v7374
  %v7536 = vpop.f32.mrb[0].mxu0
  %v7537 = vadd.f32 0.0, %v7536
  %v7538 = vpop.f32.mrb[0].mxu0
  %v7539 = vpop.f32.mrb[0].mxu0
  %v7540 = vadd.f32 0.0, %v7539
  %v7541 = vpop.f32.mrb[0].mxu0
  %7542 = vmatprep.mubr.bf16.mxu0 0
  %7543 = vmatmul.mubr.bf16.gmra.mrb[0].mxu0 %v7377
  %v7544 = vpop.f32.mrb[0].mxu0
  %v7545 = vadd.f32 0.0, %v7544
  %v7546 = vpop.f32.mrb[0].mxu0
  %v7547 = vpop.f32.mrb[0].mxu0
  %v7548 = vadd.f32 0.0, %v7547
  %v7549 = vpop.f32.mrb[0].mxu0
  %7550 = vmatprep.mubr.bf16.mxu0 0
  %7551 = vmatmul.mubr.bf16.gmra.mrb[0].mxu0 %v7380
  %v7552 = vpop.f32.mrb[0].mxu0
  %v7553 = vadd.f32 0.0, %v7552
  %v7554 = vpop.f32.mrb[0].mxu0
  %v7555 = vpop.f32.mrb[0].mxu0
  %v7556 = vadd.f32 0.0, %v7555
  %v7557 = vpop.f32.mrb[0].mxu0
  %7558 = vmatprep.mubr.bf16.mxu0 0
  %7559 = vmatmul.mubr.bf16.gmra.mrb[0].mxu0 %v7383
  %v7560 = vpop.f32.mrb[0].mxu0
  %v7561 = vadd.f32 0.0, %v7560
  %v7562 = vpop.f32.mrb[0].mxu0
  %v7563 = vpop.f32.mrb[0].mxu0
  %v7564 = vadd.f32 0.0, %v7563
  %v7565 = vpop.f32.mrb[0].mxu0
  %7566 = vmatprep.mubr.bf16.mxu0 0
  %7567 = vmatmul.mubr.bf16.gmra.mrb[0].mxu0 %v7386
  %v7568 = vpop.f32.mrb[0].mxu0
  %v7569 = vadd.f32 0.0, %v7568
  %v7570 = vpop.f32.mrb[0].mxu0
  %v7571 = vpop.f32.mrb[0].mxu0
  %v7572 = vadd.f32 0.0, %v7571
  %v7573 = vpop.f32.mrb[0].mxu0
  %7574 = vmatprep.mubr.bf16.mxu0 0
  %7575 = vmatmul.mubr.bf16.gmra.mrb[0].mxu0 %v7389
  %v7576 = vpop.f32.mrb[0].mxu0
  %v7577 = vadd.f32 0.0, %v7576
  %v7578 = vpop.f32.mrb[0].mxu0
  %v7579 = vpop.f32.mrb[0].mxu0
  %v7580 = vadd.f32 0.0, %v7579
  %v7581 = vpop.f32.mrb[0].mxu0
  %7582 = vmatprep.mubr.bf16.mxu0 0
  %7583 = vmatmul.mubr.bf16.gmra.mrb[0].mxu0 %v7392
  %v7584 = vpop.f32.mrb[0].mxu0
  %v7585 = vadd.f32 0.0, %v7584
  %v7586 = vpop.f32.mrb[0].mxu0
  %v7587 = vpop.f32.mrb[0].mxu0
  %v7588 = vadd.f32 0.0, %v7587
  %v7589 = vpop.f32.mrb[0].mxu0
  %7590 = vmatprep.mubr.bf16.mxu0 0
  %7591 = vmatmul.mubr.bf16.gmra.mrb[0].mxu0 %v7395
  %v7592 = vpop.f32.mrb[0].mxu0
  %v7593 = vadd.f32 0.0, %v7592
  %v7594 = vpop.f32.mrb[0].mxu0
  %v7595 = vpop.f32.mrb[0].mxu0
  %v7596 = vadd.f32 0.0, %v7595
  %v7597 = vpop.f32.mrb[0].mxu0
  %7598 = vmatprep.mubr.bf16.mxu0 0
  %7599 = vmatmul.mubr.bf16.gmra.mrb[0].mxu0 %v7398
  %v7600 = vpop.f32.mrb[0].mxu0
  %v7601 = vadd.f32 0.0, %v7600
  %v7602 = vpop.f32.mrb[0].mxu0
  %v7603 = vpop.f32.mrb[0].mxu0
  %v7604 = vadd.f32 0.0, %v7603
  %v7605 = vpop.f32.mrb[0].mxu0
  %7606 = vmatprep.mubr.bf16.mxu0 0
  %7607 = vmatmul.mubr.bf16.gmra.mrb[0].mxu0 %v7401
  %v7608 = vpop.f32.mrb[0].mxu0
  %v7609 = vadd.f32 0.0, %v7608
  %v7610 = vpop.f32.mrb[0].mxu0
  %v7611 = vpop.f32.mrb[0].mxu0
  %v7612 = vadd.f32 0.0, %v7611
  %v7613 = vpop.f32.mrb[0].mxu0
  %7614 = vmatprep.mubr.bf16.mxu0 0
  %7615 = vmatmul.mubr.bf16.gmra.mrb[0].mxu0 %v7404
  %v7616 = vpop.f32.mrb[0].mxu0
  %v7617 = vadd.f32 0.0, %v7616
  %v7618 = vpop.f32.mrb[0].mxu0
  %v7619 = vpop.f32.mrb[0].mxu0
  %v7620 = vadd.f32 0.0, %v7619
  %v7621 = vpop.f32.mrb[0].mxu0
  %7622 = vmatprep.mubr.bf16.mxu0 0
  %7623 = vmatmul.mubr.bf16.gmra.mrb[0].mxu0 %v7407
  %v7624 = vpop.f32.mrb[0].mxu0
  %v7625 = vadd.f32 0.0, %v7624
  %v7626 = vpop.f32.mrb[0].mxu0
  %v7627 = vpop.f32.mrb[0].mxu0
  %v7628 = vadd.f32 0.0, %v7627
  %v7629 = vpop.f32.mrb[0].mxu0
  %7630 = vmatprep.mubr.bf16.mxu0 0
  %7631 = vmatmul.mubr.bf16.gmra.mrb[0].mxu0 %v7410
  %v7632 = vpop.f32.mrb[0].mxu0
  %v7633 = vadd.f32 0.0, %v7632
  %v7634 = vpop.f32.mrb[0].mxu0
  %v7635 = vpop.f32.mrb[0].mxu0
  %v7636 = vadd.f32 0.0, %v7635
  %v7637 = vpop.f32.mrb[0].mxu0
  %7638 = vmatprep.mubr.bf16.mxu0 0
  %7639 = vmatmul.mubr.bf16.gmra.mrb[0].mxu0 %v7413
  %v7640 = vpop.f32.mrb[0].mxu0
  %v7641 = vadd.f32 0.0, %v7640
  %v7642 = vpop.f32.mrb[0].mxu0
  %v7643 = vpop.f32.mrb[0].mxu0
  %v7644 = vadd.f32 0.0, %v7643
  %v7645 = vpop.f32.mrb[0].mxu0
  %7646 = vmatprep.mubr.bf16.mxu0 0
  %7647 = vmatmul.mubr.bf16.gmra.mrb[0].mxu0 %v7416
  %v7648 = vpop.f32.mrb[0].mxu0
  %v7649 = vadd.f32 0.0, %v7648
  %v7650 = vpop.f32.mrb[0].mxu0
  %v7651 = vpop.f32.mrb[0].mxu0
  %v7652 = vadd.f32 0.0, %v7651
  %v7653 = vpop.f32.mrb[0].mxu0
  %7654 = vmatprep.mubr.bf16.mxu0 0
  %7655 = vmatmul.mubr.bf16.gmra.mrb[0].mxu0 %v7419
  %v7656 = vpop.f32.mrb[0].mxu0
  %v7657 = vadd.f32 0.0, %v7656
  %v7658 = vpop.f32.mrb[0].mxu0
  %v7659 = vpop.f32.mrb[0].mxu0
  %v7660 = vadd.f32 0.0, %v7659
  %v7661 = vpop.f32.mrb[0].mxu0
  %7662 = vmatprep.mubr.bf16.mxu0 0
  %7663 = vmatmul.mubr.bf16.gmra.mrb[0].mxu0 %v7422
  %v7664 = vpop.f32.mrb[0].mxu0
  %v7665 = vadd.f32 0.0, %v7664
  %v7666 = vpop.f32.mrb[0].mxu0
  %v7667 = vpop.f32.mrb[0].mxu0
  %v7668 = vadd.f32 0.0, %v7667
  %v7669 = vpop.f32.mrb[0].mxu0
  %7670 = vmatprep.mubr.bf16.mxu0 0
  %7671 = vmatmul.mubr.bf16.gmra.mrb[0].mxu0 %v7425
  %v7672 = vpop.f32.mrb[0].mxu0
  %v7673 = vadd.f32 0.0, %v7672
  %v7674 = vpop.f32.mrb[0].mxu0
  %v7675 = vpop.f32.mrb[0].mxu0
  %v7676 = vadd.f32 0.0, %v7675
  %v7677 = vpop.f32.mrb[0].mxu0
  %7678 = vmatprep.mubr.bf16.mxu0 0
  %7679 = vmatmul.mubr.bf16.gmra.mrb[0].mxu0 %v7428
  %v7680 = vpop.f32.mrb[0].mxu0
  %v7681 = vadd.f32 0.0, %v7680
  %v7682 = vpop.f32.mrb[0].mxu0
  %v7683 = vpop.f32.mrb[0].mxu0
  %v7684 = vadd.f32 0.0, %v7683
  %v7685 = vpop.f32.mrb[0].mxu0
  %7686 = vmatprep.mubr.bf16.mxu0 0
  %7687 = vmatmul.mubr.bf16.gmra.mrb[0].mxu0 %v7431
  %v7688 = vpop.f32.mrb[0].mxu0
  %v7689 = vadd.f32 0.0, %v7688
  %v7690 = vpop.f32.mrb[0].mxu0
  %v7691 = vpop.f32.mrb[0].mxu0
  %v7692 = vadd.f32 0.0, %v7691
  %v7693 = vpop.f32.mrb[0].mxu0
  %7694 = vmatprep.mubr.bf16.mxu0 0
  %7695 = vmatmul.mubr.bf16.gmra.mrb[0].mxu0 %v7434
  %v7696 = vpop.f32.mrb[0].mxu0
  %v7697 = vadd.f32 0.0, %v7696
  %v7698 = vpop.f32.mrb[0].mxu0
  %v7699 = vpop.f32.mrb[0].mxu0
  %v7700 = vadd.f32 0.0, %v7699
  %v7701 = vpop.f32.mrb[0].mxu0
  %7702 = vmatprep.mubr.bf16.mxu0 0
  %7703 = vmatmul.mubr.bf16.gmra.mrb[0].mxu0 %v7437
  %v7704 = vpop.f32.mrb[0].mxu0
  %v7705 = vadd.f32 0.0, %v7704
  %v7706 = vpop.f32.mrb[0].mxu0
  %v7707 = vpop.f32.mrb[0].mxu0
  %v7708 = vadd.f32 0.0, %v7707
  %v7709 = vpop.f32.mrb[0].mxu0
  %7710 = vmatprep.mubr.bf16.mxu0 0
  %7711 = vmatmul.mubr.bf16.gmra.mrb[0].mxu0 %v7440
  %v7712 = vpop.f32.mrb[0].mxu0
  %v7713 = vadd.f32 0.0, %v7712
  %v7714 = vpop.f32.mrb[0].mxu0
  %v7715 = vpop.f32.mrb[0].mxu0
  %v7716 = vadd.f32 0.0, %v7715
  %v7717 = vpop.f32.mrb[0].mxu0
  %7718 = vmatprep.mubr.bf16.mxu0 0
  %7719 = vmatmul.mubr.bf16.gmra.mrb[0].mxu0 %v7443
  %v7720 = vpop.f32.mrb[0].mxu0
  %v7721 = vadd.f32 0.0, %v7720
  %v7722 = vpop.f32.mrb[0].mxu0
  %v7723 = vpop.f32.mrb[0].mxu0
  %v7724 = vadd.f32 0.0, %v7723
  %v7725 = vpop.f32.mrb[0].mxu0
  %7726 = vmatprep.mubr.bf16.mxu0 0
  %7727 = vmatmul.mubr.bf16.gmra.mrb[0].mxu0 %v7446
  %v7728 = vpop.f32.mrb[0].mxu0
  %v7729 = vadd.f32 0.0, %v7728
  %v7730 = vpop.f32.mrb[0].mxu0
  %v7731 = vpop.f32.mrb[0].mxu0
  %v7732 = vadd.f32 0.0, %v7731
  %v7733 = vpop.f32.mrb[0].mxu0
  %7734 = vmatprep.mubr.bf16.mxu0 0
  %7735 = vmatmul.mubr.bf16.gmra.mrb[0].mxu0 %v7449
  %v7736 = vpop.f32.mrb[0].mxu0
  %v7737 = vadd.f32 0.0, %v7736
  %v7738 = vpop.f32.mrb[0].mxu0
  %v7739 = vpop.f32.mrb[0].mxu0
  %v7740 = vadd.f32 0.0, %v7739
  %v7741 = vpop.f32.mrb[0].mxu0
  %7742 = vdwg.mxu0
  %v7743 = vadd.f32 %v7193, %v7489
  %v7744 = vadd.f32 %v7194, %v7492
  %v7745 = vadd.f32 %v7195, %v7497
  %v7746 = vadd.f32 %v7196, %v7500
  %v7747 = vadd.f32 %v7197, %v7505
  %v7748 = vadd.f32 %v7198, %v7508
  %v7749 = vadd.f32 %v7199, %v7513
  %v7750 = vadd.f32 %v7200, %v7516
  %v7751 = vadd.f32 %v7201, %v7521
  %v7752 = vadd.f32 %v7202, %v7524
  %v7753 = vadd.f32 %v7203, %v7529
  %v7754 = vadd.f32 %v7204, %v7532
  %v7755 = vadd.f32 %v7205, %v7537
  %v7756 = vadd.f32 %v7206, %v7540
  %v7757 = vadd.f32 %v7207, %v7545
  %v7758 = vadd.f32 %v7208, %v7548
  %v7759 = vadd.f32 %v7209, %v7553
  %v7760 = vadd.f32 %v7210, %v7556
  %v7761 = vadd.f32 %v7211, %v7561
  %v7762 = vadd.f32 %v7212, %v7564
  %v7763 = vadd.f32 %v7213, %v7569
  %v7764 = vadd.f32 %v7214, %v7572
  %v7765 = vadd.f32 %v7215, %v7577
  %v7766 = vadd.f32 %v7216, %v7580
  %v7767 = vadd.f32 %v7217, %v7585
  %v7768 = vadd.f32 %v7218, %v7588
  %v7769 = vadd.f32 %v7219, %v7593
  %v7770 = vadd.f32 %v7220, %v7596
  %v7771 = vadd.f32 %v7221, %v7601
  %v7772 = vadd.f32 %v7222, %v7604
  %v7773 = vadd.f32 %v7223, %v7609
  %v7774 = vadd.f32 %v7224, %v7612
  %v7775 = vadd.f32 %v7225, %v7617
  %v7776 = vadd.f32 %v7226, %v7620
  %v7777 = vadd.f32 %v7227, %v7625
  %v7778 = vadd.f32 %v7228, %v7628
  %v7779 = vadd.f32 %v7229, %v7633
  %v7780 = vadd.f32 %v7230, %v7636
  %v7781 = vadd.f32 %v7231, %v7641
  %v7782 = vadd.f32 %v7232, %v7644
  %v7783 = vadd.f32 %v7233, %v7649
  %v7784 = vadd.f32 %v7234, %v7652
  %v7785 = vadd.f32 %v7235, %v7657
  %v7786 = vadd.f32 %v7236, %v7660
  %v7787 = vadd.f32 %v7237, %v7665
  %v7788 = vadd.f32 %v7238, %v7668
  %v7789 = vadd.f32 %v7239, %v7673
  %v7790 = vadd.f32 %v7240, %v7676
  %v7791 = vadd.f32 %v7241, %v7681
  %v7792 = vadd.f32 %v7242, %v7684
  %v7793 = vadd.f32 %v7243, %v7689
  %v7794 = vadd.f32 %v7244, %v7692
  %v7795 = vadd.f32 %v7245, %v7697
  %v7796 = vadd.f32 %v7246, %v7700
  %v7797 = vadd.f32 %v7247, %v7705
  %v7798 = vadd.f32 %v7248, %v7708
  %v7799 = vadd.f32 %v7249, %v7713
  %v7800 = vadd.f32 %v7250, %v7716
  %v7801 = vadd.f32 %v7251, %v7721
  %v7802 = vadd.f32 %v7252, %v7724
  %v7803 = vadd.f32 %v7253, %v7729
  %v7804 = vadd.f32 %v7254, %v7732
  %v7805 = vadd.f32 %v7255, %v7737
  %v7806 = vadd.f32 %v7256, %v7740
  %v7807 = vld [vmem:[%s179 + $0x1] sm:$0xff]
  %v7808 = vld [vmem:[%s179 + $0x9] sm:$0xff]
  %v7809 = vld [vmem:[%s179 + $0x19] sm:$0xff]
  %v7810 = vld [vmem:[%s179 + $0x21] sm:$0xff]
  %v7811 = vld [vmem:[%s179 + $0x31] sm:$0xff]
  %v7812 = vld [vmem:[%s179 + $0x39] sm:$0xff]
  %v7813 = vld [vmem:[%s179 + $0x49] sm:$0xff]
  %v7814 = vld [vmem:[%s179 + $0x51] sm:$0xff]
  %v7815 = vld [vmem:[%s179 + $0x61] sm:$0xff]
  %v7816 = vld [vmem:[%s179 + $0x69] sm:$0xff]
  %v7817 = vld [vmem:[%s179 + $0x79] sm:$0xff]
  %v7818 = vld [vmem:[%s179 + $0x81] sm:$0xff]
  %v7819 = vld [vmem:[%s179 + $0x91] sm:$0xff]
  %v7820 = vld [vmem:[%s179 + $0x99] sm:$0xff]
  %v7821 = vld [vmem:[%s179 + $0xa9] sm:$0xff]
  %v7822 = vld [vmem:[%s179 + $0xb1] sm:$0xff]
  %v7823 = vld [vmem:[%s179 + $0xc1] sm:$0xff]
  %v7824 = vld [vmem:[%s179 + $0xc9] sm:$0xff]
  %v7825 = vld [vmem:[%s179 + $0xd9] sm:$0xff]
  %v7826 = vld [vmem:[%s179 + $0xe1] sm:$0xff]
  %v7827 = vld [vmem:[%s179 + $0xf1] sm:$0xff]
  %v7828 = vld [vmem:[%s179 + $0xf9] sm:$0xff]
  %v7829 = vld [vmem:[%s179 + $0x109] sm:$0xff]
  %v7830 = vld [vmem:[%s179 + $0x111] sm:$0xff]
  %v7831 = vld [vmem:[%s179 + $0x121] sm:$0xff]
  %v7832 = vld [vmem:[%s179 + $0x129] sm:$0xff]
  %v7833 = vld [vmem:[%s179 + $0x139] sm:$0xff]
  %v7834 = vld [vmem:[%s179 + $0x141] sm:$0xff]
  %v7835 = vld [vmem:[%s179 + $0x151] sm:$0xff]
  %v7836 = vld [vmem:[%s179 + $0x159] sm:$0xff]
  %v7837 = vld [vmem:[%s179 + $0x169] sm:$0xff]
  %v7838 = vld [vmem:[%s179 + $0x171] sm:$0xff]
  %v7839 = vld [vmem:[%s179 + $0x1b1] sm:$0xff]
  %v7840 = vld [vmem:[%s179 + $0x1b9] sm:$0xff]
  %v7841 = vld [vmem:[%s179 + $0x1c9] sm:$0xff]
  %v7842 = vld [vmem:[%s179 + $0x1d1] sm:$0xff]
  %v7843 = vld [vmem:[%s179 + $0x1e1] sm:$0xff]
  %v7844 = vld [vmem:[%s179 + $0x1e9] sm:$0xff]
  %v7845 = vld [vmem:[%s179 + $0x1f9] sm:$0xff]
  %v7846 = vld [vmem:[%s179 + $0x201] sm:$0xff]
  %v7847 = vld [vmem:[%s179 + $0x211] sm:$0xff]
  %v7848 = vld [vmem:[%s179 + $0x219] sm:$0xff]
  %v7849 = vld [vmem:[%s179 + $0x229] sm:$0xff]
  %v7850 = vld [vmem:[%s179 + $0x231] sm:$0xff]
  %v7851 = vld [vmem:[%s179 + $0x241] sm:$0xff]
  %v7852 = vld [vmem:[%s179 + $0x249] sm:$0xff]
  %v7853 = vld [vmem:[%s179 + $0x259] sm:$0xff]
  %v7854 = vld [vmem:[%s179 + $0x261] sm:$0xff]
  %v7855 = vld [vmem:[%s179 + $0x271] sm:$0xff]
  %v7856 = vld [vmem:[%s179 + $0x279] sm:$0xff]
  %v7857 = vld [vmem:[%s179 + $0x289] sm:$0xff]
  %v7858 = vld [vmem:[%s179 + $0x291] sm:$0xff]
  %v7859 = vld [vmem:[%s179 + $0x2a1] sm:$0xff]
  %v7860 = vld [vmem:[%s179 + $0x2a9] sm:$0xff]
  %v7861 = vld [vmem:[%s179 + $0x2b9] sm:$0xff]
  %v7862 = vld [vmem:[%s179 + $0x2c1] sm:$0xff]
  %v7863 = vld [vmem:[%s179 + $0x2d1] sm:$0xff]
  %v7864 = vld [vmem:[%s179 + $0x2d9] sm:$0xff]
  %v7865 = vld [vmem:[%s179 + $0x2e9] sm:$0xff]
  %v7866 = vld [vmem:[%s179 + $0x2f1] sm:$0xff]
  %v7867 = vld [vmem:[%s179 + $0x301] sm:$0xff]
  %v7868 = vld [vmem:[%s179 + $0x309] sm:$0xff]
  %v7869 = vld [vmem:[%s179 + $0x319] sm:$0xff]
  %v7870 = vld [vmem:[%s179 + $0x321] sm:$0xff]
  %v7871 = vpack.c.bf16 %v7808, %v7807
  %v7872 = vpack.c.bf16 %v7810, %v7809
  %v7873 = vpack.c.bf16 %v7812, %v7811
  %v7874 = vpack.c.bf16 %v7814, %v7813
  %v7875 = vpack.c.bf16 %v7816, %v7815
  %v7876 = vpack.c.bf16 %v7818, %v7817
  %v7877 = vpack.c.bf16 %v7820, %v7819
  %v7878 = vpack.c.bf16 %v7822, %v7821
  %v7879 = vpack.c.bf16 %v7824, %v7823
  %v7880 = vpack.c.bf16 %v7826, %v7825
  %v7881 = vpack.c.bf16 %v7828, %v7827
  %v7882 = vpack.c.bf16 %v7830, %v7829
  %v7883 = vpack.c.bf16 %v7832, %v7831
  %v7884 = vpack.c.bf16 %v7834, %v7833
  %v7885 = vpack.c.bf16 %v7836, %v7835
  %v7886 = vpack.c.bf16 %v7838, %v7837
  %v7887 = vpack.c.bf16 %v7840, %v7839
  %v7888 = vpack.c.bf16 %v7842, %v7841
  %v7889 = vpack.c.bf16 %v7844, %v7843
  %v7890 = vpack.c.bf16 %v7846, %v7845
  %v7891 = vpack.c.bf16 %v7848, %v7847
  %v7892 = vpack.c.bf16 %v7850, %v7849
  %v7893 = vpack.c.bf16 %v7852, %v7851
  %v7894 = vpack.c.bf16 %v7854, %v7853
  %v7895 = vpack.c.bf16 %v7856, %v7855
  %v7896 = vpack.c.bf16 %v7858, %v7857
  %v7897 = vpack.c.bf16 %v7860, %v7859
  %v7898 = vpack.c.bf16 %v7862, %v7861
  %v7899 = vpack.c.bf16 %v7864, %v7863
  %v7900 = vpack.c.bf16 %v7866, %v7865
  %v7901 = vpack.c.bf16 %v7868, %v7867
  %v7902 = vpack.c.bf16 %v7870, %v7869
  %s7903 = scalar_lea.vmem %s4, 8
  %v7904 = vld [vmem:[%s7903] sm:$0x3]
  %v7906 = vsel %vm27, %v7871, 0
  %v7909 = vsel %vm27, %v7872, 0
  %v7912 = vsel %vm27, %v7873, 0
  %v7915 = vsel %vm27, %v7874, 0
  %v7918 = vsel %vm27, %v7875, 0
  %v7921 = vsel %vm27, %v7876, 0
  %v7924 = vsel %vm27, %v7877, 0
  %v7927 = vsel %vm27, %v7878, 0
  %v7930 = vsel %vm27, %v7879, 0
  %v7933 = vsel %vm27, %v7880, 0
  %v7936 = vsel %vm27, %v7881, 0
  %v7939 = vsel %vm27, %v7882, 0
  %v7942 = vsel %vm27, %v7883, 0
  %v7945 = vsel %vm27, %v7884, 0
  %v7948 = vsel %vm27, %v7885, 0
  %v7951 = vsel %vm27, %v7886, 0
  %v7954 = vsel %vm27, %v7887, 0
  %v7957 = vsel %vm27, %v7888, 0
  %v7960 = vsel %vm27, %v7889, 0
  %v7963 = vsel %vm27, %v7890, 0
  %v7966 = vsel %vm27, %v7891, 0
  %v7969 = vsel %vm27, %v7892, 0
  %v7972 = vsel %vm27, %v7893, 0
  %v7975 = vsel %vm27, %v7894, 0
  %v7978 = vsel %vm27, %v7895, 0
  %v7981 = vsel %vm27, %v7896, 0
  %v7984 = vsel %vm27, %v7897, 0
  %v7987 = vsel %vm27, %v7898, 0
  %v7990 = vsel %vm27, %v7899, 0
  %v7993 = vsel %vm27, %v7900, 0
  %v7996 = vsel %vm27, %v7901, 0
  %v7999 = vsel %vm27, %v7902, 0
  %v8002 = vsel %vm535, %v7904, 0
  %8004 = vmatprep.subr.bf16.mxu0 0
  %8005 = vmatpush1.bf16.msra.mxu0 %v8002
  %8006 = vmatprep.subr.bf16.mxu0 0
  %8007 = vmatpush1.bf16.msra.mxu0 0
  %8008 = vmatprep.subr.bf16.mxu0 0
  %8009 = vmatpush1.bf16.msra.mxu0 0
  %8010 = vmatprep.subr.bf16.mxu0 0
  %8011 = vmatpush1.bf16.msra.mxu0 0
  %8012 = vmatprep.subr.bf16.mxu0 0
  %8013 = vmatpush1.bf16.msra.mxu0 0
  %8014 = vmatprep.subr.bf16.mxu0 0
  %8015 = vmatpush1.bf16.msra.mxu0 0
  %8016 = vmatprep.subr.bf16.mxu0 0
  %8017 = vmatpush1.bf16.msra.mxu0 0
  %8018 = vmatprep.subr.bf16.mxu0 0
  %8019 = vmatpush1.bf16.msra.mxu0 0
  %8020 = vmatprep.subr.bf16.mxu0 0
  %8021 = vmatpush1.bf16.msra.mxu0 0
  %8022 = vmatprep.subr.bf16.mxu0 0
  %8023 = vmatpush1.bf16.msra.mxu0 0
  %8024 = vmatprep.subr.bf16.mxu0 0
  %8025 = vmatpush1.bf16.msra.mxu0 0
  %8026 = vmatprep.subr.bf16.mxu0 0
  %8027 = vmatpush1.bf16.msra.mxu0 0
  %8028 = vmatprep.subr.bf16.mxu0 0
  %8029 = vmatpush1.bf16.msra.mxu0 0
  %8030 = vmatprep.subr.bf16.mxu0 0
  %8031 = vmatpush1.bf16.msra.mxu0 0
  %8032 = vmatprep.subr.bf16.mxu0 0
  %8033 = vmatpush1.bf16.msra.mxu0 0
  %8034 = vmatprep.subr.bf16.mxu0 0
  %8035 = vmatpush1.bf16.msra.mxu0 0
  %8036 = vmatprep.mubr.bf16.mxu0 0
  %8037 = vmatmul.mubr.bf16.gmra.mrb[0].mxu0 %v7906
  %v8038 = vpop.f32.mrb[0].mxu0
  %v8039 = vadd.f32 0.0, %v8038
  %v8040 = vpop.f32.mrb[0].mxu0
  %v8041 = vpop.f32.mrb[0].mxu0
  %v8042 = vadd.f32 0.0, %v8041
  %v8043 = vpop.f32.mrb[0].mxu0
  %8044 = vmatprep.mubr.bf16.mxu0 0
  %8045 = vmatmul.mubr.bf16.gmra.mrb[0].mxu0 %v7909
  %v8046 = vpop.f32.mrb[0].mxu0
  %v8047 = vadd.f32 0.0, %v8046
  %v8048 = vpop.f32.mrb[0].mxu0
  %v8049 = vpop.f32.mrb[0].mxu0
  %v8050 = vadd.f32 0.0, %v8049
  %v8051 = vpop.f32.mrb[0].mxu0
  %8052 = vmatprep.mubr.bf16.mxu0 0
  %8053 = vmatmul.mubr.bf16.gmra.mrb[0].mxu0 %v7912
  %v8054 = vpop.f32.mrb[0].mxu0
  %v8055 = vadd.f32 0.0, %v8054
  %v8056 = vpop.f32.mrb[0].mxu0
  %v8057 = vpop.f32.mrb[0].mxu0
  %v8058 = vadd.f32 0.0, %v8057
  %v8059 = vpop.f32.mrb[0].mxu0
  %8060 = vmatprep.mubr.bf16.mxu0 0
  %8061 = vmatmul.mubr.bf16.gmra.mrb[0].mxu0 %v7915
  %v8062 = vpop.f32.mrb[0].mxu0
  %v8063 = vadd.f32 0.0, %v8062
  %v8064 = vpop.f32.mrb[0].mxu0
  %v8065 = vpop.f32.mrb[0].mxu0
  %v8066 = vadd.f32 0.0, %v8065
  %v8067 = vpop.f32.mrb[0].mxu0
  %8068 = vmatprep.mubr.bf16.mxu0 0
  %8069 = vmatmul.mubr.bf16.gmra.mrb[0].mxu0 %v7918
  %v8070 = vpop.f32.mrb[0].mxu0
  %v8071 = vadd.f32 0.0, %v8070
  %v8072 = vpop.f32.mrb[0].mxu0
  %v8073 = vpop.f32.mrb[0].mxu0
  %v8074 = vadd.f32 0.0, %v8073
  %v8075 = vpop.f32.mrb[0].mxu0
  %8076 = vmatprep.mubr.bf16.mxu0 0
  %8077 = vmatmul.mubr.bf16.gmra.mrb[0].mxu0 %v7921
  %v8078 = vpop.f32.mrb[0].mxu0
  %v8079 = vadd.f32 0.0, %v8078
  %v8080 = vpop.f32.mrb[0].mxu0
  %v8081 = vpop.f32.mrb[0].mxu0
  %v8082 = vadd.f32 0.0, %v8081
  %v8083 = vpop.f32.mrb[0].mxu0
  %8084 = vmatprep.mubr.bf16.mxu0 0
  %8085 = vmatmul.mubr.bf16.gmra.mrb[0].mxu0 %v7924
  %v8086 = vpop.f32.mrb[0].mxu0
  %v8087 = vadd.f32 0.0, %v8086
  %v8088 = vpop.f32.mrb[0].mxu0
  %v8089 = vpop.f32.mrb[0].mxu0
  %v8090 = vadd.f32 0.0, %v8089
  %v8091 = vpop.f32.mrb[0].mxu0
  %8092 = vmatprep.mubr.bf16.mxu0 0
  %8093 = vmatmul.mubr.bf16.gmra.mrb[0].mxu0 %v7927
  %v8094 = vpop.f32.mrb[0].mxu0
  %v8095 = vadd.f32 0.0, %v8094
  %v8096 = vpop.f32.mrb[0].mxu0
  %v8097 = vpop.f32.mrb[0].mxu0
  %v8098 = vadd.f32 0.0, %v8097
  %v8099 = vpop.f32.mrb[0].mxu0
  %8100 = vmatprep.mubr.bf16.mxu0 0
  %8101 = vmatmul.mubr.bf16.gmra.mrb[0].mxu0 %v7930
  %v8102 = vpop.f32.mrb[0].mxu0
  %v8103 = vadd.f32 0.0, %v8102
  %v8104 = vpop.f32.mrb[0].mxu0
  %v8105 = vpop.f32.mrb[0].mxu0
  %v8106 = vadd.f32 0.0, %v8105
  %v8107 = vpop.f32.mrb[0].mxu0
  %8108 = vmatprep.mubr.bf16.mxu0 0
  %8109 = vmatmul.mubr.bf16.gmra.mrb[0].mxu0 %v7933
  %v8110 = vpop.f32.mrb[0].mxu0
  %v8111 = vadd.f32 0.0, %v8110
  %v8112 = vpop.f32.mrb[0].mxu0
  %v8113 = vpop.f32.mrb[0].mxu0
  %v8114 = vadd.f32 0.0, %v8113
  %v8115 = vpop.f32.mrb[0].mxu0
  %8116 = vmatprep.mubr.bf16.mxu0 0
  %8117 = vmatmul.mubr.bf16.gmra.mrb[0].mxu0 %v7936
  %v8118 = vpop.f32.mrb[0].mxu0
  %v8119 = vadd.f32 0.0, %v8118
  %v8120 = vpop.f32.mrb[0].mxu0
  %v8121 = vpop.f32.mrb[0].mxu0
  %v8122 = vadd.f32 0.0, %v8121
  %v8123 = vpop.f32.mrb[0].mxu0
  %8124 = vmatprep.mubr.bf16.mxu0 0
  %8125 = vmatmul.mubr.bf16.gmra.mrb[0].mxu0 %v7939
  %v8126 = vpop.f32.mrb[0].mxu0
  %v8127 = vadd.f32 0.0, %v8126
  %v8128 = vpop.f32.mrb[0].mxu0
  %v8129 = vpop.f32.mrb[0].mxu0
  %v8130 = vadd.f32 0.0, %v8129
  %v8131 = vpop.f32.mrb[0].mxu0
  %8132 = vmatprep.mubr.bf16.mxu0 0
  %8133 = vmatmul.mubr.bf16.gmra.mrb[0].mxu0 %v7942
  %v8134 = vpop.f32.mrb[0].mxu0
  %v8135 = vadd.f32 0.0, %v8134
  %v8136 = vpop.f32.mrb[0].mxu0
  %v8137 = vpop.f32.mrb[0].mxu0
  %v8138 = vadd.f32 0.0, %v8137
  %v8139 = vpop.f32.mrb[0].mxu0
  %8140 = vmatprep.mubr.bf16.mxu0 0
  %8141 = vmatmul.mubr.bf16.gmra.mrb[0].mxu0 %v7945
  %v8142 = vpop.f32.mrb[0].mxu0
  %v8143 = vadd.f32 0.0, %v8142
  %v8144 = vpop.f32.mrb[0].mxu0
  %v8145 = vpop.f32.mrb[0].mxu0
  %v8146 = vadd.f32 0.0, %v8145
  %v8147 = vpop.f32.mrb[0].mxu0
  %8148 = vmatprep.mubr.bf16.mxu0 0
  %8149 = vmatmul.mubr.bf16.gmra.mrb[0].mxu0 %v7948
  %v8150 = vpop.f32.mrb[0].mxu0
  %v8151 = vadd.f32 0.0, %v8150
  %v8152 = vpop.f32.mrb[0].mxu0
  %v8153 = vpop.f32.mrb[0].mxu0
  %v8154 = vadd.f32 0.0, %v8153
  %v8155 = vpop.f32.mrb[0].mxu0
  %8156 = vmatprep.mubr.bf16.mxu0 0
  %8157 = vmatmul.mubr.bf16.gmra.mrb[0].mxu0 %v7951
  %v8158 = vpop.f32.mrb[0].mxu0
  %v8159 = vadd.f32 0.0, %v8158
  %v8160 = vpop.f32.mrb[0].mxu0
  %v8161 = vpop.f32.mrb[0].mxu0
  %v8162 = vadd.f32 0.0, %v8161
  %v8163 = vpop.f32.mrb[0].mxu0
  %8164 = vmatprep.mubr.bf16.mxu0 0
  %8165 = vmatmul.mubr.bf16.gmra.mrb[0].mxu0 %v7954
  %v8166 = vpop.f32.mrb[0].mxu0
  %v8167 = vadd.f32 0.0, %v8166
  %v8168 = vpop.f32.mrb[0].mxu0
  %v8169 = vpop.f32.mrb[0].mxu0
  %v8170 = vadd.f32 0.0, %v8169
  %v8171 = vpop.f32.mrb[0].mxu0
  %8172 = vmatprep.mubr.bf16.mxu0 0
  %8173 = vmatmul.mubr.bf16.gmra.mrb[0].mxu0 %v7957
  %v8174 = vpop.f32.mrb[0].mxu0
  %v8175 = vadd.f32 0.0, %v8174
  %v8176 = vpop.f32.mrb[0].mxu0
  %v8177 = vpop.f32.mrb[0].mxu0
  %v8178 = vadd.f32 0.0, %v8177
  %v8179 = vpop.f32.mrb[0].mxu0
  %8180 = vmatprep.mubr.bf16.mxu0 0
  %8181 = vmatmul.mubr.bf16.gmra.mrb[0].mxu0 %v7960
  %v8182 = vpop.f32.mrb[0].mxu0
  %v8183 = vadd.f32 0.0, %v8182
  %v8184 = vpop.f32.mrb[0].mxu0
  %v8185 = vpop.f32.mrb[0].mxu0
  %v8186 = vadd.f32 0.0, %v8185
  %v8187 = vpop.f32.mrb[0].mxu0
  %8188 = vmatprep.mubr.bf16.mxu0 0
  %8189 = vmatmul.mubr.bf16.gmra.mrb[0].mxu0 %v7963
  %v8190 = vpop.f32.mrb[0].mxu0
  %v8191 = vadd.f32 0.0, %v8190
  %v8192 = vpop.f32.mrb[0].mxu0
  %v8193 = vpop.f32.mrb[0].mxu0
  %v8194 = vadd.f32 0.0, %v8193
  %v8195 = vpop.f32.mrb[0].mxu0
  %8196 = vmatprep.mubr.bf16.mxu0 0
  %8197 = vmatmul.mubr.bf16.gmra.mrb[0].mxu0 %v7966
  %v8198 = vpop.f32.mrb[0].mxu0
  %v8199 = vadd.f32 0.0, %v8198
  %v8200 = vpop.f32.mrb[0].mxu0
  %v8201 = vpop.f32.mrb[0].mxu0
  %v8202 = vadd.f32 0.0, %v8201
  %v8203 = vpop.f32.mrb[0].mxu0
  %8204 = vmatprep.mubr.bf16.mxu0 0
  %8205 = vmatmul.mubr.bf16.gmra.mrb[0].mxu0 %v7969
  %v8206 = vpop.f32.mrb[0].mxu0
  %v8207 = vadd.f32 0.0, %v8206
  %v8208 = vpop.f32.mrb[0].mxu0
  %v8209 = vpop.f32.mrb[0].mxu0
  %v8210 = vadd.f32 0.0, %v8209
  %v8211 = vpop.f32.mrb[0].mxu0
  %8212 = vmatprep.mubr.bf16.mxu0 0
  %8213 = vmatmul.mubr.bf16.gmra.mrb[0].mxu0 %v7972
  %v8214 = vpop.f32.mrb[0].mxu0
  %v8215 = vadd.f32 0.0, %v8214
  %v8216 = vpop.f32.mrb[0].mxu0
  %v8217 = vpop.f32.mrb[0].mxu0
  %v8218 = vadd.f32 0.0, %v8217
  %v8219 = vpop.f32.mrb[0].mxu0
  %8220 = vmatprep.mubr.bf16.mxu0 0
  %8221 = vmatmul.mubr.bf16.gmra.mrb[0].mxu0 %v7975
  %v8222 = vpop.f32.mrb[0].mxu0
  %v8223 = vadd.f32 0.0, %v8222
  %v8224 = vpop.f32.mrb[0].mxu0
  %v8225 = vpop.f32.mrb[0].mxu0
  %v8226 = vadd.f32 0.0, %v8225
  %v8227 = vpop.f32.mrb[0].mxu0
  %8228 = vmatprep.mubr.bf16.mxu0 0
  %8229 = vmatmul.mubr.bf16.gmra.mrb[0].mxu0 %v7978
  %v8230 = vpop.f32.mrb[0].mxu0
  %v8231 = vadd.f32 0.0, %v8230
  %v8232 = vpop.f32.mrb[0].mxu0
  %v8233 = vpop.f32.mrb[0].mxu0
  %v8234 = vadd.f32 0.0, %v8233
  %v8235 = vpop.f32.mrb[0].mxu0
  %8236 = vmatprep.mubr.bf16.mxu0 0
  %8237 = vmatmul.mubr.bf16.gmra.mrb[0].mxu0 %v7981
  %v8238 = vpop.f32.mrb[0].mxu0
  %v8239 = vadd.f32 0.0, %v8238
  %v8240 = vpop.f32.mrb[0].mxu0
  %v8241 = vpop.f32.mrb[0].mxu0
  %v8242 = vadd.f32 0.0, %v8241
  %v8243 = vpop.f32.mrb[0].mxu0
  %8244 = vmatprep.mubr.bf16.mxu0 0
  %8245 = vmatmul.mubr.bf16.gmra.mrb[0].mxu0 %v7984
  %v8246 = vpop.f32.mrb[0].mxu0
  %v8247 = vadd.f32 0.0, %v8246
  %v8248 = vpop.f32.mrb[0].mxu0
  %v8249 = vpop.f32.mrb[0].mxu0
  %v8250 = vadd.f32 0.0, %v8249
  %v8251 = vpop.f32.mrb[0].mxu0
  %8252 = vmatprep.mubr.bf16.mxu0 0
  %8253 = vmatmul.mubr.bf16.gmra.mrb[0].mxu0 %v7987
  %v8254 = vpop.f32.mrb[0].mxu0
  %v8255 = vadd.f32 0.0, %v8254
  %v8256 = vpop.f32.mrb[0].mxu0
  %v8257 = vpop.f32.mrb[0].mxu0
  %v8258 = vadd.f32 0.0, %v8257
  %v8259 = vpop.f32.mrb[0].mxu0
  %8260 = vmatprep.mubr.bf16.mxu0 0
  %8261 = vmatmul.mubr.bf16.gmra.mrb[0].mxu0 %v7990
  %v8262 = vpop.f32.mrb[0].mxu0
  %v8263 = vadd.f32 0.0, %v8262
  %v8264 = vpop.f32.mrb[0].mxu0
  %v8265 = vpop.f32.mrb[0].mxu0
  %v8266 = vadd.f32 0.0, %v8265
  %v8267 = vpop.f32.mrb[0].mxu0
  %8268 = vmatprep.mubr.bf16.mxu0 0
  %8269 = vmatmul.mubr.bf16.gmra.mrb[0].mxu0 %v7993
  %v8270 = vpop.f32.mrb[0].mxu0
  %v8271 = vadd.f32 0.0, %v8270
  %v8272 = vpop.f32.mrb[0].mxu0
  %v8273 = vpop.f32.mrb[0].mxu0
  %v8274 = vadd.f32 0.0, %v8273
  %v8275 = vpop.f32.mrb[0].mxu0
  %8276 = vmatprep.mubr.bf16.mxu0 0
  %8277 = vmatmul.mubr.bf16.gmra.mrb[0].mxu0 %v7996
  %v8278 = vpop.f32.mrb[0].mxu0
  %v8279 = vadd.f32 0.0, %v8278
  %v8280 = vpop.f32.mrb[0].mxu0
  %v8281 = vpop.f32.mrb[0].mxu0
  %v8282 = vadd.f32 0.0, %v8281
  %v8283 = vpop.f32.mrb[0].mxu0
  %8284 = vmatprep.mubr.bf16.mxu0 0
  %8285 = vmatmul.mubr.bf16.gmra.mrb[0].mxu0 %v7999
  %v8286 = vpop.f32.mrb[0].mxu0
  %v8287 = vadd.f32 0.0, %v8286
  %v8288 = vpop.f32.mrb[0].mxu0
  %v8289 = vpop.f32.mrb[0].mxu0
  %v8290 = vadd.f32 0.0, %v8289
  %v8291 = vpop.f32.mrb[0].mxu0
  %8292 = vdwg.mxu0
  %v8293 = vadd.f32 %v7743, %v8039
  %v8294 = vadd.f32 %v7744, %v8042
  %v8295 = vadd.f32 %v7745, %v8047
  %v8296 = vadd.f32 %v7746, %v8050
  %v8297 = vadd.f32 %v7747, %v8055
  %v8298 = vadd.f32 %v7748, %v8058
  %v8299 = vadd.f32 %v7749, %v8063
  %v8300 = vadd.f32 %v7750, %v8066
  %v8301 = vadd.f32 %v7751, %v8071
  %v8302 = vadd.f32 %v7752, %v8074
  %v8303 = vadd.f32 %v7753, %v8079
  %v8304 = vadd.f32 %v7754, %v8082
  %v8305 = vadd.f32 %v7755, %v8087
  %v8306 = vadd.f32 %v7756, %v8090
  %v8307 = vadd.f32 %v7757, %v8095
  %v8308 = vadd.f32 %v7758, %v8098
  %v8309 = vadd.f32 %v7759, %v8103
  %v8310 = vadd.f32 %v7760, %v8106
  %v8311 = vadd.f32 %v7761, %v8111
  %v8312 = vadd.f32 %v7762, %v8114
  %v8313 = vadd.f32 %v7763, %v8119
  %v8314 = vadd.f32 %v7764, %v8122
  %v8315 = vadd.f32 %v7765, %v8127
  %v8316 = vadd.f32 %v7766, %v8130
  %v8317 = vadd.f32 %v7767, %v8135
  %v8318 = vadd.f32 %v7768, %v8138
  %v8319 = vadd.f32 %v7769, %v8143
  %v8320 = vadd.f32 %v7770, %v8146
  %v8321 = vadd.f32 %v7771, %v8151
  %v8322 = vadd.f32 %v7772, %v8154
  %v8323 = vadd.f32 %v7773, %v8159
  %v8324 = vadd.f32 %v7774, %v8162
  %v8325 = vadd.f32 %v7775, %v8167
  %v8326 = vadd.f32 %v7776, %v8170
  %v8327 = vadd.f32 %v7777, %v8175
  %v8328 = vadd.f32 %v7778, %v8178
  %v8329 = vadd.f32 %v7779, %v8183
  %v8330 = vadd.f32 %v7780, %v8186
  %v8331 = vadd.f32 %v7781, %v8191
  %v8332 = vadd.f32 %v7782, %v8194
  %v8333 = vadd.f32 %v7783, %v8199
  %v8334 = vadd.f32 %v7784, %v8202
  %v8335 = vadd.f32 %v7785, %v8207
  %v8336 = vadd.f32 %v7786, %v8210
  %v8337 = vadd.f32 %v7787, %v8215
  %v8338 = vadd.f32 %v7788, %v8218
  %v8339 = vadd.f32 %v7789, %v8223
  %v8340 = vadd.f32 %v7790, %v8226
  %v8341 = vadd.f32 %v7791, %v8231
  %v8342 = vadd.f32 %v7792, %v8234
  %v8343 = vadd.f32 %v7793, %v8239
  %v8344 = vadd.f32 %v7794, %v8242
  %v8345 = vadd.f32 %v7795, %v8247
  %v8346 = vadd.f32 %v7796, %v8250
  %v8347 = vadd.f32 %v7797, %v8255
  %v8348 = vadd.f32 %v7798, %v8258
  %v8349 = vadd.f32 %v7799, %v8263
  %v8350 = vadd.f32 %v7800, %v8266
  %v8351 = vadd.f32 %v7801, %v8271
  %v8352 = vadd.f32 %v7802, %v8274
  %v8353 = vadd.f32 %v7803, %v8279
  %v8354 = vadd.f32 %v7804, %v8282
  %v8355 = vadd.f32 %v7805, %v8287
  %v8356 = vadd.f32 %v7806, %v8290
  %v8357 = vld [vmem:[%s179 + $0x2] sm:$0xff]
  %v8358 = vld [vmem:[%s179 + $0xa] sm:$0xff]
  %v8359 = vld [vmem:[%s179 + $0x1a] sm:$0xff]
  %v8360 = vld [vmem:[%s179 + $0x22] sm:$0xff]
  %v8361 = vld [vmem:[%s179 + $0x32] sm:$0xff]
  %v8362 = vld [vmem:[%s179 + $0x3a] sm:$0xff]
  %v8363 = vld [vmem:[%s179 + $0x4a] sm:$0xff]
  %v8364 = vld [vmem:[%s179 + $0x52] sm:$0xff]
  %v8365 = vld [vmem:[%s179 + $0x62] sm:$0xff]
  %v8366 = vld [vmem:[%s179 + $0x6a] sm:$0xff]
  %v8367 = vld [vmem:[%s179 + $0x7a] sm:$0xff]
  %v8368 = vld [vmem:[%s179 + $0x82] sm:$0xff]
  %v8369 = vld [vmem:[%s179 + $0x92] sm:$0xff]
  %v8370 = vld [vmem:[%s179 + $0x9a] sm:$0xff]
  %v8371 = vld [vmem:[%s179 + $0xaa] sm:$0xff]
  %v8372 = vld [vmem:[%s179 + $0xb2] sm:$0xff]
  %v8373 = vld [vmem:[%s179 + $0xc2] sm:$0xff]
  %v8374 = vld [vmem:[%s179 + $0xca] sm:$0xff]
  %v8375 = vld [vmem:[%s179 + $0xda] sm:$0xff]
  %v8376 = vld [vmem:[%s179 + $0xe2] sm:$0xff]
  %v8377 = vld [vmem:[%s179 + $0xf2] sm:$0xff]
  %v8378 = vld [vmem:[%s179 + $0xfa] sm:$0xff]
  %v8379 = vld [vmem:[%s179 + $0x10a] sm:$0xff]
  %v8380 = vld [vmem:[%s179 + $0x112] sm:$0xff]
  %v8381 = vld [vmem:[%s179 + $0x122] sm:$0xff]
  %v8382 = vld [vmem:[%s179 + $0x12a] sm:$0xff]
  %v8383 = vld [vmem:[%s179 + $0x13a] sm:$0xff]
  %v8384 = vld [vmem:[%s179 + $0x142] sm:$0xff]
  %v8385 = vld [vmem:[%s179 + $0x152] sm:$0xff]
  %v8386 = vld [vmem:[%s179 + $0x15a] sm:$0xff]
  %v8387 = vld [vmem:[%s179 + $0x16a] sm:$0xff]
  %v8388 = vld [vmem:[%s179 + $0x172] sm:$0xff]
  %v8389 = vld [vmem:[%s179 + $0x1b2] sm:$0xff]
  %v8390 = vld [vmem:[%s179 + $0x1ba] sm:$0xff]
  %v8391 = vld [vmem:[%s179 + $0x1ca] sm:$0xff]
  %v8392 = vld [vmem:[%s179 + $0x1d2] sm:$0xff]
  %v8393 = vld [vmem:[%s179 + $0x1e2] sm:$0xff]
  %v8394 = vld [vmem:[%s179 + $0x1ea] sm:$0xff]
  %v8395 = vld [vmem:[%s179 + $0x1fa] sm:$0xff]
  %v8396 = vld [vmem:[%s179 + $0x202] sm:$0xff]
  %v8397 = vld [vmem:[%s179 + $0x212] sm:$0xff]
  %v8398 = vld [vmem:[%s179 + $0x21a] sm:$0xff]
  %v8399 = vld [vmem:[%s179 + $0x22a] sm:$0xff]
  %v8400 = vld [vmem:[%s179 + $0x232] sm:$0xff]
  %v8401 = vld [vmem:[%s179 + $0x242] sm:$0xff]
  %v8402 = vld [vmem:[%s179 + $0x24a] sm:$0xff]
  %v8403 = vld [vmem:[%s179 + $0x25a] sm:$0xff]
  %v8404 = vld [vmem:[%s179 + $0x262] sm:$0xff]
  %v8405 = vld [vmem:[%s179 + $0x272] sm:$0xff]
  %v8406 = vld [vmem:[%s179 + $0x27a] sm:$0xff]
  %v8407 = vld [vmem:[%s179 + $0x28a] sm:$0xff]
  %v8408 = vld [vmem:[%s179 + $0x292] sm:$0xff]
  %v8409 = vld [vmem:[%s179 + $0x2a2] sm:$0xff]
  %v8410 = vld [vmem:[%s179 + $0x2aa] sm:$0xff]
  %v8411 = vld [vmem:[%s179 + $0x2ba] sm:$0xff]
  %v8412 = vld [vmem:[%s179 + $0x2c2] sm:$0xff]
  %v8413 = vld [vmem:[%s179 + $0x2d2] sm:$0xff]
  %v8414 = vld [vmem:[%s179 + $0x2da] sm:$0xff]
  %v8415 = vld [vmem:[%s179 + $0x2ea] sm:$0xff]
  %v8416 = vld [vmem:[%s179 + $0x2f2] sm:$0xff]
  %v8417 = vld [vmem:[%s179 + $0x302] sm:$0xff]
  %v8418 = vld [vmem:[%s179 + $0x30a] sm:$0xff]
  %v8419 = vld [vmem:[%s179 + $0x31a] sm:$0xff]
  %v8420 = vld [vmem:[%s179 + $0x322] sm:$0xff]
  %v8421 = vpack.c.bf16 %v8358, %v8357
  %v8422 = vpack.c.bf16 %v8360, %v8359
  %v8423 = vpack.c.bf16 %v8362, %v8361
  %v8424 = vpack.c.bf16 %v8364, %v8363
  %v8425 = vpack.c.bf16 %v8366, %v8365
  %v8426 = vpack.c.bf16 %v8368, %v8367
  %v8427 = vpack.c.bf16 %v8370, %v8369
  %v8428 = vpack.c.bf16 %v8372, %v8371
  %v8429 = vpack.c.bf16 %v8374, %v8373
  %v8430 = vpack.c.bf16 %v8376, %v8375
  %v8431 = vpack.c.bf16 %v8378, %v8377
  %v8432 = vpack.c.bf16 %v8380, %v8379
  %v8433 = vpack.c.bf16 %v8382, %v8381
  %v8434 = vpack.c.bf16 %v8384, %v8383
  %v8435 = vpack.c.bf16 %v8386, %v8385
  %v8436 = vpack.c.bf16 %v8388, %v8387
  %v8437 = vpack.c.bf16 %v8390, %v8389
  %v8438 = vpack.c.bf16 %v8392, %v8391
  %v8439 = vpack.c.bf16 %v8394, %v8393
  %v8440 = vpack.c.bf16 %v8396, %v8395
  %v8441 = vpack.c.bf16 %v8398, %v8397
  %v8442 = vpack.c.bf16 %v8400, %v8399
  %v8443 = vpack.c.bf16 %v8402, %v8401
  %v8444 = vpack.c.bf16 %v8404, %v8403
  %v8445 = vpack.c.bf16 %v8406, %v8405
  %v8446 = vpack.c.bf16 %v8408, %v8407
  %v8447 = vpack.c.bf16 %v8410, %v8409
  %v8448 = vpack.c.bf16 %v8412, %v8411
  %v8449 = vpack.c.bf16 %v8414, %v8413
  %v8450 = vpack.c.bf16 %v8416, %v8415
  %v8451 = vpack.c.bf16 %v8418, %v8417
  %v8452 = vpack.c.bf16 %v8420, %v8419
  %s8453 = scalar_lea.vmem %s4, 10
  %v8454 = vld [vmem:[%s8453] sm:$0x3]
  %v8456 = vsel %vm27, %v8421, 0
  %v8459 = vsel %vm27, %v8422, 0
  %v8462 = vsel %vm27, %v8423, 0
  %v8465 = vsel %vm27, %v8424, 0
  %v8468 = vsel %vm27, %v8425, 0
  %v8471 = vsel %vm27, %v8426, 0
  %v8474 = vsel %vm27, %v8427, 0
  %v8477 = vsel %vm27, %v8428, 0
  %v8480 = vsel %vm27, %v8429, 0
  %v8483 = vsel %vm27, %v8430, 0
  %v8486 = vsel %vm27, %v8431, 0
  %v8489 = vsel %vm27, %v8432, 0
  %v8492 = vsel %vm27, %v8433, 0
  %v8495 = vsel %vm27, %v8434, 0
  %v8498 = vsel %vm27, %v8435, 0
  %v8501 = vsel %vm27, %v8436, 0
  %v8504 = vsel %vm27, %v8437, 0
  %v8507 = vsel %vm27, %v8438, 0
  %v8510 = vsel %vm27, %v8439, 0
  %v8513 = vsel %vm27, %v8440, 0
  %v8516 = vsel %vm27, %v8441, 0
  %v8519 = vsel %vm27, %v8442, 0
  %v8522 = vsel %vm27, %v8443, 0
  %v8525 = vsel %vm27, %v8444, 0
  %v8528 = vsel %vm27, %v8445, 0
  %v8531 = vsel %vm27, %v8446, 0
  %v8534 = vsel %vm27, %v8447, 0
  %v8537 = vsel %vm27, %v8448, 0
  %v8540 = vsel %vm27, %v8449, 0
  %v8543 = vsel %vm27, %v8450, 0
  %v8546 = vsel %vm27, %v8451, 0
  %v8549 = vsel %vm27, %v8452, 0
  %v8552 = vsel %vm535, %v8454, 0
  %8554 = vmatprep.subr.bf16.mxu0 0
  %8555 = vmatpush1.bf16.msra.mxu0 %v8552
  %8556 = vmatprep.subr.bf16.mxu0 0
  %8557 = vmatpush1.bf16.msra.mxu0 0
  %8558 = vmatprep.subr.bf16.mxu0 0
  %8559 = vmatpush1.bf16.msra.mxu0 0
  %8560 = vmatprep.subr.bf16.mxu0 0
  %8561 = vmatpush1.bf16.msra.mxu0 0
  %8562 = vmatprep.subr.bf16.mxu0 0
  %8563 = vmatpush1.bf16.msra.mxu0 0
  %8564 = vmatprep.subr.bf16.mxu0 0
  %8565 = vmatpush1.bf16.msra.mxu0 0
  %8566 = vmatprep.subr.bf16.mxu0 0
  %8567 = vmatpush1.bf16.msra.mxu0 0
  %8568 = vmatprep.subr.bf16.mxu0 0
  %8569 = vmatpush1.bf16.msra.mxu0 0
  %8570 = vmatprep.subr.bf16.mxu0 0
  %8571 = vmatpush1.bf16.msra.mxu0 0
  %8572 = vmatprep.subr.bf16.mxu0 0
  %8573 = vmatpush1.bf16.msra.mxu0 0
  %8574 = vmatprep.subr.bf16.mxu0 0
  %8575 = vmatpush1.bf16.msra.mxu0 0
  %8576 = vmatprep.subr.bf16.mxu0 0
  %8577 = vmatpush1.bf16.msra.mxu0 0
  %8578 = vmatprep.subr.bf16.mxu0 0
  %8579 = vmatpush1.bf16.msra.mxu0 0
  %8580 = vmatprep.subr.bf16.mxu0 0
  %8581 = vmatpush1.bf16.msra.mxu0 0
  %8582 = vmatprep.subr.bf16.mxu0 0
  %8583 = vmatpush1.bf16.msra.mxu0 0
  %8584 = vmatprep.subr.bf16.mxu0 0
  %8585 = vmatpush1.bf16.msra.mxu0 0
  %8586 = vmatprep.mubr.bf16.mxu0 0
  %8587 = vmatmul.mubr.bf16.gmra.mrb[0].mxu0 %v8456
  %v8588 = vpop.f32.mrb[0].mxu0
  %v8589 = vadd.f32 0.0, %v8588
  %v8590 = vpop.f32.mrb[0].mxu0
  %v8591 = vpop.f32.mrb[0].mxu0
  %v8592 = vadd.f32 0.0, %v8591
  %v8593 = vpop.f32.mrb[0].mxu0
  %8594 = vmatprep.mubr.bf16.mxu0 0
  %8595 = vmatmul.mubr.bf16.gmra.mrb[0].mxu0 %v8459
  %v8596 = vpop.f32.mrb[0].mxu0
  %v8597 = vadd.f32 0.0, %v8596
  %v8598 = vpop.f32.mrb[0].mxu0
  %v8599 = vpop.f32.mrb[0].mxu0
  %v8600 = vadd.f32 0.0, %v8599
  %v8601 = vpop.f32.mrb[0].mxu0
  %8602 = vmatprep.mubr.bf16.mxu0 0
  %8603 = vmatmul.mubr.bf16.gmra.mrb[0].mxu0 %v8462
  %v8604 = vpop.f32.mrb[0].mxu0
  %v8605 = vadd.f32 0.0, %v8604
  %v8606 = vpop.f32.mrb[0].mxu0
  %v8607 = vpop.f32.mrb[0].mxu0
  %v8608 = vadd.f32 0.0, %v8607
  %v8609 = vpop.f32.mrb[0].mxu0
  %8610 = vmatprep.mubr.bf16.mxu0 0
  %8611 = vmatmul.mubr.bf16.gmra.mrb[0].mxu0 %v8465
  %v8612 = vpop.f32.mrb[0].mxu0
  %v8613 = vadd.f32 0.0, %v8612
  %v8614 = vpop.f32.mrb[0].mxu0
  %v8615 = vpop.f32.mrb[0].mxu0
  %v8616 = vadd.f32 0.0, %v8615
  %v8617 = vpop.f32.mrb[0].mxu0
  %8618 = vmatprep.mubr.bf16.mxu0 0
  %8619 = vmatmul.mubr.bf16.gmra.mrb[0].mxu0 %v8468
  %v8620 = vpop.f32.mrb[0].mxu0
  %v8621 = vadd.f32 0.0, %v8620
  %v8622 = vpop.f32.mrb[0].mxu0
  %v8623 = vpop.f32.mrb[0].mxu0
  %v8624 = vadd.f32 0.0, %v8623
  %v8625 = vpop.f32.mrb[0].mxu0
  %8626 = vmatprep.mubr.bf16.mxu0 0
  %8627 = vmatmul.mubr.bf16.gmra.mrb[0].mxu0 %v8471
  %v8628 = vpop.f32.mrb[0].mxu0
  %v8629 = vadd.f32 0.0, %v8628
  %v8630 = vpop.f32.mrb[0].mxu0
  %v8631 = vpop.f32.mrb[0].mxu0
  %v8632 = vadd.f32 0.0, %v8631
  %v8633 = vpop.f32.mrb[0].mxu0
  %8634 = vmatprep.mubr.bf16.mxu0 0
  %8635 = vmatmul.mubr.bf16.gmra.mrb[0].mxu0 %v8474
  %v8636 = vpop.f32.mrb[0].mxu0
  %v8637 = vadd.f32 0.0, %v8636
  %v8638 = vpop.f32.mrb[0].mxu0
  %v8639 = vpop.f32.mrb[0].mxu0
  %v8640 = vadd.f32 0.0, %v8639
  %v8641 = vpop.f32.mrb[0].mxu0
  %8642 = vmatprep.mubr.bf16.mxu0 0
  %8643 = vmatmul.mubr.bf16.gmra.mrb[0].mxu0 %v8477
  %v8644 = vpop.f32.mrb[0].mxu0
  %v8645 = vadd.f32 0.0, %v8644
  %v8646 = vpop.f32.mrb[0].mxu0
  %v8647 = vpop.f32.mrb[0].mxu0
  %v8648 = vadd.f32 0.0, %v8647
  %v8649 = vpop.f32.mrb[0].mxu0
  %8650 = vmatprep.mubr.bf16.mxu0 0
  %8651 = vmatmul.mubr.bf16.gmra.mrb[0].mxu0 %v8480
  %v8652 = vpop.f32.mrb[0].mxu0
  %v8653 = vadd.f32 0.0, %v8652
  %v8654 = vpop.f32.mrb[0].mxu0
  %v8655 = vpop.f32.mrb[0].mxu0
  %v8656 = vadd.f32 0.0, %v8655
  %v8657 = vpop.f32.mrb[0].mxu0
  %8658 = vmatprep.mubr.bf16.mxu0 0
  %8659 = vmatmul.mubr.bf16.gmra.mrb[0].mxu0 %v8483
  %v8660 = vpop.f32.mrb[0].mxu0
  %v8661 = vadd.f32 0.0, %v8660
  %v8662 = vpop.f32.mrb[0].mxu0
  %v8663 = vpop.f32.mrb[0].mxu0
  %v8664 = vadd.f32 0.0, %v8663
  %v8665 = vpop.f32.mrb[0].mxu0
  %8666 = vmatprep.mubr.bf16.mxu0 0
  %8667 = vmatmul.mubr.bf16.gmra.mrb[0].mxu0 %v8486
  %v8668 = vpop.f32.mrb[0].mxu0
  %v8669 = vadd.f32 0.0, %v8668
  %v8670 = vpop.f32.mrb[0].mxu0
  %v8671 = vpop.f32.mrb[0].mxu0
  %v8672 = vadd.f32 0.0, %v8671
  %v8673 = vpop.f32.mrb[0].mxu0
  %8674 = vmatprep.mubr.bf16.mxu0 0
  %8675 = vmatmul.mubr.bf16.gmra.mrb[0].mxu0 %v8489
  %v8676 = vpop.f32.mrb[0].mxu0
  %v8677 = vadd.f32 0.0, %v8676
  %v8678 = vpop.f32.mrb[0].mxu0
  %v8679 = vpop.f32.mrb[0].mxu0
  %v8680 = vadd.f32 0.0, %v8679
  %v8681 = vpop.f32.mrb[0].mxu0
  %8682 = vmatprep.mubr.bf16.mxu0 0
  %8683 = vmatmul.mubr.bf16.gmra.mrb[0].mxu0 %v8492
  %v8684 = vpop.f32.mrb[0].mxu0
  %v8685 = vadd.f32 0.0, %v8684
  %v8686 = vpop.f32.mrb[0].mxu0
  %v8687 = vpop.f32.mrb[0].mxu0
  %v8688 = vadd.f32 0.0, %v8687
  %v8689 = vpop.f32.mrb[0].mxu0
  %8690 = vmatprep.mubr.bf16.mxu0 0
  %8691 = vmatmul.mubr.bf16.gmra.mrb[0].mxu0 %v8495
  %v8692 = vpop.f32.mrb[0].mxu0
  %v8693 = vadd.f32 0.0, %v8692
  %v8694 = vpop.f32.mrb[0].mxu0
  %v8695 = vpop.f32.mrb[0].mxu0
  %v8696 = vadd.f32 0.0, %v8695
  %v8697 = vpop.f32.mrb[0].mxu0
  %8698 = vmatprep.mubr.bf16.mxu0 0
  %8699 = vmatmul.mubr.bf16.gmra.mrb[0].mxu0 %v8498
  %v8700 = vpop.f32.mrb[0].mxu0
  %v8701 = vadd.f32 0.0, %v8700
  %v8702 = vpop.f32.mrb[0].mxu0
  %v8703 = vpop.f32.mrb[0].mxu0
  %v8704 = vadd.f32 0.0, %v8703
  %v8705 = vpop.f32.mrb[0].mxu0
  %8706 = vmatprep.mubr.bf16.mxu0 0
  %8707 = vmatmul.mubr.bf16.gmra.mrb[0].mxu0 %v8501
  %v8708 = vpop.f32.mrb[0].mxu0
  %v8709 = vadd.f32 0.0, %v8708
  %v8710 = vpop.f32.mrb[0].mxu0
  %v8711 = vpop.f32.mrb[0].mxu0
  %v8712 = vadd.f32 0.0, %v8711
  %v8713 = vpop.f32.mrb[0].mxu0
  %8714 = vmatprep.mubr.bf16.mxu0 0
  %8715 = vmatmul.mubr.bf16.gmra.mrb[0].mxu0 %v8504
  %v8716 = vpop.f32.mrb[0].mxu0
  %v8717 = vadd.f32 0.0, %v8716
  %v8718 = vpop.f32.mrb[0].mxu0
  %v8719 = vpop.f32.mrb[0].mxu0
  %v8720 = vadd.f32 0.0, %v8719
  %v8721 = vpop.f32.mrb[0].mxu0
  %8722 = vmatprep.mubr.bf16.mxu0 0
  %8723 = vmatmul.mubr.bf16.gmra.mrb[0].mxu0 %v8507
  %v8724 = vpop.f32.mrb[0].mxu0
  %v8725 = vadd.f32 0.0, %v8724
  %v8726 = vpop.f32.mrb[0].mxu0
  %v8727 = vpop.f32.mrb[0].mxu0
  %v8728 = vadd.f32 0.0, %v8727
  %v8729 = vpop.f32.mrb[0].mxu0
  %8730 = vmatprep.mubr.bf16.mxu0 0
  %8731 = vmatmul.mubr.bf16.gmra.mrb[0].mxu0 %v8510
  %v8732 = vpop.f32.mrb[0].mxu0
  %v8733 = vadd.f32 0.0, %v8732
  %v8734 = vpop.f32.mrb[0].mxu0
  %v8735 = vpop.f32.mrb[0].mxu0
  %v8736 = vadd.f32 0.0, %v8735
  %v8737 = vpop.f32.mrb[0].mxu0
  %8738 = vmatprep.mubr.bf16.mxu0 0
  %8739 = vmatmul.mubr.bf16.gmra.mrb[0].mxu0 %v8513
  %v8740 = vpop.f32.mrb[0].mxu0
  %v8741 = vadd.f32 0.0, %v8740
  %v8742 = vpop.f32.mrb[0].mxu0
  %v8743 = vpop.f32.mrb[0].mxu0
  %v8744 = vadd.f32 0.0, %v8743
  %v8745 = vpop.f32.mrb[0].mxu0
  %8746 = vmatprep.mubr.bf16.mxu0 0
  %8747 = vmatmul.mubr.bf16.gmra.mrb[0].mxu0 %v8516
  %v8748 = vpop.f32.mrb[0].mxu0
  %v8749 = vadd.f32 0.0, %v8748
  %v8750 = vpop.f32.mrb[0].mxu0
  %v8751 = vpop.f32.mrb[0].mxu0
  %v8752 = vadd.f32 0.0, %v8751
  %v8753 = vpop.f32.mrb[0].mxu0
  %8754 = vmatprep.mubr.bf16.mxu0 0
  %8755 = vmatmul.mubr.bf16.gmra.mrb[0].mxu0 %v8519
  %v8756 = vpop.f32.mrb[0].mxu0
  %v8757 = vadd.f32 0.0, %v8756
  %v8758 = vpop.f32.mrb[0].mxu0
  %v8759 = vpop.f32.mrb[0].mxu0
  %v8760 = vadd.f32 0.0, %v8759
  %v8761 = vpop.f32.mrb[0].mxu0
  %8762 = vmatprep.mubr.bf16.mxu0 0
  %8763 = vmatmul.mubr.bf16.gmra.mrb[0].mxu0 %v8522
  %v8764 = vpop.f32.mrb[0].mxu0
  %v8765 = vadd.f32 0.0, %v8764
  %v8766 = vpop.f32.mrb[0].mxu0
  %v8767 = vpop.f32.mrb[0].mxu0
  %v8768 = vadd.f32 0.0, %v8767
  %v8769 = vpop.f32.mrb[0].mxu0
  %8770 = vmatprep.mubr.bf16.mxu0 0
  %8771 = vmatmul.mubr.bf16.gmra.mrb[0].mxu0 %v8525
  %v8772 = vpop.f32.mrb[0].mxu0
  %v8773 = vadd.f32 0.0, %v8772
  %v8774 = vpop.f32.mrb[0].mxu0
  %v8775 = vpop.f32.mrb[0].mxu0
  %v8776 = vadd.f32 0.0, %v8775
  %v8777 = vpop.f32.mrb[0].mxu0
  %8778 = vmatprep.mubr.bf16.mxu0 0
  %8779 = vmatmul.mubr.bf16.gmra.mrb[0].mxu0 %v8528
  %v8780 = vpop.f32.mrb[0].mxu0
  %v8781 = vadd.f32 0.0, %v8780
  %v8782 = vpop.f32.mrb[0].mxu0
  %v8783 = vpop.f32.mrb[0].mxu0
  %v8784 = vadd.f32 0.0, %v8783
  %v8785 = vpop.f32.mrb[0].mxu0
  %8786 = vmatprep.mubr.bf16.mxu0 0
  %8787 = vmatmul.mubr.bf16.gmra.mrb[0].mxu0 %v8531
  %v8788 = vpop.f32.mrb[0].mxu0
  %v8789 = vadd.f32 0.0, %v8788
  %v8790 = vpop.f32.mrb[0].mxu0
  %v8791 = vpop.f32.mrb[0].mxu0
  %v8792 = vadd.f32 0.0, %v8791
  %v8793 = vpop.f32.mrb[0].mxu0
  %8794 = vmatprep.mubr.bf16.mxu0 0
  %8795 = vmatmul.mubr.bf16.gmra.mrb[0].mxu0 %v8534
  %v8796 = vpop.f32.mrb[0].mxu0
  %v8797 = vadd.f32 0.0, %v8796
  %v8798 = vpop.f32.mrb[0].mxu0
  %v8799 = vpop.f32.mrb[0].mxu0
  %v8800 = vadd.f32 0.0, %v8799
  %v8801 = vpop.f32.mrb[0].mxu0
  %8802 = vmatprep.mubr.bf16.mxu0 0
  %8803 = vmatmul.mubr.bf16.gmra.mrb[0].mxu0 %v8537
  %v8804 = vpop.f32.mrb[0].mxu0
  %v8805 = vadd.f32 0.0, %v8804
  %v8806 = vpop.f32.mrb[0].mxu0
  %v8807 = vpop.f32.mrb[0].mxu0
  %v8808 = vadd.f32 0.0, %v8807
  %v8809 = vpop.f32.mrb[0].mxu0
  %8810 = vmatprep.mubr.bf16.mxu0 0
  %8811 = vmatmul.mubr.bf16.gmra.mrb[0].mxu0 %v8540
  %v8812 = vpop.f32.mrb[0].mxu0
  %v8813 = vadd.f32 0.0, %v8812
  %v8814 = vpop.f32.mrb[0].mxu0
  %v8815 = vpop.f32.mrb[0].mxu0
  %v8816 = vadd.f32 0.0, %v8815
  %v8817 = vpop.f32.mrb[0].mxu0
  %8818 = vmatprep.mubr.bf16.mxu0 0
  %8819 = vmatmul.mubr.bf16.gmra.mrb[0].mxu0 %v8543
  %v8820 = vpop.f32.mrb[0].mxu0
  %v8821 = vadd.f32 0.0, %v8820
  %v8822 = vpop.f32.mrb[0].mxu0
  %v8823 = vpop.f32.mrb[0].mxu0
  %v8824 = vadd.f32 0.0, %v8823
  %v8825 = vpop.f32.mrb[0].mxu0
  %8826 = vmatprep.mubr.bf16.mxu0 0
  %8827 = vmatmul.mubr.bf16.gmra.mrb[0].mxu0 %v8546
  %v8828 = vpop.f32.mrb[0].mxu0
  %v8829 = vadd.f32 0.0, %v8828
  %v8830 = vpop.f32.mrb[0].mxu0
  %v8831 = vpop.f32.mrb[0].mxu0
  %v8832 = vadd.f32 0.0, %v8831
  %v8833 = vpop.f32.mrb[0].mxu0
  %8834 = vmatprep.mubr.bf16.mxu0 0
  %8835 = vmatmul.mubr.bf16.gmra.mrb[0].mxu0 %v8549
  %v8836 = vpop.f32.mrb[0].mxu0
  %v8837 = vadd.f32 0.0, %v8836
  %v8838 = vpop.f32.mrb[0].mxu0
  %v8839 = vpop.f32.mrb[0].mxu0
  %v8840 = vadd.f32 0.0, %v8839
  %v8841 = vpop.f32.mrb[0].mxu0
  %8842 = vdwg.mxu0
  %v8843 = vadd.f32 %v8293, %v8589
  %v8844 = vadd.f32 %v8294, %v8592
  %v8845 = vadd.f32 %v8295, %v8597
  %v8846 = vadd.f32 %v8296, %v8600
  %v8847 = vadd.f32 %v8297, %v8605
  %v8848 = vadd.f32 %v8298, %v8608
  %v8849 = vadd.f32 %v8299, %v8613
  %v8850 = vadd.f32 %v8300, %v8616
  %v8851 = vadd.f32 %v8301, %v8621
  %v8852 = vadd.f32 %v8302, %v8624
  %v8853 = vadd.f32 %v8303, %v8629
  %v8854 = vadd.f32 %v8304, %v8632
  %v8855 = vadd.f32 %v8305, %v8637
  %v8856 = vadd.f32 %v8306, %v8640
  %v8857 = vadd.f32 %v8307, %v8645
  %v8858 = vadd.f32 %v8308, %v8648
  %v8859 = vadd.f32 %v8309, %v8653
  %v8860 = vadd.f32 %v8310, %v8656
  %v8861 = vadd.f32 %v8311, %v8661
  %v8862 = vadd.f32 %v8312, %v8664
  %v8863 = vadd.f32 %v8313, %v8669
  %v8864 = vadd.f32 %v8314, %v8672
  %v8865 = vadd.f32 %v8315, %v8677
  %v8866 = vadd.f32 %v8316, %v8680
  %v8867 = vadd.f32 %v8317, %v8685
  %v8868 = vadd.f32 %v8318, %v8688
  %v8869 = vadd.f32 %v8319, %v8693
  %v8870 = vadd.f32 %v8320, %v8696
  %v8871 = vadd.f32 %v8321, %v8701
  %v8872 = vadd.f32 %v8322, %v8704
  %v8873 = vadd.f32 %v8323, %v8709
  %v8874 = vadd.f32 %v8324, %v8712
  %v8875 = vadd.f32 %v8325, %v8717
  %v8876 = vadd.f32 %v8326, %v8720
  %v8877 = vadd.f32 %v8327, %v8725
  %v8878 = vadd.f32 %v8328, %v8728
  %v8879 = vadd.f32 %v8329, %v8733
  %v8880 = vadd.f32 %v8330, %v8736
  %v8881 = vadd.f32 %v8331, %v8741
  %v8882 = vadd.f32 %v8332, %v8744
  %v8883 = vadd.f32 %v8333, %v8749
  %v8884 = vadd.f32 %v8334, %v8752
  %v8885 = vadd.f32 %v8335, %v8757
  %v8886 = vadd.f32 %v8336, %v8760
  %v8887 = vadd.f32 %v8337, %v8765
  %v8888 = vadd.f32 %v8338, %v8768
  %v8889 = vadd.f32 %v8339, %v8773
  %v8890 = vadd.f32 %v8340, %v8776
  %v8891 = vadd.f32 %v8341, %v8781
  %v8892 = vadd.f32 %v8342, %v8784
  %v8893 = vadd.f32 %v8343, %v8789
  %v8894 = vadd.f32 %v8344, %v8792
  %v8895 = vadd.f32 %v8345, %v8797
  %v8896 = vadd.f32 %v8346, %v8800
  %v8897 = vadd.f32 %v8347, %v8805
  %v8898 = vadd.f32 %v8348, %v8808
  %v8899 = vadd.f32 %v8349, %v8813
  %v8900 = vadd.f32 %v8350, %v8816
  %v8901 = vadd.f32 %v8351, %v8821
  %v8902 = vadd.f32 %v8352, %v8824
  %v8903 = vadd.f32 %v8353, %v8829
  %v8904 = vadd.f32 %v8354, %v8832
  %v8905 = vadd.f32 %v8355, %v8837
  %v8906 = vadd.f32 %v8356, %v8840
  %v8907 = vld [vmem:[%s3416] sm:$0xff]
  %v8908 = vld [vmem:[%s3416 + $0x8] sm:$0xff]
  %v8909 = vld [vmem:[%s3416 + $0x18] sm:$0xff]
  %v8910 = vld [vmem:[%s3416 + $0x20] sm:$0xff]
  %v8911 = vld [vmem:[%s3416 + $0x30] sm:$0xff]
  %v8912 = vld [vmem:[%s3416 + $0x38] sm:$0xff]
  %v8913 = vld [vmem:[%s3416 + $0x48] sm:$0xff]
  %v8914 = vld [vmem:[%s3416 + $0x50] sm:$0xff]
  %v8915 = vld [vmem:[%s3416 + $0x60] sm:$0xff]
  %v8916 = vld [vmem:[%s3416 + $0x68] sm:$0xff]
  %v8917 = vld [vmem:[%s3416 + $0x78] sm:$0xff]
  %v8918 = vld [vmem:[%s3416 + $0x80] sm:$0xff]
  %v8919 = vld [vmem:[%s3416 + $0x90] sm:$0xff]
  %v8920 = vld [vmem:[%s3416 + $0x98] sm:$0xff]
  %v8921 = vld [vmem:[%s3416 + $0xa8] sm:$0xff]
  %v8922 = vld [vmem:[%s3416 + $0xb0] sm:$0xff]
  %v8923 = vld [vmem:[%s3416 + $0xc0] sm:$0xff]
  %v8924 = vld [vmem:[%s3416 + $0xc8] sm:$0xff]
  %v8925 = vld [vmem:[%s3416 + $0xd8] sm:$0xff]
  %v8926 = vld [vmem:[%s3416 + $0xe0] sm:$0xff]
  %v8927 = vld [vmem:[%s3416 + $0xf0] sm:$0xff]
  %v8928 = vld [vmem:[%s3416 + $0xf8] sm:$0xff]
  %v8929 = vld [vmem:[%s3416 + $0x108] sm:$0xff]
  %v8930 = vld [vmem:[%s3416 + $0x110] sm:$0xff]
  %v8931 = vld [vmem:[%s3416 + $0x120] sm:$0xff]
  %v8932 = vld [vmem:[%s3416 + $0x128] sm:$0xff]
  %v8933 = vld [vmem:[%s3416 + $0x138] sm:$0xff]
  %v8934 = vld [vmem:[%s3416 + $0x140] sm:$0xff]
  %v8935 = vld [vmem:[%s3416 + $0x150] sm:$0xff]
  %v8936 = vld [vmem:[%s3416 + $0x158] sm:$0xff]
  %v8937 = vld [vmem:[%s3416 + $0x168] sm:$0xff]
  %v8938 = vld [vmem:[%s3416 + $0x170] sm:$0xff]
  %v8939 = vld [vmem:[%s3416 + $0x1b0] sm:$0xff]
  %v8940 = vld [vmem:[%s3416 + $0x1b8] sm:$0xff]
  %v8941 = vld [vmem:[%s3416 + $0x1c8] sm:$0xff]
  %v8942 = vld [vmem:[%s3416 + $0x1d0] sm:$0xff]
  %v8943 = vld [vmem:[%s3416 + $0x1e0] sm:$0xff]
  %v8944 = vld [vmem:[%s3416 + $0x1e8] sm:$0xff]
  %v8945 = vld [vmem:[%s3416 + $0x1f8] sm:$0xff]
  %v8946 = vld [vmem:[%s3416 + $0x200] sm:$0xff]
  %v8947 = vld [vmem:[%s3416 + $0x210] sm:$0xff]
  %v8948 = vld [vmem:[%s3416 + $0x218] sm:$0xff]
  %v8949 = vld [vmem:[%s3416 + $0x228] sm:$0xff]
  %v8950 = vld [vmem:[%s3416 + $0x230] sm:$0xff]
  %v8951 = vld [vmem:[%s3416 + $0x240] sm:$0xff]
  %v8952 = vld [vmem:[%s3416 + $0x248] sm:$0xff]
  %v8953 = vld [vmem:[%s3416 + $0x258] sm:$0xff]
  %v8954 = vld [vmem:[%s3416 + $0x260] sm:$0xff]
  %v8955 = vld [vmem:[%s3416 + $0x270] sm:$0xff]
  %v8956 = vld [vmem:[%s3416 + $0x278] sm:$0xff]
  %v8957 = vld [vmem:[%s3416 + $0x288] sm:$0xff]
  %v8958 = vld [vmem:[%s3416 + $0x290] sm:$0xff]
  %v8959 = vld [vmem:[%s3416 + $0x2a0] sm:$0xff]
  %v8960 = vld [vmem:[%s3416 + $0x2a8] sm:$0xff]
  %v8961 = vld [vmem:[%s3416 + $0x2b8] sm:$0xff]
  %v8962 = vld [vmem:[%s3416 + $0x2c0] sm:$0xff]
  %v8963 = vld [vmem:[%s3416 + $0x2d0] sm:$0xff]
  %v8964 = vld [vmem:[%s3416 + $0x2d8] sm:$0xff]
  %v8965 = vld [vmem:[%s3416 + $0x2e8] sm:$0xff]
  %v8966 = vld [vmem:[%s3416 + $0x2f0] sm:$0xff]
  %v8967 = vld [vmem:[%s3416 + $0x300] sm:$0xff]
  %v8968 = vld [vmem:[%s3416 + $0x308] sm:$0xff]
  %v8969 = vld [vmem:[%s3416 + $0x318] sm:$0xff]
  %v8970 = vld [vmem:[%s3416 + $0x320] sm:$0xff]
  %v8971 = vpack.c.bf16 %v8908, %v8907
  %v8972 = vpack.c.bf16 %v8910, %v8909
  %v8973 = vpack.c.bf16 %v8912, %v8911
  %v8974 = vpack.c.bf16 %v8914, %v8913
  %v8975 = vpack.c.bf16 %v8916, %v8915
  %v8976 = vpack.c.bf16 %v8918, %v8917
  %v8977 = vpack.c.bf16 %v8920, %v8919
  %v8978 = vpack.c.bf16 %v8922, %v8921
  %v8979 = vpack.c.bf16 %v8924, %v8923
  %v8980 = vpack.c.bf16 %v8926, %v8925
  %v8981 = vpack.c.bf16 %v8928, %v8927
  %v8982 = vpack.c.bf16 %v8930, %v8929
  %v8983 = vpack.c.bf16 %v8932, %v8931
  %v8984 = vpack.c.bf16 %v8934, %v8933
  %v8985 = vpack.c.bf16 %v8936, %v8935
  %v8986 = vpack.c.bf16 %v8938, %v8937
  %v8987 = vpack.c.bf16 %v8940, %v8939
  %v8988 = vpack.c.bf16 %v8942, %v8941
  %v8989 = vpack.c.bf16 %v8944, %v8943
  %v8990 = vpack.c.bf16 %v8946, %v8945
  %v8991 = vpack.c.bf16 %v8948, %v8947
  %v8992 = vpack.c.bf16 %v8950, %v8949
  %v8993 = vpack.c.bf16 %v8952, %v8951
  %v8994 = vpack.c.bf16 %v8954, %v8953
  %v8995 = vpack.c.bf16 %v8956, %v8955
  %v8996 = vpack.c.bf16 %v8958, %v8957
  %v8997 = vpack.c.bf16 %v8960, %v8959
  %v8998 = vpack.c.bf16 %v8962, %v8961
  %v8999 = vpack.c.bf16 %v8964, %v8963
  %v9000 = vpack.c.bf16 %v8966, %v8965
  %v9001 = vpack.c.bf16 %v8968, %v8967
  %v9002 = vpack.c.bf16 %v8970, %v8969
  %s9003 = scalar_lea.vmem %s4, 12
  %v9004 = vld [vmem:[%s9003] sm:$0x3]
  %v9006 = vsel %vm27, %v8971, 0
  %v9009 = vsel %vm27, %v8972, 0
  %v9012 = vsel %vm27, %v8973, 0
  %v9015 = vsel %vm27, %v8974, 0
  %v9018 = vsel %vm27, %v8975, 0
  %v9021 = vsel %vm27, %v8976, 0
  %v9024 = vsel %vm27, %v8977, 0
  %v9027 = vsel %vm27, %v8978, 0
  %v9030 = vsel %vm27, %v8979, 0
  %v9033 = vsel %vm27, %v8980, 0
  %v9036 = vsel %vm27, %v8981, 0
  %v9039 = vsel %vm27, %v8982, 0
  %v9042 = vsel %vm27, %v8983, 0
  %v9045 = vsel %vm27, %v8984, 0
  %v9048 = vsel %vm27, %v8985, 0
  %v9051 = vsel %vm27, %v8986, 0
  %v9054 = vsel %vm27, %v8987, 0
  %v9057 = vsel %vm27, %v8988, 0
  %v9060 = vsel %vm27, %v8989, 0
  %v9063 = vsel %vm27, %v8990, 0
  %v9066 = vsel %vm27, %v8991, 0
  %v9069 = vsel %vm27, %v8992, 0
  %v9072 = vsel %vm27, %v8993, 0
  %v9075 = vsel %vm27, %v8994, 0
  %v9078 = vsel %vm27, %v8995, 0
  %v9081 = vsel %vm27, %v8996, 0
  %v9084 = vsel %vm27, %v8997, 0
  %v9087 = vsel %vm27, %v8998, 0
  %v9090 = vsel %vm27, %v8999, 0
  %v9093 = vsel %vm27, %v9000, 0
  %v9096 = vsel %vm27, %v9001, 0
  %v9099 = vsel %vm27, %v9002, 0
  %v9102 = vsel %vm535, %v9004, 0
  %9104 = vmatprep.subr.bf16.mxu0 0
  %9105 = vmatpush1.bf16.msra.mxu0 %v9102
  %9106 = vmatprep.subr.bf16.mxu0 0
  %9107 = vmatpush1.bf16.msra.mxu0 0
  %9108 = vmatprep.subr.bf16.mxu0 0
  %9109 = vmatpush1.bf16.msra.mxu0 0
  %9110 = vmatprep.subr.bf16.mxu0 0
  %9111 = vmatpush1.bf16.msra.mxu0 0
  %9112 = vmatprep.subr.bf16.mxu0 0
  %9113 = vmatpush1.bf16.msra.mxu0 0
  %9114 = vmatprep.subr.bf16.mxu0 0
  %9115 = vmatpush1.bf16.msra.mxu0 0
  %9116 = vmatprep.subr.bf16.mxu0 0
  %9117 = vmatpush1.bf16.msra.mxu0 0
  %9118 = vmatprep.subr.bf16.mxu0 0
  %9119 = vmatpush1.bf16.msra.mxu0 0
  %9120 = vmatprep.subr.bf16.mxu0 0
  %9121 = vmatpush1.bf16.msra.mxu0 0
  %9122 = vmatprep.subr.bf16.mxu0 0
  %9123 = vmatpush1.bf16.msra.mxu0 0
  %9124 = vmatprep.subr.bf16.mxu0 0
  %9125 = vmatpush1.bf16.msra.mxu0 0
  %9126 = vmatprep.subr.bf16.mxu0 0
  %9127 = vmatpush1.bf16.msra.mxu0 0
  %9128 = vmatprep.subr.bf16.mxu0 0
  %9129 = vmatpush1.bf16.msra.mxu0 0
  %9130 = vmatprep.subr.bf16.mxu0 0
  %9131 = vmatpush1.bf16.msra.mxu0 0
  %9132 = vmatprep.subr.bf16.mxu0 0
  %9133 = vmatpush1.bf16.msra.mxu0 0
  %9134 = vmatprep.subr.bf16.mxu0 0
  %9135 = vmatpush1.bf16.msra.mxu0 0
  %9136 = vmatprep.mubr.bf16.mxu0 0
  %9137 = vmatmul.mubr.bf16.gmra.mrb[0].mxu0 %v9006
  %v9138 = vpop.f32.mrb[0].mxu0
  %v9139 = vadd.f32 0.0, %v9138
  %v9140 = vpop.f32.mrb[0].mxu0
  %v9141 = vpop.f32.mrb[0].mxu0
  %v9142 = vadd.f32 0.0, %v9141
  %v9143 = vpop.f32.mrb[0].mxu0
  %9144 = vmatprep.mubr.bf16.mxu0 0
  %9145 = vmatmul.mubr.bf16.gmra.mrb[0].mxu0 %v9009
  %v9146 = vpop.f32.mrb[0].mxu0
  %v9147 = vadd.f32 0.0, %v9146
  %v9148 = vpop.f32.mrb[0].mxu0
  %v9149 = vpop.f32.mrb[0].mxu0
  %v9150 = vadd.f32 0.0, %v9149
  %v9151 = vpop.f32.mrb[0].mxu0
  %9152 = vmatprep.mubr.bf16.mxu0 0
  %9153 = vmatmul.mubr.bf16.gmra.mrb[0].mxu0 %v9012
  %v9154 = vpop.f32.mrb[0].mxu0
  %v9155 = vadd.f32 0.0, %v9154
  %v9156 = vpop.f32.mrb[0].mxu0
  %v9157 = vpop.f32.mrb[0].mxu0
  %v9158 = vadd.f32 0.0, %v9157
  %v9159 = vpop.f32.mrb[0].mxu0
  %9160 = vmatprep.mubr.bf16.mxu0 0
  %9161 = vmatmul.mubr.bf16.gmra.mrb[0].mxu0 %v9015
  %v9162 = vpop.f32.mrb[0].mxu0
  %v9163 = vadd.f32 0.0, %v9162
  %v9164 = vpop.f32.mrb[0].mxu0
  %v9165 = vpop.f32.mrb[0].mxu0
  %v9166 = vadd.f32 0.0, %v9165
  %v9167 = vpop.f32.mrb[0].mxu0
  %9168 = vmatprep.mubr.bf16.mxu0 0
  %9169 = vmatmul.mubr.bf16.gmra.mrb[0].mxu0 %v9018
  %v9170 = vpop.f32.mrb[0].mxu0
  %v9171 = vadd.f32 0.0, %v9170
  %v9172 = vpop.f32.mrb[0].mxu0
  %v9173 = vpop.f32.mrb[0].mxu0
  %v9174 = vadd.f32 0.0, %v9173
  %v9175 = vpop.f32.mrb[0].mxu0
  %9176 = vmatprep.mubr.bf16.mxu0 0
  %9177 = vmatmul.mubr.bf16.gmra.mrb[0].mxu0 %v9021
  %v9178 = vpop.f32.mrb[0].mxu0
  %v9179 = vadd.f32 0.0, %v9178
  %v9180 = vpop.f32.mrb[0].mxu0
  %v9181 = vpop.f32.mrb[0].mxu0
  %v9182 = vadd.f32 0.0, %v9181
  %v9183 = vpop.f32.mrb[0].mxu0
  %9184 = vmatprep.mubr.bf16.mxu0 0
  %9185 = vmatmul.mubr.bf16.gmra.mrb[0].mxu0 %v9024
  %v9186 = vpop.f32.mrb[0].mxu0
  %v9187 = vadd.f32 0.0, %v9186
  %v9188 = vpop.f32.mrb[0].mxu0
  %v9189 = vpop.f32.mrb[0].mxu0
  %v9190 = vadd.f32 0.0, %v9189
  %v9191 = vpop.f32.mrb[0].mxu0
  %9192 = vmatprep.mubr.bf16.mxu0 0
  %9193 = vmatmul.mubr.bf16.gmra.mrb[0].mxu0 %v9027
  %v9194 = vpop.f32.mrb[0].mxu0
  %v9195 = vadd.f32 0.0, %v9194
  %v9196 = vpop.f32.mrb[0].mxu0
  %v9197 = vpop.f32.mrb[0].mxu0
  %v9198 = vadd.f32 0.0, %v9197
  %v9199 = vpop.f32.mrb[0].mxu0
  %9200 = vmatprep.mubr.bf16.mxu0 0
  %9201 = vmatmul.mubr.bf16.gmra.mrb[0].mxu0 %v9030
  %v9202 = vpop.f32.mrb[0].mxu0
  %v9203 = vadd.f32 0.0, %v9202
  %v9204 = vpop.f32.mrb[0].mxu0
  %v9205 = vpop.f32.mrb[0].mxu0
  %v9206 = vadd.f32 0.0, %v9205
  %v9207 = vpop.f32.mrb[0].mxu0
  %9208 = vmatprep.mubr.bf16.mxu0 0
  %9209 = vmatmul.mubr.bf16.gmra.mrb[0].mxu0 %v9033
  %v9210 = vpop.f32.mrb[0].mxu0
  %v9211 = vadd.f32 0.0, %v9210
  %v9212 = vpop.f32.mrb[0].mxu0
  %v9213 = vpop.f32.mrb[0].mxu0
  %v9214 = vadd.f32 0.0, %v9213
  %v9215 = vpop.f32.mrb[0].mxu0
  %9216 = vmatprep.mubr.bf16.mxu0 0
  %9217 = vmatmul.mubr.bf16.gmra.mrb[0].mxu0 %v9036
  %v9218 = vpop.f32.mrb[0].mxu0
  %v9219 = vadd.f32 0.0, %v9218
  %v9220 = vpop.f32.mrb[0].mxu0
  %v9221 = vpop.f32.mrb[0].mxu0
  %v9222 = vadd.f32 0.0, %v9221
  %v9223 = vpop.f32.mrb[0].mxu0
  %9224 = vmatprep.mubr.bf16.mxu0 0
  %9225 = vmatmul.mubr.bf16.gmra.mrb[0].mxu0 %v9039
  %v9226 = vpop.f32.mrb[0].mxu0
  %v9227 = vadd.f32 0.0, %v9226
  %v9228 = vpop.f32.mrb[0].mxu0
  %v9229 = vpop.f32.mrb[0].mxu0
  %v9230 = vadd.f32 0.0, %v9229
  %v9231 = vpop.f32.mrb[0].mxu0
  %9232 = vmatprep.mubr.bf16.mxu0 0
  %9233 = vmatmul.mubr.bf16.gmra.mrb[0].mxu0 %v9042
  %v9234 = vpop.f32.mrb[0].mxu0
  %v9235 = vadd.f32 0.0, %v9234
  %v9236 = vpop.f32.mrb[0].mxu0
  %v9237 = vpop.f32.mrb[0].mxu0
  %v9238 = vadd.f32 0.0, %v9237
  %v9239 = vpop.f32.mrb[0].mxu0
  %9240 = vmatprep.mubr.bf16.mxu0 0
  %9241 = vmatmul.mubr.bf16.gmra.mrb[0].mxu0 %v9045
  %v9242 = vpop.f32.mrb[0].mxu0
  %v9243 = vadd.f32 0.0, %v9242
  %v9244 = vpop.f32.mrb[0].mxu0
  %v9245 = vpop.f32.mrb[0].mxu0
  %v9246 = vadd.f32 0.0, %v9245
  %v9247 = vpop.f32.mrb[0].mxu0
  %9248 = vmatprep.mubr.bf16.mxu0 0
  %9249 = vmatmul.mubr.bf16.gmra.mrb[0].mxu0 %v9048
  %v9250 = vpop.f32.mrb[0].mxu0
  %v9251 = vadd.f32 0.0, %v9250
  %v9252 = vpop.f32.mrb[0].mxu0
  %v9253 = vpop.f32.mrb[0].mxu0
  %v9254 = vadd.f32 0.0, %v9253
  %v9255 = vpop.f32.mrb[0].mxu0
  %9256 = vmatprep.mubr.bf16.mxu0 0
  %9257 = vmatmul.mubr.bf16.gmra.mrb[0].mxu0 %v9051
  %v9258 = vpop.f32.mrb[0].mxu0
  %v9259 = vadd.f32 0.0, %v9258
  %v9260 = vpop.f32.mrb[0].mxu0
  %v9261 = vpop.f32.mrb[0].mxu0
  %v9262 = vadd.f32 0.0, %v9261
  %v9263 = vpop.f32.mrb[0].mxu0
  %9264 = vmatprep.mubr.bf16.mxu0 0
  %9265 = vmatmul.mubr.bf16.gmra.mrb[0].mxu0 %v9054
  %v9266 = vpop.f32.mrb[0].mxu0
  %v9267 = vadd.f32 0.0, %v9266
  %v9268 = vpop.f32.mrb[0].mxu0
  %v9269 = vpop.f32.mrb[0].mxu0
  %v9270 = vadd.f32 0.0, %v9269
  %v9271 = vpop.f32.mrb[0].mxu0
  %9272 = vmatprep.mubr.bf16.mxu0 0
  %9273 = vmatmul.mubr.bf16.gmra.mrb[0].mxu0 %v9057
  %v9274 = vpop.f32.mrb[0].mxu0
  %v9275 = vadd.f32 0.0, %v9274
  %v9276 = vpop.f32.mrb[0].mxu0
  %v9277 = vpop.f32.mrb[0].mxu0
  %v9278 = vadd.f32 0.0, %v9277
  %v9279 = vpop.f32.mrb[0].mxu0
  %9280 = vmatprep.mubr.bf16.mxu0 0
  %9281 = vmatmul.mubr.bf16.gmra.mrb[0].mxu0 %v9060
  %v9282 = vpop.f32.mrb[0].mxu0
  %v9283 = vadd.f32 0.0, %v9282
  %v9284 = vpop.f32.mrb[0].mxu0
  %v9285 = vpop.f32.mrb[0].mxu0
  %v9286 = vadd.f32 0.0, %v9285
  %v9287 = vpop.f32.mrb[0].mxu0
  %9288 = vmatprep.mubr.bf16.mxu0 0
  %9289 = vmatmul.mubr.bf16.gmra.mrb[0].mxu0 %v9063
  %v9290 = vpop.f32.mrb[0].mxu0
  %v9291 = vadd.f32 0.0, %v9290
  %v9292 = vpop.f32.mrb[0].mxu0
  %v9293 = vpop.f32.mrb[0].mxu0
  %v9294 = vadd.f32 0.0, %v9293
  %v9295 = vpop.f32.mrb[0].mxu0
  %9296 = vmatprep.mubr.bf16.mxu0 0
  %9297 = vmatmul.mubr.bf16.gmra.mrb[0].mxu0 %v9066
  %v9298 = vpop.f32.mrb[0].mxu0
  %v9299 = vadd.f32 0.0, %v9298
  %v9300 = vpop.f32.mrb[0].mxu0
  %v9301 = vpop.f32.mrb[0].mxu0
  %v9302 = vadd.f32 0.0, %v9301
  %v9303 = vpop.f32.mrb[0].mxu0
  %9304 = vmatprep.mubr.bf16.mxu0 0
  %9305 = vmatmul.mubr.bf16.gmra.mrb[0].mxu0 %v9069
  %v9306 = vpop.f32.mrb[0].mxu0
  %v9307 = vadd.f32 0.0, %v9306
  %v9308 = vpop.f32.mrb[0].mxu0
  %v9309 = vpop.f32.mrb[0].mxu0
  %v9310 = vadd.f32 0.0, %v9309
  %v9311 = vpop.f32.mrb[0].mxu0
  %9312 = vmatprep.mubr.bf16.mxu0 0
  %9313 = vmatmul.mubr.bf16.gmra.mrb[0].mxu0 %v9072
  %v9314 = vpop.f32.mrb[0].mxu0
  %v9315 = vadd.f32 0.0, %v9314
  %v9316 = vpop.f32.mrb[0].mxu0
  %v9317 = vpop.f32.mrb[0].mxu0
  %v9318 = vadd.f32 0.0, %v9317
  %v9319 = vpop.f32.mrb[0].mxu0
  %9320 = vmatprep.mubr.bf16.mxu0 0
  %9321 = vmatmul.mubr.bf16.gmra.mrb[0].mxu0 %v9075
  %v9322 = vpop.f32.mrb[0].mxu0
  %v9323 = vadd.f32 0.0, %v9322
  %v9324 = vpop.f32.mrb[0].mxu0
  %v9325 = vpop.f32.mrb[0].mxu0
  %v9326 = vadd.f32 0.0, %v9325
  %v9327 = vpop.f32.mrb[0].mxu0
  %9328 = vmatprep.mubr.bf16.mxu0 0
  %9329 = vmatmul.mubr.bf16.gmra.mrb[0].mxu0 %v9078
  %v9330 = vpop.f32.mrb[0].mxu0
  %v9331 = vadd.f32 0.0, %v9330
  %v9332 = vpop.f32.mrb[0].mxu0
  %v9333 = vpop.f32.mrb[0].mxu0
  %v9334 = vadd.f32 0.0, %v9333
  %v9335 = vpop.f32.mrb[0].mxu0
  %9336 = vmatprep.mubr.bf16.mxu0 0
  %9337 = vmatmul.mubr.bf16.gmra.mrb[0].mxu0 %v9081
  %v9338 = vpop.f32.mrb[0].mxu0
  %v9339 = vadd.f32 0.0, %v9338
  %v9340 = vpop.f32.mrb[0].mxu0
  %v9341 = vpop.f32.mrb[0].mxu0
  %v9342 = vadd.f32 0.0, %v9341
  %v9343 = vpop.f32.mrb[0].mxu0
  %9344 = vmatprep.mubr.bf16.mxu0 0
  %9345 = vmatmul.mubr.bf16.gmra.mrb[0].mxu0 %v9084
  %v9346 = vpop.f32.mrb[0].mxu0
  %v9347 = vadd.f32 0.0, %v9346
  %v9348 = vpop.f32.mrb[0].mxu0
  %v9349 = vpop.f32.mrb[0].mxu0
  %v9350 = vadd.f32 0.0, %v9349
  %v9351 = vpop.f32.mrb[0].mxu0
  %9352 = vmatprep.mubr.bf16.mxu0 0
  %9353 = vmatmul.mubr.bf16.gmra.mrb[0].mxu0 %v9087
  %v9354 = vpop.f32.mrb[0].mxu0
  %v9355 = vadd.f32 0.0, %v9354
  %v9356 = vpop.f32.mrb[0].mxu0
  %v9357 = vpop.f32.mrb[0].mxu0
  %v9358 = vadd.f32 0.0, %v9357
  %v9359 = vpop.f32.mrb[0].mxu0
  %9360 = vmatprep.mubr.bf16.mxu0 0
  %9361 = vmatmul.mubr.bf16.gmra.mrb[0].mxu0 %v9090
  %v9362 = vpop.f32.mrb[0].mxu0
  %v9363 = vadd.f32 0.0, %v9362
  %v9364 = vpop.f32.mrb[0].mxu0
  %v9365 = vpop.f32.mrb[0].mxu0
  %v9366 = vadd.f32 0.0, %v9365
  %v9367 = vpop.f32.mrb[0].mxu0
  %9368 = vmatprep.mubr.bf16.mxu0 0
  %9369 = vmatmul.mubr.bf16.gmra.mrb[0].mxu0 %v9093
  %v9370 = vpop.f32.mrb[0].mxu0
  %v9371 = vadd.f32 0.0, %v9370
  %v9372 = vpop.f32.mrb[0].mxu0
  %v9373 = vpop.f32.mrb[0].mxu0
  %v9374 = vadd.f32 0.0, %v9373
  %v9375 = vpop.f32.mrb[0].mxu0
  %9376 = vmatprep.mubr.bf16.mxu0 0
  %9377 = vmatmul.mubr.bf16.gmra.mrb[0].mxu0 %v9096
  %v9378 = vpop.f32.mrb[0].mxu0
  %v9379 = vadd.f32 0.0, %v9378
  %v9380 = vpop.f32.mrb[0].mxu0
  %v9381 = vpop.f32.mrb[0].mxu0
  %v9382 = vadd.f32 0.0, %v9381
  %v9383 = vpop.f32.mrb[0].mxu0
  %9384 = vmatprep.mubr.bf16.mxu0 0
  %9385 = vmatmul.mubr.bf16.gmra.mrb[0].mxu0 %v9099
  %v9386 = vpop.f32.mrb[0].mxu0
  %v9387 = vadd.f32 0.0, %v9386
  %v9388 = vpop.f32.mrb[0].mxu0
  %v9389 = vpop.f32.mrb[0].mxu0
  %v9390 = vadd.f32 0.0, %v9389
  %v9391 = vpop.f32.mrb[0].mxu0
  %9392 = vdwg.mxu0
  %v9393 = vadd.f32 %v8843, %v9139
  %v9394 = vadd.f32 %v8844, %v9142
  %v9395 = vadd.f32 %v8845, %v9147
  %v9396 = vadd.f32 %v8846, %v9150
  %v9397 = vadd.f32 %v8847, %v9155
  %v9398 = vadd.f32 %v8848, %v9158
  %v9399 = vadd.f32 %v8849, %v9163
  %v9400 = vadd.f32 %v8850, %v9166
  %v9401 = vadd.f32 %v8851, %v9171
  %v9402 = vadd.f32 %v8852, %v9174
  %v9403 = vadd.f32 %v8853, %v9179
  %v9404 = vadd.f32 %v8854, %v9182
  %v9405 = vadd.f32 %v8855, %v9187
  %v9406 = vadd.f32 %v8856, %v9190
  %v9407 = vadd.f32 %v8857, %v9195
  %v9408 = vadd.f32 %v8858, %v9198
  %v9409 = vadd.f32 %v8859, %v9203
  %v9410 = vadd.f32 %v8860, %v9206
  %v9411 = vadd.f32 %v8861, %v9211
  %v9412 = vadd.f32 %v8862, %v9214
  %v9413 = vadd.f32 %v8863, %v9219
  %v9414 = vadd.f32 %v8864, %v9222
  %v9415 = vadd.f32 %v8865, %v9227
  %v9416 = vadd.f32 %v8866, %v9230
  %v9417 = vadd.f32 %v8867, %v9235
  %v9418 = vadd.f32 %v8868, %v9238
  %v9419 = vadd.f32 %v8869, %v9243
  %v9420 = vadd.f32 %v8870, %v9246
  %v9421 = vadd.f32 %v8871, %v9251
  %v9422 = vadd.f32 %v8872, %v9254
  %v9423 = vadd.f32 %v8873, %v9259
  %v9424 = vadd.f32 %v8874, %v9262
  %v9425 = vadd.f32 %v8875, %v9267
  %v9426 = vadd.f32 %v8876, %v9270
  %v9427 = vadd.f32 %v8877, %v9275
  %v9428 = vadd.f32 %v8878, %v9278
  %v9429 = vadd.f32 %v8879, %v9283
  %v9430 = vadd.f32 %v8880, %v9286
  %v9431 = vadd.f32 %v8881, %v9291
  %v9432 = vadd.f32 %v8882, %v9294
  %v9433 = vadd.f32 %v8883, %v9299
  %v9434 = vadd.f32 %v8884, %v9302
  %v9435 = vadd.f32 %v8885, %v9307
  %v9436 = vadd.f32 %v8886, %v9310
  %v9437 = vadd.f32 %v8887, %v9315
  %v9438 = vadd.f32 %v8888, %v9318
  %v9439 = vadd.f32 %v8889, %v9323
  %v9440 = vadd.f32 %v8890, %v9326
  %v9441 = vadd.f32 %v8891, %v9331
  %v9442 = vadd.f32 %v8892, %v9334
  %v9443 = vadd.f32 %v8893, %v9339
  %v9444 = vadd.f32 %v8894, %v9342
  %v9445 = vadd.f32 %v8895, %v9347
  %v9446 = vadd.f32 %v8896, %v9350
  %v9447 = vadd.f32 %v8897, %v9355
  %v9448 = vadd.f32 %v8898, %v9358
  %v9449 = vadd.f32 %v8899, %v9363
  %v9450 = vadd.f32 %v8900, %v9366
  %v9451 = vadd.f32 %v8901, %v9371
  %v9452 = vadd.f32 %v8902, %v9374
  %v9453 = vadd.f32 %v8903, %v9379
  %v9454 = vadd.f32 %v8904, %v9382
  %v9455 = vadd.f32 %v8905, %v9387
  %v9456 = vadd.f32 %v8906, %v9390
  %v9457 = vld [vmem:[%s3416 + $0x1] sm:$0xff]
  %v9458 = vld [vmem:[%s3416 + $0x9] sm:$0xff]
  %v9459 = vld [vmem:[%s3416 + $0x19] sm:$0xff]
  %v9460 = vld [vmem:[%s3416 + $0x21] sm:$0xff]
  %v9461 = vld [vmem:[%s3416 + $0x31] sm:$0xff]
  %v9462 = vld [vmem:[%s3416 + $0x39] sm:$0xff]
  %v9463 = vld [vmem:[%s3416 + $0x49] sm:$0xff]
  %v9464 = vld [vmem:[%s3416 + $0x51] sm:$0xff]
  %v9465 = vld [vmem:[%s3416 + $0x61] sm:$0xff]
  %v9466 = vld [vmem:[%s3416 + $0x69] sm:$0xff]
  %v9467 = vld [vmem:[%s3416 + $0x79] sm:$0xff]
  %v9468 = vld [vmem:[%s3416 + $0x81] sm:$0xff]
  %v9469 = vld [vmem:[%s3416 + $0x91] sm:$0xff]
  %v9470 = vld [vmem:[%s3416 + $0x99] sm:$0xff]
  %v9471 = vld [vmem:[%s3416 + $0xa9] sm:$0xff]
  %v9472 = vld [vmem:[%s3416 + $0xb1] sm:$0xff]
  %v9473 = vld [vmem:[%s3416 + $0xc1] sm:$0xff]
  %v9474 = vld [vmem:[%s3416 + $0xc9] sm:$0xff]
  %v9475 = vld [vmem:[%s3416 + $0xd9] sm:$0xff]
  %v9476 = vld [vmem:[%s3416 + $0xe1] sm:$0xff]
  %v9477 = vld [vmem:[%s3416 + $0xf1] sm:$0xff]
  %v9478 = vld [vmem:[%s3416 + $0xf9] sm:$0xff]
  %v9479 = vld [vmem:[%s3416 + $0x109] sm:$0xff]
  %v9480 = vld [vmem:[%s3416 + $0x111] sm:$0xff]
  %v9481 = vld [vmem:[%s3416 + $0x121] sm:$0xff]
  %v9482 = vld [vmem:[%s3416 + $0x129] sm:$0xff]
  %v9483 = vld [vmem:[%s3416 + $0x139] sm:$0xff]
  %v9484 = vld [vmem:[%s3416 + $0x141] sm:$0xff]
  %v9485 = vld [vmem:[%s3416 + $0x151] sm:$0xff]
  %v9486 = vld [vmem:[%s3416 + $0x159] sm:$0xff]
  %v9487 = vld [vmem:[%s3416 + $0x169] sm:$0xff]
  %v9488 = vld [vmem:[%s3416 + $0x171] sm:$0xff]
  %v9489 = vld [vmem:[%s3416 + $0x1b1] sm:$0xff]
  %v9490 = vld [vmem:[%s3416 + $0x1b9] sm:$0xff]
  %v9491 = vld [vmem:[%s3416 + $0x1c9] sm:$0xff]
  %v9492 = vld [vmem:[%s3416 + $0x1d1] sm:$0xff]
  %v9493 = vld [vmem:[%s3416 + $0x1e1] sm:$0xff]
  %v9494 = vld [vmem:[%s3416 + $0x1e9] sm:$0xff]
  %v9495 = vld [vmem:[%s3416 + $0x1f9] sm:$0xff]
  %v9496 = vld [vmem:[%s3416 + $0x201] sm:$0xff]
  %v9497 = vld [vmem:[%s3416 + $0x211] sm:$0xff]
  %v9498 = vld [vmem:[%s3416 + $0x219] sm:$0xff]
  %v9499 = vld [vmem:[%s3416 + $0x229] sm:$0xff]
  %v9500 = vld [vmem:[%s3416 + $0x231] sm:$0xff]
  %v9501 = vld [vmem:[%s3416 + $0x241] sm:$0xff]
  %v9502 = vld [vmem:[%s3416 + $0x249] sm:$0xff]
  %v9503 = vld [vmem:[%s3416 + $0x259] sm:$0xff]
  %v9504 = vld [vmem:[%s3416 + $0x261] sm:$0xff]
  %v9505 = vld [vmem:[%s3416 + $0x271] sm:$0xff]
  %v9506 = vld [vmem:[%s3416 + $0x279] sm:$0xff]
  %v9507 = vld [vmem:[%s3416 + $0x289] sm:$0xff]
  %v9508 = vld [vmem:[%s3416 + $0x291] sm:$0xff]
  %v9509 = vld [vmem:[%s3416 + $0x2a1] sm:$0xff]
  %v9510 = vld [vmem:[%s3416 + $0x2a9] sm:$0xff]
  %v9511 = vld [vmem:[%s3416 + $0x2b9] sm:$0xff]
  %v9512 = vld [vmem:[%s3416 + $0x2c1] sm:$0xff]
  %v9513 = vld [vmem:[%s3416 + $0x2d1] sm:$0xff]
  %v9514 = vld [vmem:[%s3416 + $0x2d9] sm:$0xff]
  %v9515 = vld [vmem:[%s3416 + $0x2e9] sm:$0xff]
  %v9516 = vld [vmem:[%s3416 + $0x2f1] sm:$0xff]
  %v9517 = vld [vmem:[%s3416 + $0x301] sm:$0xff]
  %v9518 = vld [vmem:[%s3416 + $0x309] sm:$0xff]
  %v9519 = vld [vmem:[%s3416 + $0x319] sm:$0xff]
  %v9520 = vld [vmem:[%s3416 + $0x321] sm:$0xff]
  %v9521 = vpack.c.bf16 %v9458, %v9457
  %v9522 = vpack.c.bf16 %v9460, %v9459
  %v9523 = vpack.c.bf16 %v9462, %v9461
  %v9524 = vpack.c.bf16 %v9464, %v9463
  %v9525 = vpack.c.bf16 %v9466, %v9465
  %v9526 = vpack.c.bf16 %v9468, %v9467
  %v9527 = vpack.c.bf16 %v9470, %v9469
  %v9528 = vpack.c.bf16 %v9472, %v9471
  %v9529 = vpack.c.bf16 %v9474, %v9473
  %v9530 = vpack.c.bf16 %v9476, %v9475
  %v9531 = vpack.c.bf16 %v9478, %v9477
  %v9532 = vpack.c.bf16 %v9480, %v9479
  %v9533 = vpack.c.bf16 %v9482, %v9481
  %v9534 = vpack.c.bf16 %v9484, %v9483
  %v9535 = vpack.c.bf16 %v9486, %v9485
  %v9536 = vpack.c.bf16 %v9488, %v9487
  %v9537 = vpack.c.bf16 %v9490, %v9489
  %v9538 = vpack.c.bf16 %v9492, %v9491
  %v9539 = vpack.c.bf16 %v9494, %v9493
  %v9540 = vpack.c.bf16 %v9496, %v9495
  %v9541 = vpack.c.bf16 %v9498, %v9497
  %v9542 = vpack.c.bf16 %v9500, %v9499
  %v9543 = vpack.c.bf16 %v9502, %v9501
  %v9544 = vpack.c.bf16 %v9504, %v9503
  %v9545 = vpack.c.bf16 %v9506, %v9505
  %v9546 = vpack.c.bf16 %v9508, %v9507
  %v9547 = vpack.c.bf16 %v9510, %v9509
  %v9548 = vpack.c.bf16 %v9512, %v9511
  %v9549 = vpack.c.bf16 %v9514, %v9513
  %v9550 = vpack.c.bf16 %v9516, %v9515
  %v9551 = vpack.c.bf16 %v9518, %v9517
  %v9552 = vpack.c.bf16 %v9520, %v9519
  %s9553 = scalar_lea.vmem %s4, 14
  %v9554 = vld [vmem:[%s9553] sm:$0x3]
  %v9556 = vsel %vm27, %v9521, 0
  %v9559 = vsel %vm27, %v9522, 0
  %v9562 = vsel %vm27, %v9523, 0
  %v9565 = vsel %vm27, %v9524, 0
  %v9568 = vsel %vm27, %v9525, 0
  %v9571 = vsel %vm27, %v9526, 0
  %v9574 = vsel %vm27, %v9527, 0
  %v9577 = vsel %vm27, %v9528, 0
  %v9580 = vsel %vm27, %v9529, 0
  %v9583 = vsel %vm27, %v9530, 0
  %v9586 = vsel %vm27, %v9531, 0
  %v9589 = vsel %vm27, %v9532, 0
  %v9592 = vsel %vm27, %v9533, 0
  %v9595 = vsel %vm27, %v9534, 0
  %v9598 = vsel %vm27, %v9535, 0
  %v9601 = vsel %vm27, %v9536, 0
  %v9604 = vsel %vm27, %v9537, 0
  %v9607 = vsel %vm27, %v9538, 0
  %v9610 = vsel %vm27, %v9539, 0
  %v9613 = vsel %vm27, %v9540, 0
  %v9616 = vsel %vm27, %v9541, 0
  %v9619 = vsel %vm27, %v9542, 0
  %v9622 = vsel %vm27, %v9543, 0
  %v9625 = vsel %vm27, %v9544, 0
  %v9628 = vsel %vm27, %v9545, 0
  %v9631 = vsel %vm27, %v9546, 0
  %v9634 = vsel %vm27, %v9547, 0
  %v9637 = vsel %vm27, %v9548, 0
  %v9640 = vsel %vm27, %v9549, 0
  %v9643 = vsel %vm27, %v9550, 0
  %v9646 = vsel %vm27, %v9551, 0
  %v9649 = vsel %vm27, %v9552, 0
  %v9652 = vsel %vm535, %v9554, 0
  %9654 = vmatprep.subr.bf16.mxu0 0
  %9655 = vmatpush1.bf16.msra.mxu0 %v9652
  %9656 = vmatprep.subr.bf16.mxu0 0
  %9657 = vmatpush1.bf16.msra.mxu0 0
  %9658 = vmatprep.subr.bf16.mxu0 0
  %9659 = vmatpush1.bf16.msra.mxu0 0
  %9660 = vmatprep.subr.bf16.mxu0 0
  %9661 = vmatpush1.bf16.msra.mxu0 0
  %9662 = vmatprep.subr.bf16.mxu0 0
  %9663 = vmatpush1.bf16.msra.mxu0 0
  %9664 = vmatprep.subr.bf16.mxu0 0
  %9665 = vmatpush1.bf16.msra.mxu0 0
  %9666 = vmatprep.subr.bf16.mxu0 0
  %9667 = vmatpush1.bf16.msra.mxu0 0
  %9668 = vmatprep.subr.bf16.mxu0 0
  %9669 = vmatpush1.bf16.msra.mxu0 0
  %9670 = vmatprep.subr.bf16.mxu0 0
  %9671 = vmatpush1.bf16.msra.mxu0 0
  %9672 = vmatprep.subr.bf16.mxu0 0
  %9673 = vmatpush1.bf16.msra.mxu0 0
  %9674 = vmatprep.subr.bf16.mxu0 0
  %9675 = vmatpush1.bf16.msra.mxu0 0
  %9676 = vmatprep.subr.bf16.mxu0 0
  %9677 = vmatpush1.bf16.msra.mxu0 0
  %9678 = vmatprep.subr.bf16.mxu0 0
  %9679 = vmatpush1.bf16.msra.mxu0 0
  %9680 = vmatprep.subr.bf16.mxu0 0
  %9681 = vmatpush1.bf16.msra.mxu0 0
  %9682 = vmatprep.subr.bf16.mxu0 0
  %9683 = vmatpush1.bf16.msra.mxu0 0
  %9684 = vmatprep.subr.bf16.mxu0 0
  %9685 = vmatpush1.bf16.msra.mxu0 0
  %9686 = vmatprep.mubr.bf16.mxu0 0
  %9687 = vmatmul.mubr.bf16.gmra.mrb[0].mxu0 %v9556
  %v9688 = vpop.f32.mrb[0].mxu0
  %v9689 = vadd.f32 0.0, %v9688
  %v9690 = vpop.f32.mrb[0].mxu0
  %v9691 = vpop.f32.mrb[0].mxu0
  %v9692 = vadd.f32 0.0, %v9691
  %v9693 = vpop.f32.mrb[0].mxu0
  %9694 = vmatprep.mubr.bf16.mxu0 0
  %9695 = vmatmul.mubr.bf16.gmra.mrb[0].mxu0 %v9559
  %v9696 = vpop.f32.mrb[0].mxu0
  %v9697 = vadd.f32 0.0, %v9696
  %v9698 = vpop.f32.mrb[0].mxu0
  %v9699 = vpop.f32.mrb[0].mxu0
  %v9700 = vadd.f32 0.0, %v9699
  %v9701 = vpop.f32.mrb[0].mxu0
  %9702 = vmatprep.mubr.bf16.mxu0 0
  %9703 = vmatmul.mubr.bf16.gmra.mrb[0].mxu0 %v9562
  %v9704 = vpop.f32.mrb[0].mxu0
  %v9705 = vadd.f32 0.0, %v9704
  %v9706 = vpop.f32.mrb[0].mxu0
  %v9707 = vpop.f32.mrb[0].mxu0
  %v9708 = vadd.f32 0.0, %v9707
  %v9709 = vpop.f32.mrb[0].mxu0
  %9710 = vmatprep.mubr.bf16.mxu0 0
  %9711 = vmatmul.mubr.bf16.gmra.mrb[0].mxu0 %v9565
  %v9712 = vpop.f32.mrb[0].mxu0
  %v9713 = vadd.f32 0.0, %v9712
  %v9714 = vpop.f32.mrb[0].mxu0
  %v9715 = vpop.f32.mrb[0].mxu0
  %v9716 = vadd.f32 0.0, %v9715
  %v9717 = vpop.f32.mrb[0].mxu0
  %9718 = vmatprep.mubr.bf16.mxu0 0
  %9719 = vmatmul.mubr.bf16.gmra.mrb[0].mxu0 %v9568
  %v9720 = vpop.f32.mrb[0].mxu0
  %v9721 = vadd.f32 0.0, %v9720
  %v9722 = vpop.f32.mrb[0].mxu0
  %v9723 = vpop.f32.mrb[0].mxu0
  %v9724 = vadd.f32 0.0, %v9723
  %v9725 = vpop.f32.mrb[0].mxu0
  %9726 = vmatprep.mubr.bf16.mxu0 0
  %9727 = vmatmul.mubr.bf16.gmra.mrb[0].mxu0 %v9571
  %v9728 = vpop.f32.mrb[0].mxu0
  %v9729 = vadd.f32 0.0, %v9728
  %v9730 = vpop.f32.mrb[0].mxu0
  %v9731 = vpop.f32.mrb[0].mxu0
  %v9732 = vadd.f32 0.0, %v9731
  %v9733 = vpop.f32.mrb[0].mxu0
  %9734 = vmatprep.mubr.bf16.mxu0 0
  %9735 = vmatmul.mubr.bf16.gmra.mrb[0].mxu0 %v9574
  %v9736 = vpop.f32.mrb[0].mxu0
  %v9737 = vadd.f32 0.0, %v9736
  %v9738 = vpop.f32.mrb[0].mxu0
  %v9739 = vpop.f32.mrb[0].mxu0
  %v9740 = vadd.f32 0.0, %v9739
  %v9741 = vpop.f32.mrb[0].mxu0
  %9742 = vmatprep.mubr.bf16.mxu0 0
  %9743 = vmatmul.mubr.bf16.gmra.mrb[0].mxu0 %v9577
  %v9744 = vpop.f32.mrb[0].mxu0
  %v9745 = vadd.f32 0.0, %v9744
  %v9746 = vpop.f32.mrb[0].mxu0
  %v9747 = vpop.f32.mrb[0].mxu0
  %v9748 = vadd.f32 0.0, %v9747
  %v9749 = vpop.f32.mrb[0].mxu0
  %9750 = vmatprep.mubr.bf16.mxu0 0
  %9751 = vmatmul.mubr.bf16.gmra.mrb[0].mxu0 %v9580
  %v9752 = vpop.f32.mrb[0].mxu0
  %v9753 = vadd.f32 0.0, %v9752
  %v9754 = vpop.f32.mrb[0].mxu0
  %v9755 = vpop.f32.mrb[0].mxu0
  %v9756 = vadd.f32 0.0, %v9755
  %v9757 = vpop.f32.mrb[0].mxu0
  %9758 = vmatprep.mubr.bf16.mxu0 0
  %9759 = vmatmul.mubr.bf16.gmra.mrb[0].mxu0 %v9583
  %v9760 = vpop.f32.mrb[0].mxu0
  %v9761 = vadd.f32 0.0, %v9760
  %v9762 = vpop.f32.mrb[0].mxu0
  %v9763 = vpop.f32.mrb[0].mxu0
  %v9764 = vadd.f32 0.0, %v9763
  %v9765 = vpop.f32.mrb[0].mxu0
  %9766 = vmatprep.mubr.bf16.mxu0 0
  %9767 = vmatmul.mubr.bf16.gmra.mrb[0].mxu0 %v9586
  %v9768 = vpop.f32.mrb[0].mxu0
  %v9769 = vadd.f32 0.0, %v9768
  %v9770 = vpop.f32.mrb[0].mxu0
  %v9771 = vpop.f32.mrb[0].mxu0
  %v9772 = vadd.f32 0.0, %v9771
  %v9773 = vpop.f32.mrb[0].mxu0
  %9774 = vmatprep.mubr.bf16.mxu0 0
  %9775 = vmatmul.mubr.bf16.gmra.mrb[0].mxu0 %v9589
  %v9776 = vpop.f32.mrb[0].mxu0
  %v9777 = vadd.f32 0.0, %v9776
  %v9778 = vpop.f32.mrb[0].mxu0
  %v9779 = vpop.f32.mrb[0].mxu0
  %v9780 = vadd.f32 0.0, %v9779
  %v9781 = vpop.f32.mrb[0].mxu0
  %9782 = vmatprep.mubr.bf16.mxu0 0
  %9783 = vmatmul.mubr.bf16.gmra.mrb[0].mxu0 %v9592
  %v9784 = vpop.f32.mrb[0].mxu0
  %v9785 = vadd.f32 0.0, %v9784
  %v9786 = vpop.f32.mrb[0].mxu0
  %v9787 = vpop.f32.mrb[0].mxu0
  %v9788 = vadd.f32 0.0, %v9787
  %v9789 = vpop.f32.mrb[0].mxu0
  %9790 = vmatprep.mubr.bf16.mxu0 0
  %9791 = vmatmul.mubr.bf16.gmra.mrb[0].mxu0 %v9595
  %v9792 = vpop.f32.mrb[0].mxu0
  %v9793 = vadd.f32 0.0, %v9792
  %v9794 = vpop.f32.mrb[0].mxu0
  %v9795 = vpop.f32.mrb[0].mxu0
  %v9796 = vadd.f32 0.0, %v9795
  %v9797 = vpop.f32.mrb[0].mxu0
  %9798 = vmatprep.mubr.bf16.mxu0 0
  %9799 = vmatmul.mubr.bf16.gmra.mrb[0].mxu0 %v9598
  %v9800 = vpop.f32.mrb[0].mxu0
  %v9801 = vadd.f32 0.0, %v9800
  %v9802 = vpop.f32.mrb[0].mxu0
  %v9803 = vpop.f32.mrb[0].mxu0
  %v9804 = vadd.f32 0.0, %v9803
  %v9805 = vpop.f32.mrb[0].mxu0
  %9806 = vmatprep.mubr.bf16.mxu0 0
  %9807 = vmatmul.mubr.bf16.gmra.mrb[0].mxu0 %v9601
  %v9808 = vpop.f32.mrb[0].mxu0
  %v9809 = vadd.f32 0.0, %v9808
  %v9810 = vpop.f32.mrb[0].mxu0
  %v9811 = vpop.f32.mrb[0].mxu0
  %v9812 = vadd.f32 0.0, %v9811
  %v9813 = vpop.f32.mrb[0].mxu0
  %9814 = vmatprep.mubr.bf16.mxu0 0
  %9815 = vmatmul.mubr.bf16.gmra.mrb[0].mxu0 %v9604
  %v9816 = vpop.f32.mrb[0].mxu0
  %v9817 = vadd.f32 0.0, %v9816
  %v9818 = vpop.f32.mrb[0].mxu0
  %v9819 = vpop.f32.mrb[0].mxu0
  %v9820 = vadd.f32 0.0, %v9819
  %v9821 = vpop.f32.mrb[0].mxu0
  %9822 = vmatprep.mubr.bf16.mxu0 0
  %9823 = vmatmul.mubr.bf16.gmra.mrb[0].mxu0 %v9607
  %v9824 = vpop.f32.mrb[0].mxu0
  %v9825 = vadd.f32 0.0, %v9824
  %v9826 = vpop.f32.mrb[0].mxu0
  %v9827 = vpop.f32.mrb[0].mxu0
  %v9828 = vadd.f32 0.0, %v9827
  %v9829 = vpop.f32.mrb[0].mxu0
  %9830 = vmatprep.mubr.bf16.mxu0 0
  %9831 = vmatmul.mubr.bf16.gmra.mrb[0].mxu0 %v9610
  %v9832 = vpop.f32.mrb[0].mxu0
  %v9833 = vadd.f32 0.0, %v9832
  %v9834 = vpop.f32.mrb[0].mxu0
  %v9835 = vpop.f32.mrb[0].mxu0
  %v9836 = vadd.f32 0.0, %v9835
  %v9837 = vpop.f32.mrb[0].mxu0
  %9838 = vmatprep.mubr.bf16.mxu0 0
  %9839 = vmatmul.mubr.bf16.gmra.mrb[0].mxu0 %v9613
  %v9840 = vpop.f32.mrb[0].mxu0
  %v9841 = vadd.f32 0.0, %v9840
  %v9842 = vpop.f32.mrb[0].mxu0
  %v9843 = vpop.f32.mrb[0].mxu0
  %v9844 = vadd.f32 0.0, %v9843
  %v9845 = vpop.f32.mrb[0].mxu0
  %9846 = vmatprep.mubr.bf16.mxu0 0
  %9847 = vmatmul.mubr.bf16.gmra.mrb[0].mxu0 %v9616
  %v9848 = vpop.f32.mrb[0].mxu0
  %v9849 = vadd.f32 0.0, %v9848
  %v9850 = vpop.f32.mrb[0].mxu0
  %v9851 = vpop.f32.mrb[0].mxu0
  %v9852 = vadd.f32 0.0, %v9851
  %v9853 = vpop.f32.mrb[0].mxu0
  %9854 = vmatprep.mubr.bf16.mxu0 0
  %9855 = vmatmul.mubr.bf16.gmra.mrb[0].mxu0 %v9619
  %v9856 = vpop.f32.mrb[0].mxu0
  %v9857 = vadd.f32 0.0, %v9856
  %v9858 = vpop.f32.mrb[0].mxu0
  %v9859 = vpop.f32.mrb[0].mxu0
  %v9860 = vadd.f32 0.0, %v9859
  %v9861 = vpop.f32.mrb[0].mxu0
  %9862 = vmatprep.mubr.bf16.mxu0 0
  %9863 = vmatmul.mubr.bf16.gmra.mrb[0].mxu0 %v9622
  %v9864 = vpop.f32.mrb[0].mxu0
  %v9865 = vadd.f32 0.0, %v9864
  %v9866 = vpop.f32.mrb[0].mxu0
  %v9867 = vpop.f32.mrb[0].mxu0
  %v9868 = vadd.f32 0.0, %v9867
  %v9869 = vpop.f32.mrb[0].mxu0
  %9870 = vmatprep.mubr.bf16.mxu0 0
  %9871 = vmatmul.mubr.bf16.gmra.mrb[0].mxu0 %v9625
  %v9872 = vpop.f32.mrb[0].mxu0
  %v9873 = vadd.f32 0.0, %v9872
  %v9874 = vpop.f32.mrb[0].mxu0
  %v9875 = vpop.f32.mrb[0].mxu0
  %v9876 = vadd.f32 0.0, %v9875
  %v9877 = vpop.f32.mrb[0].mxu0
  %9878 = vmatprep.mubr.bf16.mxu0 0
  %9879 = vmatmul.mubr.bf16.gmra.mrb[0].mxu0 %v9628
  %v9880 = vpop.f32.mrb[0].mxu0
  %v9881 = vadd.f32 0.0, %v9880
  %v9882 = vpop.f32.mrb[0].mxu0
  %v9883 = vpop.f32.mrb[0].mxu0
  %v9884 = vadd.f32 0.0, %v9883
  %v9885 = vpop.f32.mrb[0].mxu0
  %9886 = vmatprep.mubr.bf16.mxu0 0
  %9887 = vmatmul.mubr.bf16.gmra.mrb[0].mxu0 %v9631
  %v9888 = vpop.f32.mrb[0].mxu0
  %v9889 = vadd.f32 0.0, %v9888
  %v9890 = vpop.f32.mrb[0].mxu0
  %v9891 = vpop.f32.mrb[0].mxu0
  %v9892 = vadd.f32 0.0, %v9891
  %v9893 = vpop.f32.mrb[0].mxu0
  %9894 = vmatprep.mubr.bf16.mxu0 0
  %9895 = vmatmul.mubr.bf16.gmra.mrb[0].mxu0 %v9634
  %v9896 = vpop.f32.mrb[0].mxu0
  %v9897 = vadd.f32 0.0, %v9896
  %v9898 = vpop.f32.mrb[0].mxu0
  %v9899 = vpop.f32.mrb[0].mxu0
  %v9900 = vadd.f32 0.0, %v9899
  %v9901 = vpop.f32.mrb[0].mxu0
  %9902 = vmatprep.mubr.bf16.mxu0 0
  %9903 = vmatmul.mubr.bf16.gmra.mrb[0].mxu0 %v9637
  %v9904 = vpop.f32.mrb[0].mxu0
  %v9905 = vadd.f32 0.0, %v9904
  %v9906 = vpop.f32.mrb[0].mxu0
  %v9907 = vpop.f32.mrb[0].mxu0
  %v9908 = vadd.f32 0.0, %v9907
  %v9909 = vpop.f32.mrb[0].mxu0
  %9910 = vmatprep.mubr.bf16.mxu0 0
  %9911 = vmatmul.mubr.bf16.gmra.mrb[0].mxu0 %v9640
  %v9912 = vpop.f32.mrb[0].mxu0
  %v9913 = vadd.f32 0.0, %v9912
  %v9914 = vpop.f32.mrb[0].mxu0
  %v9915 = vpop.f32.mrb[0].mxu0
  %v9916 = vadd.f32 0.0, %v9915
  %v9917 = vpop.f32.mrb[0].mxu0
  %9918 = vmatprep.mubr.bf16.mxu0 0
  %9919 = vmatmul.mubr.bf16.gmra.mrb[0].mxu0 %v9643
  %v9920 = vpop.f32.mrb[0].mxu0
  %v9921 = vadd.f32 0.0, %v9920
  %v9922 = vpop.f32.mrb[0].mxu0
  %v9923 = vpop.f32.mrb[0].mxu0
  %v9924 = vadd.f32 0.0, %v9923
  %v9925 = vpop.f32.mrb[0].mxu0
  %9926 = vmatprep.mubr.bf16.mxu0 0
  %9927 = vmatmul.mubr.bf16.gmra.mrb[0].mxu0 %v9646
  %v9928 = vpop.f32.mrb[0].mxu0
  %v9929 = vadd.f32 0.0, %v9928
  %v9930 = vpop.f32.mrb[0].mxu0
  %v9931 = vpop.f32.mrb[0].mxu0
  %v9932 = vadd.f32 0.0, %v9931
  %v9933 = vpop.f32.mrb[0].mxu0
  %9934 = vmatprep.mubr.bf16.mxu0 0
  %9935 = vmatmul.mubr.bf16.gmra.mrb[0].mxu0 %v9649
  %v9936 = vpop.f32.mrb[0].mxu0
  %v9937 = vadd.f32 0.0, %v9936
  %v9938 = vpop.f32.mrb[0].mxu0
  %v9939 = vpop.f32.mrb[0].mxu0
  %v9940 = vadd.f32 0.0, %v9939
  %v9941 = vpop.f32.mrb[0].mxu0
  %9942 = vdwg.mxu0
  %v9943 = vadd.f32 %v9393, %v9689
  %v9944 = vadd.f32 %v9394, %v9692
  %v9945 = vadd.f32 %v9395, %v9697
  %v9946 = vadd.f32 %v9396, %v9700
  %v9947 = vadd.f32 %v9397, %v9705
  %v9948 = vadd.f32 %v9398, %v9708
  %v9949 = vadd.f32 %v9399, %v9713
  %v9950 = vadd.f32 %v9400, %v9716
  %v9951 = vadd.f32 %v9401, %v9721
  %v9952 = vadd.f32 %v9402, %v9724
  %v9953 = vadd.f32 %v9403, %v9729
  %v9954 = vadd.f32 %v9404, %v9732
  %v9955 = vadd.f32 %v9405, %v9737
  %v9956 = vadd.f32 %v9406, %v9740
  %v9957 = vadd.f32 %v9407, %v9745
  %v9958 = vadd.f32 %v9408, %v9748
  %v9959 = vadd.f32 %v9409, %v9753
  %v9960 = vadd.f32 %v9410, %v9756
  %v9961 = vadd.f32 %v9411, %v9761
  %v9962 = vadd.f32 %v9412, %v9764
  %v9963 = vadd.f32 %v9413, %v9769
  %v9964 = vadd.f32 %v9414, %v9772
  %v9965 = vadd.f32 %v9415, %v9777
  %v9966 = vadd.f32 %v9416, %v9780
  %v9967 = vadd.f32 %v9417, %v9785
  %v9968 = vadd.f32 %v9418, %v9788
  %v9969 = vadd.f32 %v9419, %v9793
  %v9970 = vadd.f32 %v9420, %v9796
  %v9971 = vadd.f32 %v9421, %v9801
  %v9972 = vadd.f32 %v9422, %v9804
  %v9973 = vadd.f32 %v9423, %v9809
  %v9974 = vadd.f32 %v9424, %v9812
  %v9975 = vadd.f32 %v9425, %v9817
  %v9976 = vadd.f32 %v9426, %v9820
  %v9977 = vadd.f32 %v9427, %v9825
  %v9978 = vadd.f32 %v9428, %v9828
  %v9979 = vadd.f32 %v9429, %v9833
  %v9980 = vadd.f32 %v9430, %v9836
  %v9981 = vadd.f32 %v9431, %v9841
  %v9982 = vadd.f32 %v9432, %v9844
  %v9983 = vadd.f32 %v9433, %v9849
  %v9984 = vadd.f32 %v9434, %v9852
  %v9985 = vadd.f32 %v9435, %v9857
  %v9986 = vadd.f32 %v9436, %v9860
  %v9987 = vadd.f32 %v9437, %v9865
  %v9988 = vadd.f32 %v9438, %v9868
  %v9989 = vadd.f32 %v9439, %v9873
  %v9990 = vadd.f32 %v9440, %v9876
  %v9991 = vadd.f32 %v9441, %v9881
  %v9992 = vadd.f32 %v9442, %v9884
  %v9993 = vadd.f32 %v9443, %v9889
  %v9994 = vadd.f32 %v9444, %v9892
  %v9995 = vadd.f32 %v9445, %v9897
  %v9996 = vadd.f32 %v9446, %v9900
  %v9997 = vadd.f32 %v9447, %v9905
  %v9998 = vadd.f32 %v9448, %v9908
  %v9999 = vadd.f32 %v9449, %v9913
  %v10000 = vadd.f32 %v9450, %v9916
  %v10001 = vadd.f32 %v9451, %v9921
  %v10002 = vadd.f32 %v9452, %v9924
  %v10003 = vadd.f32 %v9453, %v9929
  %v10004 = vadd.f32 %v9454, %v9932
  %v10005 = vadd.f32 %v9455, %v9937
  %v10006 = vadd.f32 %v9456, %v9940
  %v10007 = vld [vmem:[%s3416 + $0x2] sm:$0xff]
  %v10008 = vld [vmem:[%s3416 + $0xa] sm:$0xff]
  %v10009 = vld [vmem:[%s3416 + $0x1a] sm:$0xff]
  %v10010 = vld [vmem:[%s3416 + $0x22] sm:$0xff]
  %v10011 = vld [vmem:[%s3416 + $0x32] sm:$0xff]
  %v10012 = vld [vmem:[%s3416 + $0x3a] sm:$0xff]
  %v10013 = vld [vmem:[%s3416 + $0x4a] sm:$0xff]
  %v10014 = vld [vmem:[%s3416 + $0x52] sm:$0xff]
  %v10015 = vld [vmem:[%s3416 + $0x62] sm:$0xff]
  %v10016 = vld [vmem:[%s3416 + $0x6a] sm:$0xff]
  %v10017 = vld [vmem:[%s3416 + $0x7a] sm:$0xff]
  %v10018 = vld [vmem:[%s3416 + $0x82] sm:$0xff]
  %v10019 = vld [vmem:[%s3416 + $0x92] sm:$0xff]
  %v10020 = vld [vmem:[%s3416 + $0x9a] sm:$0xff]
  %v10021 = vld [vmem:[%s3416 + $0xaa] sm:$0xff]
  %v10022 = vld [vmem:[%s3416 + $0xb2] sm:$0xff]
  %v10023 = vld [vmem:[%s3416 + $0xc2] sm:$0xff]
  %v10024 = vld [vmem:[%s3416 + $0xca] sm:$0xff]
  %v10025 = vld [vmem:[%s3416 + $0xda] sm:$0xff]
  %v10026 = vld [vmem:[%s3416 + $0xe2] sm:$0xff]
  %v10027 = vld [vmem:[%s3416 + $0xf2] sm:$0xff]
  %v10028 = vld [vmem:[%s3416 + $0xfa] sm:$0xff]
  %v10029 = vld [vmem:[%s3416 + $0x10a] sm:$0xff]
  %v10030 = vld [vmem:[%s3416 + $0x112] sm:$0xff]
  %v10031 = vld [vmem:[%s3416 + $0x122] sm:$0xff]
  %v10032 = vld [vmem:[%s3416 + $0x12a] sm:$0xff]
  %v10033 = vld [vmem:[%s3416 + $0x13a] sm:$0xff]
  %v10034 = vld [vmem:[%s3416 + $0x142] sm:$0xff]
  %v10035 = vld [vmem:[%s3416 + $0x152] sm:$0xff]
  %v10036 = vld [vmem:[%s3416 + $0x15a] sm:$0xff]
  %v10037 = vld [vmem:[%s3416 + $0x16a] sm:$0xff]
  %v10038 = vld [vmem:[%s3416 + $0x172] sm:$0xff]
  %v10039 = vld [vmem:[%s3416 + $0x1b2] sm:$0xff]
  %v10040 = vld [vmem:[%s3416 + $0x1ba] sm:$0xff]
  %v10041 = vld [vmem:[%s3416 + $0x1ca] sm:$0xff]
  %v10042 = vld [vmem:[%s3416 + $0x1d2] sm:$0xff]
  %v10043 = vld [vmem:[%s3416 + $0x1e2] sm:$0xff]
  %v10044 = vld [vmem:[%s3416 + $0x1ea] sm:$0xff]
  %v10045 = vld [vmem:[%s3416 + $0x1fa] sm:$0xff]
  %v10046 = vld [vmem:[%s3416 + $0x202] sm:$0xff]
  %v10047 = vld [vmem:[%s3416 + $0x212] sm:$0xff]
  %v10048 = vld [vmem:[%s3416 + $0x21a] sm:$0xff]
  %v10049 = vld [vmem:[%s3416 + $0x22a] sm:$0xff]
  %v10050 = vld [vmem:[%s3416 + $0x232] sm:$0xff]
  %v10051 = vld [vmem:[%s3416 + $0x242] sm:$0xff]
  %v10052 = vld [vmem:[%s3416 + $0x24a] sm:$0xff]
  %v10053 = vld [vmem:[%s3416 + $0x25a] sm:$0xff]
  %v10054 = vld [vmem:[%s3416 + $0x262] sm:$0xff]
  %v10055 = vld [vmem:[%s3416 + $0x272] sm:$0xff]
  %v10056 = vld [vmem:[%s3416 + $0x27a] sm:$0xff]
  %v10057 = vld [vmem:[%s3416 + $0x28a] sm:$0xff]
  %v10058 = vld [vmem:[%s3416 + $0x292] sm:$0xff]
  %v10059 = vld [vmem:[%s3416 + $0x2a2] sm:$0xff]
  %v10060 = vld [vmem:[%s3416 + $0x2aa] sm:$0xff]
  %v10061 = vld [vmem:[%s3416 + $0x2ba] sm:$0xff]
  %v10062 = vld [vmem:[%s3416 + $0x2c2] sm:$0xff]
  %v10063 = vld [vmem:[%s3416 + $0x2d2] sm:$0xff]
  %v10064 = vld [vmem:[%s3416 + $0x2da] sm:$0xff]
  %v10065 = vld [vmem:[%s3416 + $0x2ea] sm:$0xff]
  %v10066 = vld [vmem:[%s3416 + $0x2f2] sm:$0xff]
  %v10067 = vld [vmem:[%s3416 + $0x302] sm:$0xff]
  %v10068 = vld [vmem:[%s3416 + $0x30a] sm:$0xff]
  %v10069 = vld [vmem:[%s3416 + $0x31a] sm:$0xff]
  %v10070 = vld [vmem:[%s3416 + $0x322] sm:$0xff]
  %v10071 = vpack.c.bf16 %v10008, %v10007
  %v10072 = vpack.c.bf16 %v10010, %v10009
  %v10073 = vpack.c.bf16 %v10012, %v10011
  %v10074 = vpack.c.bf16 %v10014, %v10013
  %v10075 = vpack.c.bf16 %v10016, %v10015
  %v10076 = vpack.c.bf16 %v10018, %v10017
  %v10077 = vpack.c.bf16 %v10020, %v10019
  %v10078 = vpack.c.bf16 %v10022, %v10021
  %v10079 = vpack.c.bf16 %v10024, %v10023
  %v10080 = vpack.c.bf16 %v10026, %v10025
  %v10081 = vpack.c.bf16 %v10028, %v10027
  %v10082 = vpack.c.bf16 %v10030, %v10029
  %v10083 = vpack.c.bf16 %v10032, %v10031
  %v10084 = vpack.c.bf16 %v10034, %v10033
  %v10085 = vpack.c.bf16 %v10036, %v10035
  %v10086 = vpack.c.bf16 %v10038, %v10037
  %v10087 = vpack.c.bf16 %v10040, %v10039
  %v10088 = vpack.c.bf16 %v10042, %v10041
  %v10089 = vpack.c.bf16 %v10044, %v10043
  %v10090 = vpack.c.bf16 %v10046, %v10045
  %v10091 = vpack.c.bf16 %v10048, %v10047
  %v10092 = vpack.c.bf16 %v10050, %v10049
  %v10093 = vpack.c.bf16 %v10052, %v10051
  %v10094 = vpack.c.bf16 %v10054, %v10053
  %v10095 = vpack.c.bf16 %v10056, %v10055
  %v10096 = vpack.c.bf16 %v10058, %v10057
  %v10097 = vpack.c.bf16 %v10060, %v10059
  %v10098 = vpack.c.bf16 %v10062, %v10061
  %v10099 = vpack.c.bf16 %v10064, %v10063
  %v10100 = vpack.c.bf16 %v10066, %v10065
  %v10101 = vpack.c.bf16 %v10068, %v10067
  %v10102 = vpack.c.bf16 %v10070, %v10069
  %s10103 = scalar_lea.vmem %s4, 16
  %v10104 = vld [vmem:[%s10103] sm:$0x3]
  %v10106 = vsel %vm27, %v10071, 0
  %v10109 = vsel %vm27, %v10072, 0
  %v10112 = vsel %vm27, %v10073, 0
  %v10115 = vsel %vm27, %v10074, 0
  %v10118 = vsel %vm27, %v10075, 0
  %v10121 = vsel %vm27, %v10076, 0
  %v10124 = vsel %vm27, %v10077, 0
  %v10127 = vsel %vm27, %v10078, 0
  %v10130 = vsel %vm27, %v10079, 0
  %v10133 = vsel %vm27, %v10080, 0
  %v10136 = vsel %vm27, %v10081, 0
  %v10139 = vsel %vm27, %v10082, 0
  %v10142 = vsel %vm27, %v10083, 0
  %v10145 = vsel %vm27, %v10084, 0
  %v10148 = vsel %vm27, %v10085, 0
  %v10151 = vsel %vm27, %v10086, 0
  %v10154 = vsel %vm27, %v10087, 0
  %v10157 = vsel %vm27, %v10088, 0
  %v10160 = vsel %vm27, %v10089, 0
  %v10163 = vsel %vm27, %v10090, 0
  %v10166 = vsel %vm27, %v10091, 0
  %v10169 = vsel %vm27, %v10092, 0
  %v10172 = vsel %vm27, %v10093, 0
  %v10175 = vsel %vm27, %v10094, 0
  %v10178 = vsel %vm27, %v10095, 0
  %v10181 = vsel %vm27, %v10096, 0
  %v10184 = vsel %vm27, %v10097, 0
  %v10187 = vsel %vm27, %v10098, 0
  %v10190 = vsel %vm27, %v10099, 0
  %v10193 = vsel %vm27, %v10100, 0
  %v10196 = vsel %vm27, %v10101, 0
  %v10199 = vsel %vm27, %v10102, 0
  %v10202 = vsel %vm535, %v10104, 0
  %10204 = vmatprep.subr.bf16.mxu0 0
  %10205 = vmatpush1.bf16.msra.mxu0 %v10202
  %10206 = vmatprep.subr.bf16.mxu0 0
  %10207 = vmatpush1.bf16.msra.mxu0 0
  %10208 = vmatprep.subr.bf16.mxu0 0
  %10209 = vmatpush1.bf16.msra.mxu0 0
  %10210 = vmatprep.subr.bf16.mxu0 0
  %10211 = vmatpush1.bf16.msra.mxu0 0
  %10212 = vmatprep.subr.bf16.mxu0 0
  %10213 = vmatpush1.bf16.msra.mxu0 0
  %10214 = vmatprep.subr.bf16.mxu0 0
  %10215 = vmatpush1.bf16.msra.mxu0 0
  %10216 = vmatprep.subr.bf16.mxu0 0
  %10217 = vmatpush1.bf16.msra.mxu0 0
  %10218 = vmatprep.subr.bf16.mxu0 0
  %10219 = vmatpush1.bf16.msra.mxu0 0
  %10220 = vmatprep.subr.bf16.mxu0 0
  %10221 = vmatpush1.bf16.msra.mxu0 0
  %10222 = vmatprep.subr.bf16.mxu0 0
  %10223 = vmatpush1.bf16.msra.mxu0 0
  %10224 = vmatprep.subr.bf16.mxu0 0
  %10225 = vmatpush1.bf16.msra.mxu0 0
  %10226 = vmatprep.subr.bf16.mxu0 0
  %10227 = vmatpush1.bf16.msra.mxu0 0
  %10228 = vmatprep.subr.bf16.mxu0 0
  %10229 = vmatpush1.bf16.msra.mxu0 0
  %10230 = vmatprep.subr.bf16.mxu0 0
  %10231 = vmatpush1.bf16.msra.mxu0 0
  %10232 = vmatprep.subr.bf16.mxu0 0
  %10233 = vmatpush1.bf16.msra.mxu0 0
  %10234 = vmatprep.subr.bf16.mxu0 0
  %10235 = vmatpush1.bf16.msra.mxu0 0
  %10236 = vmatprep.mubr.bf16.mxu0 0
  %10237 = vmatmul.mubr.bf16.gmra.mrb[0].mxu0 %v10106
  %v10238 = vpop.f32.mrb[0].mxu0
  %v10239 = vadd.f32 0.0, %v10238
  %v10240 = vpop.f32.mrb[0].mxu0
  %v10241 = vpop.f32.mrb[0].mxu0
  %v10242 = vadd.f32 0.0, %v10241
  %v10243 = vpop.f32.mrb[0].mxu0
  %10244 = vmatprep.mubr.bf16.mxu0 0
  %10245 = vmatmul.mubr.bf16.gmra.mrb[0].mxu0 %v10109
  %v10246 = vpop.f32.mrb[0].mxu0
  %v10247 = vadd.f32 0.0, %v10246
  %v10248 = vpop.f32.mrb[0].mxu0
  %v10249 = vpop.f32.mrb[0].mxu0
  %v10250 = vadd.f32 0.0, %v10249
  %v10251 = vpop.f32.mrb[0].mxu0
  %10252 = vmatprep.mubr.bf16.mxu0 0
  %10253 = vmatmul.mubr.bf16.gmra.mrb[0].mxu0 %v10112
  %v10254 = vpop.f32.mrb[0].mxu0
  %v10255 = vadd.f32 0.0, %v10254
  %v10256 = vpop.f32.mrb[0].mxu0
  %v10257 = vpop.f32.mrb[0].mxu0
  %v10258 = vadd.f32 0.0, %v10257
  %v10259 = vpop.f32.mrb[0].mxu0
  %10260 = vmatprep.mubr.bf16.mxu0 0
  %10261 = vmatmul.mubr.bf16.gmra.mrb[0].mxu0 %v10115
  %v10262 = vpop.f32.mrb[0].mxu0
  %v10263 = vadd.f32 0.0, %v10262
  %v10264 = vpop.f32.mrb[0].mxu0
  %v10265 = vpop.f32.mrb[0].mxu0
  %v10266 = vadd.f32 0.0, %v10265
  %v10267 = vpop.f32.mrb[0].mxu0
  %10268 = vmatprep.mubr.bf16.mxu0 0
  %10269 = vmatmul.mubr.bf16.gmra.mrb[0].mxu0 %v10118
  %v10270 = vpop.f32.mrb[0].mxu0
  %v10271 = vadd.f32 0.0, %v10270
  %v10272 = vpop.f32.mrb[0].mxu0
  %v10273 = vpop.f32.mrb[0].mxu0
  %v10274 = vadd.f32 0.0, %v10273
  %v10275 = vpop.f32.mrb[0].mxu0
  %10276 = vmatprep.mubr.bf16.mxu0 0
  %10277 = vmatmul.mubr.bf16.gmra.mrb[0].mxu0 %v10121
  %v10278 = vpop.f32.mrb[0].mxu0
  %v10279 = vadd.f32 0.0, %v10278
  %v10280 = vpop.f32.mrb[0].mxu0
  %v10281 = vpop.f32.mrb[0].mxu0
  %v10282 = vadd.f32 0.0, %v10281
  %v10283 = vpop.f32.mrb[0].mxu0
  %10284 = vmatprep.mubr.bf16.mxu0 0
  %10285 = vmatmul.mubr.bf16.gmra.mrb[0].mxu0 %v10124
  %v10286 = vpop.f32.mrb[0].mxu0
  %v10287 = vadd.f32 0.0, %v10286
  %v10288 = vpop.f32.mrb[0].mxu0
  %v10289 = vpop.f32.mrb[0].mxu0
  %v10290 = vadd.f32 0.0, %v10289
  %v10291 = vpop.f32.mrb[0].mxu0
  %10292 = vmatprep.mubr.bf16.mxu0 0
  %10293 = vmatmul.mubr.bf16.gmra.mrb[0].mxu0 %v10127
  %v10294 = vpop.f32.mrb[0].mxu0
  %v10295 = vadd.f32 0.0, %v10294
  %v10296 = vpop.f32.mrb[0].mxu0
  %v10297 = vpop.f32.mrb[0].mxu0
  %v10298 = vadd.f32 0.0, %v10297
  %v10299 = vpop.f32.mrb[0].mxu0
  %10300 = vmatprep.mubr.bf16.mxu0 0
  %10301 = vmatmul.mubr.bf16.gmra.mrb[0].mxu0 %v10130
  %v10302 = vpop.f32.mrb[0].mxu0
  %v10303 = vadd.f32 0.0, %v10302
  %v10304 = vpop.f32.mrb[0].mxu0
  %v10305 = vpop.f32.mrb[0].mxu0
  %v10306 = vadd.f32 0.0, %v10305
  %v10307 = vpop.f32.mrb[0].mxu0
  %10308 = vmatprep.mubr.bf16.mxu0 0
  %10309 = vmatmul.mubr.bf16.gmra.mrb[0].mxu0 %v10133
  %v10310 = vpop.f32.mrb[0].mxu0
  %v10311 = vadd.f32 0.0, %v10310
  %v10312 = vpop.f32.mrb[0].mxu0
  %v10313 = vpop.f32.mrb[0].mxu0
  %v10314 = vadd.f32 0.0, %v10313
  %v10315 = vpop.f32.mrb[0].mxu0
  %10316 = vmatprep.mubr.bf16.mxu0 0
  %10317 = vmatmul.mubr.bf16.gmra.mrb[0].mxu0 %v10136
  %v10318 = vpop.f32.mrb[0].mxu0
  %v10319 = vadd.f32 0.0, %v10318
  %v10320 = vpop.f32.mrb[0].mxu0
  %v10321 = vpop.f32.mrb[0].mxu0
  %v10322 = vadd.f32 0.0, %v10321
  %v10323 = vpop.f32.mrb[0].mxu0
  %10324 = vmatprep.mubr.bf16.mxu0 0
  %10325 = vmatmul.mubr.bf16.gmra.mrb[0].mxu0 %v10139
  %v10326 = vpop.f32.mrb[0].mxu0
  %v10327 = vadd.f32 0.0, %v10326
  %v10328 = vpop.f32.mrb[0].mxu0
  %v10329 = vpop.f32.mrb[0].mxu0
  %v10330 = vadd.f32 0.0, %v10329
  %v10331 = vpop.f32.mrb[0].mxu0
  %10332 = vmatprep.mubr.bf16.mxu0 0
  %10333 = vmatmul.mubr.bf16.gmra.mrb[0].mxu0 %v10142
  %v10334 = vpop.f32.mrb[0].mxu0
  %v10335 = vadd.f32 0.0, %v10334
  %v10336 = vpop.f32.mrb[0].mxu0
  %v10337 = vpop.f32.mrb[0].mxu0
  %v10338 = vadd.f32 0.0, %v10337
  %v10339 = vpop.f32.mrb[0].mxu0
  %10340 = vmatprep.mubr.bf16.mxu0 0
  %10341 = vmatmul.mubr.bf16.gmra.mrb[0].mxu0 %v10145
  %v10342 = vpop.f32.mrb[0].mxu0
  %v10343 = vadd.f32 0.0, %v10342
  %v10344 = vpop.f32.mrb[0].mxu0
  %v10345 = vpop.f32.mrb[0].mxu0
  %v10346 = vadd.f32 0.0, %v10345
  %v10347 = vpop.f32.mrb[0].mxu0
  %10348 = vmatprep.mubr.bf16.mxu0 0
  %10349 = vmatmul.mubr.bf16.gmra.mrb[0].mxu0 %v10148
  %v10350 = vpop.f32.mrb[0].mxu0
  %v10351 = vadd.f32 0.0, %v10350
  %v10352 = vpop.f32.mrb[0].mxu0
  %v10353 = vpop.f32.mrb[0].mxu0
  %v10354 = vadd.f32 0.0, %v10353
  %v10355 = vpop.f32.mrb[0].mxu0
  %10356 = vmatprep.mubr.bf16.mxu0 0
  %10357 = vmatmul.mubr.bf16.gmra.mrb[0].mxu0 %v10151
  %v10358 = vpop.f32.mrb[0].mxu0
  %v10359 = vadd.f32 0.0, %v10358
  %v10360 = vpop.f32.mrb[0].mxu0
  %v10361 = vpop.f32.mrb[0].mxu0
  %v10362 = vadd.f32 0.0, %v10361
  %v10363 = vpop.f32.mrb[0].mxu0
  %10364 = vmatprep.mubr.bf16.mxu0 0
  %10365 = vmatmul.mubr.bf16.gmra.mrb[0].mxu0 %v10154
  %v10366 = vpop.f32.mrb[0].mxu0
  %v10367 = vadd.f32 0.0, %v10366
  %v10368 = vpop.f32.mrb[0].mxu0
  %v10369 = vpop.f32.mrb[0].mxu0
  %v10370 = vadd.f32 0.0, %v10369
  %v10371 = vpop.f32.mrb[0].mxu0
  %10372 = vmatprep.mubr.bf16.mxu0 0
  %10373 = vmatmul.mubr.bf16.gmra.mrb[0].mxu0 %v10157
  %v10374 = vpop.f32.mrb[0].mxu0
  %v10375 = vadd.f32 0.0, %v10374
  %v10376 = vpop.f32.mrb[0].mxu0
  %v10377 = vpop.f32.mrb[0].mxu0
  %v10378 = vadd.f32 0.0, %v10377
  %v10379 = vpop.f32.mrb[0].mxu0
  %10380 = vmatprep.mubr.bf16.mxu0 0
  %10381 = vmatmul.mubr.bf16.gmra.mrb[0].mxu0 %v10160
  %v10382 = vpop.f32.mrb[0].mxu0
  %v10383 = vadd.f32 0.0, %v10382
  %v10384 = vpop.f32.mrb[0].mxu0
  %v10385 = vpop.f32.mrb[0].mxu0
  %v10386 = vadd.f32 0.0, %v10385
  %v10387 = vpop.f32.mrb[0].mxu0
  %10388 = vmatprep.mubr.bf16.mxu0 0
  %10389 = vmatmul.mubr.bf16.gmra.mrb[0].mxu0 %v10163
  %v10390 = vpop.f32.mrb[0].mxu0
  %v10391 = vadd.f32 0.0, %v10390
  %v10392 = vpop.f32.mrb[0].mxu0
  %v10393 = vpop.f32.mrb[0].mxu0
  %v10394 = vadd.f32 0.0, %v10393
  %v10395 = vpop.f32.mrb[0].mxu0
  %10396 = vmatprep.mubr.bf16.mxu0 0
  %10397 = vmatmul.mubr.bf16.gmra.mrb[0].mxu0 %v10166
  %v10398 = vpop.f32.mrb[0].mxu0
  %v10399 = vadd.f32 0.0, %v10398
  %v10400 = vpop.f32.mrb[0].mxu0
  %v10401 = vpop.f32.mrb[0].mxu0
  %v10402 = vadd.f32 0.0, %v10401
  %v10403 = vpop.f32.mrb[0].mxu0
  %10404 = vmatprep.mubr.bf16.mxu0 0
  %10405 = vmatmul.mubr.bf16.gmra.mrb[0].mxu0 %v10169
  %v10406 = vpop.f32.mrb[0].mxu0
  %v10407 = vadd.f32 0.0, %v10406
  %v10408 = vpop.f32.mrb[0].mxu0
  %v10409 = vpop.f32.mrb[0].mxu0
  %v10410 = vadd.f32 0.0, %v10409
  %v10411 = vpop.f32.mrb[0].mxu0
  %10412 = vmatprep.mubr.bf16.mxu0 0
  %10413 = vmatmul.mubr.bf16.gmra.mrb[0].mxu0 %v10172
  %v10414 = vpop.f32.mrb[0].mxu0
  %v10415 = vadd.f32 0.0, %v10414
  %v10416 = vpop.f32.mrb[0].mxu0
  %v10417 = vpop.f32.mrb[0].mxu0
  %v10418 = vadd.f32 0.0, %v10417
  %v10419 = vpop.f32.mrb[0].mxu0
  %10420 = vmatprep.mubr.bf16.mxu0 0
  %10421 = vmatmul.mubr.bf16.gmra.mrb[0].mxu0 %v10175
  %v10422 = vpop.f32.mrb[0].mxu0
  %v10423 = vadd.f32 0.0, %v10422
  %v10424 = vpop.f32.mrb[0].mxu0
  %v10425 = vpop.f32.mrb[0].mxu0
  %v10426 = vadd.f32 0.0, %v10425
  %v10427 = vpop.f32.mrb[0].mxu0
  %10428 = vmatprep.mubr.bf16.mxu0 0
  %10429 = vmatmul.mubr.bf16.gmra.mrb[0].mxu0 %v10178
  %v10430 = vpop.f32.mrb[0].mxu0
  %v10431 = vadd.f32 0.0, %v10430
  %v10432 = vpop.f32.mrb[0].mxu0
  %v10433 = vpop.f32.mrb[0].mxu0
  %v10434 = vadd.f32 0.0, %v10433
  %v10435 = vpop.f32.mrb[0].mxu0
  %10436 = vmatprep.mubr.bf16.mxu0 0
  %10437 = vmatmul.mubr.bf16.gmra.mrb[0].mxu0 %v10181
  %v10438 = vpop.f32.mrb[0].mxu0
  %v10439 = vadd.f32 0.0, %v10438
  %v10440 = vpop.f32.mrb[0].mxu0
  %v10441 = vpop.f32.mrb[0].mxu0
  %v10442 = vadd.f32 0.0, %v10441
  %v10443 = vpop.f32.mrb[0].mxu0
  %10444 = vmatprep.mubr.bf16.mxu0 0
  %10445 = vmatmul.mubr.bf16.gmra.mrb[0].mxu0 %v10184
  %v10446 = vpop.f32.mrb[0].mxu0
  %v10447 = vadd.f32 0.0, %v10446
  %v10448 = vpop.f32.mrb[0].mxu0
  %v10449 = vpop.f32.mrb[0].mxu0
  %v10450 = vadd.f32 0.0, %v10449
  %v10451 = vpop.f32.mrb[0].mxu0
  %10452 = vmatprep.mubr.bf16.mxu0 0
  %10453 = vmatmul.mubr.bf16.gmra.mrb[0].mxu0 %v10187
  %v10454 = vpop.f32.mrb[0].mxu0
  %v10455 = vadd.f32 0.0, %v10454
  %v10456 = vpop.f32.mrb[0].mxu0
  %v10457 = vpop.f32.mrb[0].mxu0
  %v10458 = vadd.f32 0.0, %v10457
  %v10459 = vpop.f32.mrb[0].mxu0
  %10460 = vmatprep.mubr.bf16.mxu0 0
  %10461 = vmatmul.mubr.bf16.gmra.mrb[0].mxu0 %v10190
  %v10462 = vpop.f32.mrb[0].mxu0
  %v10463 = vadd.f32 0.0, %v10462
  %v10464 = vpop.f32.mrb[0].mxu0
  %v10465 = vpop.f32.mrb[0].mxu0
  %v10466 = vadd.f32 0.0, %v10465
  %v10467 = vpop.f32.mrb[0].mxu0
  %10468 = vmatprep.mubr.bf16.mxu0 0
  %10469 = vmatmul.mubr.bf16.gmra.mrb[0].mxu0 %v10193
  %v10470 = vpop.f32.mrb[0].mxu0
  %v10471 = vadd.f32 0.0, %v10470
  %v10472 = vpop.f32.mrb[0].mxu0
  %v10473 = vpop.f32.mrb[0].mxu0
  %v10474 = vadd.f32 0.0, %v10473
  %v10475 = vpop.f32.mrb[0].mxu0
  %10476 = vmatprep.mubr.bf16.mxu0 0
  %10477 = vmatmul.mubr.bf16.gmra.mrb[0].mxu0 %v10196
  %v10478 = vpop.f32.mrb[0].mxu0
  %v10479 = vadd.f32 0.0, %v10478
  %v10480 = vpop.f32.mrb[0].mxu0
  %v10481 = vpop.f32.mrb[0].mxu0
  %v10482 = vadd.f32 0.0, %v10481
  %v10483 = vpop.f32.mrb[0].mxu0
  %10484 = vmatprep.mubr.bf16.mxu0 0
  %10485 = vmatmul.mubr.bf16.gmra.mrb[0].mxu0 %v10199
  %v10486 = vpop.f32.mrb[0].mxu0
  %v10487 = vadd.f32 0.0, %v10486
  %v10488 = vpop.f32.mrb[0].mxu0
  %v10489 = vpop.f32.mrb[0].mxu0
  %v10490 = vadd.f32 0.0, %v10489
  %v10491 = vpop.f32.mrb[0].mxu0
  %10492 = vdwg.mxu0
  %v10493 = vadd.f32 %v9943, %v10239
  %v10494 = vadd.f32 %v9944, %v10242
  %v10495 = vadd.f32 %v9945, %v10247
  %v10496 = vadd.f32 %v9946, %v10250
  %v10497 = vadd.f32 %v9947, %v10255
  %v10498 = vadd.f32 %v9948, %v10258
  %v10499 = vadd.f32 %v9949, %v10263
  %v10500 = vadd.f32 %v9950, %v10266
  %v10501 = vadd.f32 %v9951, %v10271
  %v10502 = vadd.f32 %v9952, %v10274
  %v10503 = vadd.f32 %v9953, %v10279
  %v10504 = vadd.f32 %v9954, %v10282
  %v10505 = vadd.f32 %v9955, %v10287
  %v10506 = vadd.f32 %v9956, %v10290
  %v10507 = vadd.f32 %v9957, %v10295
  %v10508 = vadd.f32 %v9958, %v10298
  %v10509 = vadd.f32 %v9959, %v10303
  %v10510 = vadd.f32 %v9960, %v10306
  %v10511 = vadd.f32 %v9961, %v10311
  %v10512 = vadd.f32 %v9962, %v10314
  %v10513 = vadd.f32 %v9963, %v10319
  %v10514 = vadd.f32 %v9964, %v10322
  %v10515 = vadd.f32 %v9965, %v10327
  %v10516 = vadd.f32 %v9966, %v10330
  %v10517 = vadd.f32 %v9967, %v10335
  %v10518 = vadd.f32 %v9968, %v10338
  %v10519 = vadd.f32 %v9969, %v10343
  %v10520 = vadd.f32 %v9970, %v10346
  %v10521 = vadd.f32 %v9971, %v10351
  %v10522 = vadd.f32 %v9972, %v10354
  %v10523 = vadd.f32 %v9973, %v10359
  %v10524 = vadd.f32 %v9974, %v10362
  %v10525 = vadd.f32 %v9975, %v10367
  %v10526 = vadd.f32 %v9976, %v10370
  %v10527 = vadd.f32 %v9977, %v10375
  %v10528 = vadd.f32 %v9978, %v10378
  %v10529 = vadd.f32 %v9979, %v10383
  %v10530 = vadd.f32 %v9980, %v10386
  %v10531 = vadd.f32 %v9981, %v10391
  %v10532 = vadd.f32 %v9982, %v10394
  %v10533 = vadd.f32 %v9983, %v10399
  %v10534 = vadd.f32 %v9984, %v10402
  %v10535 = vadd.f32 %v9985, %v10407
  %v10536 = vadd.f32 %v9986, %v10410
  %v10537 = vadd.f32 %v9987, %v10415
  %v10538 = vadd.f32 %v9988, %v10418
  %v10539 = vadd.f32 %v9989, %v10423
  %v10540 = vadd.f32 %v9990, %v10426
  %v10541 = vadd.f32 %v9991, %v10431
  %v10542 = vadd.f32 %v9992, %v10434
  %v10543 = vadd.f32 %v9993, %v10439
  %v10544 = vadd.f32 %v9994, %v10442
  %v10545 = vadd.f32 %v9995, %v10447
  %v10546 = vadd.f32 %v9996, %v10450
  %v10547 = vadd.f32 %v9997, %v10455
  %v10548 = vadd.f32 %v9998, %v10458
  %v10549 = vadd.f32 %v9999, %v10463
  %v10550 = vadd.f32 %v10000, %v10466
  %v10551 = vadd.f32 %v10001, %v10471
  %v10552 = vadd.f32 %v10002, %v10474
  %v10553 = vadd.f32 %v10003, %v10479
  %v10554 = vadd.f32 %v10004, %v10482
  %v10555 = vadd.f32 %v10005, %v10487
  %v10556 = vadd.f32 %v10006, %v10490
  %v10557 = vsel %vm27, %v10493, 0.0
  %v10558 = vsel %vm27, %v10494, 0.0
  %v10559 = vadd.f32 %v10557, %v10558
  %v10560 = vsel %vm27, %v10495, 0.0
  %v10561 = vadd.f32 %v10559, %v10560
  %v10562 = vsel %vm27, %v10496, 0.0
  %v10563 = vadd.f32 %v10561, %v10562
  %v10564 = vsel %vm27, %v10497, 0.0
  %v10565 = vadd.f32 %v10563, %v10564
  %v10566 = vsel %vm27, %v10498, 0.0
  %v10567 = vadd.f32 %v10565, %v10566
  %v10568 = vsel %vm27, %v10499, 0.0
  %v10569 = vadd.f32 %v10567, %v10568
  %v10570 = vsel %vm27, %v10500, 0.0
  %v10571 = vadd.f32 %v10569, %v10570
  %v10572 = vsel %vm27, %v10501, 0.0
  %v10573 = vadd.f32 %v10571, %v10572
  %v10574 = vsel %vm27, %v10502, 0.0
  %v10575 = vadd.f32 %v10573, %v10574
  %v10576 = vsel %vm27, %v10503, 0.0
  %v10577 = vadd.f32 %v10575, %v10576
  %v10578 = vsel %vm27, %v10504, 0.0
  %v10579 = vadd.f32 %v10577, %v10578
  %v10580 = vsel %vm27, %v10505, 0.0
  %v10581 = vadd.f32 %v10579, %v10580
  %v10582 = vsel %vm27, %v10506, 0.0
  %v10583 = vadd.f32 %v10581, %v10582
  %v10584 = vsel %vm27, %v10507, 0.0
  %v10585 = vadd.f32 %v10583, %v10584
  %v10586 = vsel %vm27, %v10508, 0.0
  %v10587 = vadd.f32 %v10585, %v10586
  %v10588 = vsel %vm27, %v10509, 0.0
  %v10589 = vadd.f32 %v10587, %v10588
  %v10590 = vsel %vm27, %v10510, 0.0
  %v10591 = vadd.f32 %v10589, %v10590
  %v10592 = vsel %vm27, %v10511, 0.0
  %v10593 = vadd.f32 %v10591, %v10592
  %v10594 = vsel %vm27, %v10512, 0.0
  %v10595 = vadd.f32 %v10593, %v10594
  %v10596 = vsel %vm27, %v10513, 0.0
  %v10597 = vadd.f32 %v10595, %v10596
  %v10598 = vsel %vm27, %v10514, 0.0
  %v10599 = vadd.f32 %v10597, %v10598
  %v10600 = vsel %vm27, %v10515, 0.0
  %v10601 = vadd.f32 %v10599, %v10600
  %v10602 = vsel %vm27, %v10516, 0.0
  %v10603 = vadd.f32 %v10601, %v10602
  %v10604 = vsel %vm27, %v10517, 0.0
  %v10605 = vadd.f32 %v10603, %v10604
  %v10606 = vsel %vm27, %v10518, 0.0
  %v10607 = vadd.f32 %v10605, %v10606
  %v10608 = vsel %vm27, %v10519, 0.0
  %v10609 = vadd.f32 %v10607, %v10608
  %v10610 = vsel %vm27, %v10520, 0.0
  %v10611 = vadd.f32 %v10609, %v10610
  %v10612 = vsel %vm27, %v10521, 0.0
  %v10613 = vadd.f32 %v10611, %v10612
  %v10614 = vsel %vm27, %v10522, 0.0
  %v10615 = vadd.f32 %v10613, %v10614
  %v10616 = vsel %vm27, %v10523, 0.0
  %v10617 = vadd.f32 %v10615, %v10616
  %v10618 = vsel %vm27, %v10524, 0.0
  %v10619 = vadd.f32 %v10617, %v10618
  %v10620 = vsel %vm27, %v10525, 0.0
  %v10621 = vadd.f32 %v10619, %v10620
  %v10622 = vsel %vm27, %v10526, 0.0
  %v10623 = vadd.f32 %v10621, %v10622
  %v10624 = vsel %vm27, %v10527, 0.0
  %v10625 = vadd.f32 %v10623, %v10624
  %v10626 = vsel %vm27, %v10528, 0.0
  %v10627 = vadd.f32 %v10625, %v10626
  %v10628 = vsel %vm27, %v10529, 0.0
  %v10629 = vadd.f32 %v10627, %v10628
  %v10630 = vsel %vm27, %v10530, 0.0
  %v10631 = vadd.f32 %v10629, %v10630
  %v10632 = vsel %vm27, %v10531, 0.0
  %v10633 = vadd.f32 %v10631, %v10632
  %v10634 = vsel %vm27, %v10532, 0.0
  %v10635 = vadd.f32 %v10633, %v10634
  %v10636 = vsel %vm27, %v10533, 0.0
  %v10637 = vadd.f32 %v10635, %v10636
  %v10638 = vsel %vm27, %v10534, 0.0
  %v10639 = vadd.f32 %v10637, %v10638
  %v10640 = vsel %vm27, %v10535, 0.0
  %v10641 = vadd.f32 %v10639, %v10640
  %v10642 = vsel %vm27, %v10536, 0.0
  %v10643 = vadd.f32 %v10641, %v10642
  %v10644 = vsel %vm27, %v10537, 0.0
  %v10645 = vadd.f32 %v10643, %v10644
  %v10646 = vsel %vm27, %v10538, 0.0
  %v10647 = vadd.f32 %v10645, %v10646
  %v10648 = vsel %vm27, %v10539, 0.0
  %v10649 = vadd.f32 %v10647, %v10648
  %v10650 = vsel %vm27, %v10540, 0.0
  %v10651 = vadd.f32 %v10649, %v10650
  %v10652 = vsel %vm27, %v10541, 0.0
  %v10653 = vadd.f32 %v10651, %v10652
  %v10654 = vsel %vm27, %v10542, 0.0
  %v10655 = vadd.f32 %v10653, %v10654
  %v10656 = vsel %vm27, %v10543, 0.0
  %v10657 = vadd.f32 %v10655, %v10656
  %v10658 = vsel %vm27, %v10544, 0.0
  %v10659 = vadd.f32 %v10657, %v10658
  %v10660 = vsel %vm27, %v10545, 0.0
  %v10661 = vadd.f32 %v10659, %v10660
  %v10662 = vsel %vm27, %v10546, 0.0
  %v10663 = vadd.f32 %v10661, %v10662
  %v10664 = vsel %vm27, %v10547, 0.0
  %v10665 = vadd.f32 %v10663, %v10664
  %v10666 = vsel %vm27, %v10548, 0.0
  %v10667 = vadd.f32 %v10665, %v10666
  %v10668 = vsel %vm27, %v10549, 0.0
  %v10669 = vadd.f32 %v10667, %v10668
  %v10670 = vsel %vm27, %v10550, 0.0
  %v10671 = vadd.f32 %v10669, %v10670
  %v10672 = vsel %vm27, %v10551, 0.0
  %v10673 = vadd.f32 %v10671, %v10672
  %v10674 = vsel %vm27, %v10552, 0.0
  %v10675 = vadd.f32 %v10673, %v10674
  %v10676 = vsel %vm27, %v10553, 0.0
  %v10677 = vadd.f32 %v10675, %v10676
  %v10678 = vsel %vm27, %v10554, 0.0
  %v10679 = vadd.f32 %v10677, %v10678
  %v10680 = vsel %vm27, %v10555, 0.0
  %v10681 = vadd.f32 %v10679, %v10680
  %v10682 = vsel %vm27, %v10556, 0.0
  %v10683 = vadd.f32 %v10681, %v10682
  %v10684 = vrot.slane %v10683, 4
  %v10685 = vadd.f32 %v10683, %v10684
  %v10686 = vrot.slane %v10685, 2
  %v10687 = vadd.f32 %v10685, %v10686
  %v10688 = vrot.slane %v10687, 1
  %v10689 = vadd.f32 %v10687, %v10688
  %v10690 = vmul.f32 %v10689, 0.001953125
  %v10691 = vsub.f32 %v10493, %v10690
  %v10692 = vsub.f32 %v10494, %v10690
  %v10693 = vsub.f32 %v10495, %v10690
  %v10694 = vsub.f32 %v10496, %v10690
  %v10695 = vsub.f32 %v10497, %v10690
  %v10696 = vsub.f32 %v10498, %v10690
  %v10697 = vsub.f32 %v10499, %v10690
  %v10698 = vsub.f32 %v10500, %v10690
  %v10699 = vsub.f32 %v10501, %v10690
  %v10700 = vsub.f32 %v10502, %v10690
  %v10701 = vsub.f32 %v10503, %v10690
  %v10702 = vsub.f32 %v10504, %v10690
  %v10703 = vsub.f32 %v10505, %v10690
  %v10704 = vsub.f32 %v10506, %v10690
  %v10705 = vsub.f32 %v10507, %v10690
  %v10706 = vsub.f32 %v10508, %v10690
  %v10707 = vsub.f32 %v10509, %v10690
  %v10708 = vsub.f32 %v10510, %v10690
  %v10709 = vsub.f32 %v10511, %v10690
  %v10710 = vsub.f32 %v10512, %v10690
  %v10711 = vsub.f32 %v10513, %v10690
  %v10712 = vsub.f32 %v10514, %v10690
  %v10713 = vsub.f32 %v10515, %v10690
  %v10714 = vsub.f32 %v10516, %v10690
  %v10715 = vsub.f32 %v10517, %v10690
  %v10716 = vsub.f32 %v10518, %v10690
  %v10717 = vsub.f32 %v10519, %v10690
  %v10718 = vsub.f32 %v10520, %v10690
  %v10719 = vsub.f32 %v10521, %v10690
  %v10720 = vsub.f32 %v10522, %v10690
  %v10721 = vsub.f32 %v10523, %v10690
  %v10722 = vsub.f32 %v10524, %v10690
  %v10723 = vsub.f32 %v10525, %v10690
  %v10724 = vsub.f32 %v10526, %v10690
  %v10725 = vsub.f32 %v10527, %v10690
  %v10726 = vsub.f32 %v10528, %v10690
  %v10727 = vsub.f32 %v10529, %v10690
  %v10728 = vsub.f32 %v10530, %v10690
  %v10729 = vsub.f32 %v10531, %v10690
  %v10730 = vsub.f32 %v10532, %v10690
  %v10731 = vsub.f32 %v10533, %v10690
  %v10732 = vsub.f32 %v10534, %v10690
  %v10733 = vsub.f32 %v10535, %v10690
  %v10734 = vsub.f32 %v10536, %v10690
  %v10735 = vsub.f32 %v10537, %v10690
  %v10736 = vsub.f32 %v10538, %v10690
  %v10737 = vsub.f32 %v10539, %v10690
  %v10738 = vsub.f32 %v10540, %v10690
  %v10739 = vsub.f32 %v10541, %v10690
  %v10740 = vsub.f32 %v10542, %v10690
  %v10741 = vsub.f32 %v10543, %v10690
  %v10742 = vsub.f32 %v10544, %v10690
  %v10743 = vsub.f32 %v10545, %v10690
  %v10744 = vsub.f32 %v10546, %v10690
  %v10745 = vsub.f32 %v10547, %v10690
  %v10746 = vsub.f32 %v10548, %v10690
  %v10747 = vsub.f32 %v10549, %v10690
  %v10748 = vsub.f32 %v10550, %v10690
  %v10749 = vsub.f32 %v10551, %v10690
  %v10750 = vsub.f32 %v10552, %v10690
  %v10751 = vsub.f32 %v10553, %v10690
  %v10752 = vsub.f32 %v10554, %v10690
  %v10753 = vsub.f32 %v10555, %v10690
  %v10754 = vsub.f32 %v10556, %v10690
  %v10755 = vmul.f32 %v10691, %v10691
  %v10756 = vmul.f32 %v10692, %v10692
  %v10757 = vmul.f32 %v10693, %v10693
  %v10758 = vmul.f32 %v10694, %v10694
  %v10759 = vmul.f32 %v10695, %v10695
  %v10760 = vmul.f32 %v10696, %v10696
  %v10761 = vmul.f32 %v10697, %v10697
  %v10762 = vmul.f32 %v10698, %v10698
  %v10763 = vmul.f32 %v10699, %v10699
  %v10764 = vmul.f32 %v10700, %v10700
  %v10765 = vmul.f32 %v10701, %v10701
  %v10766 = vmul.f32 %v10702, %v10702
  %v10767 = vmul.f32 %v10703, %v10703
  %v10768 = vmul.f32 %v10704, %v10704
  %v10769 = vmul.f32 %v10705, %v10705
  %v10770 = vmul.f32 %v10706, %v10706
  %v10771 = vmul.f32 %v10707, %v10707
  %v10772 = vmul.f32 %v10708, %v10708
  %v10773 = vmul.f32 %v10709, %v10709
  %v10774 = vmul.f32 %v10710, %v10710
  %v10775 = vmul.f32 %v10711, %v10711
  %v10776 = vmul.f32 %v10712, %v10712
  %v10777 = vmul.f32 %v10713, %v10713
  %v10778 = vmul.f32 %v10714, %v10714
  %v10779 = vmul.f32 %v10715, %v10715
  %v10780 = vmul.f32 %v10716, %v10716
  %v10781 = vmul.f32 %v10717, %v10717
  %v10782 = vmul.f32 %v10718, %v10718
  %v10783 = vmul.f32 %v10719, %v10719
  %v10784 = vmul.f32 %v10720, %v10720
  %v10785 = vmul.f32 %v10721, %v10721
  %v10786 = vmul.f32 %v10722, %v10722
  %v10787 = vmul.f32 %v10723, %v10723
  %v10788 = vmul.f32 %v10724, %v10724
  %v10789 = vmul.f32 %v10725, %v10725
  %v10790 = vmul.f32 %v10726, %v10726
  %v10791 = vmul.f32 %v10727, %v10727
  %v10792 = vmul.f32 %v10728, %v10728
  %v10793 = vmul.f32 %v10729, %v10729
  %v10794 = vmul.f32 %v10730, %v10730
  %v10795 = vmul.f32 %v10731, %v10731
  %v10796 = vmul.f32 %v10732, %v10732
  %v10797 = vmul.f32 %v10733, %v10733
  %v10798 = vmul.f32 %v10734, %v10734
  %v10799 = vmul.f32 %v10735, %v10735
  %v10800 = vmul.f32 %v10736, %v10736
  %v10801 = vmul.f32 %v10737, %v10737
  %v10802 = vmul.f32 %v10738, %v10738
  %v10803 = vmul.f32 %v10739, %v10739
  %v10804 = vmul.f32 %v10740, %v10740
  %v10805 = vmul.f32 %v10741, %v10741
  %v10806 = vmul.f32 %v10742, %v10742
  %v10807 = vmul.f32 %v10743, %v10743
  %v10808 = vmul.f32 %v10744, %v10744
  %v10809 = vmul.f32 %v10745, %v10745
  %v10810 = vmul.f32 %v10746, %v10746
  %v10811 = vmul.f32 %v10747, %v10747
  %v10812 = vmul.f32 %v10748, %v10748
  %v10813 = vmul.f32 %v10749, %v10749
  %v10814 = vmul.f32 %v10750, %v10750
  %v10815 = vmul.f32 %v10751, %v10751
  %v10816 = vmul.f32 %v10752, %v10752
  %v10817 = vmul.f32 %v10753, %v10753
  %v10818 = vmul.f32 %v10754, %v10754
  %v10819 = vsel %vm27, %v10755, 0.0
  %v10820 = vsel %vm27, %v10756, 0.0
  %v10821 = vadd.f32 %v10819, %v10820
  %v10822 = vsel %vm27, %v10757, 0.0
  %v10823 = vadd.f32 %v10821, %v10822
  %v10824 = vsel %vm27, %v10758, 0.0
  %v10825 = vadd.f32 %v10823, %v10824
  %v10826 = vsel %vm27, %v10759, 0.0
  %v10827 = vadd.f32 %v10825, %v10826
  %v10828 = vsel %vm27, %v10760, 0.0
  %v10829 = vadd.f32 %v10827, %v10828
  %v10830 = vsel %vm27, %v10761, 0.0
  %v10831 = vadd.f32 %v10829, %v10830
  %v10832 = vsel %vm27, %v10762, 0.0
  %v10833 = vadd.f32 %v10831, %v10832
  %v10834 = vsel %vm27, %v10763, 0.0
  %v10835 = vadd.f32 %v10833, %v10834
  %v10836 = vsel %vm27, %v10764, 0.0
  %v10837 = vadd.f32 %v10835, %v10836
  %v10838 = vsel %vm27, %v10765, 0.0
  %v10839 = vadd.f32 %v10837, %v10838
  %v10840 = vsel %vm27, %v10766, 0.0
  %v10841 = vadd.f32 %v10839, %v10840
  %v10842 = vsel %vm27, %v10767, 0.0
  %v10843 = vadd.f32 %v10841, %v10842
  %v10844 = vsel %vm27, %v10768, 0.0
  %v10845 = vadd.f32 %v10843, %v10844
  %v10846 = vsel %vm27, %v10769, 0.0
  %v10847 = vadd.f32 %v10845, %v10846
  %v10848 = vsel %vm27, %v10770, 0.0
  %v10849 = vadd.f32 %v10847, %v10848
  %v10850 = vsel %vm27, %v10771, 0.0
  %v10851 = vadd.f32 %v10849, %v10850
  %v10852 = vsel %vm27, %v10772, 0.0
  %v10853 = vadd.f32 %v10851, %v10852
  %v10854 = vsel %vm27, %v10773, 0.0
  %v10855 = vadd.f32 %v10853, %v10854
  %v10856 = vsel %vm27, %v10774, 0.0
  %v10857 = vadd.f32 %v10855, %v10856
  %v10858 = vsel %vm27, %v10775, 0.0
  %v10859 = vadd.f32 %v10857, %v10858
  %v10860 = vsel %vm27, %v10776, 0.0
  %v10861 = vadd.f32 %v10859, %v10860
  %v10862 = vsel %vm27, %v10777, 0.0
  %v10863 = vadd.f32 %v10861, %v10862
  %v10864 = vsel %vm27, %v10778, 0.0
  %v10865 = vadd.f32 %v10863, %v10864
  %v10866 = vsel %vm27, %v10779, 0.0
  %v10867 = vadd.f32 %v10865, %v10866
  %v10868 = vsel %vm27, %v10780, 0.0
  %v10869 = vadd.f32 %v10867, %v10868
  %v10870 = vsel %vm27, %v10781, 0.0
  %v10871 = vadd.f32 %v10869, %v10870
  %v10872 = vsel %vm27, %v10782, 0.0
  %v10873 = vadd.f32 %v10871, %v10872
  %v10874 = vsel %vm27, %v10783, 0.0
  %v10875 = vadd.f32 %v10873, %v10874
  %v10876 = vsel %vm27, %v10784, 0.0
  %v10877 = vadd.f32 %v10875, %v10876
  %v10878 = vsel %vm27, %v10785, 0.0
  %v10879 = vadd.f32 %v10877, %v10878
  %v10880 = vsel %vm27, %v10786, 0.0
  %v10881 = vadd.f32 %v10879, %v10880
  %v10882 = vsel %vm27, %v10787, 0.0
  %v10883 = vadd.f32 %v10881, %v10882
  %v10884 = vsel %vm27, %v10788, 0.0
  %v10885 = vadd.f32 %v10883, %v10884
  %v10886 = vsel %vm27, %v10789, 0.0
  %v10887 = vadd.f32 %v10885, %v10886
  %v10888 = vsel %vm27, %v10790, 0.0
  %v10889 = vadd.f32 %v10887, %v10888
  %v10890 = vsel %vm27, %v10791, 0.0
  %v10891 = vadd.f32 %v10889, %v10890
  %v10892 = vsel %vm27, %v10792, 0.0
  %v10893 = vadd.f32 %v10891, %v10892
  %v10894 = vsel %vm27, %v10793, 0.0
  %v10895 = vadd.f32 %v10893, %v10894
  %v10896 = vsel %vm27, %v10794, 0.0
  %v10897 = vadd.f32 %v10895, %v10896
  %v10898 = vsel %vm27, %v10795, 0.0
  %v10899 = vadd.f32 %v10897, %v10898
  %v10900 = vsel %vm27, %v10796, 0.0
  %v10901 = vadd.f32 %v10899, %v10900
  %v10902 = vsel %vm27, %v10797, 0.0
  %v10903 = vadd.f32 %v10901, %v10902
  %v10904 = vsel %vm27, %v10798, 0.0
  %v10905 = vadd.f32 %v10903, %v10904
  %v10906 = vsel %vm27, %v10799, 0.0
  %v10907 = vadd.f32 %v10905, %v10906
  %v10908 = vsel %vm27, %v10800, 0.0
  %v10909 = vadd.f32 %v10907, %v10908
  %v10910 = vsel %vm27, %v10801, 0.0
  %v10911 = vadd.f32 %v10909, %v10910
  %v10912 = vsel %vm27, %v10802, 0.0
  %v10913 = vadd.f32 %v10911, %v10912
  %v10914 = vsel %vm27, %v10803, 0.0
  %v10915 = vadd.f32 %v10913, %v10914
  %v10916 = vsel %vm27, %v10804, 0.0
  %v10917 = vadd.f32 %v10915, %v10916
  %v10918 = vsel %vm27, %v10805, 0.0
  %v10919 = vadd.f32 %v10917, %v10918
  %v10920 = vsel %vm27, %v10806, 0.0
  %v10921 = vadd.f32 %v10919, %v10920
  %v10922 = vsel %vm27, %v10807, 0.0
  %v10923 = vadd.f32 %v10921, %v10922
  %v10924 = vsel %vm27, %v10808, 0.0
  %v10925 = vadd.f32 %v10923, %v10924
  %v10926 = vsel %vm27, %v10809, 0.0
  %v10927 = vadd.f32 %v10925, %v10926
  %v10928 = vsel %vm27, %v10810, 0.0
  %v10929 = vadd.f32 %v10927, %v10928
  %v10930 = vsel %vm27, %v10811, 0.0
  %v10931 = vadd.f32 %v10929, %v10930
  %v10932 = vsel %vm27, %v10812, 0.0
  %v10933 = vadd.f32 %v10931, %v10932
  %v10934 = vsel %vm27, %v10813, 0.0
  %v10935 = vadd.f32 %v10933, %v10934
  %v10936 = vsel %vm27, %v10814, 0.0
  %v10937 = vadd.f32 %v10935, %v10936
  %v10938 = vsel %vm27, %v10815, 0.0
  %v10939 = vadd.f32 %v10937, %v10938
  %v10940 = vsel %vm27, %v10816, 0.0
  %v10941 = vadd.f32 %v10939, %v10940
  %v10942 = vsel %vm27, %v10817, 0.0
  %v10943 = vadd.f32 %v10941, %v10942
  %v10944 = vsel %vm27, %v10818, 0.0
  %v10945 = vadd.f32 %v10943, %v10944
  %v10946 = vrot.slane %v10945, 4
  %v10947 = vadd.f32 %v10945, %v10946
  %v10948 = vrot.slane %v10947, 2
  %v10949 = vadd.f32 %v10947, %v10948
  %v10950 = vrot.slane %v10949, 1
  %v10951 = vadd.f32 %v10949, %v10950
  %v10952 = vmul.f32 %v10951, 0.001953125
  %v10953 = vld [vmem:[%s5] sm:$0x1]
  %v10954 = vadd.f32 %v10952, 1e-05
  %v10955 = vrsqrt.pop %v10954
  %v10956 = vmul.f32 %v10953, %v10955
  %v10958 = vlaneseq
  %v10959 = vshrl.u32 %v10958, 7
  %v10960 = vsub.s32 0, %v10959
  %v10961 = vrot.slane %v10956, %v10960
  %v10963 = vmul.f32 %v10691, %v10961
  %v10964 = vmul.f32 %v10692, %v10961
  %v10965 = vmul.f32 %v10693, %v10961
  %v10966 = vmul.f32 %v10694, %v10961
  %v10967 = vmul.f32 %v10695, %v10961
  %v10968 = vmul.f32 %v10696, %v10961
  %v10969 = vmul.f32 %v10697, %v10961
  %v10970 = vmul.f32 %v10698, %v10961
  %v10971 = vmul.f32 %v10699, %v10961
  %v10972 = vmul.f32 %v10700, %v10961
  %v10973 = vmul.f32 %v10701, %v10961
  %v10974 = vmul.f32 %v10702, %v10961
  %v10975 = vmul.f32 %v10703, %v10961
  %v10976 = vmul.f32 %v10704, %v10961
  %v10977 = vmul.f32 %v10705, %v10961
  %v10978 = vmul.f32 %v10706, %v10961
  %v10979 = vmul.f32 %v10707, %v10961
  %v10980 = vmul.f32 %v10708, %v10961
  %v10981 = vmul.f32 %v10709, %v10961
  %v10982 = vmul.f32 %v10710, %v10961
  %v10983 = vmul.f32 %v10711, %v10961
  %v10984 = vmul.f32 %v10712, %v10961
  %v10985 = vmul.f32 %v10713, %v10961
  %v10986 = vmul.f32 %v10714, %v10961
  %v10987 = vmul.f32 %v10715, %v10961
  %v10988 = vmul.f32 %v10716, %v10961
  %v10989 = vmul.f32 %v10717, %v10961
  %v10990 = vmul.f32 %v10718, %v10961
  %v10991 = vmul.f32 %v10719, %v10961
  %v10992 = vmul.f32 %v10720, %v10961
  %v10993 = vmul.f32 %v10721, %v10961
  %v10994 = vmul.f32 %v10722, %v10961
  %v10995 = vmul.f32 %v10723, %v10961
  %v10996 = vmul.f32 %v10724, %v10961
  %v10997 = vmul.f32 %v10725, %v10961
  %v10998 = vmul.f32 %v10726, %v10961
  %v10999 = vmul.f32 %v10727, %v10961
  %v11000 = vmul.f32 %v10728, %v10961
  %v11001 = vmul.f32 %v10729, %v10961
  %v11002 = vmul.f32 %v10730, %v10961
  %v11003 = vmul.f32 %v10731, %v10961
  %v11004 = vmul.f32 %v10732, %v10961
  %v11005 = vmul.f32 %v10733, %v10961
  %v11006 = vmul.f32 %v10734, %v10961
  %v11007 = vmul.f32 %v10735, %v10961
  %v11008 = vmul.f32 %v10736, %v10961
  %v11009 = vmul.f32 %v10737, %v10961
  %v11010 = vmul.f32 %v10738, %v10961
  %v11011 = vmul.f32 %v10739, %v10961
  %v11012 = vmul.f32 %v10740, %v10961
  %v11013 = vmul.f32 %v10741, %v10961
  %v11014 = vmul.f32 %v10742, %v10961
  %v11015 = vmul.f32 %v10743, %v10961
  %v11016 = vmul.f32 %v10744, %v10961
  %v11017 = vmul.f32 %v10745, %v10961
  %v11018 = vmul.f32 %v10746, %v10961
  %v11019 = vmul.f32 %v10747, %v10961
  %v11020 = vmul.f32 %v10748, %v10961
  %v11021 = vmul.f32 %v10749, %v10961
  %v11022 = vmul.f32 %v10750, %v10961
  %v11023 = vmul.f32 %v10751, %v10961
  %v11024 = vmul.f32 %v10752, %v10961
  %v11025 = vmul.f32 %v10753, %v10961
  %v11026 = vmul.f32 %v10754, %v10961
  %v11027 = vld [vmem:[%s6] sm:$0x1]
  %v11029 = vlaneseq
  %v11030 = vshrl.u32 %v11029, 7
  %v11031 = vsub.s32 0, %v11030
  %v11032 = vrot.slane %v11027, %v11031
  %v11034 = vadd.f32 %v10963, %v11032
  %v11035 = vadd.f32 %v10964, %v11032
  %v11036 = vadd.f32 %v10965, %v11032
  %v11037 = vadd.f32 %v10966, %v11032
  %v11038 = vadd.f32 %v10967, %v11032
  %v11039 = vadd.f32 %v10968, %v11032
  %v11040 = vadd.f32 %v10969, %v11032
  %v11041 = vadd.f32 %v10970, %v11032
  %v11042 = vadd.f32 %v10971, %v11032
  %v11043 = vadd.f32 %v10972, %v11032
  %v11044 = vadd.f32 %v10973, %v11032
  %v11045 = vadd.f32 %v10974, %v11032
  %v11046 = vadd.f32 %v10975, %v11032
  %v11047 = vadd.f32 %v10976, %v11032
  %v11048 = vadd.f32 %v10977, %v11032
  %v11049 = vadd.f32 %v10978, %v11032
  %v11050 = vadd.f32 %v10979, %v11032
  %v11051 = vadd.f32 %v10980, %v11032
  %v11052 = vadd.f32 %v10981, %v11032
  %v11053 = vadd.f32 %v10982, %v11032
  %v11054 = vadd.f32 %v10983, %v11032
  %v11055 = vadd.f32 %v10984, %v11032
  %v11056 = vadd.f32 %v10985, %v11032
  %v11057 = vadd.f32 %v10986, %v11032
  %v11058 = vadd.f32 %v10987, %v11032
  %v11059 = vadd.f32 %v10988, %v11032
  %v11060 = vadd.f32 %v10989, %v11032
  %v11061 = vadd.f32 %v10990, %v11032
  %v11062 = vadd.f32 %v10991, %v11032
  %v11063 = vadd.f32 %v10992, %v11032
  %v11064 = vadd.f32 %v10993, %v11032
  %v11065 = vadd.f32 %v10994, %v11032
  %v11066 = vadd.f32 %v10995, %v11032
  %v11067 = vadd.f32 %v10996, %v11032
  %v11068 = vadd.f32 %v10997, %v11032
  %v11069 = vadd.f32 %v10998, %v11032
  %v11070 = vadd.f32 %v10999, %v11032
  %v11071 = vadd.f32 %v11000, %v11032
  %v11072 = vadd.f32 %v11001, %v11032
  %v11073 = vadd.f32 %v11002, %v11032
  %v11074 = vadd.f32 %v11003, %v11032
  %v11075 = vadd.f32 %v11004, %v11032
  %v11076 = vadd.f32 %v11005, %v11032
  %v11077 = vadd.f32 %v11006, %v11032
  %v11078 = vadd.f32 %v11007, %v11032
  %v11079 = vadd.f32 %v11008, %v11032
  %v11080 = vadd.f32 %v11009, %v11032
  %v11081 = vadd.f32 %v11010, %v11032
  %v11082 = vadd.f32 %v11011, %v11032
  %v11083 = vadd.f32 %v11012, %v11032
  %v11084 = vadd.f32 %v11013, %v11032
  %v11085 = vadd.f32 %v11014, %v11032
  %v11086 = vadd.f32 %v11015, %v11032
  %v11087 = vadd.f32 %v11016, %v11032
  %v11088 = vadd.f32 %v11017, %v11032
  %v11089 = vadd.f32 %v11018, %v11032
  %v11090 = vadd.f32 %v11019, %v11032
  %v11091 = vadd.f32 %v11020, %v11032
  %v11092 = vadd.f32 %v11021, %v11032
  %v11093 = vadd.f32 %v11022, %v11032
  %v11094 = vadd.f32 %v11023, %v11032
  %v11095 = vadd.f32 %v11024, %v11032
  %v11096 = vadd.f32 %v11025, %v11032
  %v11097 = vadd.f32 %v11026, %v11032
  %v11098 = vld [vmem:[%s0] sm:$0xff]
  %v11099 = vld [vmem:[%s0 + $0x8] sm:$0xff]
  %v11100 = vld [vmem:[%s0 + $0x10] sm:$0xff]
  %v11101 = vld [vmem:[%s0 + $0x18] sm:$0xff]
  %v11102 = vld [vmem:[%s0 + $0x20] sm:$0xff]
  %v11103 = vld [vmem:[%s0 + $0x28] sm:$0xff]
  %v11104 = vld [vmem:[%s0 + $0x30] sm:$0xff]
  %v11105 = vld [vmem:[%s0 + $0x38] sm:$0xff]
  %v11106 = vld [vmem:[%s0 + $0x40] sm:$0xff]
  %v11107 = vld [vmem:[%s0 + $0x48] sm:$0xff]
  %v11108 = vld [vmem:[%s0 + $0x50] sm:$0xff]
  %v11109 = vld [vmem:[%s0 + $0x58] sm:$0xff]
  %v11110 = vld [vmem:[%s0 + $0x60] sm:$0xff]
  %v11111 = vld [vmem:[%s0 + $0x68] sm:$0xff]
  %v11112 = vld [vmem:[%s0 + $0x70] sm:$0xff]
  %v11113 = vld [vmem:[%s0 + $0x78] sm:$0xff]
  %v11114 = vld [vmem:[%s0 + $0x80] sm:$0xff]
  %v11115 = vld [vmem:[%s0 + $0x88] sm:$0xff]
  %v11116 = vld [vmem:[%s0 + $0x90] sm:$0xff]
  %v11117 = vld [vmem:[%s0 + $0x98] sm:$0xff]
  %v11118 = vld [vmem:[%s0 + $0xa0] sm:$0xff]
  %v11119 = vld [vmem:[%s0 + $0xa8] sm:$0xff]
  %v11120 = vld [vmem:[%s0 + $0xb0] sm:$0xff]
  %v11121 = vld [vmem:[%s0 + $0xb8] sm:$0xff]
  %v11122 = vld [vmem:[%s0 + $0xc0] sm:$0xff]
  %v11123 = vld [vmem:[%s0 + $0xc8] sm:$0xff]
  %v11124 = vld [vmem:[%s0 + $0xd0] sm:$0xff]
  %v11125 = vld [vmem:[%s0 + $0xd8] sm:$0xff]
  %v11126 = vld [vmem:[%s0 + $0xe0] sm:$0xff]
  %v11127 = vld [vmem:[%s0 + $0xe8] sm:$0xff]
  %v11128 = vld [vmem:[%s0 + $0xf0] sm:$0xff]
  %v11129 = vld [vmem:[%s0 + $0xf8] sm:$0xff]
  %v11130 = vld [vmem:[%s0 + $0x100] sm:$0xff]
  %v11131 = vld [vmem:[%s0 + $0x108] sm:$0xff]
  %v11132 = vld [vmem:[%s0 + $0x110] sm:$0xff]
  %v11133 = vld [vmem:[%s0 + $0x118] sm:$0xff]
  %v11134 = vld [vmem:[%s0 + $0x120] sm:$0xff]
  %v11135 = vld [vmem:[%s0 + $0x128] sm:$0xff]
  %v11136 = vld [vmem:[%s0 + $0x130] sm:$0xff]
  %v11137 = vld [vmem:[%s0 + $0x138] sm:$0xff]
  %v11138 = vld [vmem:[%s0 + $0x140] sm:$0xff]
  %v11139 = vld [vmem:[%s0 + $0x148] sm:$0xff]
  %v11140 = vld [vmem:[%s0 + $0x150] sm:$0xff]
  %v11141 = vld [vmem:[%s0 + $0x158] sm:$0xff]
  %v11142 = vld [vmem:[%s0 + $0x160] sm:$0xff]
  %v11143 = vld [vmem:[%s0 + $0x168] sm:$0xff]
  %v11144 = vld [vmem:[%s0 + $0x170] sm:$0xff]
  %v11145 = vld [vmem:[%s0 + $0x178] sm:$0xff]
  %v11146 = vld [vmem:[%s0 + $0x180] sm:$0xff]
  %v11147 = vld [vmem:[%s0 + $0x188] sm:$0xff]
  %v11148 = vld [vmem:[%s0 + $0x190] sm:$0xff]
  %v11149 = vld [vmem:[%s0 + $0x198] sm:$0xff]
  %v11150 = vld [vmem:[%s0 + $0x1a0] sm:$0xff]
  %v11151 = vld [vmem:[%s0 + $0x1a8] sm:$0xff]
  %v11152 = vld [vmem:[%s0 + $0x1b0] sm:$0xff]
  %v11153 = vld [vmem:[%s0 + $0x1b8] sm:$0xff]
  %v11154 = vld [vmem:[%s0 + $0x1c0] sm:$0xff]
  %v11155 = vld [vmem:[%s0 + $0x1c8] sm:$0xff]
  %v11156 = vld [vmem:[%s0 + $0x1d0] sm:$0xff]
  %v11157 = vld [vmem:[%s0 + $0x1d8] sm:$0xff]
  %v11158 = vld [vmem:[%s0 + $0x1e0] sm:$0xff]
  %v11159 = vld [vmem:[%s0 + $0x1e8] sm:$0xff]
  %v11160 = vld [vmem:[%s0 + $0x1f0] sm:$0xff]
  %v11161 = vld [vmem:[%s0 + $0x1f8] sm:$0xff]
  %v11162 = vadd.f32 %v11034, %v11098
  %v11163 = vadd.f32 %v11035, %v11099
  %v11164 = vadd.f32 %v11036, %v11100
  %v11165 = vadd.f32 %v11037, %v11101
  %v11166 = vadd.f32 %v11038, %v11102
  %v11167 = vadd.f32 %v11039, %v11103
  %v11168 = vadd.f32 %v11040, %v11104
  %v11169 = vadd.f32 %v11041, %v11105
  %v11170 = vadd.f32 %v11042, %v11106
  %v11171 = vadd.f32 %v11043, %v11107
  %v11172 = vadd.f32 %v11044, %v11108
  %v11173 = vadd.f32 %v11045, %v11109
  %v11174 = vadd.f32 %v11046, %v11110
  %v11175 = vadd.f32 %v11047, %v11111
  %v11176 = vadd.f32 %v11048, %v11112
  %v11177 = vadd.f32 %v11049, %v11113
  %v11178 = vadd.f32 %v11050, %v11114
  %v11179 = vadd.f32 %v11051, %v11115
  %v11180 = vadd.f32 %v11052, %v11116
  %v11181 = vadd.f32 %v11053, %v11117
  %v11182 = vadd.f32 %v11054, %v11118
  %v11183 = vadd.f32 %v11055, %v11119
  %v11184 = vadd.f32 %v11056, %v11120
  %v11185 = vadd.f32 %v11057, %v11121
  %v11186 = vadd.f32 %v11058, %v11122
  %v11187 = vadd.f32 %v11059, %v11123
  %v11188 = vadd.f32 %v11060, %v11124
  %v11189 = vadd.f32 %v11061, %v11125
  %v11190 = vadd.f32 %v11062, %v11126
  %v11191 = vadd.f32 %v11063, %v11127
  %v11192 = vadd.f32 %v11064, %v11128
  %v11193 = vadd.f32 %v11065, %v11129
  %v11194 = vadd.f32 %v11066, %v11130
  %v11195 = vadd.f32 %v11067, %v11131
  %v11196 = vadd.f32 %v11068, %v11132
  %v11197 = vadd.f32 %v11069, %v11133
  %v11198 = vadd.f32 %v11070, %v11134
  %v11199 = vadd.f32 %v11071, %v11135
  %v11200 = vadd.f32 %v11072, %v11136
  %v11201 = vadd.f32 %v11073, %v11137
  %v11202 = vadd.f32 %v11074, %v11138
  %v11203 = vadd.f32 %v11075, %v11139
  %v11204 = vadd.f32 %v11076, %v11140
  %v11205 = vadd.f32 %v11077, %v11141
  %v11206 = vadd.f32 %v11078, %v11142
  %v11207 = vadd.f32 %v11079, %v11143
  %v11208 = vadd.f32 %v11080, %v11144
  %v11209 = vadd.f32 %v11081, %v11145
  %v11210 = vadd.f32 %v11082, %v11146
  %v11211 = vadd.f32 %v11083, %v11147
  %v11212 = vadd.f32 %v11084, %v11148
  %v11213 = vadd.f32 %v11085, %v11149
  %v11214 = vadd.f32 %v11086, %v11150
  %v11215 = vadd.f32 %v11087, %v11151
  %v11216 = vadd.f32 %v11088, %v11152
  %v11217 = vadd.f32 %v11089, %v11153
  %v11218 = vadd.f32 %v11090, %v11154
  %v11219 = vadd.f32 %v11091, %v11155
  %v11220 = vadd.f32 %v11092, %v11156
  %v11221 = vadd.f32 %v11093, %v11157
  %v11222 = vadd.f32 %v11094, %v11158
  %v11223 = vadd.f32 %v11095, %v11159
  %v11224 = vadd.f32 %v11096, %v11160
  %v11225 = vadd.f32 %v11097, %v11161
  %v11226 = vmax.f32 %v11162, 0.0
  %v11227 = vmax.f32 %v11163, 0.0
  %v11228 = vmax.f32 %v11164, 0.0
  %v11229 = vmax.f32 %v11165, 0.0
  %v11230 = vmax.f32 %v11166, 0.0
  %v11231 = vmax.f32 %v11167, 0.0
  %v11232 = vmax.f32 %v11168, 0.0
  %v11233 = vmax.f32 %v11169, 0.0
  %v11234 = vmax.f32 %v11170, 0.0
  %v11235 = vmax.f32 %v11171, 0.0
  %v11236 = vmax.f32 %v11172, 0.0
  %v11237 = vmax.f32 %v11173, 0.0
  %v11238 = vmax.f32 %v11174, 0.0
  %v11239 = vmax.f32 %v11175, 0.0
  %v11240 = vmax.f32 %v11176, 0.0
  %v11241 = vmax.f32 %v11177, 0.0
  %v11242 = vmax.f32 %v11178, 0.0
  %v11243 = vmax.f32 %v11179, 0.0
  %v11244 = vmax.f32 %v11180, 0.0
  %v11245 = vmax.f32 %v11181, 0.0
  %v11246 = vmax.f32 %v11182, 0.0
  %v11247 = vmax.f32 %v11183, 0.0
  %v11248 = vmax.f32 %v11184, 0.0
  %v11249 = vmax.f32 %v11185, 0.0
  %v11250 = vmax.f32 %v11186, 0.0
  %v11251 = vmax.f32 %v11187, 0.0
  %v11252 = vmax.f32 %v11188, 0.0
  %v11253 = vmax.f32 %v11189, 0.0
  %v11254 = vmax.f32 %v11190, 0.0
  %v11255 = vmax.f32 %v11191, 0.0
  %v11256 = vmax.f32 %v11192, 0.0
  %v11257 = vmax.f32 %v11193, 0.0
  %v11258 = vmax.f32 %v11194, 0.0
  %v11259 = vmax.f32 %v11195, 0.0
  %v11260 = vmax.f32 %v11196, 0.0
  %v11261 = vmax.f32 %v11197, 0.0
  %v11262 = vmax.f32 %v11198, 0.0
  %v11263 = vmax.f32 %v11199, 0.0
  %v11264 = vmax.f32 %v11200, 0.0
  %v11265 = vmax.f32 %v11201, 0.0
  %v11266 = vmax.f32 %v11202, 0.0
  %v11267 = vmax.f32 %v11203, 0.0
  %v11268 = vmax.f32 %v11204, 0.0
  %v11269 = vmax.f32 %v11205, 0.0
  %v11270 = vmax.f32 %v11206, 0.0
  %v11271 = vmax.f32 %v11207, 0.0
  %v11272 = vmax.f32 %v11208, 0.0
  %v11273 = vmax.f32 %v11209, 0.0
  %v11274 = vmax.f32 %v11210, 0.0
  %v11275 = vmax.f32 %v11211, 0.0
  %v11276 = vmax.f32 %v11212, 0.0
  %v11277 = vmax.f32 %v11213, 0.0
  %v11278 = vmax.f32 %v11214, 0.0
  %v11279 = vmax.f32 %v11215, 0.0
  %v11280 = vmax.f32 %v11216, 0.0
  %v11281 = vmax.f32 %v11217, 0.0
  %v11282 = vmax.f32 %v11218, 0.0
  %v11283 = vmax.f32 %v11219, 0.0
  %v11284 = vmax.f32 %v11220, 0.0
  %v11285 = vmax.f32 %v11221, 0.0
  %v11286 = vmax.f32 %v11222, 0.0
  %v11287 = vmax.f32 %v11223, 0.0
  %v11288 = vmax.f32 %v11224, 0.0
  %v11289 = vmax.f32 %v11225, 0.0
  %11290 = vst.msk [vmem:[%s7] sm:$0xff] %vm27, %v11226
  %11291 = vst.msk [vmem:[%s7 + $0x8] sm:$0xff] %vm27, %v11227
  %11292 = vst.msk [vmem:[%s7 + $0x10] sm:$0xff] %vm27, %v11228
  %11293 = vst.msk [vmem:[%s7 + $0x18] sm:$0xff] %vm27, %v11229
  %11294 = vst.msk [vmem:[%s7 + $0x20] sm:$0xff] %vm27, %v11230
  %11295 = vst.msk [vmem:[%s7 + $0x28] sm:$0xff] %vm27, %v11231
  %11296 = vst.msk [vmem:[%s7 + $0x30] sm:$0xff] %vm27, %v11232
  %11297 = vst.msk [vmem:[%s7 + $0x38] sm:$0xff] %vm27, %v11233
  %11298 = vst.msk [vmem:[%s7 + $0x40] sm:$0xff] %vm27, %v11234
  %11299 = vst.msk [vmem:[%s7 + $0x48] sm:$0xff] %vm27, %v11235
  %11300 = vst.msk [vmem:[%s7 + $0x50] sm:$0xff] %vm27, %v11236
  %11301 = vst.msk [vmem:[%s7 + $0x58] sm:$0xff] %vm27, %v11237
  %11302 = vst.msk [vmem:[%s7 + $0x60] sm:$0xff] %vm27, %v11238
  %11303 = vst.msk [vmem:[%s7 + $0x68] sm:$0xff] %vm27, %v11239
  %11304 = vst.msk [vmem:[%s7 + $0x70] sm:$0xff] %vm27, %v11240
  %11305 = vst.msk [vmem:[%s7 + $0x78] sm:$0xff] %vm27, %v11241
  %11306 = vst.msk [vmem:[%s7 + $0x80] sm:$0xff] %vm27, %v11242
  %11307 = vst.msk [vmem:[%s7 + $0x88] sm:$0xff] %vm27, %v11243
  %11308 = vst.msk [vmem:[%s7 + $0x90] sm:$0xff] %vm27, %v11244
  %11309 = vst.msk [vmem:[%s7 + $0x98] sm:$0xff] %vm27, %v11245
  %11310 = vst.msk [vmem:[%s7 + $0xa0] sm:$0xff] %vm27, %v11246
  %11311 = vst.msk [vmem:[%s7 + $0xa8] sm:$0xff] %vm27, %v11247
  %11312 = vst.msk [vmem:[%s7 + $0xb0] sm:$0xff] %vm27, %v11248
  %11313 = vst.msk [vmem:[%s7 + $0xb8] sm:$0xff] %vm27, %v11249
  %11314 = vst.msk [vmem:[%s7 + $0xc0] sm:$0xff] %vm27, %v11250
  %11315 = vst.msk [vmem:[%s7 + $0xc8] sm:$0xff] %vm27, %v11251
  %11316 = vst.msk [vmem:[%s7 + $0xd0] sm:$0xff] %vm27, %v11252
  %11317 = vst.msk [vmem:[%s7 + $0xd8] sm:$0xff] %vm27, %v11253
  %11318 = vst.msk [vmem:[%s7 + $0xe0] sm:$0xff] %vm27, %v11254
  %11319 = vst.msk [vmem:[%s7 + $0xe8] sm:$0xff] %vm27, %v11255
  %11320 = vst.msk [vmem:[%s7 + $0xf0] sm:$0xff] %vm27, %v11256
  %11321 = vst.msk [vmem:[%s7 + $0xf8] sm:$0xff] %vm27, %v11257
  %11322 = vst.msk [vmem:[%s7 + $0x100] sm:$0xff] %vm27, %v11258
  %11323 = vst.msk [vmem:[%s7 + $0x108] sm:$0xff] %vm27, %v11259
  %11324 = vst.msk [vmem:[%s7 + $0x110] sm:$0xff] %vm27, %v11260
  %11325 = vst.msk [vmem:[%s7 + $0x118] sm:$0xff] %vm27, %v11261
  %11326 = vst.msk [vmem:[%s7 + $0x120] sm:$0xff] %vm27, %v11262
  %11327 = vst.msk [vmem:[%s7 + $0x128] sm:$0xff] %vm27, %v11263
  %11328 = vst.msk [vmem:[%s7 + $0x130] sm:$0xff] %vm27, %v11264
  %11329 = vst.msk [vmem:[%s7 + $0x138] sm:$0xff] %vm27, %v11265
  %11330 = vst.msk [vmem:[%s7 + $0x140] sm:$0xff] %vm27, %v11266
  %11331 = vst.msk [vmem:[%s7 + $0x148] sm:$0xff] %vm27, %v11267
  %11332 = vst.msk [vmem:[%s7 + $0x150] sm:$0xff] %vm27, %v11268
  %11333 = vst.msk [vmem:[%s7 + $0x158] sm:$0xff] %vm27, %v11269
  %11334 = vst.msk [vmem:[%s7 + $0x160] sm:$0xff] %vm27, %v11270
  %11335 = vst.msk [vmem:[%s7 + $0x168] sm:$0xff] %vm27, %v11271
  %11336 = vst.msk [vmem:[%s7 + $0x170] sm:$0xff] %vm27, %v11272
  %11337 = vst.msk [vmem:[%s7 + $0x178] sm:$0xff] %vm27, %v11273
  %11338 = vst.msk [vmem:[%s7 + $0x180] sm:$0xff] %vm27, %v11274
  %11339 = vst.msk [vmem:[%s7 + $0x188] sm:$0xff] %vm27, %v11275
  %11340 = vst.msk [vmem:[%s7 + $0x190] sm:$0xff] %vm27, %v11276
  %11341 = vst.msk [vmem:[%s7 + $0x198] sm:$0xff] %vm27, %v11277
  %11342 = vst.msk [vmem:[%s7 + $0x1a0] sm:$0xff] %vm27, %v11278
  %11343 = vst.msk [vmem:[%s7 + $0x1a8] sm:$0xff] %vm27, %v11279
  %11344 = vst.msk [vmem:[%s7 + $0x1b0] sm:$0xff] %vm27, %v11280
  %11345 = vst.msk [vmem:[%s7 + $0x1b8] sm:$0xff] %vm27, %v11281
  %11346 = vst.msk [vmem:[%s7 + $0x1c0] sm:$0xff] %vm27, %v11282
  %11347 = vst.msk [vmem:[%s7 + $0x1c8] sm:$0xff] %vm27, %v11283
  %11348 = vst.msk [vmem:[%s7 + $0x1d0] sm:$0xff] %vm27, %v11284
  %11349 = vst.msk [vmem:[%s7 + $0x1d8] sm:$0xff] %vm27, %v11285
  %11350 = vst.msk [vmem:[%s7 + $0x1e0] sm:$0xff] %vm27, %v11286
  %11351 = vst.msk [vmem:[%s7 + $0x1e8] sm:$0xff] %vm27, %v11287
  %11352 = vst.msk [vmem:[%s7 + $0x1f0] sm:$0xff] %vm27, %v11288
  %11353 = vst.msk [vmem:[%s7 + $0x1f8] sm:$0xff] %vm27, %v11289
  // Predicated region
  $region30: #{residual_block.1} parent=0 // pred_check
    _
  $region31: #{residual_block.1} parent=0 // pred_check_branch
    %11355 = sbr.rel (0) target = $region33
  $region32: #{residual_block.1} parent=0 // pred_region
    _
  $region33: #{residual_block.1} parent=0 // pred_fallthru
    _
  // Predicated region
  $region34: #{residual_block.1} parent=0 // pred_check
    _
  $region35: #{residual_block.1} parent=0 // pred_check_branch
    %11357 = sbr.rel (0) target = $region37
  $region36: #{residual_block.1} parent=0 // pred_region
    _
  $region37: #{residual_block.1} parent=0 // pred_fallthru
    _

</llo_original>
